<compile_context>
chip_gen: v7x
topology: tpu7x:2x2x1
jax: 0.10.0
libtpu: 0.0.40
codegen_flags: <defaults>
</compile_context>

<pallas_src>
import functools

import jax
import jax.numpy as jnp
from jax.experimental import pallas as pl
from jax.experimental.pallas import tpu as pltpu


_LANES = 128
_BN_EPS = 1e-5


def _round_up(n, m):
    return ((n + m - 1) // m) * m


def _vmem_limit_bytes():
    # ~48 MiB on v7x (64 MiB physical), ~96 MiB on v5e/v6e (128 MiB physical).
    try:
        cap = pltpu.get_tpu_info().vmem_capacity_bytes
    except Exception:
        cap = 128 * 1024 * 1024
    return min(100 * 1024 * 1024, int(cap * 3 // 4))


# --------------------------------------------------------------------------
# Fused kernel: one batch element per grid step.
# Layouts: x / out are flattened width-padded NHWC ((H+2)*(W+2), Cp) slabs,
# zero spatial border, channels zero-padded to Cp (lane width).
# --------------------------------------------------------------------------
def _basic_block_kernel(x_ref, w1_ref, b1_ref, w2_ref, b2_ref, out_ref,
                        p1_ref, *, H, W):
    Wp = W + 2
    Nflat = (H + 2) * Wp
    Cp = out_ref.shape[-1]
    # Flat output rows covering all valid pixels: i = r*Wp + c, r<H, c<Wp
    # (last row only needs c<W).  Max input read index stays < Nflat.
    L = (H - 1) * Wp + W
    border = W + 3                      # rows not covered by the bulk store

    # Columns c >= W of each width-Wp row are wrap-around garbage -> mask to 0.
    col = jax.lax.broadcasted_iota(jnp.int32, (L, 1), 0) % Wp
    valid = col < W

    def conv3x3(window, w_ref):
        # 9 accumulating MXU dots; bf16 operands, f32 accumulation.
        acc = None
        for k in range(9):
            dy, dx = divmod(k, 3)
            part = jnp.dot(window(dy * Wp + dx), w_ref[k],
                           preferred_element_type=jnp.float32)
            acc = part if acc is None else acc + part
        return acc

    x_win = lambda off: x_ref[0, pl.ds(off, L), :]

    # ---- conv1 (BN1 scale folded into w1) -> +shift -> ReLU -> padded P1 ----
    y1 = conv3x3(x_win, w1_ref) + b1_ref[...]
    y1 = jnp.where(valid, jnp.maximum(y1, 0.0), 0.0).astype(p1_ref.dtype)
    zb1 = jnp.zeros((border, Cp), p1_ref.dtype)
    p1_ref[pl.ds(0, border), :] = zb1                     # top border strip
    p1_ref[pl.ds(Nflat - border, border), :] = zb1        # bottom border strip
    p1_ref[pl.ds(Wp + 1, L), :] = y1                      # interior (+0 borders)

    # ---- conv2 (BN2 scale folded) -> +shift -> +residual -> ReLU -> out ----
    p1_win = lambda off: p1_ref[pl.ds(off, L), :]
    y2 = conv3x3(p1_win, w2_ref) + b2_ref[...]
    y2 = y2 + x_ref[0, pl.ds(Wp + 1, L), :].astype(jnp.float32)   # residual
    y2 = jnp.where(valid, jnp.maximum(y2, 0.0), 0.0)
    zb2 = jnp.zeros((border, Cp), out_ref.dtype)
    out_ref[0, pl.ds(0, border), :] = zb2
    out_ref[0, pl.ds(Nflat - border, border), :] = zb2
    out_ref[0, pl.ds(Wp + 1, L), :] = y2.astype(out_ref.dtype)


# --------------------------------------------------------------------------
# Parameter preparation (wrapper-side, tiny tensors)
# --------------------------------------------------------------------------
def _fold_conv_bn(w_oihw, gamma, beta, mean, var, c_pad, eps=_BN_EPS):
    """conv weight (Cout,Cin,3,3) + BN -> (9, Cp, Cp) bf16 weights (scale
    folded into output columns) and (1, Cp) f32 shift."""
    scale = gamma / jnp.sqrt(var + eps)
    shift = beta - mean * scale
    c_out, c_in = w_oihw.shape[0], w_oihw.shape[1]
    w = jnp.transpose(w_oihw, (2, 3, 1, 0)).astype(jnp.float32)   # (ky,kx,I,O)
    w = w * scale[None, None, None, :]
    w_full = jnp.zeros((3, 3, c_pad, c_pad), jnp.float32)
    w_full = w_full.at[:, :, :c_in, :c_out].set(w)
    w9 = w_full.reshape(9, c_pad, c_pad).astype(jnp.bfloat16)
    b = jnp.zeros((1, c_pad), jnp.float32).at[0, :c_out].set(
        shift.astype(jnp.float32))
    return w9, b


# --------------------------------------------------------------------------
# Forward wrapper
# --------------------------------------------------------------------------
@jax.jit
def basic_block_forward(x_nchw, params):
    """BasicBlock forward. x_nchw: (N, C, H, W) float32 (PyTorch layout)."""
    N, C, H, W = x_nchw.shape
    Cp = _round_up(C, _LANES)
    Hp, Wp = H + 2, W + 2
    Nflat = Hp * Wp

    w1, b1 = _fold_conv_bn(params["conv1_w"], params["bn1_g"], params["bn1_b"],
                           params["bn1_m"], params["bn1_v"], Cp)
    w2, b2 = _fold_conv_bn(params["conv2_w"], params["bn2_g"], params["bn2_b"],
                           params["bn2_m"], params["bn2_v"], Cp)

    # Layout glue at the block boundary: NCHW -> NHWC, channel-pad to the lane
    # width, spatial-pad by 1, bf16, flatten (H+2,W+2)->rows.
    # TODO(synk): when chaining blocks, keep this padded-flat layout between
    #             blocks and convert only at network boundaries.
    x_nhwc = jnp.transpose(x_nchw, (0, 2, 3, 1))
    x_p = jnp.pad(x_nhwc, ((0, 0), (1, 1), (1, 1), (0, Cp - C)))
    x_flat = x_p.astype(jnp.bfloat16).reshape(N, Nflat, Cp)

    kernel = functools.partial(_basic_block_kernel, H=H, W=W)

    out_flat = pl.pallas_call(
        kernel,
        out_shape=jax.ShapeDtypeStruct((N, Nflat, Cp), jnp.float32),
        grid=(N,),
        in_specs=[
            pl.BlockSpec((1, Nflat, Cp), lambda n: (n, 0, 0)),   # x (padded, flat)
            pl.BlockSpec((9, Cp, Cp), lambda n: (0, 0, 0)),      # w1 (scale folded)
            pl.BlockSpec((1, Cp), lambda n: (0, 0)),             # bn1 shift
            pl.BlockSpec((9, Cp, Cp), lambda n: (0, 0, 0)),      # w2 (scale folded)
            pl.BlockSpec((1, Cp), lambda n: (0, 0)),             # bn2 shift
        ],
        out_specs=pl.BlockSpec((1, Nflat, Cp), lambda n: (n, 0, 0)),
        scratch_shapes=[
            pltpu.VMEM((Nflat, Cp), jnp.bfloat16),   # relu(bn1(conv1)), padded
        ],
        compiler_params=pltpu.CompilerParams(
            dimension_semantics=("parallel",),
            vmem_limit_bytes=_vmem_limit_bytes()),
    )(x_flat, w1, b1, w2, b2)

    # Drop spatial border + padded channels, back to NCHW.
    out = out_flat.reshape(N, Hp, Wp, Cp)[:, 1:H + 1, 1:W + 1, :C]
    return jnp.transpose(out, (0, 3, 1, 2))


# --------------------------------------------------------------------------
# Pure-JAX reference (mirrors the PyTorch module, eval-mode BN, f32)
# --------------------------------------------------------------------------
def _reference(x_nchw, params, eps=_BN_EPS):
    def conv(x, w):
        return jax.lax.conv_general_dilated(
            x, w, window_strides=(1, 1), padding=((1, 1), (1, 1)),
            dimension_numbers=("NCHW", "OIHW", "NCHW"))

    def bn(x, g, b, m, v):
        g = g[None, :, None, None]; b = b[None, :, None, None]
        m = m[None, :, None, None]; v = v[None, :, None, None]
        return (x - m) / jnp.sqrt(v + eps) * g + b

    out = conv(x_nchw, params["conv1_w"])
    out = bn(out, params["bn1_g"], params["bn1_b"], params["bn1_m"],
             params["bn1_v"])
    out = jnp.maximum(out, 0.0)
    out = conv(out, params["conv2_w"])
    out = bn(out, params["bn2_g"], params["bn2_b"], params["bn2_m"],
             params["bn2_v"])
    out = out + x_nchw
    return jnp.maximum(out, 0.0)


# --------------------------------------------------------------------------
# Main
# --------------------------------------------------------------------------
if __name__ == "__main__":
    # Small shapes: inplanes == planes (required when downsample is None).
    N, C, H, W = 2, 8, 16, 16

    key = jax.random.PRNGKey(0)
    keys = jax.random.split(key, 11)

    params = {
        "conv1_w": 0.1 * jax.random.normal(keys[0], (C, C, 3, 3), jnp.float32),
        "conv2_w": 0.1 * jax.random.normal(keys[1], (C, C, 3, 3), jnp.float32),
        "bn1_g": 0.5 + jax.random.uniform(keys[2], (C,), jnp.float32),
        "bn1_b": 0.1 * jax.random.normal(keys[3], (C,), jnp.float32),
        "bn1_m": 0.1 * jax.random.normal(keys[4], (C,), jnp.float32),
        "bn1_v": 0.5 + jax.random.uniform(keys[5], (C,), jnp.float32),
        "bn2_g": 0.5 + jax.random.uniform(keys[6], (C,), jnp.float32),
        "bn2_b": 0.1 * jax.random.normal(keys[7], (C,), jnp.float32),
        "bn2_m": 0.1 * jax.random.normal(keys[8], (C,), jnp.float32),
        "bn2_v": 0.5 + jax.random.uniform(keys[9], (C,), jnp.float32),
    }

    x = jax.random.normal(keys[10], (N, C, H, W), jnp.float32)

    out = jax.block_until_ready(basic_block_forward(x, params))
    ref = jax.block_until_ready(_reference(x, params))

    assert out.shape == (N, C, H, W), out.shape
    max_err = float(jnp.max(jnp.abs(out - ref)))
    # bf16 conv operands (f32 accumulation) -> looser tolerance than pure f32.
    assert jnp.allclose(out, ref, rtol=3e-2, atol=3e-2), max_err

    print("KERNEL_OK")
</pallas_src>

<mosaic_0001>
module attributes {stable_mosaic.version = 11 : i64} {
  func.func @_basic_block_kernel(%arg0: i32, %arg1: memref<1x324x128xbf16, #tpu.memory_space<vmem>>, %arg2: memref<9x128x128xbf16, #tpu.memory_space<vmem>>, %arg3: memref<1x128xf32, #tpu.memory_space<vmem>>, %arg4: memref<9x128x128xbf16, #tpu.memory_space<vmem>>, %arg5: memref<1x128xf32, #tpu.memory_space<vmem>>, %arg6: memref<1x324x128xf32, #tpu.memory_space<vmem>>, %arg7: memref<324x128xbf16, #tpu.memory_space<vmem>>) attributes {dimension_semantics = [#tpu.dimension_semantics<parallel>], iteration_bounds = array<i64: 2>, scalar_prefetch = 0 : i64, scratch_operands = 1 : i64, tpu.core_type = #tpu.core_type<tc>, window_params = [{transform_indices = @transform_0, window_bounds = array<i64: 1, 324, 128>}, {pipeline_mode = #tpu.pipeline_mode<synchronous>, transform_indices = @transform_1, window_bounds = array<i64: 9, 128, 128>}, {pipeline_mode = #tpu.pipeline_mode<synchronous>, transform_indices = @transform_2, window_bounds = array<i64: 1, 128>}, {pipeline_mode = #tpu.pipeline_mode<synchronous>, transform_indices = @transform_3, window_bounds = array<i64: 9, 128, 128>}, {pipeline_mode = #tpu.pipeline_mode<synchronous>, transform_indices = @transform_4, window_bounds = array<i64: 1, 128>}, {transform_indices = @transform_5, window_bounds = array<i64: 1, 324, 128>}]} {
    %0 = tpu.iota {dimensions = array<i32: 0>} : vector<286x1xi32>
    %c18_i32 = arith.constant 18 : i32
    %c0_i32 = arith.constant 0 : i32
    %1 = arith.cmpi eq, %c18_i32, %c0_i32 : i32
    %c1_i32 = arith.constant 1 : i32
    %2 = arith.select %1, %c1_i32, %c18_i32 : i32
    %3 = vector.broadcast %2 : i32 to vector<286x1xi32>
    %4 = arith.remsi %0, %3 : vector<286x1xi32>
    %c0_i32_0 = arith.constant 0 : i32
    %5 = vector.broadcast %c0_i32_0 : i32 to vector<286x1xi32>
    %6 = arith.cmpi ne, %4, %5 : vector<286x1xi32>
    %c0_i32_1 = arith.constant 0 : i32
    %7 = vector.broadcast %c0_i32_1 : i32 to vector<286x1xi32>
    %8 = arith.cmpi slt, %4, %7 : vector<286x1xi32>
    %c0_i32_2 = arith.constant 0 : i32
    %9 = arith.cmpi slt, %2, %c0_i32_2 : i32
    %10 = vector.broadcast %9 : i1 to vector<286x1xi1>
    %11 = vector.broadcast %10 : vector<286x1xi1> to vector<286x1xi1>
    %12 = arith.xori %8, %11 : vector<286x1xi1>
    %13 = arith.andi %12, %6 : vector<286x1xi1>
    %14 = vector.broadcast %2 : i32 to vector<286x1xi32>
    %15 = arith.addi %4, %14 : vector<286x1xi32>
    %16 = arith.select %13, %15, %4 : vector<286x1xi1>, vector<286x1xi32>
    %c16_i32 = arith.constant 16 : i32
    %17 = vector.broadcast %c16_i32 : i32 to vector<286x1xi32>
    %18 = arith.cmpi slt, %16, %17 : vector<286x1xi32>
    %c0 = arith.constant 0 : index
    %c0_3 = arith.constant 0 : index
    %c0_4 = arith.constant 0 : index
    %19 = vector.load %arg1[%c0, %c0_3, %c0_4] : memref<1x324x128xbf16, #tpu.memory_space<vmem>>, vector<1x286x128xbf16>
    %20 = vector.shape_cast %19 : vector<1x286x128xbf16> to vector<286x128xbf16>
    %c0_5 = arith.constant 0 : index
    %c0_6 = arith.constant 0 : index
    %c0_7 = arith.constant 0 : index
    %21 = vector.load %arg2[%c0_5, %c0_6, %c0_7] : memref<9x128x128xbf16, #tpu.memory_space<vmem>>, vector<1x128x128xbf16>
    %22 = vector.shape_cast %21 : vector<1x128x128xbf16> to vector<128x128xbf16>
    %cst = arith.constant dense<0.000000e+00> : vector<286x128xf32>
    %23 = tpu.matmul %20, %22, %cst {dimension_numbers = #tpu.dot_dimension_numbers<[1], [0], [0], [1], [0, 0, 1, 1], [], []>} : vector<286x128xbf16>, vector<128x128xbf16>, vector<286x128xf32> -> vector<286x128xf32>
    %c0_8 = arith.constant 0 : index
    %c1 = arith.constant 1 : index
    %c0_9 = arith.constant 0 : index
    %24 = vector.load %arg1[%c0_8, %c1, %c0_9] : memref<1x324x128xbf16, #tpu.memory_space<vmem>>, vector<1x286x128xbf16>
    %25 = vector.shape_cast %24 : vector<1x286x128xbf16> to vector<286x128xbf16>
    %c1_10 = arith.constant 1 : index
    %c0_11 = arith.constant 0 : index
    %c0_12 = arith.constant 0 : index
    %26 = vector.load %arg2[%c1_10, %c0_11, %c0_12] : memref<9x128x128xbf16, #tpu.memory_space<vmem>>, vector<1x128x128xbf16>
    %27 = vector.shape_cast %26 : vector<1x128x128xbf16> to vector<128x128xbf16>
    %cst_13 = arith.constant dense<0.000000e+00> : vector<286x128xf32>
    %28 = tpu.matmul %25, %27, %cst_13 {dimension_numbers = #tpu.dot_dimension_numbers<[1], [0], [0], [1], [0, 0, 1, 1], [], []>} : vector<286x128xbf16>, vector<128x128xbf16>, vector<286x128xf32> -> vector<286x128xf32>
    %29 = arith.addf %23, %28 : vector<286x128xf32>
    %c0_14 = arith.constant 0 : index
    %c2 = arith.constant 2 : index
    %c0_15 = arith.constant 0 : index
    %30 = vector.load %arg1[%c0_14, %c2, %c0_15] : memref<1x324x128xbf16, #tpu.memory_space<vmem>>, vector<1x286x128xbf16>
    %31 = vector.shape_cast %30 : vector<1x286x128xbf16> to vector<286x128xbf16>
    %c2_16 = arith.constant 2 : index
    %c0_17 = arith.constant 0 : index
    %c0_18 = arith.constant 0 : index
    %32 = vector.load %arg2[%c2_16, %c0_17, %c0_18] : memref<9x128x128xbf16, #tpu.memory_space<vmem>>, vector<1x128x128xbf16>
    %33 = vector.shape_cast %32 : vector<1x128x128xbf16> to vector<128x128xbf16>
    %cst_19 = arith.constant dense<0.000000e+00> : vector<286x128xf32>
    %34 = tpu.matmul %31, %33, %cst_19 {dimension_numbers = #tpu.dot_dimension_numbers<[1], [0], [0], [1], [0, 0, 1, 1], [], []>} : vector<286x128xbf16>, vector<128x128xbf16>, vector<286x128xf32> -> vector<286x128xf32>
    %35 = arith.addf %29, %34 : vector<286x128xf32>
    %c0_20 = arith.constant 0 : index
    %c18 = arith.constant 18 : index
    %c0_21 = arith.constant 0 : index
    %36 = vector.load %arg1[%c0_20, %c18, %c0_21] : memref<1x324x128xbf16, #tpu.memory_space<vmem>>, vector<1x286x128xbf16>
    %37 = vector.shape_cast %36 : vector<1x286x128xbf16> to vector<286x128xbf16>
    %c3 = arith.constant 3 : index
    %c0_22 = arith.constant 0 : index
    %c0_23 = arith.constant 0 : index
    %38 = vector.load %arg2[%c3, %c0_22, %c0_23] : memref<9x128x128xbf16, #tpu.memory_space<vmem>>, vector<1x128x128xbf16>
    %39 = vector.shape_cast %38 : vector<1x128x128xbf16> to vector<128x128xbf16>
    %cst_24 = arith.constant dense<0.000000e+00> : vector<286x128xf32>
    %40 = tpu.matmul %37, %39, %cst_24 {dimension_numbers = #tpu.dot_dimension_numbers<[1], [0], [0], [1], [0, 0, 1, 1], [], []>} : vector<286x128xbf16>, vector<128x128xbf16>, vector<286x128xf32> -> vector<286x128xf32>
    %41 = arith.addf %35, %40 : vector<286x128xf32>
    %c0_25 = arith.constant 0 : index
    %c19 = arith.constant 19 : index
    %c0_26 = arith.constant 0 : index
    %42 = vector.load %arg1[%c0_25, %c19, %c0_26] : memref<1x324x128xbf16, #tpu.memory_space<vmem>>, vector<1x286x128xbf16>
    %43 = vector.shape_cast %42 : vector<1x286x128xbf16> to vector<286x128xbf16>
    %c4 = arith.constant 4 : index
    %c0_27 = arith.constant 0 : index
    %c0_28 = arith.constant 0 : index
    %44 = vector.load %arg2[%c4, %c0_27, %c0_28] : memref<9x128x128xbf16, #tpu.memory_space<vmem>>, vector<1x128x128xbf16>
    %45 = vector.shape_cast %44 : vector<1x128x128xbf16> to vector<128x128xbf16>
    %cst_29 = arith.constant dense<0.000000e+00> : vector<286x128xf32>
    %46 = tpu.matmul %43, %45, %cst_29 {dimension_numbers = #tpu.dot_dimension_numbers<[1], [0], [0], [1], [0, 0, 1, 1], [], []>} : vector<286x128xbf16>, vector<128x128xbf16>, vector<286x128xf32> -> vector<286x128xf32>
    %47 = arith.addf %41, %46 : vector<286x128xf32>
    %c0_30 = arith.constant 0 : index
    %c20 = arith.constant 20 : index
    %c0_31 = arith.constant 0 : index
    %48 = vector.load %arg1[%c0_30, %c20, %c0_31] : memref<1x324x128xbf16, #tpu.memory_space<vmem>>, vector<1x286x128xbf16>
    %49 = vector.shape_cast %48 : vector<1x286x128xbf16> to vector<286x128xbf16>
    %c5 = arith.constant 5 : index
    %c0_32 = arith.constant 0 : index
    %c0_33 = arith.constant 0 : index
    %50 = vector.load %arg2[%c5, %c0_32, %c0_33] : memref<9x128x128xbf16, #tpu.memory_space<vmem>>, vector<1x128x128xbf16>
    %51 = vector.shape_cast %50 : vector<1x128x128xbf16> to vector<128x128xbf16>
    %cst_34 = arith.constant dense<0.000000e+00> : vector<286x128xf32>
    %52 = tpu.matmul %49, %51, %cst_34 {dimension_numbers = #tpu.dot_dimension_numbers<[1], [0], [0], [1], [0, 0, 1, 1], [], []>} : vector<286x128xbf16>, vector<128x128xbf16>, vector<286x128xf32> -> vector<286x128xf32>
    %53 = arith.addf %47, %52 : vector<286x128xf32>
    %c0_35 = arith.constant 0 : index
    %c36 = arith.constant 36 : index
    %c0_36 = arith.constant 0 : index
    %54 = vector.load %arg1[%c0_35, %c36, %c0_36] : memref<1x324x128xbf16, #tpu.memory_space<vmem>>, vector<1x286x128xbf16>
    %55 = vector.shape_cast %54 : vector<1x286x128xbf16> to vector<286x128xbf16>
    %c6 = arith.constant 6 : index
    %c0_37 = arith.constant 0 : index
    %c0_38 = arith.constant 0 : index
    %56 = vector.load %arg2[%c6, %c0_37, %c0_38] : memref<9x128x128xbf16, #tpu.memory_space<vmem>>, vector<1x128x128xbf16>
    %57 = vector.shape_cast %56 : vector<1x128x128xbf16> to vector<128x128xbf16>
    %cst_39 = arith.constant dense<0.000000e+00> : vector<286x128xf32>
    %58 = tpu.matmul %55, %57, %cst_39 {dimension_numbers = #tpu.dot_dimension_numbers<[1], [0], [0], [1], [0, 0, 1, 1], [], []>} : vector<286x128xbf16>, vector<128x128xbf16>, vector<286x128xf32> -> vector<286x128xf32>
    %59 = arith.addf %53, %58 : vector<286x128xf32>
    %c0_40 = arith.constant 0 : index
    %c37 = arith.constant 37 : index
    %c0_41 = arith.constant 0 : index
    %60 = vector.load %arg1[%c0_40, %c37, %c0_41] : memref<1x324x128xbf16, #tpu.memory_space<vmem>>, vector<1x286x128xbf16>
    %61 = vector.shape_cast %60 : vector<1x286x128xbf16> to vector<286x128xbf16>
    %c7 = arith.constant 7 : index
    %c0_42 = arith.constant 0 : index
    %c0_43 = arith.constant 0 : index
    %62 = vector.load %arg2[%c7, %c0_42, %c0_43] : memref<9x128x128xbf16, #tpu.memory_space<vmem>>, vector<1x128x128xbf16>
    %63 = vector.shape_cast %62 : vector<1x128x128xbf16> to vector<128x128xbf16>
    %cst_44 = arith.constant dense<0.000000e+00> : vector<286x128xf32>
    %64 = tpu.matmul %61, %63, %cst_44 {dimension_numbers = #tpu.dot_dimension_numbers<[1], [0], [0], [1], [0, 0, 1, 1], [], []>} : vector<286x128xbf16>, vector<128x128xbf16>, vector<286x128xf32> -> vector<286x128xf32>
    %65 = arith.addf %59, %64 : vector<286x128xf32>
    %c0_45 = arith.constant 0 : index
    %c38 = arith.constant 38 : index
    %c0_46 = arith.constant 0 : index
    %66 = vector.load %arg1[%c0_45, %c38, %c0_46] : memref<1x324x128xbf16, #tpu.memory_space<vmem>>, vector<1x286x128xbf16>
    %67 = vector.shape_cast %66 : vector<1x286x128xbf16> to vector<286x128xbf16>
    %c8 = arith.constant 8 : index
    %c0_47 = arith.constant 0 : index
    %c0_48 = arith.constant 0 : index
    %68 = vector.load %arg2[%c8, %c0_47, %c0_48] : memref<9x128x128xbf16, #tpu.memory_space<vmem>>, vector<1x128x128xbf16>
    %69 = vector.shape_cast %68 : vector<1x128x128xbf16> to vector<128x128xbf16>
    %cst_49 = arith.constant dense<0.000000e+00> : vector<286x128xf32>
    %70 = tpu.matmul %67, %69, %cst_49 {dimension_numbers = #tpu.dot_dimension_numbers<[1], [0], [0], [1], [0, 0, 1, 1], [], []>} : vector<286x128xbf16>, vector<128x128xbf16>, vector<286x128xf32> -> vector<286x128xf32>
    %71 = arith.addf %65, %70 : vector<286x128xf32>
    %c0_50 = arith.constant 0 : index
    %c0_51 = arith.constant 0 : index
    %72 = vector.load %arg3[%c0_50, %c0_51] : memref<1x128xf32, #tpu.memory_space<vmem>>, vector<1x128xf32>
    %73 = vector.broadcast %72 : vector<1x128xf32> to vector<286x128xf32>
    %74 = arith.addf %71, %73 : vector<286x128xf32>
    %cst_52 = arith.constant 0.000000e+00 : f32
    %75 = vector.broadcast %cst_52 : f32 to vector<286x128xf32>
    %76 = arith.maximumf %74, %75 : vector<286x128xf32>
    %cst_53 = arith.constant 0.000000e+00 : f32
    %77 = vector.shape_cast %18 : vector<286x1xi1> to vector<286x1xi1>
    %78 = vector.broadcast %77 : vector<286x1xi1> to vector<286x128xi1>
    %79 = vector.broadcast %cst_53 : f32 to vector<286x128xf32>
    %80 = arith.select %78, %76, %79 : vector<286x128xi1>, vector<286x128xf32>
    %81 = arith.truncf %80 : vector<286x128xf32> to vector<286x128xbf16>
    %cst_54 = arith.constant 0.000000e+00 : bf16
    %82 = vector.broadcast %cst_54 : bf16 to vector<19x128xbf16>
    %c0_55 = arith.constant 0 : index
    %c0_56 = arith.constant 0 : index
    %83 = vector.load %arg7[%c0_55, %c0_56] : memref<324x128xbf16, #tpu.memory_space<vmem>>, vector<19x128xbf16>
    tpu.vector_store %arg7[%c0_55, %c0_56], %82 {strides = array<i32>} : memref<324x128xbf16, #tpu.memory_space<vmem>>, vector<19x128xbf16>,
    %c305 = arith.constant 305 : index
    %c0_57 = arith.constant 0 : index
    %84 = vector.load %arg7[%c305, %c0_57] : memref<324x128xbf16, #tpu.memory_space<vmem>>, vector<19x128xbf16>
    tpu.vector_store %arg7[%c305, %c0_57], %82 {strides = array<i32>} : memref<324x128xbf16, #tpu.memory_space<vmem>>, vector<19x128xbf16>,
    %c19_58 = arith.constant 19 : index
    %c0_59 = arith.constant 0 : index
    %85 = vector.load %arg7[%c19_58, %c0_59] : memref<324x128xbf16, #tpu.memory_space<vmem>>, vector<286x128xbf16>
    tpu.vector_store %arg7[%c19_58, %c0_59], %81 {strides = array<i32>} : memref<324x128xbf16, #tpu.memory_space<vmem>>, vector<286x128xbf16>,
    %c0_60 = arith.constant 0 : index
    %c0_61 = arith.constant 0 : index
    %86 = vector.load %arg7[%c0_60, %c0_61] : memref<324x128xbf16, #tpu.memory_space<vmem>>, vector<286x128xbf16>
    %c0_62 = arith.constant 0 : index
    %c0_63 = arith.constant 0 : index
    %c0_64 = arith.constant 0 : index
    %87 = vector.load %arg4[%c0_62, %c0_63, %c0_64] : memref<9x128x128xbf16, #tpu.memory_space<vmem>>, vector<1x128x128xbf16>
    %88 = vector.shape_cast %87 : vector<1x128x128xbf16> to vector<128x128xbf16>
    %cst_65 = arith.constant dense<0.000000e+00> : vector<286x128xf32>
    %89 = tpu.matmul %86, %88, %cst_65 {dimension_numbers = #tpu.dot_dimension_numbers<[1], [0], [0], [1], [0, 0, 1, 1], [], []>} : vector<286x128xbf16>, vector<128x128xbf16>, vector<286x128xf32> -> vector<286x128xf32>
    %c1_66 = arith.constant 1 : index
    %c0_67 = arith.constant 0 : index
    %90 = vector.load %arg7[%c1_66, %c0_67] : memref<324x128xbf16, #tpu.memory_space<vmem>>, vector<286x128xbf16>
    %c1_68 = arith.constant 1 : index
    %c0_69 = arith.constant 0 : index
    %c0_70 = arith.constant 0 : index
    %91 = vector.load %arg4[%c1_68, %c0_69, %c0_70] : memref<9x128x128xbf16, #tpu.memory_space<vmem>>, vector<1x128x128xbf16>
    %92 = vector.shape_cast %91 : vector<1x128x128xbf16> to vector<128x128xbf16>
    %cst_71 = arith.constant dense<0.000000e+00> : vector<286x128xf32>
    %93 = tpu.matmul %90, %92, %cst_71 {dimension_numbers = #tpu.dot_dimension_numbers<[1], [0], [0], [1], [0, 0, 1, 1], [], []>} : vector<286x128xbf16>, vector<128x128xbf16>, vector<286x128xf32> -> vector<286x128xf32>
    %94 = arith.addf %89, %93 : vector<286x128xf32>
    %c2_72 = arith.constant 2 : index
    %c0_73 = arith.constant 0 : index
    %95 = vector.load %arg7[%c2_72, %c0_73] : memref<324x128xbf16, #tpu.memory_space<vmem>>, vector<286x128xbf16>
    %c2_74 = arith.constant 2 : index
    %c0_75 = arith.constant 0 : index
    %c0_76 = arith.constant 0 : index
    %96 = vector.load %arg4[%c2_74, %c0_75, %c0_76] : memref<9x128x128xbf16, #tpu.memory_space<vmem>>, vector<1x128x128xbf16>
    %97 = vector.shape_cast %96 : vector<1x128x128xbf16> to vector<128x128xbf16>
    %cst_77 = arith.constant dense<0.000000e+00> : vector<286x128xf32>
    %98 = tpu.matmul %95, %97, %cst_77 {dimension_numbers = #tpu.dot_dimension_numbers<[1], [0], [0], [1], [0, 0, 1, 1], [], []>} : vector<286x128xbf16>, vector<128x128xbf16>, vector<286x128xf32> -> vector<286x128xf32>
    %99 = arith.addf %94, %98 : vector<286x128xf32>
    %c18_78 = arith.constant 18 : index
    %c0_79 = arith.constant 0 : index
    %100 = vector.load %arg7[%c18_78, %c0_79] : memref<324x128xbf16, #tpu.memory_space<vmem>>, vector<286x128xbf16>
    %c3_80 = arith.constant 3 : index
    %c0_81 = arith.constant 0 : index
    %c0_82 = arith.constant 0 : index
    %101 = vector.load %arg4[%c3_80, %c0_81, %c0_82] : memref<9x128x128xbf16, #tpu.memory_space<vmem>>, vector<1x128x128xbf16>
    %102 = vector.shape_cast %101 : vector<1x128x128xbf16> to vector<128x128xbf16>
    %cst_83 = arith.constant dense<0.000000e+00> : vector<286x128xf32>
    %103 = tpu.matmul %100, %102, %cst_83 {dimension_numbers = #tpu.dot_dimension_numbers<[1], [0], [0], [1], [0, 0, 1, 1], [], []>} : vector<286x128xbf16>, vector<128x128xbf16>, vector<286x128xf32> -> vector<286x128xf32>
    %104 = arith.addf %99, %103 : vector<286x128xf32>
    %c19_84 = arith.constant 19 : index
    %c0_85 = arith.constant 0 : index
    %105 = vector.load %arg7[%c19_84, %c0_85] : memref<324x128xbf16, #tpu.memory_space<vmem>>, vector<286x128xbf16>
    %c4_86 = arith.constant 4 : index
    %c0_87 = arith.constant 0 : index
    %c0_88 = arith.constant 0 : index
    %106 = vector.load %arg4[%c4_86, %c0_87, %c0_88] : memref<9x128x128xbf16, #tpu.memory_space<vmem>>, vector<1x128x128xbf16>
    %107 = vector.shape_cast %106 : vector<1x128x128xbf16> to vector<128x128xbf16>
    %cst_89 = arith.constant dense<0.000000e+00> : vector<286x128xf32>
    %108 = tpu.matmul %105, %107, %cst_89 {dimension_numbers = #tpu.dot_dimension_numbers<[1], [0], [0], [1], [0, 0, 1, 1], [], []>} : vector<286x128xbf16>, vector<128x128xbf16>, vector<286x128xf32> -> vector<286x128xf32>
    %109 = arith.addf %104, %108 : vector<286x128xf32>
    %c20_90 = arith.constant 20 : index
    %c0_91 = arith.constant 0 : index
    %110 = vector.load %arg7[%c20_90, %c0_91] : memref<324x128xbf16, #tpu.memory_space<vmem>>, vector<286x128xbf16>
    %c5_92 = arith.constant 5 : index
    %c0_93 = arith.constant 0 : index
    %c0_94 = arith.constant 0 : index
    %111 = vector.load %arg4[%c5_92, %c0_93, %c0_94] : memref<9x128x128xbf16, #tpu.memory_space<vmem>>, vector<1x128x128xbf16>
    %112 = vector.shape_cast %111 : vector<1x128x128xbf16> to vector<128x128xbf16>
    %cst_95 = arith.constant dense<0.000000e+00> : vector<286x128xf32>
    %113 = tpu.matmul %110, %112, %cst_95 {dimension_numbers = #tpu.dot_dimension_numbers<[1], [0], [0], [1], [0, 0, 1, 1], [], []>} : vector<286x128xbf16>, vector<128x128xbf16>, vector<286x128xf32> -> vector<286x128xf32>
    %114 = arith.addf %109, %113 : vector<286x128xf32>
    %c36_96 = arith.constant 36 : index
    %c0_97 = arith.constant 0 : index
    %115 = vector.load %arg7[%c36_96, %c0_97] : memref<324x128xbf16, #tpu.memory_space<vmem>>, vector<286x128xbf16>
    %c6_98 = arith.constant 6 : index
    %c0_99 = arith.constant 0 : index
    %c0_100 = arith.constant 0 : index
    %116 = vector.load %arg4[%c6_98, %c0_99, %c0_100] : memref<9x128x128xbf16, #tpu.memory_space<vmem>>, vector<1x128x128xbf16>
    %117 = vector.shape_cast %116 : vector<1x128x128xbf16> to vector<128x128xbf16>
    %cst_101 = arith.constant dense<0.000000e+00> : vector<286x128xf32>
    %118 = tpu.matmul %115, %117, %cst_101 {dimension_numbers = #tpu.dot_dimension_numbers<[1], [0], [0], [1], [0, 0, 1, 1], [], []>} : vector<286x128xbf16>, vector<128x128xbf16>, vector<286x128xf32> -> vector<286x128xf32>
    %119 = arith.addf %114, %118 : vector<286x128xf32>
    %c37_102 = arith.constant 37 : index
    %c0_103 = arith.constant 0 : index
    %120 = vector.load %arg7[%c37_102, %c0_103] : memref<324x128xbf16, #tpu.memory_space<vmem>>, vector<286x128xbf16>
    %c7_104 = arith.constant 7 : index
    %c0_105 = arith.constant 0 : index
    %c0_106 = arith.constant 0 : index
    %121 = vector.load %arg4[%c7_104, %c0_105, %c0_106] : memref<9x128x128xbf16, #tpu.memory_space<vmem>>, vector<1x128x128xbf16>
    %122 = vector.shape_cast %121 : vector<1x128x128xbf16> to vector<128x128xbf16>
    %cst_107 = arith.constant dense<0.000000e+00> : vector<286x128xf32>
    %123 = tpu.matmul %120, %122, %cst_107 {dimension_numbers = #tpu.dot_dimension_numbers<[1], [0], [0], [1], [0, 0, 1, 1], [], []>} : vector<286x128xbf16>, vector<128x128xbf16>, vector<286x128xf32> -> vector<286x128xf32>
    %124 = arith.addf %119, %123 : vector<286x128xf32>
    %c38_108 = arith.constant 38 : index
    %c0_109 = arith.constant 0 : index
    %125 = vector.load %arg7[%c38_108, %c0_109] : memref<324x128xbf16, #tpu.memory_space<vmem>>, vector<286x128xbf16>
    %c8_110 = arith.constant 8 : index
    %c0_111 = arith.constant 0 : index
    %c0_112 = arith.constant 0 : index
    %126 = vector.load %arg4[%c8_110, %c0_111, %c0_112] : memref<9x128x128xbf16, #tpu.memory_space<vmem>>, vector<1x128x128xbf16>
    %127 = vector.shape_cast %126 : vector<1x128x128xbf16> to vector<128x128xbf16>
    %cst_113 = arith.constant dense<0.000000e+00> : vector<286x128xf32>
    %128 = tpu.matmul %125, %127, %cst_113 {dimension_numbers = #tpu.dot_dimension_numbers<[1], [0], [0], [1], [0, 0, 1, 1], [], []>} : vector<286x128xbf16>, vector<128x128xbf16>, vector<286x128xf32> -> vector<286x128xf32>
    %129 = arith.addf %124, %128 : vector<286x128xf32>
    %c0_114 = arith.constant 0 : index
    %c0_115 = arith.constant 0 : index
    %130 = vector.load %arg5[%c0_114, %c0_115] : memref<1x128xf32, #tpu.memory_space<vmem>>, vector<1x128xf32>
    %131 = vector.broadcast %130 : vector<1x128xf32> to vector<286x128xf32>
    %132 = arith.addf %129, %131 : vector<286x128xf32>
    %c0_116 = arith.constant 0 : index
    %c19_117 = arith.constant 19 : index
    %c0_118 = arith.constant 0 : index
    %133 = vector.load %arg1[%c0_116, %c19_117, %c0_118] : memref<1x324x128xbf16, #tpu.memory_space<vmem>>, vector<1x286x128xbf16>
    %134 = vector.shape_cast %133 : vector<1x286x128xbf16> to vector<286x128xbf16>
    %135 = arith.extf %134 : vector<286x128xbf16> to vector<286x128xf32>
    %136 = arith.addf %132, %135 : vector<286x128xf32>
    %cst_119 = arith.constant 0.000000e+00 : f32
    %137 = vector.broadcast %cst_119 : f32 to vector<286x128xf32>
    %138 = arith.maximumf %136, %137 : vector<286x128xf32>
    %cst_120 = arith.constant 0.000000e+00 : f32
    %139 = vector.shape_cast %18 : vector<286x1xi1> to vector<286x1xi1>
    %140 = vector.broadcast %139 : vector<286x1xi1> to vector<286x128xi1>
    %141 = vector.broadcast %cst_120 : f32 to vector<286x128xf32>
    %142 = arith.select %140, %138, %141 : vector<286x128xi1>, vector<286x128xf32>
    %cst_121 = arith.constant 0.000000e+00 : f32
    %143 = vector.broadcast %cst_121 : f32 to vector<19x128xf32>
    %c0_122 = arith.constant 0 : index
    %c0_123 = arith.constant 0 : index
    %c0_124 = arith.constant 0 : index
    %144 = vector.load %arg6[%c0_122, %c0_123, %c0_124] : memref<1x324x128xf32, #tpu.memory_space<vmem>>, vector<1x19x128xf32>
    %145 = vector.shape_cast %144 : vector<1x19x128xf32> to vector<19x128xf32>
    %146 = vector.shape_cast %143 : vector<19x128xf32> to vector<1x19x128xf32>
    tpu.vector_store %arg6[%c0_122, %c0_123, %c0_124], %146 {strides = array<i32>} : memref<1x324x128xf32, #tpu.memory_space<vmem>>, vector<1x19x128xf32>,
    %c0_125 = arith.constant 0 : index
    %c305_126 = arith.constant 305 : index
    %c0_127 = arith.constant 0 : index
    %147 = vector.load %arg6[%c0_125, %c305_126, %c0_127] : memref<1x324x128xf32, #tpu.memory_space<vmem>>, vector<1x19x128xf32>
    %148 = vector.shape_cast %147 : vector<1x19x128xf32> to vector<19x128xf32>
    %149 = vector.shape_cast %143 : vector<19x128xf32> to vector<1x19x128xf32>
    tpu.vector_store %arg6[%c0_125, %c305_126, %c0_127], %149 {strides = array<i32>} : memref<1x324x128xf32, #tpu.memory_space<vmem>>, vector<1x19x128xf32>,
    %c0_128 = arith.constant 0 : index
    %c19_129 = arith.constant 19 : index
    %c0_130 = arith.constant 0 : index
    %150 = vector.load %arg6[%c0_128, %c19_129, %c0_130] : memref<1x324x128xf32, #tpu.memory_space<vmem>>, vector<1x286x128xf32>
    %151 = vector.shape_cast %150 : vector<1x286x128xf32> to vector<286x128xf32>
    %152 = vector.shape_cast %142 : vector<286x128xf32> to vector<1x286x128xf32>
    tpu.vector_store %arg6[%c0_128, %c19_129, %c0_130], %152 {strides = array<i32>} : memref<1x324x128xf32, #tpu.memory_space<vmem>>, vector<1x286x128xf32>,
    return
  }
  func.func @transform_0(%arg0: i32) -> (i32, i32, i32) {
    %c0_i32 = arith.constant 0 : i32
    %c0_i32_0 = arith.constant 0 : i32
    %c0_i32_1 = arith.constant 0 : i32
    return %arg0, %c0_i32, %c0_i32_0 : i32, i32, i32
  }
  func.func @transform_1(%arg0: i32) -> (i32, i32, i32) {
    %c0_i32 = arith.constant 0 : i32
    %c0_i32_0 = arith.constant 0 : i32
    %c0_i32_1 = arith.constant 0 : i32
    %c0_i32_2 = arith.constant 0 : i32
    return %c0_i32, %c0_i32_0, %c0_i32_1 : i32, i32, i32
  }
  func.func @transform_2(%arg0: i32) -> (i32, i32) {
    %c0_i32 = arith.constant 0 : i32
    %c0_i32_0 = arith.constant 0 : i32
    %c0_i32_1 = arith.constant 0 : i32
    return %c0_i32, %c0_i32_0 : i32, i32
  }
  func.func @transform_3(%arg0: i32) -> (i32, i32, i32) {
    %c0_i32 = arith.constant 0 : i32
    %c0_i32_0 = arith.constant 0 : i32
    %c0_i32_1 = arith.constant 0 : i32
    %c0_i32_2 = arith.constant 0 : i32
    return %c0_i32, %c0_i32_0, %c0_i32_1 : i32, i32, i32
  }
  func.func @transform_4(%arg0: i32) -> (i32, i32) {
    %c0_i32 = arith.constant 0 : i32
    %c0_i32_0 = arith.constant 0 : i32
    %c0_i32_1 = arith.constant 0 : i32
    return %c0_i32, %c0_i32_0 : i32, i32
  }
  func.func @transform_5(%arg0: i32) -> (i32, i32, i32) {
    %c0_i32 = arith.constant 0 : i32
    %c0_i32_0 = arith.constant 0 : i32
    %c0_i32_1 = arith.constant 0 : i32
    return %arg0, %c0_i32, %c0_i32_0 : i32, i32, i32
  }
}

</mosaic_0001>

<llo_original>
// kernel: basic_block_forward.1
$region0: #{basic_block_forward.1}
  #allocation0 [shape = 'u32[]', space=smem, size = 0x4, offset = 0x4, fixed_abs, tag = 'smem constant byte address 0x4 - core index']
  #allocation1 [shape = 'u32[144,128]{1,0:T(1,128)}', space=vmem, size = 0x12000, scoped, tag = 'internal scratch']
  #allocation2 [shape = 'bf16[324,128]{1,0:T(8,128)(2,1)}', space=vmem, size = 0x14800, scoped, tag = 'scratch operand']
  %s0 = inlined_call_operand.hbm [shape: bf16[2,324,128], index: 0, kind: input, shape index: {}]
  %s1 = inlined_call_operand.hbm [shape: bf16[9,128,128], index: 1, kind: input, shape index: {}]
  %s2 = inlined_call_operand.hbm [shape: f32[1,128], index: 2, kind: input, shape index: {}]
  %s3 = inlined_call_operand.hbm [shape: bf16[9,128,128], index: 3, kind: input, shape index: {}]
  %s4 = inlined_call_operand.hbm [shape: f32[1,128], index: 4, kind: input, shape index: {}]
  %s5 = inlined_call_operand.hbm [shape: f32[2,324,128], index: 5, kind: output, shape index: {}]
  %s6 = sld [smem:[#allocation0]]
  $region73: #{basic_block_forward.1} parent=0
    _
  %s8 = ssub.s32 1, %s6
  %s9 = scalar_select 0, %s8, %s6
  $region1: #{basic_block_forward.1} parent=0
    #allocation3 [shape = 'u8[167936]{0}', space=vmem, size = 0x29000, scoped, tag = 'input window, operand 0']
    #allocation4 [shape = 's32[2]{0}', space=sflag, size = 0x8, scoped, tag = 'scoped memory for basic_block_forward.1']
    #allocation5 [shape = 's32[2]{0}', space=sflag, size = 0x8, scoped, tag = 'scoped memory for basic_block_forward.1']
    #allocation6 [shape = 'u8[294912]{0}', space=vmem, size = 0x48000, scoped, tag = 'input window, operand 1, single buffered']
    #allocation7 [shape = 's32[1]{0}', space=sflag, size = 0x4, scoped, tag = 'scoped memory for basic_block_forward.1']
    #allocation8 [shape = 'u8[512]{0}', space=vmem, size = 0x400, scoped, tag = 'input window, operand 2, single buffered']
    #allocation9 [shape = 'u8[294912]{0}', space=vmem, size = 0x48000, scoped, tag = 'input window, operand 3, single buffered']
    #allocation10 [shape = 's32[1]{0}', space=sflag, size = 0x4, scoped, tag = 'scoped memory for basic_block_forward.1']
    #allocation11 [shape = 'u8[512]{0}', space=vmem, size = 0x400, scoped, tag = 'input window, operand 4, single buffered']
    #allocation12 [shape = 'u8[335872]{0}', space=vmem, size = 0x52000, scoped, tag = 'output window, operand 0']
    %10 = vsyncpa [#allocation4], 0
    %s11 = scalar_lea.sflag [#allocation4], 1
    %12 = vsyncpa %s11, 0
    %13 = vsyncpa [#allocation7], 0
    %14 = vsyncpa [#allocation10], 0
    %15 = vsyncpa [#allocation5], 0
    %s16 = scalar_lea.sflag [#allocation5], 1
    %17 = vsyncpa %s16, 0
    loop: start=0, step=1, limit=4
    $region2: #{basic_block_forward.1} parent=1 // loop_pre_header
      _
    $region3: #{basic_block_forward.1} parent=1 // loop_header
      %s19 = sphi 0, %s23
      %p20 = scmp.ge.s32.totalorder %s19, 4
      %s29 = sphi 0, %s31
      %s32 = sphi 0, %s29
      %s33 = sphi 0, %s32
      %s49 = sphi 0, %s33
      %s53 = sphi 0, %s53
      %s55 = sphi 0, %s53
      %s56 = sphi 0, %s55
      %s70 = sphi 0, %s56
      %s74 = sphi 0, %s74
      %s76 = sphi 0, %s74
      %s77 = sphi 0, %s76
      %s91 = sphi 0, %s77
      %s95 = sphi 0, %s95
      %s97 = sphi 0, %s95
      %s98 = sphi 0, %s97
      %s112 = sphi 0, %s98
      %s116 = sphi 0, %s116
      %s118 = sphi 0, %s116
      %s119 = sphi 0, %s118
      %s133 = sphi 0, %s119
      %s139 = sphi 0, %s141
      %s142 = sphi 0, %s139
      %s143 = sphi 0, %s142
      %s159 = sphi 0, %s143
    $region4: #{basic_block_forward.1} parent=1 // loop_header_branch
      %22 = sbr.rel (%p20) target = $region8
    $region5: #{basic_block_forward.1} parent=1 // loop_body
      %s24 = ssub.s32 %s19, 1
      %s25 = ssub.s32 %s19, 2
      %s26 = sadd.s32 %s19, 1
      %s27 = ssub.s32 %s19, %s26
      %p28 = scmp.eq.s32.totalorder %s27, 0
      %s30 = sadd.s32 %s29, 1
      %s31 = scalar_select %p28, %s29, %s30
      %p34 = pneg %p28
      %p35 = scmp.eq.s32.totalorder %s19, 1
      %p36 = por %p34, %p35
      %p37 = scmp.ne.s32.totalorder %s29, %s32
      %p38 = scmp.eq.s32.totalorder %s19, 0
      %p39 = por %p37, %p38
      %p40 = scmp.ne.s32.totalorder %s29, %s32
      %p41 = scmp.eq.s32.totalorder %s24, 1
      %p42 = por %p40, %p41
      %p43 = scmp.ne.s32.totalorder %s32, %s33
      %p44 = scmp.eq.s32.totalorder %s24, 0
      %p45 = por %p43, %p44
      %p46 = scmp.ne.s32.totalorder %s32, %s33
      %p47 = scmp.eq.s32.totalorder %s25, 1
      %p48 = por %p46, %p47
      %p50 = scmp.ne.s32.totalorder %s33, %s49
      %p51 = scmp.eq.s32.totalorder %s25, 0
      %p52 = por %p50, %p51
      %s54 = sadd.s32 %s53, 1
      %p57 = scmp.eq.s32.totalorder %s19, 1
      %p58 = scmp.ne.s32.totalorder %s53, %s55
      %p59 = scmp.eq.s32.totalorder %s19, 0
      %p60 = por %p58, %p59
      %p61 = scmp.ne.s32.totalorder %s53, %s55
      %p62 = scmp.eq.s32.totalorder %s24, 1
      %p63 = por %p61, %p62
      %p64 = scmp.ne.s32.totalorder %s55, %s56
      %p65 = scmp.eq.s32.totalorder %s24, 0
      %p66 = por %p64, %p65
      %p67 = scmp.ne.s32.totalorder %s55, %s56
      %p68 = scmp.eq.s32.totalorder %s25, 1
      %p69 = por %p67, %p68
      %p71 = scmp.ne.s32.totalorder %s56, %s70
      %p72 = scmp.eq.s32.totalorder %s25, 0
      %p73 = por %p71, %p72
      %s75 = sadd.s32 %s74, 1
      %p78 = scmp.eq.s32.totalorder %s19, 1
      %p79 = scmp.ne.s32.totalorder %s74, %s76
      %p80 = scmp.eq.s32.totalorder %s19, 0
      %p81 = por %p79, %p80
      %p82 = scmp.ne.s32.totalorder %s74, %s76
      %p83 = scmp.eq.s32.totalorder %s24, 1
      %p84 = por %p82, %p83
      %p85 = scmp.ne.s32.totalorder %s76, %s77
      %p86 = scmp.eq.s32.totalorder %s24, 0
      %p87 = por %p85, %p86
      %p88 = scmp.ne.s32.totalorder %s76, %s77
      %p89 = scmp.eq.s32.totalorder %s25, 1
      %p90 = por %p88, %p89
      %p92 = scmp.ne.s32.totalorder %s77, %s91
      %p93 = scmp.eq.s32.totalorder %s25, 0
      %p94 = por %p92, %p93
      %s96 = sadd.s32 %s95, 1
      %p99 = scmp.eq.s32.totalorder %s19, 1
      %p100 = scmp.ne.s32.totalorder %s95, %s97
      %p101 = scmp.eq.s32.totalorder %s19, 0
      %p102 = por %p100, %p101
      %p103 = scmp.ne.s32.totalorder %s95, %s97
      %p104 = scmp.eq.s32.totalorder %s24, 1
      %p105 = por %p103, %p104
      %p106 = scmp.ne.s32.totalorder %s97, %s98
      %p107 = scmp.eq.s32.totalorder %s24, 0
      %p108 = por %p106, %p107
      %p109 = scmp.ne.s32.totalorder %s97, %s98
      %p110 = scmp.eq.s32.totalorder %s25, 1
      %p111 = por %p109, %p110
      %p113 = scmp.ne.s32.totalorder %s98, %s112
      %p114 = scmp.eq.s32.totalorder %s25, 0
      %p115 = por %p113, %p114
      %s117 = sadd.s32 %s116, 1
      %p120 = scmp.eq.s32.totalorder %s19, 1
      %p121 = scmp.ne.s32.totalorder %s116, %s118
      %p122 = scmp.eq.s32.totalorder %s19, 0
      %p123 = por %p121, %p122
      %p124 = scmp.ne.s32.totalorder %s116, %s118
      %p125 = scmp.eq.s32.totalorder %s24, 1
      %p126 = por %p124, %p125
      %p127 = scmp.ne.s32.totalorder %s118, %s119
      %p128 = scmp.eq.s32.totalorder %s24, 0
      %p129 = por %p127, %p128
      %p130 = scmp.ne.s32.totalorder %s118, %s119
      %p131 = scmp.eq.s32.totalorder %s25, 1
      %p132 = por %p130, %p131
      %p134 = scmp.ne.s32.totalorder %s119, %s133
      %p135 = scmp.eq.s32.totalorder %s25, 0
      %p136 = por %p134, %p135
      %s137 = ssub.s32 %s19, %s26
      %p138 = scmp.eq.s32.totalorder %s137, 0
      %s140 = sadd.s32 %s139, 1
      %s141 = scalar_select %p138, %s139, %s140
      %p144 = pneg %p138
      %p145 = scmp.eq.s32.totalorder %s19, 1
      %p146 = por %p144, %p145
      %p147 = scmp.ne.s32.totalorder %s139, %s142
      %p148 = scmp.eq.s32.totalorder %s19, 0
      %p149 = por %p147, %p148
      %p150 = scmp.ne.s32.totalorder %s139, %s142
      %p151 = scmp.eq.s32.totalorder %s24, 1
      %p152 = por %p150, %p151
      %p153 = scmp.ne.s32.totalorder %s142, %s143
      %p154 = scmp.eq.s32.totalorder %s24, 0
      %p155 = por %p153, %p154
      %p156 = scmp.ne.s32.totalorder %s142, %s143
      %p157 = scmp.eq.s32.totalorder %s25, 1
      %p158 = por %p156, %p157
      %p160 = scmp.ne.s32.totalorder %s143, %s159
      %p161 = scmp.eq.s32.totalorder %s25, 0
      %p162 = por %p160, %p161
      %p163 = scmp.le.s32.totalorder 1, %s19
      %p164 = scmp.lt.s32.totalorder %s19, 3
      %p165 = pnand %p163, %p164
      %p166 = pneg %p165
      // Predicated region
      $region9: #{basic_block_forward.1} parent=5 // pred_check
        _
      $region10: #{basic_block_forward.1} parent=5 // pred_check_branch
        %168 = sbr.rel (%p165) target = $region12
      $region11: #{basic_block_forward.1} parent=5 // pred_region
        %s169 = ssub.s32 %s19, 1
        // Predicated region
        $region13: #{basic_block_forward.1} parent=11 // pred_check
          %p170 = pneg %p66
        $region14: #{basic_block_forward.1} parent=11 // pred_check_branch
          %172 = sbr.rel (%p170) target = $region16
        $region15: #{basic_block_forward.1} parent=11 // pred_region
          %s174 = ssub.s32 9216, 9216
          %175 = vsyncadd [#allocation7], %s174
          %s176 = sshll.u32 [#allocation6], 4
          %s177 = int_to_ptr.vmem [resolvable:$true] %s176
          %182 = dma.hbm_to_vmem [thread:$0]  %s1, 9216, %s177, [#allocation7], 64, 64, 4
        $region16: #{basic_block_forward.1} parent=11 // pred_fallthru
          _
        // Predicated region
        $region17: #{basic_block_forward.1} parent=11 // pred_check
          %p183 = pneg %p87
        $region18: #{basic_block_forward.1} parent=11 // pred_check_branch
          %185 = sbr.rel (%p183) target = $region20
        $region19: #{basic_block_forward.1} parent=11 // pred_region
          %s187 = ssub.s32 16, 16
          %188 = vsyncadd [#allocation7], %s187
          %s190 = sshll.u32 [#allocation8], 4
          %s191 = int_to_ptr.vmem [resolvable:$true] %s190
          %193 = dma.hbm_to_vmem [thread:$0]  %s2, 16, %s191, [#allocation7]
        $region20: #{basic_block_forward.1} parent=11 // pred_fallthru
          _
        // Predicated region
        $region21: #{basic_block_forward.1} parent=11 // pred_check
          %p194 = pneg %p108
        $region22: #{basic_block_forward.1} parent=11 // pred_check_branch
          %196 = sbr.rel (%p194) target = $region24
        $region23: #{basic_block_forward.1} parent=11 // pred_region
          %s198 = ssub.s32 9216, 9216
          %199 = vsyncadd [#allocation10], %s198
          %s200 = sshll.u32 [#allocation9], 4
          %s201 = int_to_ptr.vmem [resolvable:$true] %s200
          %206 = dma.hbm_to_vmem [thread:$0]  %s3, 9216, %s201, [#allocation10], 64, 64, 4
        $region24: #{basic_block_forward.1} parent=11 // pred_fallthru
          _
        // Predicated region
        $region25: #{basic_block_forward.1} parent=11 // pred_check
          %p207 = pneg %p129
        $region26: #{basic_block_forward.1} parent=11 // pred_check_branch
          %209 = sbr.rel (%p207) target = $region28
        $region27: #{basic_block_forward.1} parent=11 // pred_region
          %s211 = ssub.s32 16, 16
          %212 = vsyncadd [#allocation10], %s211
          %s214 = sshll.u32 [#allocation11], 4
          %s215 = int_to_ptr.vmem [resolvable:$true] %s214
          %217 = dma.hbm_to_vmem [thread:$0]  %s4, 16, %s215, [#allocation10]
        $region28: #{basic_block_forward.1} parent=11 // pred_fallthru
          _
      $region12: #{basic_block_forward.1} parent=5 // pred_fallthru
        _
      %p218 = scmp.lt.s32.totalorder %s19, 2
      // Predicated region
      $region29: #{basic_block_forward.1} parent=5 // pred_check
        %p219 = pneg %p218
      $region30: #{basic_block_forward.1} parent=5 // pred_check_branch
        %221 = sbr.rel (%p219) target = $region32
      $region31: #{basic_block_forward.1} parent=5 // pred_region
        // Predicated region
        $region33: #{basic_block_forward.1} parent=31 // pred_check
          %p222 = pneg %p39
        $region34: #{basic_block_forward.1} parent=31 // pred_check_branch
          %224 = sbr.rel (%p222) target = $region36
        $region35: #{basic_block_forward.1} parent=31 // pred_region
          %s225 = sand.u32 %s29, 1
          %s226 = scalar_lea.sflag [#allocation4], %s225
          %s227 = sand.u32 %s29, 1
          %s228 = smul.addr %s227, 164
          %s229 = scalar_lea.vmem [#allocation3], %s228
          %s231 = ssub.s32 2624, 2624
          %232 = vsyncadd %s226, %s231
          %s233 = smul.addr %s19, 41
          %s234 = smul.addr %s233, 64
          %s235 = scalar_lea.hbm %s0, %s234
          %s236 = sshll.u32 %s229, 4
          %s237 = int_to_ptr.vmem [resolvable:$true] %s236
          %242 = dma.hbm_to_vmem [thread:$0]  %s235, 2624, %s237, %s226, 64, 64, 4
        $region36: #{basic_block_forward.1} parent=31 // pred_fallthru
          _
      $region32: #{basic_block_forward.1} parent=5 // pred_fallthru
        _
      %p243 = scmp.le.s32.totalorder 1, %s19
      %p244 = scmp.lt.s32.totalorder %s19, 3
      %p245 = pnand %p243, %p244
      %p246 = pneg %p245
      // Predicated region
      $region37: #{basic_block_forward.1} parent=5 // pred_check
        _
      $region38: #{basic_block_forward.1} parent=5 // pred_check_branch
        %248 = sbr.rel (%p245) target = $region40
      $region39: #{basic_block_forward.1} parent=5 // pred_region
        %s249 = ssub.s32 %s19, 1
        %s250 = sand.u32 %s32, 1
        %s251 = scalar_lea.sflag [#allocation4], %s250
        %s252 = sand.u32 %s32, 1
        %s253 = smul.addr %s252, 164
        %s254 = scalar_lea.vmem [#allocation3], %s253
        // Predicated region
        $region41: #{basic_block_forward.1} parent=39 // pred_check
          %p255 = pneg %p45
        $region42: #{basic_block_forward.1} parent=39 // pred_check_branch
          %257 = sbr.rel (%p255) target = $region44
        $region43: #{basic_block_forward.1} parent=39 // pred_region
          %258 = dma.done %s251, 2624
        $region44: #{basic_block_forward.1} parent=39 // pred_fallthru
          _
        // Predicated region
        $region45: #{basic_block_forward.1} parent=39 // pred_check
          %p259 = pneg %p66
        $region46: #{basic_block_forward.1} parent=39 // pred_check_branch
          %261 = sbr.rel (%p259) target = $region48
        $region47: #{basic_block_forward.1} parent=39 // pred_region
          %262 = dma.done [#allocation7], 9216
        $region48: #{basic_block_forward.1} parent=39 // pred_fallthru
          _
        // Predicated region
        $region49: #{basic_block_forward.1} parent=39 // pred_check
          %p263 = pneg %p87
        $region50: #{basic_block_forward.1} parent=39 // pred_check_branch
          %265 = sbr.rel (%p263) target = $region52
        $region51: #{basic_block_forward.1} parent=39 // pred_region
          %266 = dma.done [#allocation7], 16
        $region52: #{basic_block_forward.1} parent=39 // pred_fallthru
          _
        // Predicated region
        $region53: #{basic_block_forward.1} parent=39 // pred_check
          %p267 = pneg %p108
        $region54: #{basic_block_forward.1} parent=39 // pred_check_branch
          %269 = sbr.rel (%p267) target = $region56
        $region55: #{basic_block_forward.1} parent=39 // pred_region
          %270 = dma.done [#allocation10], 9216
        $region56: #{basic_block_forward.1} parent=39 // pred_fallthru
          _
        // Predicated region
        $region57: #{basic_block_forward.1} parent=39 // pred_check
          %p271 = pneg %p129
        $region58: #{basic_block_forward.1} parent=39 // pred_check_branch
          %273 = sbr.rel (%p271) target = $region60
        $region59: #{basic_block_forward.1} parent=39 // pred_region
          %274 = dma.done [#allocation10], 16
        $region60: #{basic_block_forward.1} parent=39 // pred_fallthru
          _
        %s275 = sand.u32 %s32, 1
        %s276 = scalar_lea.sflag [#allocation4], %s275
        %s277 = sand.u32 %s32, 1
        %s278 = smul.addr %s277, 164
        %s279 = scalar_lea.vmem [#allocation3], %s278
        %p280 = pneg %p45
        %p281 = pneg %p42
        %p282 = pneg %p66
        %p283 = pneg %p63
        %p284 = pneg %p87
        %p285 = pneg %p84
        %p286 = pneg %p108
        %p287 = pneg %p105
        %p288 = pneg %p129
        %p289 = pneg %p126
        %p290 = pneg %p155
        %p291 = pneg %p152
        %s292 = sand.u32 %s142, 1
        %s293 = scalar_lea.sflag [#allocation5], %s292
        %s294 = sand.u32 %s142, 1
        %s295 = smul.addr %s294, 328
        %s296 = scalar_lea.vmem [#allocation12], %s295
        %v298 = vlaneseq
        %v299 = vshrl.u32 %v298, 7
        %v300 = vadd.s32 %v299, 8
        %v301 = vadd.s32 %v299, 16
        %v302 = vadd.s32 %v299, 24
        %v303 = vadd.s32 %v299, 32
        %v304 = vadd.s32 %v299, 40
        %v305 = vadd.s32 %v299, 48
        %v306 = vadd.s32 %v299, 56
        %v307 = vadd.s32 %v299, 64
        %v308 = vadd.s32 %v299, 72
        %v309 = vadd.s32 %v299, 80
        %v310 = vadd.s32 %v299, 88
        %v311 = vadd.s32 %v299, 96
        %v312 = vadd.s32 %v299, 104
        %v313 = vadd.s32 %v299, 112
        %v314 = vadd.s32 %v299, 120
        %v315 = vadd.s32 %v299, 128
        %v316 = vadd.s32 %v299, 136
        %v317 = vadd.s32 %v299, 144
        %v318 = vadd.s32 %v299, 152
        %v319 = vadd.s32 %v299, 160
        %v320 = vadd.s32 %v299, 168
        %v321 = vadd.s32 %v299, 176
        %v322 = vadd.s32 %v299, 184
        %v323 = vadd.s32 %v299, 192
        %v324 = vadd.s32 %v299, 200
        %v325 = vadd.s32 %v299, 208
        %v326 = vadd.s32 %v299, 216
        %v327 = vadd.s32 %v299, 224
        %v328 = vadd.s32 %v299, 232
        %v329 = vadd.s32 %v299, 240
        %v330 = vadd.s32 %v299, 248
        %v331 = vadd.s32 %v299, 256
        %v332 = vadd.s32 %v299, 264
        %v333 = vadd.s32 %v299, 272
        %v334 = vadd.s32 %v299, 280
        %vm335 = vcmp.lt.s32.totalorder %v299, 0
        %v336 = vsub.s32 0, %v299
        %v337 = vsel %vm335, %v336, %v299
        %v338 = vmul.u32.u64.compose %v337, 3817748708
        %v339 = vextract.low.u32 %v338
        %v340 = vextract.high.u32 %v338
        %v341 = vshrl.u32 %v340, 4
        %v342 = vmul.u32 %v341, 18
        %v343 = vsub.s32 %v337, %v342
        %v344 = vsub.s32 0, %v343
        %v345 = vsel %vm335, %v344, %v343
        %vm346 = vcmp.lt.s32.totalorder %v300, 0
        %v347 = vsub.s32 0, %v300
        %v348 = vsel %vm346, %v347, %v300
        %v349 = vmul.u32.u64.compose %v348, 3817748708
        %v350 = vextract.low.u32 %v349
        %v351 = vextract.high.u32 %v349
        %v352 = vshrl.u32 %v351, 4
        %v353 = vmul.u32 %v352, 18
        %v354 = vsub.s32 %v348, %v353
        %v355 = vsub.s32 0, %v354
        %v356 = vsel %vm346, %v355, %v354
        %vm357 = vcmp.lt.s32.totalorder %v301, 0
        %v358 = vsub.s32 0, %v301
        %v359 = vsel %vm357, %v358, %v301
        %v360 = vmul.u32.u64.compose %v359, 3817748708
        %v361 = vextract.low.u32 %v360
        %v362 = vextract.high.u32 %v360
        %v363 = vshrl.u32 %v362, 4
        %v364 = vmul.u32 %v363, 18
        %v365 = vsub.s32 %v359, %v364
        %v366 = vsub.s32 0, %v365
        %v367 = vsel %vm357, %v366, %v365
        %vm368 = vcmp.lt.s32.totalorder %v302, 0
        %v369 = vsub.s32 0, %v302
        %v370 = vsel %vm368, %v369, %v302
        %v371 = vmul.u32.u64.compose %v370, 3817748708
        %v372 = vextract.low.u32 %v371
        %v373 = vextract.high.u32 %v371
        %v374 = vshrl.u32 %v373, 4
        %v375 = vmul.u32 %v374, 18
        %v376 = vsub.s32 %v370, %v375
        %v377 = vsub.s32 0, %v376
        %v378 = vsel %vm368, %v377, %v376
        %vm379 = vcmp.lt.s32.totalorder %v303, 0
        %v380 = vsub.s32 0, %v303
        %v381 = vsel %vm379, %v380, %v303
        %v382 = vmul.u32.u64.compose %v381, 3817748708
        %v383 = vextract.low.u32 %v382
        %v384 = vextract.high.u32 %v382
        %v385 = vshrl.u32 %v384, 4
        %v386 = vmul.u32 %v385, 18
        %v387 = vsub.s32 %v381, %v386
        %v388 = vsub.s32 0, %v387
        %v389 = vsel %vm379, %v388, %v387
        %vm390 = vcmp.lt.s32.totalorder %v304, 0
        %v391 = vsub.s32 0, %v304
        %v392 = vsel %vm390, %v391, %v304
        %v393 = vmul.u32.u64.compose %v392, 3817748708
        %v394 = vextract.low.u32 %v393
        %v395 = vextract.high.u32 %v393
        %v396 = vshrl.u32 %v395, 4
        %v397 = vmul.u32 %v396, 18
        %v398 = vsub.s32 %v392, %v397
        %v399 = vsub.s32 0, %v398
        %v400 = vsel %vm390, %v399, %v398
        %vm401 = vcmp.lt.s32.totalorder %v305, 0
        %v402 = vsub.s32 0, %v305
        %v403 = vsel %vm401, %v402, %v305
        %v404 = vmul.u32.u64.compose %v403, 3817748708
        %v405 = vextract.low.u32 %v404
        %v406 = vextract.high.u32 %v404
        %v407 = vshrl.u32 %v406, 4
        %v408 = vmul.u32 %v407, 18
        %v409 = vsub.s32 %v403, %v408
        %v410 = vsub.s32 0, %v409
        %v411 = vsel %vm401, %v410, %v409
        %vm412 = vcmp.lt.s32.totalorder %v306, 0
        %v413 = vsub.s32 0, %v306
        %v414 = vsel %vm412, %v413, %v306
        %v415 = vmul.u32.u64.compose %v414, 3817748708
        %v416 = vextract.low.u32 %v415
        %v417 = vextract.high.u32 %v415
        %v418 = vshrl.u32 %v417, 4
        %v419 = vmul.u32 %v418, 18
        %v420 = vsub.s32 %v414, %v419
        %v421 = vsub.s32 0, %v420
        %v422 = vsel %vm412, %v421, %v420
        %vm423 = vcmp.lt.s32.totalorder %v307, 0
        %v424 = vsub.s32 0, %v307
        %v425 = vsel %vm423, %v424, %v307
        %v426 = vmul.u32.u64.compose %v425, 3817748708
        %v427 = vextract.low.u32 %v426
        %v428 = vextract.high.u32 %v426
        %v429 = vshrl.u32 %v428, 4
        %v430 = vmul.u32 %v429, 18
        %v431 = vsub.s32 %v425, %v430
        %v432 = vsub.s32 0, %v431
        %v433 = vsel %vm423, %v432, %v431
        %vm434 = vcmp.lt.s32.totalorder %v308, 0
        %v435 = vsub.s32 0, %v308
        %v436 = vsel %vm434, %v435, %v308
        %v437 = vmul.u32.u64.compose %v436, 3817748708
        %v438 = vextract.low.u32 %v437
        %v439 = vextract.high.u32 %v437
        %v440 = vshrl.u32 %v439, 4
        %v441 = vmul.u32 %v440, 18
        %v442 = vsub.s32 %v436, %v441
        %v443 = vsub.s32 0, %v442
        %v444 = vsel %vm434, %v443, %v442
        %vm445 = vcmp.lt.s32.totalorder %v309, 0
        %v446 = vsub.s32 0, %v309
        %v447 = vsel %vm445, %v446, %v309
        %v448 = vmul.u32.u64.compose %v447, 3817748708
        %v449 = vextract.low.u32 %v448
        %v450 = vextract.high.u32 %v448
        %v451 = vshrl.u32 %v450, 4
        %v452 = vmul.u32 %v451, 18
        %v453 = vsub.s32 %v447, %v452
        %v454 = vsub.s32 0, %v453
        %v455 = vsel %vm445, %v454, %v453
        %vm456 = vcmp.lt.s32.totalorder %v310, 0
        %v457 = vsub.s32 0, %v310
        %v458 = vsel %vm456, %v457, %v310
        %v459 = vmul.u32.u64.compose %v458, 3817748708
        %v460 = vextract.low.u32 %v459
        %v461 = vextract.high.u32 %v459
        %v462 = vshrl.u32 %v461, 4
        %v463 = vmul.u32 %v462, 18
        %v464 = vsub.s32 %v458, %v463
        %v465 = vsub.s32 0, %v464
        %v466 = vsel %vm456, %v465, %v464
        %vm467 = vcmp.lt.s32.totalorder %v311, 0
        %v468 = vsub.s32 0, %v311
        %v469 = vsel %vm467, %v468, %v311
        %v470 = vmul.u32.u64.compose %v469, 3817748708
        %v471 = vextract.low.u32 %v470
        %v472 = vextract.high.u32 %v470
        %v473 = vshrl.u32 %v472, 4
        %v474 = vmul.u32 %v473, 18
        %v475 = vsub.s32 %v469, %v474
        %v476 = vsub.s32 0, %v475
        %v477 = vsel %vm467, %v476, %v475
        %vm478 = vcmp.lt.s32.totalorder %v312, 0
        %v479 = vsub.s32 0, %v312
        %v480 = vsel %vm478, %v479, %v312
        %v481 = vmul.u32.u64.compose %v480, 3817748708
        %v482 = vextract.low.u32 %v481
        %v483 = vextract.high.u32 %v481
        %v484 = vshrl.u32 %v483, 4
        %v485 = vmul.u32 %v484, 18
        %v486 = vsub.s32 %v480, %v485
        %v487 = vsub.s32 0, %v486
        %v488 = vsel %vm478, %v487, %v486
        %vm489 = vcmp.lt.s32.totalorder %v313, 0
        %v490 = vsub.s32 0, %v313
        %v491 = vsel %vm489, %v490, %v313
        %v492 = vmul.u32.u64.compose %v491, 3817748708
        %v493 = vextract.low.u32 %v492
        %v494 = vextract.high.u32 %v492
        %v495 = vshrl.u32 %v494, 4
        %v496 = vmul.u32 %v495, 18
        %v497 = vsub.s32 %v491, %v496
        %v498 = vsub.s32 0, %v497
        %v499 = vsel %vm489, %v498, %v497
        %vm500 = vcmp.lt.s32.totalorder %v314, 0
        %v501 = vsub.s32 0, %v314
        %v502 = vsel %vm500, %v501, %v314
        %v503 = vmul.u32.u64.compose %v502, 3817748708
        %v504 = vextract.low.u32 %v503
        %v505 = vextract.high.u32 %v503
        %v506 = vshrl.u32 %v505, 4
        %v507 = vmul.u32 %v506, 18
        %v508 = vsub.s32 %v502, %v507
        %v509 = vsub.s32 0, %v508
        %v510 = vsel %vm500, %v509, %v508
        %vm511 = vcmp.lt.s32.totalorder %v315, 0
        %v512 = vsub.s32 0, %v315
        %v513 = vsel %vm511, %v512, %v315
        %v514 = vmul.u32.u64.compose %v513, 3817748708
        %v515 = vextract.low.u32 %v514
        %v516 = vextract.high.u32 %v514
        %v517 = vshrl.u32 %v516, 4
        %v518 = vmul.u32 %v517, 18
        %v519 = vsub.s32 %v513, %v518
        %v520 = vsub.s32 0, %v519
        %v521 = vsel %vm511, %v520, %v519
        %vm522 = vcmp.lt.s32.totalorder %v316, 0
        %v523 = vsub.s32 0, %v316
        %v524 = vsel %vm522, %v523, %v316
        %v525 = vmul.u32.u64.compose %v524, 3817748708
        %v526 = vextract.low.u32 %v525
        %v527 = vextract.high.u32 %v525
        %v528 = vshrl.u32 %v527, 4
        %v529 = vmul.u32 %v528, 18
        %v530 = vsub.s32 %v524, %v529
        %v531 = vsub.s32 0, %v530
        %v532 = vsel %vm522, %v531, %v530
        %vm533 = vcmp.lt.s32.totalorder %v317, 0
        %v534 = vsub.s32 0, %v317
        %v535 = vsel %vm533, %v534, %v317
        %v536 = vmul.u32.u64.compose %v535, 3817748708
        %v537 = vextract.low.u32 %v536
        %v538 = vextract.high.u32 %v536
        %v539 = vshrl.u32 %v538, 4
        %v540 = vmul.u32 %v539, 18
        %v541 = vsub.s32 %v535, %v540
        %v542 = vsub.s32 0, %v541
        %v543 = vsel %vm533, %v542, %v541
        %vm544 = vcmp.lt.s32.totalorder %v318, 0
        %v545 = vsub.s32 0, %v318
        %v546 = vsel %vm544, %v545, %v318
        %v547 = vmul.u32.u64.compose %v546, 3817748708
        %v548 = vextract.low.u32 %v547
        %v549 = vextract.high.u32 %v547
        %v550 = vshrl.u32 %v549, 4
        %v551 = vmul.u32 %v550, 18
        %v552 = vsub.s32 %v546, %v551
        %v553 = vsub.s32 0, %v552
        %v554 = vsel %vm544, %v553, %v552
        %vm555 = vcmp.lt.s32.totalorder %v319, 0
        %v556 = vsub.s32 0, %v319
        %v557 = vsel %vm555, %v556, %v319
        %v558 = vmul.u32.u64.compose %v557, 3817748708
        %v559 = vextract.low.u32 %v558
        %v560 = vextract.high.u32 %v558
        %v561 = vshrl.u32 %v560, 4
        %v562 = vmul.u32 %v561, 18
        %v563 = vsub.s32 %v557, %v562
        %v564 = vsub.s32 0, %v563
        %v565 = vsel %vm555, %v564, %v563
        %vm566 = vcmp.lt.s32.totalorder %v320, 0
        %v567 = vsub.s32 0, %v320
        %v568 = vsel %vm566, %v567, %v320
        %v569 = vmul.u32.u64.compose %v568, 3817748708
        %v570 = vextract.low.u32 %v569
        %v571 = vextract.high.u32 %v569
        %v572 = vshrl.u32 %v571, 4
        %v573 = vmul.u32 %v572, 18
        %v574 = vsub.s32 %v568, %v573
        %v575 = vsub.s32 0, %v574
        %v576 = vsel %vm566, %v575, %v574
        %vm577 = vcmp.lt.s32.totalorder %v321, 0
        %v578 = vsub.s32 0, %v321
        %v579 = vsel %vm577, %v578, %v321
        %v580 = vmul.u32.u64.compose %v579, 3817748708
        %v581 = vextract.low.u32 %v580
        %v582 = vextract.high.u32 %v580
        %v583 = vshrl.u32 %v582, 4
        %v584 = vmul.u32 %v583, 18
        %v585 = vsub.s32 %v579, %v584
        %v586 = vsub.s32 0, %v585
        %v587 = vsel %vm577, %v586, %v585
        %vm588 = vcmp.lt.s32.totalorder %v322, 0
        %v589 = vsub.s32 0, %v322
        %v590 = vsel %vm588, %v589, %v322
        %v591 = vmul.u32.u64.compose %v590, 3817748708
        %v592 = vextract.low.u32 %v591
        %v593 = vextract.high.u32 %v591
        %v594 = vshrl.u32 %v593, 4
        %v595 = vmul.u32 %v594, 18
        %v596 = vsub.s32 %v590, %v595
        %v597 = vsub.s32 0, %v596
        %v598 = vsel %vm588, %v597, %v596
        %vm599 = vcmp.lt.s32.totalorder %v323, 0
        %v600 = vsub.s32 0, %v323
        %v601 = vsel %vm599, %v600, %v323
        %v602 = vmul.u32.u64.compose %v601, 3817748708
        %v603 = vextract.low.u32 %v602
        %v604 = vextract.high.u32 %v602
        %v605 = vshrl.u32 %v604, 4
        %v606 = vmul.u32 %v605, 18
        %v607 = vsub.s32 %v601, %v606
        %v608 = vsub.s32 0, %v607
        %v609 = vsel %vm599, %v608, %v607
        %vm610 = vcmp.lt.s32.totalorder %v324, 0
        %v611 = vsub.s32 0, %v324
        %v612 = vsel %vm610, %v611, %v324
        %v613 = vmul.u32.u64.compose %v612, 3817748708
        %v614 = vextract.low.u32 %v613
        %v615 = vextract.high.u32 %v613
        %v616 = vshrl.u32 %v615, 4
        %v617 = vmul.u32 %v616, 18
        %v618 = vsub.s32 %v612, %v617
        %v619 = vsub.s32 0, %v618
        %v620 = vsel %vm610, %v619, %v618
        %vm621 = vcmp.lt.s32.totalorder %v325, 0
        %v622 = vsub.s32 0, %v325
        %v623 = vsel %vm621, %v622, %v325
        %v624 = vmul.u32.u64.compose %v623, 3817748708
        %v625 = vextract.low.u32 %v624
        %v626 = vextract.high.u32 %v624
        %v627 = vshrl.u32 %v626, 4
        %v628 = vmul.u32 %v627, 18
        %v629 = vsub.s32 %v623, %v628
        %v630 = vsub.s32 0, %v629
        %v631 = vsel %vm621, %v630, %v629
        %vm632 = vcmp.lt.s32.totalorder %v326, 0
        %v633 = vsub.s32 0, %v326
        %v634 = vsel %vm632, %v633, %v326
        %v635 = vmul.u32.u64.compose %v634, 3817748708
        %v636 = vextract.low.u32 %v635
        %v637 = vextract.high.u32 %v635
        %v638 = vshrl.u32 %v637, 4
        %v639 = vmul.u32 %v638, 18
        %v640 = vsub.s32 %v634, %v639
        %v641 = vsub.s32 0, %v640
        %v642 = vsel %vm632, %v641, %v640
        %vm643 = vcmp.lt.s32.totalorder %v327, 0
        %v644 = vsub.s32 0, %v327
        %v645 = vsel %vm643, %v644, %v327
        %v646 = vmul.u32.u64.compose %v645, 3817748708
        %v647 = vextract.low.u32 %v646
        %v648 = vextract.high.u32 %v646
        %v649 = vshrl.u32 %v648, 4
        %v650 = vmul.u32 %v649, 18
        %v651 = vsub.s32 %v645, %v650
        %v652 = vsub.s32 0, %v651
        %v653 = vsel %vm643, %v652, %v651
        %vm654 = vcmp.lt.s32.totalorder %v328, 0
        %v655 = vsub.s32 0, %v328
        %v656 = vsel %vm654, %v655, %v328
        %v657 = vmul.u32.u64.compose %v656, 3817748708
        %v658 = vextract.low.u32 %v657
        %v659 = vextract.high.u32 %v657
        %v660 = vshrl.u32 %v659, 4
        %v661 = vmul.u32 %v660, 18
        %v662 = vsub.s32 %v656, %v661
        %v663 = vsub.s32 0, %v662
        %v664 = vsel %vm654, %v663, %v662
        %vm665 = vcmp.lt.s32.totalorder %v329, 0
        %v666 = vsub.s32 0, %v329
        %v667 = vsel %vm665, %v666, %v329
        %v668 = vmul.u32.u64.compose %v667, 3817748708
        %v669 = vextract.low.u32 %v668
        %v670 = vextract.high.u32 %v668
        %v671 = vshrl.u32 %v670, 4
        %v672 = vmul.u32 %v671, 18
        %v673 = vsub.s32 %v667, %v672
        %v674 = vsub.s32 0, %v673
        %v675 = vsel %vm665, %v674, %v673
        %vm676 = vcmp.lt.s32.totalorder %v330, 0
        %v677 = vsub.s32 0, %v330
        %v678 = vsel %vm676, %v677, %v330
        %v679 = vmul.u32.u64.compose %v678, 3817748708
        %v680 = vextract.low.u32 %v679
        %v681 = vextract.high.u32 %v679
        %v682 = vshrl.u32 %v681, 4
        %v683 = vmul.u32 %v682, 18
        %v684 = vsub.s32 %v678, %v683
        %v685 = vsub.s32 0, %v684
        %v686 = vsel %vm676, %v685, %v684
        %vm687 = vcmp.lt.s32.totalorder %v331, 0
        %v688 = vsub.s32 0, %v331
        %v689 = vsel %vm687, %v688, %v331
        %v690 = vmul.u32.u64.compose %v689, 3817748708
        %v691 = vextract.low.u32 %v690
        %v692 = vextract.high.u32 %v690
        %v693 = vshrl.u32 %v692, 4
        %v694 = vmul.u32 %v693, 18
        %v695 = vsub.s32 %v689, %v694
        %v696 = vsub.s32 0, %v695
        %v697 = vsel %vm687, %v696, %v695
        %vm698 = vcmp.lt.s32.totalorder %v332, 0
        %v699 = vsub.s32 0, %v332
        %v700 = vsel %vm698, %v699, %v332
        %v701 = vmul.u32.u64.compose %v700, 3817748708
        %v702 = vextract.low.u32 %v701
        %v703 = vextract.high.u32 %v701
        %v704 = vshrl.u32 %v703, 4
        %v705 = vmul.u32 %v704, 18
        %v706 = vsub.s32 %v700, %v705
        %v707 = vsub.s32 0, %v706
        %v708 = vsel %vm698, %v707, %v706
        %vm709 = vcmp.lt.s32.totalorder %v333, 0
        %v710 = vsub.s32 0, %v333
        %v711 = vsel %vm709, %v710, %v333
        %v712 = vmul.u32.u64.compose %v711, 3817748708
        %v713 = vextract.low.u32 %v712
        %v714 = vextract.high.u32 %v712
        %v715 = vshrl.u32 %v714, 4
        %v716 = vmul.u32 %v715, 18
        %v717 = vsub.s32 %v711, %v716
        %v718 = vsub.s32 0, %v717
        %v719 = vsel %vm709, %v718, %v717
        %vm720 = vcmp.lt.s32.totalorder %v334, 0
        %v721 = vsub.s32 0, %v334
        %v722 = vsel %vm720, %v721, %v334
        %v723 = vmul.u32.u64.compose %v722, 3817748708
        %v724 = vextract.low.u32 %v723
        %v725 = vextract.high.u32 %v723
        %v726 = vshrl.u32 %v725, 4
        %v727 = vmul.u32 %v726, 18
        %v728 = vsub.s32 %v722, %v727
        %v729 = vsub.s32 0, %v728
        %v730 = vsel %vm720, %v729, %v728
        %vm731 = vcmp.ne.s32.totalorder %v345, 0
        %vm732 = vcmp.ne.s32.totalorder %v356, 0
        %vm733 = vcmp.ne.s32.totalorder %v367, 0
        %vm734 = vcmp.ne.s32.totalorder %v378, 0
        %vm735 = vcmp.ne.s32.totalorder %v389, 0
        %vm736 = vcmp.ne.s32.totalorder %v400, 0
        %vm737 = vcmp.ne.s32.totalorder %v411, 0
        %vm738 = vcmp.ne.s32.totalorder %v422, 0
        %vm739 = vcmp.ne.s32.totalorder %v433, 0
        %vm740 = vcmp.ne.s32.totalorder %v444, 0
        %vm741 = vcmp.ne.s32.totalorder %v455, 0
        %vm742 = vcmp.ne.s32.totalorder %v466, 0
        %vm743 = vcmp.ne.s32.totalorder %v477, 0
        %vm744 = vcmp.ne.s32.totalorder %v488, 0
        %vm745 = vcmp.ne.s32.totalorder %v499, 0
        %vm746 = vcmp.ne.s32.totalorder %v510, 0
        %vm747 = vcmp.ne.s32.totalorder %v521, 0
        %vm748 = vcmp.ne.s32.totalorder %v532, 0
        %vm749 = vcmp.ne.s32.totalorder %v543, 0
        %vm750 = vcmp.ne.s32.totalorder %v554, 0
        %vm751 = vcmp.ne.s32.totalorder %v565, 0
        %vm752 = vcmp.ne.s32.totalorder %v576, 0
        %vm753 = vcmp.ne.s32.totalorder %v587, 0
        %vm754 = vcmp.ne.s32.totalorder %v598, 0
        %vm755 = vcmp.ne.s32.totalorder %v609, 0
        %vm756 = vcmp.ne.s32.totalorder %v620, 0
        %vm757 = vcmp.ne.s32.totalorder %v631, 0
        %vm758 = vcmp.ne.s32.totalorder %v642, 0
        %vm759 = vcmp.ne.s32.totalorder %v653, 0
        %vm760 = vcmp.ne.s32.totalorder %v664, 0
        %vm761 = vcmp.ne.s32.totalorder %v675, 0
        %vm762 = vcmp.ne.s32.totalorder %v686, 0
        %vm763 = vcmp.ne.s32.totalorder %v697, 0
        %vm764 = vcmp.ne.s32.totalorder %v708, 0
        %vm765 = vcmp.ne.s32.totalorder %v719, 0
        %vm766 = vcmp.ne.s32.totalorder %v730, 0
        %vm767 = vcmp.lt.s32.totalorder %v345, 0
        %vm768 = vcmp.lt.s32.totalorder %v356, 0
        %vm769 = vcmp.lt.s32.totalorder %v367, 0
        %vm770 = vcmp.lt.s32.totalorder %v378, 0
        %vm771 = vcmp.lt.s32.totalorder %v389, 0
        %vm772 = vcmp.lt.s32.totalorder %v400, 0
        %vm773 = vcmp.lt.s32.totalorder %v411, 0
        %vm774 = vcmp.lt.s32.totalorder %v422, 0
        %vm775 = vcmp.lt.s32.totalorder %v433, 0
        %vm776 = vcmp.lt.s32.totalorder %v444, 0
        %vm777 = vcmp.lt.s32.totalorder %v455, 0
        %vm778 = vcmp.lt.s32.totalorder %v466, 0
        %vm779 = vcmp.lt.s32.totalorder %v477, 0
        %vm780 = vcmp.lt.s32.totalorder %v488, 0
        %vm781 = vcmp.lt.s32.totalorder %v499, 0
        %vm782 = vcmp.lt.s32.totalorder %v510, 0
        %vm783 = vcmp.lt.s32.totalorder %v521, 0
        %vm784 = vcmp.lt.s32.totalorder %v532, 0
        %vm785 = vcmp.lt.s32.totalorder %v543, 0
        %vm786 = vcmp.lt.s32.totalorder %v554, 0
        %vm787 = vcmp.lt.s32.totalorder %v565, 0
        %vm788 = vcmp.lt.s32.totalorder %v576, 0
        %vm789 = vcmp.lt.s32.totalorder %v587, 0
        %vm790 = vcmp.lt.s32.totalorder %v598, 0
        %vm791 = vcmp.lt.s32.totalorder %v609, 0
        %vm792 = vcmp.lt.s32.totalorder %v620, 0
        %vm793 = vcmp.lt.s32.totalorder %v631, 0
        %vm794 = vcmp.lt.s32.totalorder %v642, 0
        %vm795 = vcmp.lt.s32.totalorder %v653, 0
        %vm796 = vcmp.lt.s32.totalorder %v664, 0
        %vm797 = vcmp.lt.s32.totalorder %v675, 0
        %vm798 = vcmp.lt.s32.totalorder %v686, 0
        %vm799 = vcmp.lt.s32.totalorder %v697, 0
        %vm800 = vcmp.lt.s32.totalorder %v708, 0
        %vm801 = vcmp.lt.s32.totalorder %v719, 0
        %vm802 = vcmp.lt.s32.totalorder %v730, 0
        %vm803 = vmand %vm767, %vm731
        %vm804 = vmand %vm768, %vm732
        %vm805 = vmand %vm769, %vm733
        %vm806 = vmand %vm770, %vm734
        %vm807 = vmand %vm771, %vm735
        %vm808 = vmand %vm772, %vm736
        %vm809 = vmand %vm773, %vm737
        %vm810 = vmand %vm774, %vm738
        %vm811 = vmand %vm775, %vm739
        %vm812 = vmand %vm776, %vm740
        %vm813 = vmand %vm777, %vm741
        %vm814 = vmand %vm778, %vm742
        %vm815 = vmand %vm779, %vm743
        %vm816 = vmand %vm780, %vm744
        %vm817 = vmand %vm781, %vm745
        %vm818 = vmand %vm782, %vm746
        %vm819 = vmand %vm783, %vm747
        %vm820 = vmand %vm784, %vm748
        %vm821 = vmand %vm785, %vm749
        %vm822 = vmand %vm786, %vm750
        %vm823 = vmand %vm787, %vm751
        %vm824 = vmand %vm788, %vm752
        %vm825 = vmand %vm789, %vm753
        %vm826 = vmand %vm790, %vm754
        %vm827 = vmand %vm791, %vm755
        %vm828 = vmand %vm792, %vm756
        %vm829 = vmand %vm793, %vm757
        %vm830 = vmand %vm794, %vm758
        %vm831 = vmand %vm795, %vm759
        %vm832 = vmand %vm796, %vm760
        %vm833 = vmand %vm797, %vm761
        %vm834 = vmand %vm798, %vm762
        %vm835 = vmand %vm799, %vm763
        %vm836 = vmand %vm800, %vm764
        %vm837 = vmand %vm801, %vm765
        %vm838 = vmand %vm802, %vm766
        %v839 = vadd.s32 %v345, 18
        %v840 = vadd.s32 %v356, 18
        %v841 = vadd.s32 %v367, 18
        %v842 = vadd.s32 %v378, 18
        %v843 = vadd.s32 %v389, 18
        %v844 = vadd.s32 %v400, 18
        %v845 = vadd.s32 %v411, 18
        %v846 = vadd.s32 %v422, 18
        %v847 = vadd.s32 %v433, 18
        %v848 = vadd.s32 %v444, 18
        %v849 = vadd.s32 %v455, 18
        %v850 = vadd.s32 %v466, 18
        %v851 = vadd.s32 %v477, 18
        %v852 = vadd.s32 %v488, 18
        %v853 = vadd.s32 %v499, 18
        %v854 = vadd.s32 %v510, 18
        %v855 = vadd.s32 %v521, 18
        %v856 = vadd.s32 %v532, 18
        %v857 = vadd.s32 %v543, 18
        %v858 = vadd.s32 %v554, 18
        %v859 = vadd.s32 %v565, 18
        %v860 = vadd.s32 %v576, 18
        %v861 = vadd.s32 %v587, 18
        %v862 = vadd.s32 %v598, 18
        %v863 = vadd.s32 %v609, 18
        %v864 = vadd.s32 %v620, 18
        %v865 = vadd.s32 %v631, 18
        %v866 = vadd.s32 %v642, 18
        %v867 = vadd.s32 %v653, 18
        %v868 = vadd.s32 %v664, 18
        %v869 = vadd.s32 %v675, 18
        %v870 = vadd.s32 %v686, 18
        %v871 = vadd.s32 %v697, 18
        %v872 = vadd.s32 %v708, 18
        %v873 = vadd.s32 %v719, 18
        %v874 = vadd.s32 %v730, 18
        %v875 = vsel %vm803, %v839, %v345
        %v876 = vsel %vm804, %v840, %v356
        %v877 = vsel %vm805, %v841, %v367
        %v878 = vsel %vm806, %v842, %v378
        %v879 = vsel %vm807, %v843, %v389
        %v880 = vsel %vm808, %v844, %v400
        %v881 = vsel %vm809, %v845, %v411
        %v882 = vsel %vm810, %v846, %v422
        %v883 = vsel %vm811, %v847, %v433
        %v884 = vsel %vm812, %v848, %v444
        %v885 = vsel %vm813, %v849, %v455
        %v886 = vsel %vm814, %v850, %v466
        %v887 = vsel %vm815, %v851, %v477
        %v888 = vsel %vm816, %v852, %v488
        %v889 = vsel %vm817, %v853, %v499
        %v890 = vsel %vm818, %v854, %v510
        %v891 = vsel %vm819, %v855, %v521
        %v892 = vsel %vm820, %v856, %v532
        %v893 = vsel %vm821, %v857, %v543
        %v894 = vsel %vm822, %v858, %v554
        %v895 = vsel %vm823, %v859, %v565
        %v896 = vsel %vm824, %v860, %v576
        %v897 = vsel %vm825, %v861, %v587
        %v898 = vsel %vm826, %v862, %v598
        %v899 = vsel %vm827, %v863, %v609
        %v900 = vsel %vm828, %v864, %v620
        %v901 = vsel %vm829, %v865, %v631
        %v902 = vsel %vm830, %v866, %v642
        %v903 = vsel %vm831, %v867, %v653
        %v904 = vsel %vm832, %v868, %v664
        %v905 = vsel %vm833, %v869, %v675
        %v906 = vsel %vm834, %v870, %v686
        %v907 = vsel %vm835, %v871, %v697
        %v908 = vsel %vm836, %v872, %v708
        %v909 = vsel %vm837, %v873, %v719
        %v910 = vsel %vm838, %v874, %v730
        %vm911 = vcmp.lt.s32.totalorder %v875, 16
        %vm912 = vcmp.lt.s32.totalorder %v876, 16
        %vm913 = vcmp.lt.s32.totalorder %v877, 16
        %vm914 = vcmp.lt.s32.totalorder %v878, 16
        %vm915 = vcmp.lt.s32.totalorder %v879, 16
        %vm916 = vcmp.lt.s32.totalorder %v880, 16
        %vm917 = vcmp.lt.s32.totalorder %v881, 16
        %vm918 = vcmp.lt.s32.totalorder %v882, 16
        %vm919 = vcmp.lt.s32.totalorder %v883, 16
        %vm920 = vcmp.lt.s32.totalorder %v884, 16
        %vm921 = vcmp.lt.s32.totalorder %v885, 16
        %vm922 = vcmp.lt.s32.totalorder %v886, 16
        %vm923 = vcmp.lt.s32.totalorder %v887, 16
        %vm924 = vcmp.lt.s32.totalorder %v888, 16
        %vm925 = vcmp.lt.s32.totalorder %v889, 16
        %vm926 = vcmp.lt.s32.totalorder %v890, 16
        %vm927 = vcmp.lt.s32.totalorder %v891, 16
        %vm928 = vcmp.lt.s32.totalorder %v892, 16
        %vm929 = vcmp.lt.s32.totalorder %v893, 16
        %vm930 = vcmp.lt.s32.totalorder %v894, 16
        %vm931 = vcmp.lt.s32.totalorder %v895, 16
        %vm932 = vcmp.lt.s32.totalorder %v896, 16
        %vm933 = vcmp.lt.s32.totalorder %v897, 16
        %vm934 = vcmp.lt.s32.totalorder %v898, 16
        %vm935 = vcmp.lt.s32.totalorder %v899, 16
        %vm936 = vcmp.lt.s32.totalorder %v900, 16
        %vm937 = vcmp.lt.s32.totalorder %v901, 16
        %vm938 = vcmp.lt.s32.totalorder %v902, 16
        %vm939 = vcmp.lt.s32.totalorder %v903, 16
        %vm940 = vcmp.lt.s32.totalorder %v904, 16
        %vm941 = vcmp.lt.s32.totalorder %v905, 16
        %vm942 = vcmp.lt.s32.totalorder %v906, 16
        %vm943 = vcmp.lt.s32.totalorder %v907, 16
        %vm944 = vcmp.lt.s32.totalorder %v908, 16
        %vm945 = vcmp.lt.s32.totalorder %v909, 16
        %vm946 = vcmp.lt.s32.totalorder %v910, 16
        %v947 = vld [vmem:[%s254] sm:$0xf]
        %v948 = vld [vmem:[%s254 + $0x4] sm:$0xf]
        %v949 = vld [vmem:[%s254 + $0x8] sm:$0xf]
        %v950 = vld [vmem:[%s254 + $0xc] sm:$0xf]
        %v951 = vld [vmem:[%s254 + $0x10] sm:$0xf]
        %v952 = vld [vmem:[%s254 + $0x14] sm:$0xf]
        %v953 = vld [vmem:[%s254 + $0x18] sm:$0xf]
        %v954 = vld [vmem:[%s254 + $0x1c] sm:$0xf]
        %v955 = vld [vmem:[%s254 + $0x20] sm:$0xf]
        %v956 = vld [vmem:[%s254 + $0x24] sm:$0xf]
        %v957 = vld [vmem:[%s254 + $0x28] sm:$0xf]
        %v958 = vld [vmem:[%s254 + $0x2c] sm:$0xf]
        %v959 = vld [vmem:[%s254 + $0x30] sm:$0xf]
        %v960 = vld [vmem:[%s254 + $0x34] sm:$0xf]
        %v961 = vld [vmem:[%s254 + $0x38] sm:$0xf]
        %v962 = vld [vmem:[%s254 + $0x3c] sm:$0xf]
        %v963 = vld [vmem:[%s254 + $0x40] sm:$0xf]
        %v964 = vld [vmem:[%s254 + $0x44] sm:$0xf]
        %v965 = vld [vmem:[%s254 + $0x48] sm:$0xf]
        %v966 = vld [vmem:[%s254 + $0x4c] sm:$0xf]
        %v967 = vld [vmem:[%s254 + $0x50] sm:$0xf]
        %v968 = vld [vmem:[%s254 + $0x54] sm:$0xf]
        %v969 = vld [vmem:[%s254 + $0x58] sm:$0xf]
        %v970 = vld [vmem:[%s254 + $0x5c] sm:$0xf]
        %v971 = vld [vmem:[%s254 + $0x60] sm:$0xf]
        %v972 = vld [vmem:[%s254 + $0x64] sm:$0xf]
        %v973 = vld [vmem:[%s254 + $0x68] sm:$0xf]
        %v974 = vld [vmem:[%s254 + $0x6c] sm:$0xf]
        %v975 = vld [vmem:[%s254 + $0x70] sm:$0xf]
        %v976 = vld [vmem:[%s254 + $0x74] sm:$0xf]
        %v977 = vld [vmem:[%s254 + $0x78] sm:$0xf]
        %v978 = vld [vmem:[%s254 + $0x7c] sm:$0xf]
        %v979 = vld [vmem:[%s254 + $0x80] sm:$0xf]
        %v980 = vld [vmem:[%s254 + $0x84] sm:$0xf]
        %v981 = vld [vmem:[%s254 + $0x88] sm:$0xf]
        %v982 = vld [vmem:[%s254 + $0x8c] sm:$0x7]
        %v983 = vld [vmem:[#allocation6] sm:$0xf]
        %v984 = vld [vmem:[#allocation6 + $0x4] sm:$0xf]
        %v985 = vld [vmem:[#allocation6 + $0x8] sm:$0xf]
        %v986 = vld [vmem:[#allocation6 + $0xc] sm:$0xf]
        %v987 = vld [vmem:[#allocation6 + $0x10] sm:$0xf]
        %v988 = vld [vmem:[#allocation6 + $0x14] sm:$0xf]
        %v989 = vld [vmem:[#allocation6 + $0x18] sm:$0xf]
        %v990 = vld [vmem:[#allocation6 + $0x1c] sm:$0xf]
        %v991 = vld [vmem:[#allocation6 + $0x20] sm:$0xf]
        %v992 = vld [vmem:[#allocation6 + $0x24] sm:$0xf]
        %v993 = vld [vmem:[#allocation6 + $0x28] sm:$0xf]
        %v994 = vld [vmem:[#allocation6 + $0x2c] sm:$0xf]
        %v995 = vld [vmem:[#allocation6 + $0x30] sm:$0xf]
        %v996 = vld [vmem:[#allocation6 + $0x34] sm:$0xf]
        %v997 = vld [vmem:[#allocation6 + $0x38] sm:$0xf]
        %v998 = vld [vmem:[#allocation6 + $0x3c] sm:$0xf]
        %v999 = vld [vmem:[%s254 + $0x8c] sm:$0xf]
        %s1000 = scalar_lea.vmem [#allocation6], 64
        %v1001 = vld [vmem:[%s1000] sm:$0xf]
        %v1002 = vld [vmem:[%s1000 + $0x4] sm:$0xf]
        %v1003 = vld [vmem:[%s1000 + $0x8] sm:$0xf]
        %v1004 = vld [vmem:[%s1000 + $0xc] sm:$0xf]
        %v1005 = vld [vmem:[%s1000 + $0x10] sm:$0xf]
        %v1006 = vld [vmem:[%s1000 + $0x14] sm:$0xf]
        %v1007 = vld [vmem:[%s1000 + $0x18] sm:$0xf]
        %v1008 = vld [vmem:[%s1000 + $0x1c] sm:$0xf]
        %v1009 = vld [vmem:[%s1000 + $0x20] sm:$0xf]
        %v1010 = vld [vmem:[%s1000 + $0x24] sm:$0xf]
        %v1011 = vld [vmem:[%s1000 + $0x28] sm:$0xf]
        %v1012 = vld [vmem:[%s1000 + $0x2c] sm:$0xf]
        %v1013 = vld [vmem:[%s1000 + $0x30] sm:$0xf]
        %v1014 = vld [vmem:[%s1000 + $0x34] sm:$0xf]
        %v1015 = vld [vmem:[%s1000 + $0x38] sm:$0xf]
        %v1016 = vld [vmem:[%s1000 + $0x3c] sm:$0xf]
        %v1053 = vunpack.c.l.b16 %v947
        %v1054 = vunpack.c.l.b16 %v948
        %v1055 = vunpack.c.l.b16 %v949
        %v1056 = vunpack.c.l.b16 %v950
        %v1057 = vunpack.c.l.b16 %v951
        %v1058 = vunpack.c.l.b16 %v952
        %v1059 = vunpack.c.l.b16 %v953
        %v1060 = vunpack.c.l.b16 %v954
        %v1061 = vunpack.c.l.b16 %v955
        %v1062 = vunpack.c.l.b16 %v956
        %v1063 = vunpack.c.l.b16 %v957
        %v1064 = vunpack.c.l.b16 %v958
        %v1065 = vunpack.c.l.b16 %v959
        %v1066 = vunpack.c.l.b16 %v960
        %v1067 = vunpack.c.l.b16 %v961
        %v1068 = vunpack.c.l.b16 %v962
        %v1069 = vunpack.c.l.b16 %v963
        %v1070 = vunpack.c.l.b16 %v964
        %v1071 = vunpack.c.l.b16 %v965
        %v1072 = vunpack.c.l.b16 %v966
        %v1073 = vunpack.c.l.b16 %v967
        %v1074 = vunpack.c.l.b16 %v968
        %v1075 = vunpack.c.l.b16 %v969
        %v1076 = vunpack.c.l.b16 %v970
        %v1077 = vunpack.c.l.b16 %v971
        %v1078 = vunpack.c.l.b16 %v972
        %v1079 = vunpack.c.l.b16 %v973
        %v1080 = vunpack.c.l.b16 %v974
        %v1081 = vunpack.c.l.b16 %v975
        %v1082 = vunpack.c.l.b16 %v976
        %v1083 = vunpack.c.l.b16 %v977
        %v1084 = vunpack.c.l.b16 %v978
        %v1085 = vunpack.c.l.b16 %v979
        %v1086 = vunpack.c.l.b16 %v980
        %v1087 = vunpack.c.l.b16 %v981
        %v1088 = vunpack.c.l.b16 %v999
        %v1089 = vpack.c.b16 %v1054, %v1053
        %v1090 = vpack.c.b16 %v1056, %v1055
        %v1091 = vpack.c.b16 %v1058, %v1057
        %v1092 = vpack.c.b16 %v1060, %v1059
        %v1093 = vpack.c.b16 %v1062, %v1061
        %v1094 = vpack.c.b16 %v1064, %v1063
        %v1095 = vpack.c.b16 %v1066, %v1065
        %v1096 = vpack.c.b16 %v1068, %v1067
        %v1097 = vpack.c.b16 %v1070, %v1069
        %v1098 = vpack.c.b16 %v1072, %v1071
        %v1099 = vpack.c.b16 %v1074, %v1073
        %v1100 = vpack.c.b16 %v1076, %v1075
        %v1101 = vpack.c.b16 %v1078, %v1077
        %v1102 = vpack.c.b16 %v1080, %v1079
        %v1103 = vpack.c.b16 %v1082, %v1081
        %v1104 = vpack.c.b16 %v1084, %v1083
        %v1105 = vpack.c.b16 %v1086, %v1085
        %v1106 = vpack.c.b16 %v1088, %v1087
        %vm1107 = vsmask.f32 7424
        %v1109 = vshrl.u32 %v1089, 16
        %v1111 = vshll.u32 %v1089, 16
        %v1113 = vrot.slane %v1111, 1
        %v1114 = vor.u32 %v1109, %v1113
        %v1116 = vshll.u32 %v1090, 16
        %v1118 = vrot.slane %v1116, 1
        %v1119 = vsel %vm1107, %v1114, %v1118
        %v1120 = vshrl.u32 %v1090, 16
        %v1122 = vor.u32 %v1120, %v1118
        %v1124 = vshll.u32 %v1091, 16
        %v1126 = vrot.slane %v1124, 1
        %v1127 = vsel %vm1107, %v1122, %v1126
        %v1128 = vshrl.u32 %v1091, 16
        %v1130 = vor.u32 %v1128, %v1126
        %v1132 = vshll.u32 %v1092, 16
        %v1134 = vrot.slane %v1132, 1
        %v1135 = vsel %vm1107, %v1130, %v1134
        %v1136 = vshrl.u32 %v1092, 16
        %v1138 = vor.u32 %v1136, %v1134
        %v1140 = vshll.u32 %v1093, 16
        %v1142 = vrot.slane %v1140, 1
        %v1143 = vsel %vm1107, %v1138, %v1142
        %v1144 = vshrl.u32 %v1093, 16
        %v1146 = vor.u32 %v1144, %v1142
        %v1148 = vshll.u32 %v1094, 16
        %v1150 = vrot.slane %v1148, 1
        %v1151 = vsel %vm1107, %v1146, %v1150
        %v1152 = vshrl.u32 %v1094, 16
        %v1154 = vor.u32 %v1152, %v1150
        %v1156 = vshll.u32 %v1095, 16
        %v1158 = vrot.slane %v1156, 1
        %v1159 = vsel %vm1107, %v1154, %v1158
        %v1160 = vshrl.u32 %v1095, 16
        %v1162 = vor.u32 %v1160, %v1158
        %v1164 = vshll.u32 %v1096, 16
        %v1166 = vrot.slane %v1164, 1
        %v1167 = vsel %vm1107, %v1162, %v1166
        %v1168 = vshrl.u32 %v1096, 16
        %v1170 = vor.u32 %v1168, %v1166
        %v1172 = vshll.u32 %v1097, 16
        %v1174 = vrot.slane %v1172, 1
        %v1175 = vsel %vm1107, %v1170, %v1174
        %v1176 = vshrl.u32 %v1097, 16
        %v1178 = vor.u32 %v1176, %v1174
        %v1180 = vshll.u32 %v1098, 16
        %v1182 = vrot.slane %v1180, 1
        %v1183 = vsel %vm1107, %v1178, %v1182
        %v1184 = vshrl.u32 %v1098, 16
        %v1186 = vor.u32 %v1184, %v1182
        %v1188 = vshll.u32 %v1099, 16
        %v1190 = vrot.slane %v1188, 1
        %v1191 = vsel %vm1107, %v1186, %v1190
        %v1192 = vshrl.u32 %v1099, 16
        %v1194 = vor.u32 %v1192, %v1190
        %v1196 = vshll.u32 %v1100, 16
        %v1198 = vrot.slane %v1196, 1
        %v1199 = vsel %vm1107, %v1194, %v1198
        %v1200 = vshrl.u32 %v1100, 16
        %v1202 = vor.u32 %v1200, %v1198
        %v1204 = vshll.u32 %v1101, 16
        %v1206 = vrot.slane %v1204, 1
        %v1207 = vsel %vm1107, %v1202, %v1206
        %v1208 = vshrl.u32 %v1101, 16
        %v1210 = vor.u32 %v1208, %v1206
        %v1212 = vshll.u32 %v1102, 16
        %v1214 = vrot.slane %v1212, 1
        %v1215 = vsel %vm1107, %v1210, %v1214
        %v1216 = vshrl.u32 %v1102, 16
        %v1218 = vor.u32 %v1216, %v1214
        %v1220 = vshll.u32 %v1103, 16
        %v1222 = vrot.slane %v1220, 1
        %v1223 = vsel %vm1107, %v1218, %v1222
        %v1224 = vshrl.u32 %v1103, 16
        %v1226 = vor.u32 %v1224, %v1222
        %v1228 = vshll.u32 %v1104, 16
        %v1230 = vrot.slane %v1228, 1
        %v1231 = vsel %vm1107, %v1226, %v1230
        %v1232 = vshrl.u32 %v1104, 16
        %v1234 = vor.u32 %v1232, %v1230
        %v1236 = vshll.u32 %v1105, 16
        %v1238 = vrot.slane %v1236, 1
        %v1239 = vsel %vm1107, %v1234, %v1238
        %v1240 = vshrl.u32 %v1105, 16
        %v1242 = vor.u32 %v1240, %v1238
        %v1244 = vshll.u32 %v1106, 16
        %v1246 = vrot.slane %v1244, 1
        %v1247 = vsel %vm1107, %v1242, %v1246
        %v1248 = vshrl.u32 %v1106, 16
        %v1250 = vor.u32 %v1248, %v1246
        %v1285 = vunpack.c.l.b16 %v1001
        %v1286 = vunpack.c.l.b16 %v1002
        %v1287 = vunpack.c.l.b16 %v1003
        %v1288 = vunpack.c.l.b16 %v1004
        %v1289 = vunpack.c.l.b16 %v1005
        %v1290 = vunpack.c.l.b16 %v1006
        %v1291 = vunpack.c.l.b16 %v1007
        %v1292 = vunpack.c.l.b16 %v1008
        %v1293 = vunpack.c.l.b16 %v1009
        %v1294 = vunpack.c.l.b16 %v1010
        %v1295 = vunpack.c.l.b16 %v1011
        %v1296 = vunpack.c.l.b16 %v1012
        %v1297 = vunpack.c.l.b16 %v1013
        %v1298 = vunpack.c.l.b16 %v1014
        %v1299 = vunpack.c.l.b16 %v1015
        %v1300 = vunpack.c.l.b16 %v1016
        %v1301 = vpack.c.b16 %v1286, %v1285
        %v1302 = vpack.c.b16 %v1288, %v1287
        %v1303 = vpack.c.b16 %v1290, %v1289
        %v1304 = vpack.c.b16 %v1292, %v1291
        %v1305 = vpack.c.b16 %v1294, %v1293
        %v1306 = vpack.c.b16 %v1296, %v1295
        %v1307 = vpack.c.b16 %v1298, %v1297
        %v1308 = vpack.c.b16 %v1300, %v1299
        %1317 = vmatprep.subr.bf16.mxu0 0
        %1318 = vmatpush1.bf16.msra.mxu0 %v1301
        %1319 = vmatprep.subr.bf16.mxu0 0
        %1320 = vmatpush1.bf16.msra.mxu0 %v1302
        %1321 = vmatprep.subr.bf16.mxu0 0
        %1322 = vmatpush1.bf16.msra.mxu0 %v1303
        %1323 = vmatprep.subr.bf16.mxu0 0
        %1324 = vmatpush1.bf16.msra.mxu0 %v1304
        %1325 = vmatprep.subr.bf16.mxu0 0
        %1326 = vmatpush1.bf16.msra.mxu0 %v1305
        %1327 = vmatprep.subr.bf16.mxu0 0
        %1328 = vmatpush1.bf16.msra.mxu0 %v1306
        %1329 = vmatprep.subr.bf16.mxu0 0
        %1330 = vmatpush1.bf16.msra.mxu0 %v1307
        %1331 = vmatprep.subr.bf16.mxu0 0
        %1332 = vmatpush1.bf16.msra.mxu0 %v1308
        %1333 = vmatprep.subr.bf16.mxu0 0
        %1334 = vmatpush1.bf16.msra.mxu0 0
        %1335 = vmatprep.subr.bf16.mxu0 0
        %1336 = vmatpush1.bf16.msra.mxu0 0
        %1337 = vmatprep.subr.bf16.mxu0 0
        %1338 = vmatpush1.bf16.msra.mxu0 0
        %1339 = vmatprep.subr.bf16.mxu0 0
        %1340 = vmatpush1.bf16.msra.mxu0 0
        %1341 = vmatprep.subr.bf16.mxu0 0
        %1342 = vmatpush1.bf16.msra.mxu0 0
        %1343 = vmatprep.subr.bf16.mxu0 0
        %1344 = vmatpush1.bf16.msra.mxu0 0
        %1345 = vmatprep.subr.bf16.mxu0 0
        %1346 = vmatpush1.bf16.msra.mxu0 0
        %1347 = vmatprep.subr.bf16.mxu0 0
        %1348 = vmatpush1.bf16.msra.mxu0 0
        %1349 = vmatprep.mubr.bf16.mxu0 0
        %1350 = vmatmul.mubr.bf16.gmra.mrb[0].mxu0 %v1119
        %v1351 = vpop.f32.mrb[0].mxu0
        %v1352 = vadd.f32 0.0, %v1351
        %v1353 = vpop.f32.mrb[0].mxu0
        %v1354 = vpop.f32.mrb[0].mxu0
        %v1355 = vadd.f32 0.0, %v1354
        %v1356 = vpop.f32.mrb[0].mxu0
        %1357 = vmatprep.mubr.bf16.mxu0 0
        %1358 = vmatmul.mubr.bf16.gmra.mrb[0].mxu0 %v1127
        %v1359 = vpop.f32.mrb[0].mxu0
        %v1360 = vadd.f32 0.0, %v1359
        %v1361 = vpop.f32.mrb[0].mxu0
        %v1362 = vpop.f32.mrb[0].mxu0
        %v1363 = vadd.f32 0.0, %v1362
        %v1364 = vpop.f32.mrb[0].mxu0
        %1365 = vmatprep.mubr.bf16.mxu0 0
        %1366 = vmatmul.mubr.bf16.gmra.mrb[0].mxu0 %v1135
        %v1367 = vpop.f32.mrb[0].mxu0
        %v1368 = vadd.f32 0.0, %v1367
        %v1369 = vpop.f32.mrb[0].mxu0
        %v1370 = vpop.f32.mrb[0].mxu0
        %v1371 = vadd.f32 0.0, %v1370
        %v1372 = vpop.f32.mrb[0].mxu0
        %1373 = vmatprep.mubr.bf16.mxu0 0
        %1374 = vmatmul.mubr.bf16.gmra.mrb[0].mxu0 %v1143
        %v1375 = vpop.f32.mrb[0].mxu0
        %v1376 = vadd.f32 0.0, %v1375
        %v1377 = vpop.f32.mrb[0].mxu0
        %v1378 = vpop.f32.mrb[0].mxu0
        %v1379 = vadd.f32 0.0, %v1378
        %v1380 = vpop.f32.mrb[0].mxu0
        %1381 = vmatprep.mubr.bf16.mxu0 0
        %1382 = vmatmul.mubr.bf16.gmra.mrb[0].mxu0 %v1151
        %v1383 = vpop.f32.mrb[0].mxu0
        %v1384 = vadd.f32 0.0, %v1383
        %v1385 = vpop.f32.mrb[0].mxu0
        %v1386 = vpop.f32.mrb[0].mxu0
        %v1387 = vadd.f32 0.0, %v1386
        %v1388 = vpop.f32.mrb[0].mxu0
        %1389 = vmatprep.mubr.bf16.mxu0 0
        %1390 = vmatmul.mubr.bf16.gmra.mrb[0].mxu0 %v1159
        %v1391 = vpop.f32.mrb[0].mxu0
        %v1392 = vadd.f32 0.0, %v1391
        %v1393 = vpop.f32.mrb[0].mxu0
        %v1394 = vpop.f32.mrb[0].mxu0
        %v1395 = vadd.f32 0.0, %v1394
        %v1396 = vpop.f32.mrb[0].mxu0
        %1397 = vmatprep.mubr.bf16.mxu0 0
        %1398 = vmatmul.mubr.bf16.gmra.mrb[0].mxu0 %v1167
        %v1399 = vpop.f32.mrb[0].mxu0
        %v1400 = vadd.f32 0.0, %v1399
        %v1401 = vpop.f32.mrb[0].mxu0
        %v1402 = vpop.f32.mrb[0].mxu0
        %v1403 = vadd.f32 0.0, %v1402
        %v1404 = vpop.f32.mrb[0].mxu0
        %1405 = vmatprep.mubr.bf16.mxu0 0
        %1406 = vmatmul.mubr.bf16.gmra.mrb[0].mxu0 %v1175
        %v1407 = vpop.f32.mrb[0].mxu0
        %v1408 = vadd.f32 0.0, %v1407
        %v1409 = vpop.f32.mrb[0].mxu0
        %v1410 = vpop.f32.mrb[0].mxu0
        %v1411 = vadd.f32 0.0, %v1410
        %v1412 = vpop.f32.mrb[0].mxu0
        %1413 = vmatprep.mubr.bf16.mxu0 0
        %1414 = vmatmul.mubr.bf16.gmra.mrb[0].mxu0 %v1183
        %v1415 = vpop.f32.mrb[0].mxu0
        %v1416 = vadd.f32 0.0, %v1415
        %v1417 = vpop.f32.mrb[0].mxu0
        %v1418 = vpop.f32.mrb[0].mxu0
        %v1419 = vadd.f32 0.0, %v1418
        %v1420 = vpop.f32.mrb[0].mxu0
        %1421 = vmatprep.mubr.bf16.mxu0 0
        %1422 = vmatmul.mubr.bf16.gmra.mrb[0].mxu0 %v1191
        %v1423 = vpop.f32.mrb[0].mxu0
        %v1424 = vadd.f32 0.0, %v1423
        %v1425 = vpop.f32.mrb[0].mxu0
        %v1426 = vpop.f32.mrb[0].mxu0
        %v1427 = vadd.f32 0.0, %v1426
        %v1428 = vpop.f32.mrb[0].mxu0
        %1429 = vmatprep.mubr.bf16.mxu0 0
        %1430 = vmatmul.mubr.bf16.gmra.mrb[0].mxu0 %v1199
        %v1431 = vpop.f32.mrb[0].mxu0
        %v1432 = vadd.f32 0.0, %v1431
        %v1433 = vpop.f32.mrb[0].mxu0
        %v1434 = vpop.f32.mrb[0].mxu0
        %v1435 = vadd.f32 0.0, %v1434
        %v1436 = vpop.f32.mrb[0].mxu0
        %1437 = vmatprep.mubr.bf16.mxu0 0
        %1438 = vmatmul.mubr.bf16.gmra.mrb[0].mxu0 %v1207
        %v1439 = vpop.f32.mrb[0].mxu0
        %v1440 = vadd.f32 0.0, %v1439
        %v1441 = vpop.f32.mrb[0].mxu0
        %v1442 = vpop.f32.mrb[0].mxu0
        %v1443 = vadd.f32 0.0, %v1442
        %v1444 = vpop.f32.mrb[0].mxu0
        %1445 = vmatprep.mubr.bf16.mxu0 0
        %1446 = vmatmul.mubr.bf16.gmra.mrb[0].mxu0 %v1215
        %v1447 = vpop.f32.mrb[0].mxu0
        %v1448 = vadd.f32 0.0, %v1447
        %v1449 = vpop.f32.mrb[0].mxu0
        %v1450 = vpop.f32.mrb[0].mxu0
        %v1451 = vadd.f32 0.0, %v1450
        %v1452 = vpop.f32.mrb[0].mxu0
        %1453 = vmatprep.mubr.bf16.mxu0 0
        %1454 = vmatmul.mubr.bf16.gmra.mrb[0].mxu0 %v1223
        %v1455 = vpop.f32.mrb[0].mxu0
        %v1456 = vadd.f32 0.0, %v1455
        %v1457 = vpop.f32.mrb[0].mxu0
        %v1458 = vpop.f32.mrb[0].mxu0
        %v1459 = vadd.f32 0.0, %v1458
        %v1460 = vpop.f32.mrb[0].mxu0
        %1461 = vmatprep.mubr.bf16.mxu0 0
        %1462 = vmatmul.mubr.bf16.gmra.mrb[0].mxu0 %v1231
        %v1463 = vpop.f32.mrb[0].mxu0
        %v1464 = vadd.f32 0.0, %v1463
        %v1465 = vpop.f32.mrb[0].mxu0
        %v1466 = vpop.f32.mrb[0].mxu0
        %v1467 = vadd.f32 0.0, %v1466
        %v1468 = vpop.f32.mrb[0].mxu0
        %1469 = vmatprep.mubr.bf16.mxu0 0
        %1470 = vmatmul.mubr.bf16.gmra.mrb[0].mxu0 %v1239
        %v1471 = vpop.f32.mrb[0].mxu0
        %v1472 = vadd.f32 0.0, %v1471
        %v1473 = vpop.f32.mrb[0].mxu0
        %v1474 = vpop.f32.mrb[0].mxu0
        %v1475 = vadd.f32 0.0, %v1474
        %v1476 = vpop.f32.mrb[0].mxu0
        %1477 = vmatprep.mubr.bf16.mxu0 0
        %1478 = vmatmul.mubr.bf16.gmra.mrb[0].mxu0 %v1247
        %v1479 = vpop.f32.mrb[0].mxu0
        %v1480 = vadd.f32 0.0, %v1479
        %v1481 = vpop.f32.mrb[0].mxu0
        %v1482 = vpop.f32.mrb[0].mxu0
        %v1483 = vadd.f32 0.0, %v1482
        %v1484 = vpop.f32.mrb[0].mxu0
        %1485 = vmatprep.mubr.bf16.mxu0 0
        %1486 = vmatmul.mubr.bf16.gmra.mrb[0].mxu0 %v1250
        %v1487 = vpop.f32.mrb[0].mxu0
        %v1488 = vadd.f32 0.0, %v1487
        %v1489 = vpop.f32.mrb[0].mxu0
        %v1490 = vpop.f32.mrb[0].mxu0
        %v1491 = vadd.f32 0.0, %v1490
        %v1492 = vpop.f32.mrb[0].mxu0
        %1493 = vdwg.mxu0
        %v1495 = vunpack.c.l.b16 %v982
        %v1496 = vpack.c.b16 %v1495, %v1087
        %v1531 = vunpack.c.l.b16 %v983
        %v1532 = vunpack.c.l.b16 %v984
        %v1533 = vunpack.c.l.b16 %v985
        %v1534 = vunpack.c.l.b16 %v986
        %v1535 = vunpack.c.l.b16 %v987
        %v1536 = vunpack.c.l.b16 %v988
        %v1537 = vunpack.c.l.b16 %v989
        %v1538 = vunpack.c.l.b16 %v990
        %v1539 = vunpack.c.l.b16 %v991
        %v1540 = vunpack.c.l.b16 %v992
        %v1541 = vunpack.c.l.b16 %v993
        %v1542 = vunpack.c.l.b16 %v994
        %v1543 = vunpack.c.l.b16 %v995
        %v1544 = vunpack.c.l.b16 %v996
        %v1545 = vunpack.c.l.b16 %v997
        %v1546 = vunpack.c.l.b16 %v998
        %v1547 = vpack.c.b16 %v1532, %v1531
        %v1548 = vpack.c.b16 %v1534, %v1533
        %v1549 = vpack.c.b16 %v1536, %v1535
        %v1550 = vpack.c.b16 %v1538, %v1537
        %v1551 = vpack.c.b16 %v1540, %v1539
        %v1552 = vpack.c.b16 %v1542, %v1541
        %v1553 = vpack.c.b16 %v1544, %v1543
        %v1554 = vpack.c.b16 %v1546, %v1545
        %1563 = vmatprep.subr.bf16.mxu0 0
        %1564 = vmatpush1.bf16.msra.mxu0 %v1547
        %1565 = vmatprep.subr.bf16.mxu0 0
        %1566 = vmatpush1.bf16.msra.mxu0 %v1548
        %1567 = vmatprep.subr.bf16.mxu0 0
        %1568 = vmatpush1.bf16.msra.mxu0 %v1549
        %1569 = vmatprep.subr.bf16.mxu0 0
        %1570 = vmatpush1.bf16.msra.mxu0 %v1550
        %1571 = vmatprep.subr.bf16.mxu0 0
        %1572 = vmatpush1.bf16.msra.mxu0 %v1551
        %1573 = vmatprep.subr.bf16.mxu0 0
        %1574 = vmatpush1.bf16.msra.mxu0 %v1552
        %1575 = vmatprep.subr.bf16.mxu0 0
        %1576 = vmatpush1.bf16.msra.mxu0 %v1553
        %1577 = vmatprep.subr.bf16.mxu0 0
        %1578 = vmatpush1.bf16.msra.mxu0 %v1554
        %1579 = vmatprep.subr.bf16.mxu0 0
        %1580 = vmatpush1.bf16.msra.mxu0 0
        %1581 = vmatprep.subr.bf16.mxu0 0
        %1582 = vmatpush1.bf16.msra.mxu0 0
        %1583 = vmatprep.subr.bf16.mxu0 0
        %1584 = vmatpush1.bf16.msra.mxu0 0
        %1585 = vmatprep.subr.bf16.mxu0 0
        %1586 = vmatpush1.bf16.msra.mxu0 0
        %1587 = vmatprep.subr.bf16.mxu0 0
        %1588 = vmatpush1.bf16.msra.mxu0 0
        %1589 = vmatprep.subr.bf16.mxu0 0
        %1590 = vmatpush1.bf16.msra.mxu0 0
        %1591 = vmatprep.subr.bf16.mxu0 0
        %1592 = vmatpush1.bf16.msra.mxu0 0
        %1593 = vmatprep.subr.bf16.mxu0 0
        %1594 = vmatpush1.bf16.msra.mxu0 0
        %1595 = vmatprep.mubr.bf16.mxu0 0
        %1596 = vmatmul.mubr.bf16.gmra.mrb[0].mxu0 %v1089
        %v1597 = vpop.f32.mrb[0].mxu0
        %v1598 = vadd.f32 %v1352, %v1597
        %v1599 = vpop.f32.mrb[0].mxu0
        %v1600 = vpop.f32.mrb[0].mxu0
        %v1601 = vadd.f32 %v1355, %v1600
        %v1602 = vpop.f32.mrb[0].mxu0
        %1603 = vmatprep.mubr.bf16.mxu0 0
        %1604 = vmatmul.mubr.bf16.gmra.mrb[0].mxu0 %v1090
        %v1605 = vpop.f32.mrb[0].mxu0
        %v1606 = vadd.f32 %v1360, %v1605
        %v1607 = vpop.f32.mrb[0].mxu0
        %v1608 = vpop.f32.mrb[0].mxu0
        %v1609 = vadd.f32 %v1363, %v1608
        %v1610 = vpop.f32.mrb[0].mxu0
        %1611 = vmatprep.mubr.bf16.mxu0 0
        %1612 = vmatmul.mubr.bf16.gmra.mrb[0].mxu0 %v1091
        %v1613 = vpop.f32.mrb[0].mxu0
        %v1614 = vadd.f32 %v1368, %v1613
        %v1615 = vpop.f32.mrb[0].mxu0
        %v1616 = vpop.f32.mrb[0].mxu0
        %v1617 = vadd.f32 %v1371, %v1616
        %v1618 = vpop.f32.mrb[0].mxu0
        %1619 = vmatprep.mubr.bf16.mxu0 0
        %1620 = vmatmul.mubr.bf16.gmra.mrb[0].mxu0 %v1092
        %v1621 = vpop.f32.mrb[0].mxu0
        %v1622 = vadd.f32 %v1376, %v1621
        %v1623 = vpop.f32.mrb[0].mxu0
        %v1624 = vpop.f32.mrb[0].mxu0
        %v1625 = vadd.f32 %v1379, %v1624
        %v1626 = vpop.f32.mrb[0].mxu0
        %1627 = vmatprep.mubr.bf16.mxu0 0
        %1628 = vmatmul.mubr.bf16.gmra.mrb[0].mxu0 %v1093
        %v1629 = vpop.f32.mrb[0].mxu0
        %v1630 = vadd.f32 %v1384, %v1629
        %v1631 = vpop.f32.mrb[0].mxu0
        %v1632 = vpop.f32.mrb[0].mxu0
        %v1633 = vadd.f32 %v1387, %v1632
        %v1634 = vpop.f32.mrb[0].mxu0
        %1635 = vmatprep.mubr.bf16.mxu0 0
        %1636 = vmatmul.mubr.bf16.gmra.mrb[0].mxu0 %v1094
        %v1637 = vpop.f32.mrb[0].mxu0
        %v1638 = vadd.f32 %v1392, %v1637
        %v1639 = vpop.f32.mrb[0].mxu0
        %v1640 = vpop.f32.mrb[0].mxu0
        %v1641 = vadd.f32 %v1395, %v1640
        %v1642 = vpop.f32.mrb[0].mxu0
        %1643 = vmatprep.mubr.bf16.mxu0 0
        %1644 = vmatmul.mubr.bf16.gmra.mrb[0].mxu0 %v1095
        %v1645 = vpop.f32.mrb[0].mxu0
        %v1646 = vadd.f32 %v1400, %v1645
        %v1647 = vpop.f32.mrb[0].mxu0
        %v1648 = vpop.f32.mrb[0].mxu0
        %v1649 = vadd.f32 %v1403, %v1648
        %v1650 = vpop.f32.mrb[0].mxu0
        %1651 = vmatprep.mubr.bf16.mxu0 0
        %1652 = vmatmul.mubr.bf16.gmra.mrb[0].mxu0 %v1096
        %v1653 = vpop.f32.mrb[0].mxu0
        %v1654 = vadd.f32 %v1408, %v1653
        %v1655 = vpop.f32.mrb[0].mxu0
        %v1656 = vpop.f32.mrb[0].mxu0
        %v1657 = vadd.f32 %v1411, %v1656
        %v1658 = vpop.f32.mrb[0].mxu0
        %1659 = vmatprep.mubr.bf16.mxu0 0
        %1660 = vmatmul.mubr.bf16.gmra.mrb[0].mxu0 %v1097
        %v1661 = vpop.f32.mrb[0].mxu0
        %v1662 = vadd.f32 %v1416, %v1661
        %v1663 = vpop.f32.mrb[0].mxu0
        %v1664 = vpop.f32.mrb[0].mxu0
        %v1665 = vadd.f32 %v1419, %v1664
        %v1666 = vpop.f32.mrb[0].mxu0
        %1667 = vmatprep.mubr.bf16.mxu0 0
        %1668 = vmatmul.mubr.bf16.gmra.mrb[0].mxu0 %v1098
        %v1669 = vpop.f32.mrb[0].mxu0
        %v1670 = vadd.f32 %v1424, %v1669
        %v1671 = vpop.f32.mrb[0].mxu0
        %v1672 = vpop.f32.mrb[0].mxu0
        %v1673 = vadd.f32 %v1427, %v1672
        %v1674 = vpop.f32.mrb[0].mxu0
        %1675 = vmatprep.mubr.bf16.mxu0 0
        %1676 = vmatmul.mubr.bf16.gmra.mrb[0].mxu0 %v1099
        %v1677 = vpop.f32.mrb[0].mxu0
        %v1678 = vadd.f32 %v1432, %v1677
        %v1679 = vpop.f32.mrb[0].mxu0
        %v1680 = vpop.f32.mrb[0].mxu0
        %v1681 = vadd.f32 %v1435, %v1680
        %v1682 = vpop.f32.mrb[0].mxu0
        %1683 = vmatprep.mubr.bf16.mxu0 0
        %1684 = vmatmul.mubr.bf16.gmra.mrb[0].mxu0 %v1100
        %v1685 = vpop.f32.mrb[0].mxu0
        %v1686 = vadd.f32 %v1440, %v1685
        %v1687 = vpop.f32.mrb[0].mxu0
        %v1688 = vpop.f32.mrb[0].mxu0
        %v1689 = vadd.f32 %v1443, %v1688
        %v1690 = vpop.f32.mrb[0].mxu0
        %1691 = vmatprep.mubr.bf16.mxu0 0
        %1692 = vmatmul.mubr.bf16.gmra.mrb[0].mxu0 %v1101
        %v1693 = vpop.f32.mrb[0].mxu0
        %v1694 = vadd.f32 %v1448, %v1693
        %v1695 = vpop.f32.mrb[0].mxu0
        %v1696 = vpop.f32.mrb[0].mxu0
        %v1697 = vadd.f32 %v1451, %v1696
        %v1698 = vpop.f32.mrb[0].mxu0
        %1699 = vmatprep.mubr.bf16.mxu0 0
        %1700 = vmatmul.mubr.bf16.gmra.mrb[0].mxu0 %v1102
        %v1701 = vpop.f32.mrb[0].mxu0
        %v1702 = vadd.f32 %v1456, %v1701
        %v1703 = vpop.f32.mrb[0].mxu0
        %v1704 = vpop.f32.mrb[0].mxu0
        %v1705 = vadd.f32 %v1459, %v1704
        %v1706 = vpop.f32.mrb[0].mxu0
        %1707 = vmatprep.mubr.bf16.mxu0 0
        %1708 = vmatmul.mubr.bf16.gmra.mrb[0].mxu0 %v1103
        %v1709 = vpop.f32.mrb[0].mxu0
        %v1710 = vadd.f32 %v1464, %v1709
        %v1711 = vpop.f32.mrb[0].mxu0
        %v1712 = vpop.f32.mrb[0].mxu0
        %v1713 = vadd.f32 %v1467, %v1712
        %v1714 = vpop.f32.mrb[0].mxu0
        %1715 = vmatprep.mubr.bf16.mxu0 0
        %1716 = vmatmul.mubr.bf16.gmra.mrb[0].mxu0 %v1104
        %v1717 = vpop.f32.mrb[0].mxu0
        %v1718 = vadd.f32 %v1472, %v1717
        %v1719 = vpop.f32.mrb[0].mxu0
        %v1720 = vpop.f32.mrb[0].mxu0
        %v1721 = vadd.f32 %v1475, %v1720
        %v1722 = vpop.f32.mrb[0].mxu0
        %1723 = vmatprep.mubr.bf16.mxu0 0
        %1724 = vmatmul.mubr.bf16.gmra.mrb[0].mxu0 %v1105
        %v1725 = vpop.f32.mrb[0].mxu0
        %v1726 = vadd.f32 %v1480, %v1725
        %v1727 = vpop.f32.mrb[0].mxu0
        %v1728 = vpop.f32.mrb[0].mxu0
        %v1729 = vadd.f32 %v1483, %v1728
        %v1730 = vpop.f32.mrb[0].mxu0
        %1731 = vmatprep.mubr.bf16.mxu0 0
        %1732 = vmatmul.mubr.bf16.gmra.mrb[0].mxu0 %v1496
        %v1733 = vpop.f32.mrb[0].mxu0
        %v1734 = vadd.f32 %v1488, %v1733
        %v1735 = vpop.f32.mrb[0].mxu0
        %v1736 = vpop.f32.mrb[0].mxu0
        %v1737 = vadd.f32 %v1491, %v1736
        %v1738 = vpop.f32.mrb[0].mxu0
        %1739 = vdwg.mxu0
        %v1740 = vld [vmem:[%s254] sm:$0xe]
        %s1741 = scalar_lea.vmem [#allocation6], 128
        %v1742 = vld [vmem:[%s1741] sm:$0xf]
        %v1743 = vld [vmem:[%s1741 + $0x4] sm:$0xf]
        %v1744 = vld [vmem:[%s1741 + $0x8] sm:$0xf]
        %v1745 = vld [vmem:[%s1741 + $0xc] sm:$0xf]
        %v1746 = vld [vmem:[%s1741 + $0x10] sm:$0xf]
        %v1747 = vld [vmem:[%s1741 + $0x14] sm:$0xf]
        %v1748 = vld [vmem:[%s1741 + $0x18] sm:$0xf]
        %v1749 = vld [vmem:[%s1741 + $0x1c] sm:$0xf]
        %v1750 = vld [vmem:[%s1741 + $0x20] sm:$0xf]
        %v1751 = vld [vmem:[%s1741 + $0x24] sm:$0xf]
        %v1752 = vld [vmem:[%s1741 + $0x28] sm:$0xf]
        %v1753 = vld [vmem:[%s1741 + $0x2c] sm:$0xf]
        %v1754 = vld [vmem:[%s1741 + $0x30] sm:$0xf]
        %v1755 = vld [vmem:[%s1741 + $0x34] sm:$0xf]
        %v1756 = vld [vmem:[%s1741 + $0x38] sm:$0xf]
        %v1757 = vld [vmem:[%s1741 + $0x3c] sm:$0xf]
        %v1759 = vunpack.c.l.b16 %v1740
        %v1760 = vpack.c.b16 %v1054, %v1759
        %vm1761 = vcmask 1046528
        %v1762 = vrot.slane %v1760, 1
        %v1763 = vrot.slane %v1090, 1
        %v1764 = vsel %vm1761, %v1762, %v1763
        %v1765 = vrot.slane %v1091, 1
        %v1766 = vsel %vm1761, %v1763, %v1765
        %v1767 = vrot.slane %v1092, 1
        %v1768 = vsel %vm1761, %v1765, %v1767
        %v1769 = vrot.slane %v1093, 1
        %v1770 = vsel %vm1761, %v1767, %v1769
        %v1771 = vrot.slane %v1094, 1
        %v1772 = vsel %vm1761, %v1769, %v1771
        %v1773 = vrot.slane %v1095, 1
        %v1774 = vsel %vm1761, %v1771, %v1773
        %v1775 = vrot.slane %v1096, 1
        %v1776 = vsel %vm1761, %v1773, %v1775
        %v1777 = vrot.slane %v1097, 1
        %v1778 = vsel %vm1761, %v1775, %v1777
        %v1779 = vrot.slane %v1098, 1
        %v1780 = vsel %vm1761, %v1777, %v1779
        %v1781 = vrot.slane %v1099, 1
        %v1782 = vsel %vm1761, %v1779, %v1781
        %v1783 = vrot.slane %v1100, 1
        %v1784 = vsel %vm1761, %v1781, %v1783
        %v1785 = vrot.slane %v1101, 1
        %v1786 = vsel %vm1761, %v1783, %v1785
        %v1787 = vrot.slane %v1102, 1
        %v1788 = vsel %vm1761, %v1785, %v1787
        %v1789 = vrot.slane %v1103, 1
        %v1790 = vsel %vm1761, %v1787, %v1789
        %v1791 = vrot.slane %v1104, 1
        %v1792 = vsel %vm1761, %v1789, %v1791
        %v1793 = vrot.slane %v1105, 1
        %v1794 = vsel %vm1761, %v1791, %v1793
        %v1795 = vrot.slane %v1106, 1
        %v1796 = vsel %vm1761, %v1793, %v1795
        %v1831 = vunpack.c.l.b16 %v1742
        %v1832 = vunpack.c.l.b16 %v1743
        %v1833 = vunpack.c.l.b16 %v1744
        %v1834 = vunpack.c.l.b16 %v1745
        %v1835 = vunpack.c.l.b16 %v1746
        %v1836 = vunpack.c.l.b16 %v1747
        %v1837 = vunpack.c.l.b16 %v1748
        %v1838 = vunpack.c.l.b16 %v1749
        %v1839 = vunpack.c.l.b16 %v1750
        %v1840 = vunpack.c.l.b16 %v1751
        %v1841 = vunpack.c.l.b16 %v1752
        %v1842 = vunpack.c.l.b16 %v1753
        %v1843 = vunpack.c.l.b16 %v1754
        %v1844 = vunpack.c.l.b16 %v1755
        %v1845 = vunpack.c.l.b16 %v1756
        %v1846 = vunpack.c.l.b16 %v1757
        %v1847 = vpack.c.b16 %v1832, %v1831
        %v1848 = vpack.c.b16 %v1834, %v1833
        %v1849 = vpack.c.b16 %v1836, %v1835
        %v1850 = vpack.c.b16 %v1838, %v1837
        %v1851 = vpack.c.b16 %v1840, %v1839
        %v1852 = vpack.c.b16 %v1842, %v1841
        %v1853 = vpack.c.b16 %v1844, %v1843
        %v1854 = vpack.c.b16 %v1846, %v1845
        %1863 = vmatprep.subr.bf16.mxu0 0
        %1864 = vmatpush1.bf16.msra.mxu0 %v1847
        %1865 = vmatprep.subr.bf16.mxu0 0
        %1866 = vmatpush1.bf16.msra.mxu0 %v1848
        %1867 = vmatprep.subr.bf16.mxu0 0
        %1868 = vmatpush1.bf16.msra.mxu0 %v1849
        %1869 = vmatprep.subr.bf16.mxu0 0
        %1870 = vmatpush1.bf16.msra.mxu0 %v1850
        %1871 = vmatprep.subr.bf16.mxu0 0
        %1872 = vmatpush1.bf16.msra.mxu0 %v1851
        %1873 = vmatprep.subr.bf16.mxu0 0
        %1874 = vmatpush1.bf16.msra.mxu0 %v1852
        %1875 = vmatprep.subr.bf16.mxu0 0
        %1876 = vmatpush1.bf16.msra.mxu0 %v1853
        %1877 = vmatprep.subr.bf16.mxu0 0
        %1878 = vmatpush1.bf16.msra.mxu0 %v1854
        %1879 = vmatprep.subr.bf16.mxu0 0
        %1880 = vmatpush1.bf16.msra.mxu0 0
        %1881 = vmatprep.subr.bf16.mxu0 0
        %1882 = vmatpush1.bf16.msra.mxu0 0
        %1883 = vmatprep.subr.bf16.mxu0 0
        %1884 = vmatpush1.bf16.msra.mxu0 0
        %1885 = vmatprep.subr.bf16.mxu0 0
        %1886 = vmatpush1.bf16.msra.mxu0 0
        %1887 = vmatprep.subr.bf16.mxu0 0
        %1888 = vmatpush1.bf16.msra.mxu0 0
        %1889 = vmatprep.subr.bf16.mxu0 0
        %1890 = vmatpush1.bf16.msra.mxu0 0
        %1891 = vmatprep.subr.bf16.mxu0 0
        %1892 = vmatpush1.bf16.msra.mxu0 0
        %1893 = vmatprep.subr.bf16.mxu0 0
        %1894 = vmatpush1.bf16.msra.mxu0 0
        %1895 = vmatprep.mubr.bf16.mxu0 0
        %1896 = vmatmul.mubr.bf16.gmra.mrb[0].mxu0 %v1764
        %v1897 = vpop.f32.mrb[0].mxu0
        %v1898 = vadd.f32 0.0, %v1897
        %v1899 = vpop.f32.mrb[0].mxu0
        %v1900 = vpop.f32.mrb[0].mxu0
        %v1901 = vadd.f32 0.0, %v1900
        %v1902 = vpop.f32.mrb[0].mxu0
        %1903 = vmatprep.mubr.bf16.mxu0 0
        %1904 = vmatmul.mubr.bf16.gmra.mrb[0].mxu0 %v1766
        %v1905 = vpop.f32.mrb[0].mxu0
        %v1906 = vadd.f32 0.0, %v1905
        %v1907 = vpop.f32.mrb[0].mxu0
        %v1908 = vpop.f32.mrb[0].mxu0
        %v1909 = vadd.f32 0.0, %v1908
        %v1910 = vpop.f32.mrb[0].mxu0
        %1911 = vmatprep.mubr.bf16.mxu0 0
        %1912 = vmatmul.mubr.bf16.gmra.mrb[0].mxu0 %v1768
        %v1913 = vpop.f32.mrb[0].mxu0
        %v1914 = vadd.f32 0.0, %v1913
        %v1915 = vpop.f32.mrb[0].mxu0
        %v1916 = vpop.f32.mrb[0].mxu0
        %v1917 = vadd.f32 0.0, %v1916
        %v1918 = vpop.f32.mrb[0].mxu0
        %1919 = vmatprep.mubr.bf16.mxu0 0
        %1920 = vmatmul.mubr.bf16.gmra.mrb[0].mxu0 %v1770
        %v1921 = vpop.f32.mrb[0].mxu0
        %v1922 = vadd.f32 0.0, %v1921
        %v1923 = vpop.f32.mrb[0].mxu0
        %v1924 = vpop.f32.mrb[0].mxu0
        %v1925 = vadd.f32 0.0, %v1924
        %v1926 = vpop.f32.mrb[0].mxu0
        %1927 = vmatprep.mubr.bf16.mxu0 0
        %1928 = vmatmul.mubr.bf16.gmra.mrb[0].mxu0 %v1772
        %v1929 = vpop.f32.mrb[0].mxu0
        %v1930 = vadd.f32 0.0, %v1929
        %v1931 = vpop.f32.mrb[0].mxu0
        %v1932 = vpop.f32.mrb[0].mxu0
        %v1933 = vadd.f32 0.0, %v1932
        %v1934 = vpop.f32.mrb[0].mxu0
        %1935 = vmatprep.mubr.bf16.mxu0 0
        %1936 = vmatmul.mubr.bf16.gmra.mrb[0].mxu0 %v1774
        %v1937 = vpop.f32.mrb[0].mxu0
        %v1938 = vadd.f32 0.0, %v1937
        %v1939 = vpop.f32.mrb[0].mxu0
        %v1940 = vpop.f32.mrb[0].mxu0
        %v1941 = vadd.f32 0.0, %v1940
        %v1942 = vpop.f32.mrb[0].mxu0
        %1943 = vmatprep.mubr.bf16.mxu0 0
        %1944 = vmatmul.mubr.bf16.gmra.mrb[0].mxu0 %v1776
        %v1945 = vpop.f32.mrb[0].mxu0
        %v1946 = vadd.f32 0.0, %v1945
        %v1947 = vpop.f32.mrb[0].mxu0
        %v1948 = vpop.f32.mrb[0].mxu0
        %v1949 = vadd.f32 0.0, %v1948
        %v1950 = vpop.f32.mrb[0].mxu0
        %1951 = vmatprep.mubr.bf16.mxu0 0
        %1952 = vmatmul.mubr.bf16.gmra.mrb[0].mxu0 %v1778
        %v1953 = vpop.f32.mrb[0].mxu0
        %v1954 = vadd.f32 0.0, %v1953
        %v1955 = vpop.f32.mrb[0].mxu0
        %v1956 = vpop.f32.mrb[0].mxu0
        %v1957 = vadd.f32 0.0, %v1956
        %v1958 = vpop.f32.mrb[0].mxu0
        %1959 = vmatprep.mubr.bf16.mxu0 0
        %1960 = vmatmul.mubr.bf16.gmra.mrb[0].mxu0 %v1780
        %v1961 = vpop.f32.mrb[0].mxu0
        %v1962 = vadd.f32 0.0, %v1961
        %v1963 = vpop.f32.mrb[0].mxu0
        %v1964 = vpop.f32.mrb[0].mxu0
        %v1965 = vadd.f32 0.0, %v1964
        %v1966 = vpop.f32.mrb[0].mxu0
        %1967 = vmatprep.mubr.bf16.mxu0 0
        %1968 = vmatmul.mubr.bf16.gmra.mrb[0].mxu0 %v1782
        %v1969 = vpop.f32.mrb[0].mxu0
        %v1970 = vadd.f32 0.0, %v1969
        %v1971 = vpop.f32.mrb[0].mxu0
        %v1972 = vpop.f32.mrb[0].mxu0
        %v1973 = vadd.f32 0.0, %v1972
        %v1974 = vpop.f32.mrb[0].mxu0
        %1975 = vmatprep.mubr.bf16.mxu0 0
        %1976 = vmatmul.mubr.bf16.gmra.mrb[0].mxu0 %v1784
        %v1977 = vpop.f32.mrb[0].mxu0
        %v1978 = vadd.f32 0.0, %v1977
        %v1979 = vpop.f32.mrb[0].mxu0
        %v1980 = vpop.f32.mrb[0].mxu0
        %v1981 = vadd.f32 0.0, %v1980
        %v1982 = vpop.f32.mrb[0].mxu0
        %1983 = vmatprep.mubr.bf16.mxu0 0
        %1984 = vmatmul.mubr.bf16.gmra.mrb[0].mxu0 %v1786
        %v1985 = vpop.f32.mrb[0].mxu0
        %v1986 = vadd.f32 0.0, %v1985
        %v1987 = vpop.f32.mrb[0].mxu0
        %v1988 = vpop.f32.mrb[0].mxu0
        %v1989 = vadd.f32 0.0, %v1988
        %v1990 = vpop.f32.mrb[0].mxu0
        %1991 = vmatprep.mubr.bf16.mxu0 0
        %1992 = vmatmul.mubr.bf16.gmra.mrb[0].mxu0 %v1788
        %v1993 = vpop.f32.mrb[0].mxu0
        %v1994 = vadd.f32 0.0, %v1993
        %v1995 = vpop.f32.mrb[0].mxu0
        %v1996 = vpop.f32.mrb[0].mxu0
        %v1997 = vadd.f32 0.0, %v1996
        %v1998 = vpop.f32.mrb[0].mxu0
        %1999 = vmatprep.mubr.bf16.mxu0 0
        %2000 = vmatmul.mubr.bf16.gmra.mrb[0].mxu0 %v1790
        %v2001 = vpop.f32.mrb[0].mxu0
        %v2002 = vadd.f32 0.0, %v2001
        %v2003 = vpop.f32.mrb[0].mxu0
        %v2004 = vpop.f32.mrb[0].mxu0
        %v2005 = vadd.f32 0.0, %v2004
        %v2006 = vpop.f32.mrb[0].mxu0
        %2007 = vmatprep.mubr.bf16.mxu0 0
        %2008 = vmatmul.mubr.bf16.gmra.mrb[0].mxu0 %v1792
        %v2009 = vpop.f32.mrb[0].mxu0
        %v2010 = vadd.f32 0.0, %v2009
        %v2011 = vpop.f32.mrb[0].mxu0
        %v2012 = vpop.f32.mrb[0].mxu0
        %v2013 = vadd.f32 0.0, %v2012
        %v2014 = vpop.f32.mrb[0].mxu0
        %2015 = vmatprep.mubr.bf16.mxu0 0
        %2016 = vmatmul.mubr.bf16.gmra.mrb[0].mxu0 %v1794
        %v2017 = vpop.f32.mrb[0].mxu0
        %v2018 = vadd.f32 0.0, %v2017
        %v2019 = vpop.f32.mrb[0].mxu0
        %v2020 = vpop.f32.mrb[0].mxu0
        %v2021 = vadd.f32 0.0, %v2020
        %v2022 = vpop.f32.mrb[0].mxu0
        %2023 = vmatprep.mubr.bf16.mxu0 0
        %2024 = vmatmul.mubr.bf16.gmra.mrb[0].mxu0 %v1796
        %v2025 = vpop.f32.mrb[0].mxu0
        %v2026 = vadd.f32 0.0, %v2025
        %v2027 = vpop.f32.mrb[0].mxu0
        %v2028 = vpop.f32.mrb[0].mxu0
        %v2029 = vadd.f32 0.0, %v2028
        %v2030 = vpop.f32.mrb[0].mxu0
        %2031 = vmatprep.mubr.bf16.mxu0 0
        %2032 = vmatmul.mubr.bf16.gmra.mrb[0].mxu0 %v1795
        %v2033 = vpop.f32.mrb[0].mxu0
        %v2034 = vadd.f32 0.0, %v2033
        %v2035 = vpop.f32.mrb[0].mxu0
        %v2036 = vpop.f32.mrb[0].mxu0
        %v2037 = vadd.f32 0.0, %v2036
        %v2038 = vpop.f32.mrb[0].mxu0
        %2039 = vdwg.mxu0
        %v2040 = vadd.f32 %v1598, %v1898
        %v2041 = vadd.f32 %v1601, %v1901
        %v2042 = vadd.f32 %v1606, %v1906
        %v2043 = vadd.f32 %v1609, %v1909
        %v2044 = vadd.f32 %v1614, %v1914
        %v2045 = vadd.f32 %v1617, %v1917
        %v2046 = vadd.f32 %v1622, %v1922
        %v2047 = vadd.f32 %v1625, %v1925
        %v2048 = vadd.f32 %v1630, %v1930
        %v2049 = vadd.f32 %v1633, %v1933
        %v2050 = vadd.f32 %v1638, %v1938
        %v2051 = vadd.f32 %v1641, %v1941
        %v2052 = vadd.f32 %v1646, %v1946
        %v2053 = vadd.f32 %v1649, %v1949
        %v2054 = vadd.f32 %v1654, %v1954
        %v2055 = vadd.f32 %v1657, %v1957
        %v2056 = vadd.f32 %v1662, %v1962
        %v2057 = vadd.f32 %v1665, %v1965
        %v2058 = vadd.f32 %v1670, %v1970
        %v2059 = vadd.f32 %v1673, %v1973
        %v2060 = vadd.f32 %v1678, %v1978
        %v2061 = vadd.f32 %v1681, %v1981
        %v2062 = vadd.f32 %v1686, %v1986
        %v2063 = vadd.f32 %v1689, %v1989
        %v2064 = vadd.f32 %v1694, %v1994
        %v2065 = vadd.f32 %v1697, %v1997
        %v2066 = vadd.f32 %v1702, %v2002
        %v2067 = vadd.f32 %v1705, %v2005
        %v2068 = vadd.f32 %v1710, %v2010
        %v2069 = vadd.f32 %v1713, %v2013
        %v2070 = vadd.f32 %v1718, %v2018
        %v2071 = vadd.f32 %v1721, %v2021
        %v2072 = vadd.f32 %v1726, %v2026
        %v2073 = vadd.f32 %v1729, %v2029
        %v2074 = vadd.f32 %v1734, %v2034
        %v2075 = vadd.f32 %v1737, %v2037
        %v2076 = vld [vmem:[%s254 + $0x8] sm:$0xe]
        %v2077 = vld [vmem:[%s254 + $0xc] sm:$0xf]
        %v2078 = vld [vmem:[%s254 + $0x10] sm:$0xf]
        %v2079 = vld [vmem:[%s254 + $0x14] sm:$0xf]
        %v2080 = vld [vmem:[%s254 + $0x18] sm:$0xf]
        %v2081 = vld [vmem:[%s254 + $0x1c] sm:$0xf]
        %v2082 = vld [vmem:[%s254 + $0x20] sm:$0xf]
        %v2083 = vld [vmem:[%s254 + $0x24] sm:$0xf]
        %v2084 = vld [vmem:[%s254 + $0x28] sm:$0xf]
        %v2085 = vld [vmem:[%s254 + $0x2c] sm:$0xf]
        %v2086 = vld [vmem:[%s254 + $0x30] sm:$0xf]
        %v2087 = vld [vmem:[%s254 + $0x34] sm:$0xf]
        %v2088 = vld [vmem:[%s254 + $0x38] sm:$0xf]
        %v2089 = vld [vmem:[%s254 + $0x3c] sm:$0xf]
        %v2090 = vld [vmem:[%s254 + $0x40] sm:$0xf]
        %v2091 = vld [vmem:[%s254 + $0x44] sm:$0xf]
        %v2092 = vld [vmem:[%s254 + $0x48] sm:$0xf]
        %v2093 = vld [vmem:[%s254 + $0x4c] sm:$0xf]
        %v2094 = vld [vmem:[%s254 + $0x50] sm:$0xf]
        %v2095 = vld [vmem:[%s254 + $0x54] sm:$0xf]
        %v2096 = vld [vmem:[%s254 + $0x58] sm:$0xf]
        %v2097 = vld [vmem:[%s254 + $0x5c] sm:$0xf]
        %v2098 = vld [vmem:[%s254 + $0x60] sm:$0xf]
        %v2099 = vld [vmem:[%s254 + $0x64] sm:$0xf]
        %v2100 = vld [vmem:[%s254 + $0x68] sm:$0xf]
        %v2101 = vld [vmem:[%s254 + $0x6c] sm:$0xf]
        %v2102 = vld [vmem:[%s254 + $0x70] sm:$0xf]
        %v2103 = vld [vmem:[%s254 + $0x74] sm:$0xf]
        %v2104 = vld [vmem:[%s254 + $0x78] sm:$0xf]
        %v2105 = vld [vmem:[%s254 + $0x7c] sm:$0xf]
        %v2106 = vld [vmem:[%s254 + $0x80] sm:$0xf]
        %v2107 = vld [vmem:[%s254 + $0x84] sm:$0xf]
        %v2108 = vld [vmem:[%s254 + $0x88] sm:$0xf]
        %v2109 = vld [vmem:[%s254 + $0x8c] sm:$0xf]
        %v2110 = vld [vmem:[%s254 + $0x90] sm:$0xf]
        %v2111 = vld [vmem:[%s254 + $0x94] sm:$0xf]
        %s2112 = scalar_lea.vmem [#allocation6], 192
        %v2113 = vld [vmem:[%s2112] sm:$0xf]
        %v2114 = vld [vmem:[%s2112 + $0x4] sm:$0xf]
        %v2115 = vld [vmem:[%s2112 + $0x8] sm:$0xf]
        %v2116 = vld [vmem:[%s2112 + $0xc] sm:$0xf]
        %v2117 = vld [vmem:[%s2112 + $0x10] sm:$0xf]
        %v2118 = vld [vmem:[%s2112 + $0x14] sm:$0xf]
        %v2119 = vld [vmem:[%s2112 + $0x18] sm:$0xf]
        %v2120 = vld [vmem:[%s2112 + $0x1c] sm:$0xf]
        %v2121 = vld [vmem:[%s2112 + $0x20] sm:$0xf]
        %v2122 = vld [vmem:[%s2112 + $0x24] sm:$0xf]
        %v2123 = vld [vmem:[%s2112 + $0x28] sm:$0xf]
        %v2124 = vld [vmem:[%s2112 + $0x2c] sm:$0xf]
        %v2125 = vld [vmem:[%s2112 + $0x30] sm:$0xf]
        %v2126 = vld [vmem:[%s2112 + $0x34] sm:$0xf]
        %v2127 = vld [vmem:[%s2112 + $0x38] sm:$0xf]
        %v2128 = vld [vmem:[%s2112 + $0x3c] sm:$0xf]
        %v2165 = vunpack.c.l.b16 %v2076
        %v2166 = vunpack.c.l.b16 %v2077
        %v2167 = vunpack.c.l.b16 %v2078
        %v2168 = vunpack.c.l.b16 %v2079
        %v2169 = vunpack.c.l.b16 %v2080
        %v2170 = vunpack.c.l.b16 %v2081
        %v2171 = vunpack.c.l.b16 %v2082
        %v2172 = vunpack.c.l.b16 %v2083
        %v2173 = vunpack.c.l.b16 %v2084
        %v2174 = vunpack.c.l.b16 %v2085
        %v2175 = vunpack.c.l.b16 %v2086
        %v2176 = vunpack.c.l.b16 %v2087
        %v2177 = vunpack.c.l.b16 %v2088
        %v2178 = vunpack.c.l.b16 %v2089
        %v2179 = vunpack.c.l.b16 %v2090
        %v2180 = vunpack.c.l.b16 %v2091
        %v2181 = vunpack.c.l.b16 %v2092
        %v2182 = vunpack.c.l.b16 %v2093
        %v2183 = vunpack.c.l.b16 %v2094
        %v2184 = vunpack.c.l.b16 %v2095
        %v2185 = vunpack.c.l.b16 %v2096
        %v2186 = vunpack.c.l.b16 %v2097
        %v2187 = vunpack.c.l.b16 %v2098
        %v2188 = vunpack.c.l.b16 %v2099
        %v2189 = vunpack.c.l.b16 %v2100
        %v2190 = vunpack.c.l.b16 %v2101
        %v2191 = vunpack.c.l.b16 %v2102
        %v2192 = vunpack.c.l.b16 %v2103
        %v2193 = vunpack.c.l.b16 %v2104
        %v2194 = vunpack.c.l.b16 %v2105
        %v2195 = vunpack.c.l.b16 %v2106
        %v2196 = vunpack.c.l.b16 %v2107
        %v2197 = vunpack.c.l.b16 %v2108
        %v2198 = vunpack.c.l.b16 %v2109
        %v2199 = vunpack.c.l.b16 %v2110
        %v2200 = vunpack.c.l.b16 %v2111
        %v2201 = vpack.c.b16 %v2166, %v2165
        %v2202 = vpack.c.b16 %v2168, %v2167
        %v2203 = vpack.c.b16 %v2170, %v2169
        %v2204 = vpack.c.b16 %v2172, %v2171
        %v2205 = vpack.c.b16 %v2174, %v2173
        %v2206 = vpack.c.b16 %v2176, %v2175
        %v2207 = vpack.c.b16 %v2178, %v2177
        %v2208 = vpack.c.b16 %v2180, %v2179
        %v2209 = vpack.c.b16 %v2182, %v2181
        %v2210 = vpack.c.b16 %v2184, %v2183
        %v2211 = vpack.c.b16 %v2186, %v2185
        %v2212 = vpack.c.b16 %v2188, %v2187
        %v2213 = vpack.c.b16 %v2190, %v2189
        %v2214 = vpack.c.b16 %v2192, %v2191
        %v2215 = vpack.c.b16 %v2194, %v2193
        %v2216 = vpack.c.b16 %v2196, %v2195
        %v2217 = vpack.c.b16 %v2198, %v2197
        %v2218 = vpack.c.b16 %v2200, %v2199
        %v2219 = vrot.slane %v2201, 1
        %v2220 = vrot.slane %v2202, 1
        %v2221 = vsel %vm1761, %v2219, %v2220
        %v2222 = vrot.slane %v2203, 1
        %v2223 = vsel %vm1761, %v2220, %v2222
        %v2224 = vrot.slane %v2204, 1
        %v2225 = vsel %vm1761, %v2222, %v2224
        %v2226 = vrot.slane %v2205, 1
        %v2227 = vsel %vm1761, %v2224, %v2226
        %v2228 = vrot.slane %v2206, 1
        %v2229 = vsel %vm1761, %v2226, %v2228
        %v2230 = vrot.slane %v2207, 1
        %v2231 = vsel %vm1761, %v2228, %v2230
        %v2232 = vrot.slane %v2208, 1
        %v2233 = vsel %vm1761, %v2230, %v2232
        %v2234 = vrot.slane %v2209, 1
        %v2235 = vsel %vm1761, %v2232, %v2234
        %v2236 = vrot.slane %v2210, 1
        %v2237 = vsel %vm1761, %v2234, %v2236
        %v2238 = vrot.slane %v2211, 1
        %v2239 = vsel %vm1761, %v2236, %v2238
        %v2240 = vrot.slane %v2212, 1
        %v2241 = vsel %vm1761, %v2238, %v2240
        %v2242 = vrot.slane %v2213, 1
        %v2243 = vsel %vm1761, %v2240, %v2242
        %v2244 = vrot.slane %v2214, 1
        %v2245 = vsel %vm1761, %v2242, %v2244
        %v2246 = vrot.slane %v2215, 1
        %v2247 = vsel %vm1761, %v2244, %v2246
        %v2248 = vrot.slane %v2216, 1
        %v2249 = vsel %vm1761, %v2246, %v2248
        %v2250 = vrot.slane %v2217, 1
        %v2251 = vsel %vm1761, %v2248, %v2250
        %v2252 = vrot.slane %v2218, 1
        %v2253 = vsel %vm1761, %v2250, %v2252
        %v2288 = vunpack.c.l.b16 %v2113
        %v2289 = vunpack.c.l.b16 %v2114
        %v2290 = vunpack.c.l.b16 %v2115
        %v2291 = vunpack.c.l.b16 %v2116
        %v2292 = vunpack.c.l.b16 %v2117
        %v2293 = vunpack.c.l.b16 %v2118
        %v2294 = vunpack.c.l.b16 %v2119
        %v2295 = vunpack.c.l.b16 %v2120
        %v2296 = vunpack.c.l.b16 %v2121
        %v2297 = vunpack.c.l.b16 %v2122
        %v2298 = vunpack.c.l.b16 %v2123
        %v2299 = vunpack.c.l.b16 %v2124
        %v2300 = vunpack.c.l.b16 %v2125
        %v2301 = vunpack.c.l.b16 %v2126
        %v2302 = vunpack.c.l.b16 %v2127
        %v2303 = vunpack.c.l.b16 %v2128
        %v2304 = vpack.c.b16 %v2289, %v2288
        %v2305 = vpack.c.b16 %v2291, %v2290
        %v2306 = vpack.c.b16 %v2293, %v2292
        %v2307 = vpack.c.b16 %v2295, %v2294
        %v2308 = vpack.c.b16 %v2297, %v2296
        %v2309 = vpack.c.b16 %v2299, %v2298
        %v2310 = vpack.c.b16 %v2301, %v2300
        %v2311 = vpack.c.b16 %v2303, %v2302
        %2320 = vmatprep.subr.bf16.mxu0 0
        %2321 = vmatpush1.bf16.msra.mxu0 %v2304
        %2322 = vmatprep.subr.bf16.mxu0 0
        %2323 = vmatpush1.bf16.msra.mxu0 %v2305
        %2324 = vmatprep.subr.bf16.mxu0 0
        %2325 = vmatpush1.bf16.msra.mxu0 %v2306
        %2326 = vmatprep.subr.bf16.mxu0 0
        %2327 = vmatpush1.bf16.msra.mxu0 %v2307
        %2328 = vmatprep.subr.bf16.mxu0 0
        %2329 = vmatpush1.bf16.msra.mxu0 %v2308
        %2330 = vmatprep.subr.bf16.mxu0 0
        %2331 = vmatpush1.bf16.msra.mxu0 %v2309
        %2332 = vmatprep.subr.bf16.mxu0 0
        %2333 = vmatpush1.bf16.msra.mxu0 %v2310
        %2334 = vmatprep.subr.bf16.mxu0 0
        %2335 = vmatpush1.bf16.msra.mxu0 %v2311
        %2336 = vmatprep.subr.bf16.mxu0 0
        %2337 = vmatpush1.bf16.msra.mxu0 0
        %2338 = vmatprep.subr.bf16.mxu0 0
        %2339 = vmatpush1.bf16.msra.mxu0 0
        %2340 = vmatprep.subr.bf16.mxu0 0
        %2341 = vmatpush1.bf16.msra.mxu0 0
        %2342 = vmatprep.subr.bf16.mxu0 0
        %2343 = vmatpush1.bf16.msra.mxu0 0
        %2344 = vmatprep.subr.bf16.mxu0 0
        %2345 = vmatpush1.bf16.msra.mxu0 0
        %2346 = vmatprep.subr.bf16.mxu0 0
        %2347 = vmatpush1.bf16.msra.mxu0 0
        %2348 = vmatprep.subr.bf16.mxu0 0
        %2349 = vmatpush1.bf16.msra.mxu0 0
        %2350 = vmatprep.subr.bf16.mxu0 0
        %2351 = vmatpush1.bf16.msra.mxu0 0
        %2352 = vmatprep.mubr.bf16.mxu0 0
        %2353 = vmatmul.mubr.bf16.gmra.mrb[0].mxu0 %v2221
        %v2354 = vpop.f32.mrb[0].mxu0
        %v2355 = vadd.f32 0.0, %v2354
        %v2356 = vpop.f32.mrb[0].mxu0
        %v2357 = vpop.f32.mrb[0].mxu0
        %v2358 = vadd.f32 0.0, %v2357
        %v2359 = vpop.f32.mrb[0].mxu0
        %2360 = vmatprep.mubr.bf16.mxu0 0
        %2361 = vmatmul.mubr.bf16.gmra.mrb[0].mxu0 %v2223
        %v2362 = vpop.f32.mrb[0].mxu0
        %v2363 = vadd.f32 0.0, %v2362
        %v2364 = vpop.f32.mrb[0].mxu0
        %v2365 = vpop.f32.mrb[0].mxu0
        %v2366 = vadd.f32 0.0, %v2365
        %v2367 = vpop.f32.mrb[0].mxu0
        %2368 = vmatprep.mubr.bf16.mxu0 0
        %2369 = vmatmul.mubr.bf16.gmra.mrb[0].mxu0 %v2225
        %v2370 = vpop.f32.mrb[0].mxu0
        %v2371 = vadd.f32 0.0, %v2370
        %v2372 = vpop.f32.mrb[0].mxu0
        %v2373 = vpop.f32.mrb[0].mxu0
        %v2374 = vadd.f32 0.0, %v2373
        %v2375 = vpop.f32.mrb[0].mxu0
        %2376 = vmatprep.mubr.bf16.mxu0 0
        %2377 = vmatmul.mubr.bf16.gmra.mrb[0].mxu0 %v2227
        %v2378 = vpop.f32.mrb[0].mxu0
        %v2379 = vadd.f32 0.0, %v2378
        %v2380 = vpop.f32.mrb[0].mxu0
        %v2381 = vpop.f32.mrb[0].mxu0
        %v2382 = vadd.f32 0.0, %v2381
        %v2383 = vpop.f32.mrb[0].mxu0
        %2384 = vmatprep.mubr.bf16.mxu0 0
        %2385 = vmatmul.mubr.bf16.gmra.mrb[0].mxu0 %v2229
        %v2386 = vpop.f32.mrb[0].mxu0
        %v2387 = vadd.f32 0.0, %v2386
        %v2388 = vpop.f32.mrb[0].mxu0
        %v2389 = vpop.f32.mrb[0].mxu0
        %v2390 = vadd.f32 0.0, %v2389
        %v2391 = vpop.f32.mrb[0].mxu0
        %2392 = vmatprep.mubr.bf16.mxu0 0
        %2393 = vmatmul.mubr.bf16.gmra.mrb[0].mxu0 %v2231
        %v2394 = vpop.f32.mrb[0].mxu0
        %v2395 = vadd.f32 0.0, %v2394
        %v2396 = vpop.f32.mrb[0].mxu0
        %v2397 = vpop.f32.mrb[0].mxu0
        %v2398 = vadd.f32 0.0, %v2397
        %v2399 = vpop.f32.mrb[0].mxu0
        %2400 = vmatprep.mubr.bf16.mxu0 0
        %2401 = vmatmul.mubr.bf16.gmra.mrb[0].mxu0 %v2233
        %v2402 = vpop.f32.mrb[0].mxu0
        %v2403 = vadd.f32 0.0, %v2402
        %v2404 = vpop.f32.mrb[0].mxu0
        %v2405 = vpop.f32.mrb[0].mxu0
        %v2406 = vadd.f32 0.0, %v2405
        %v2407 = vpop.f32.mrb[0].mxu0
        %2408 = vmatprep.mubr.bf16.mxu0 0
        %2409 = vmatmul.mubr.bf16.gmra.mrb[0].mxu0 %v2235
        %v2410 = vpop.f32.mrb[0].mxu0
        %v2411 = vadd.f32 0.0, %v2410
        %v2412 = vpop.f32.mrb[0].mxu0
        %v2413 = vpop.f32.mrb[0].mxu0
        %v2414 = vadd.f32 0.0, %v2413
        %v2415 = vpop.f32.mrb[0].mxu0
        %2416 = vmatprep.mubr.bf16.mxu0 0
        %2417 = vmatmul.mubr.bf16.gmra.mrb[0].mxu0 %v2237
        %v2418 = vpop.f32.mrb[0].mxu0
        %v2419 = vadd.f32 0.0, %v2418
        %v2420 = vpop.f32.mrb[0].mxu0
        %v2421 = vpop.f32.mrb[0].mxu0
        %v2422 = vadd.f32 0.0, %v2421
        %v2423 = vpop.f32.mrb[0].mxu0
        %2424 = vmatprep.mubr.bf16.mxu0 0
        %2425 = vmatmul.mubr.bf16.gmra.mrb[0].mxu0 %v2239
        %v2426 = vpop.f32.mrb[0].mxu0
        %v2427 = vadd.f32 0.0, %v2426
        %v2428 = vpop.f32.mrb[0].mxu0
        %v2429 = vpop.f32.mrb[0].mxu0
        %v2430 = vadd.f32 0.0, %v2429
        %v2431 = vpop.f32.mrb[0].mxu0
        %2432 = vmatprep.mubr.bf16.mxu0 0
        %2433 = vmatmul.mubr.bf16.gmra.mrb[0].mxu0 %v2241
        %v2434 = vpop.f32.mrb[0].mxu0
        %v2435 = vadd.f32 0.0, %v2434
        %v2436 = vpop.f32.mrb[0].mxu0
        %v2437 = vpop.f32.mrb[0].mxu0
        %v2438 = vadd.f32 0.0, %v2437
        %v2439 = vpop.f32.mrb[0].mxu0
        %2440 = vmatprep.mubr.bf16.mxu0 0
        %2441 = vmatmul.mubr.bf16.gmra.mrb[0].mxu0 %v2243
        %v2442 = vpop.f32.mrb[0].mxu0
        %v2443 = vadd.f32 0.0, %v2442
        %v2444 = vpop.f32.mrb[0].mxu0
        %v2445 = vpop.f32.mrb[0].mxu0
        %v2446 = vadd.f32 0.0, %v2445
        %v2447 = vpop.f32.mrb[0].mxu0
        %2448 = vmatprep.mubr.bf16.mxu0 0
        %2449 = vmatmul.mubr.bf16.gmra.mrb[0].mxu0 %v2245
        %v2450 = vpop.f32.mrb[0].mxu0
        %v2451 = vadd.f32 0.0, %v2450
        %v2452 = vpop.f32.mrb[0].mxu0
        %v2453 = vpop.f32.mrb[0].mxu0
        %v2454 = vadd.f32 0.0, %v2453
        %v2455 = vpop.f32.mrb[0].mxu0
        %2456 = vmatprep.mubr.bf16.mxu0 0
        %2457 = vmatmul.mubr.bf16.gmra.mrb[0].mxu0 %v2247
        %v2458 = vpop.f32.mrb[0].mxu0
        %v2459 = vadd.f32 0.0, %v2458
        %v2460 = vpop.f32.mrb[0].mxu0
        %v2461 = vpop.f32.mrb[0].mxu0
        %v2462 = vadd.f32 0.0, %v2461
        %v2463 = vpop.f32.mrb[0].mxu0
        %2464 = vmatprep.mubr.bf16.mxu0 0
        %2465 = vmatmul.mubr.bf16.gmra.mrb[0].mxu0 %v2249
        %v2466 = vpop.f32.mrb[0].mxu0
        %v2467 = vadd.f32 0.0, %v2466
        %v2468 = vpop.f32.mrb[0].mxu0
        %v2469 = vpop.f32.mrb[0].mxu0
        %v2470 = vadd.f32 0.0, %v2469
        %v2471 = vpop.f32.mrb[0].mxu0
        %2472 = vmatprep.mubr.bf16.mxu0 0
        %2473 = vmatmul.mubr.bf16.gmra.mrb[0].mxu0 %v2251
        %v2474 = vpop.f32.mrb[0].mxu0
        %v2475 = vadd.f32 0.0, %v2474
        %v2476 = vpop.f32.mrb[0].mxu0
        %v2477 = vpop.f32.mrb[0].mxu0
        %v2478 = vadd.f32 0.0, %v2477
        %v2479 = vpop.f32.mrb[0].mxu0
        %2480 = vmatprep.mubr.bf16.mxu0 0
        %2481 = vmatmul.mubr.bf16.gmra.mrb[0].mxu0 %v2253
        %v2482 = vpop.f32.mrb[0].mxu0
        %v2483 = vadd.f32 0.0, %v2482
        %v2484 = vpop.f32.mrb[0].mxu0
        %v2485 = vpop.f32.mrb[0].mxu0
        %v2486 = vadd.f32 0.0, %v2485
        %v2487 = vpop.f32.mrb[0].mxu0
        %2488 = vmatprep.mubr.bf16.mxu0 0
        %2489 = vmatmul.mubr.bf16.gmra.mrb[0].mxu0 %v2252
        %v2490 = vpop.f32.mrb[0].mxu0
        %v2491 = vadd.f32 0.0, %v2490
        %v2492 = vpop.f32.mrb[0].mxu0
        %v2493 = vpop.f32.mrb[0].mxu0
        %v2494 = vadd.f32 0.0, %v2493
        %v2495 = vpop.f32.mrb[0].mxu0
        %2496 = vdwg.mxu0
        %v2497 = vadd.f32 %v2040, %v2355
        %v2498 = vadd.f32 %v2041, %v2358
        %v2499 = vadd.f32 %v2042, %v2363
        %v2500 = vadd.f32 %v2043, %v2366
        %v2501 = vadd.f32 %v2044, %v2371
        %v2502 = vadd.f32 %v2045, %v2374
        %v2503 = vadd.f32 %v2046, %v2379
        %v2504 = vadd.f32 %v2047, %v2382
        %v2505 = vadd.f32 %v2048, %v2387
        %v2506 = vadd.f32 %v2049, %v2390
        %v2507 = vadd.f32 %v2050, %v2395
        %v2508 = vadd.f32 %v2051, %v2398
        %v2509 = vadd.f32 %v2052, %v2403
        %v2510 = vadd.f32 %v2053, %v2406
        %v2511 = vadd.f32 %v2054, %v2411
        %v2512 = vadd.f32 %v2055, %v2414
        %v2513 = vadd.f32 %v2056, %v2419
        %v2514 = vadd.f32 %v2057, %v2422
        %v2515 = vadd.f32 %v2058, %v2427
        %v2516 = vadd.f32 %v2059, %v2430
        %v2517 = vadd.f32 %v2060, %v2435
        %v2518 = vadd.f32 %v2061, %v2438
        %v2519 = vadd.f32 %v2062, %v2443
        %v2520 = vadd.f32 %v2063, %v2446
        %v2521 = vadd.f32 %v2064, %v2451
        %v2522 = vadd.f32 %v2065, %v2454
        %v2523 = vadd.f32 %v2066, %v2459
        %v2524 = vadd.f32 %v2067, %v2462
        %v2525 = vadd.f32 %v2068, %v2467
        %v2526 = vadd.f32 %v2069, %v2470
        %v2527 = vadd.f32 %v2070, %v2475
        %v2528 = vadd.f32 %v2071, %v2478
        %v2529 = vadd.f32 %v2072, %v2483
        %v2530 = vadd.f32 %v2073, %v2486
        %v2531 = vadd.f32 %v2074, %v2491
        %v2532 = vadd.f32 %v2075, %v2494
        %v2533 = vld [vmem:[%s254 + $0x8] sm:$0xe]
        %v2534 = vld [vmem:[%s254 + $0xc] sm:$0xf]
        %v2535 = vld [vmem:[%s254 + $0x10] sm:$0xf]
        %v2536 = vld [vmem:[%s254 + $0x14] sm:$0xf]
        %v2537 = vld [vmem:[%s254 + $0x18] sm:$0xf]
        %v2538 = vld [vmem:[%s254 + $0x1c] sm:$0xf]
        %v2539 = vld [vmem:[%s254 + $0x20] sm:$0xf]
        %v2540 = vld [vmem:[%s254 + $0x24] sm:$0xf]
        %v2541 = vld [vmem:[%s254 + $0x28] sm:$0xf]
        %v2542 = vld [vmem:[%s254 + $0x2c] sm:$0xf]
        %v2543 = vld [vmem:[%s254 + $0x30] sm:$0xf]
        %v2544 = vld [vmem:[%s254 + $0x34] sm:$0xf]
        %v2545 = vld [vmem:[%s254 + $0x38] sm:$0xf]
        %v2546 = vld [vmem:[%s254 + $0x3c] sm:$0xf]
        %v2547 = vld [vmem:[%s254 + $0x40] sm:$0xf]
        %v2548 = vld [vmem:[%s254 + $0x44] sm:$0xf]
        %v2549 = vld [vmem:[%s254 + $0x48] sm:$0xf]
        %v2550 = vld [vmem:[%s254 + $0x4c] sm:$0xf]
        %v2551 = vld [vmem:[%s254 + $0x50] sm:$0xf]
        %v2552 = vld [vmem:[%s254 + $0x54] sm:$0xf]
        %v2553 = vld [vmem:[%s254 + $0x58] sm:$0xf]
        %v2554 = vld [vmem:[%s254 + $0x5c] sm:$0xf]
        %v2555 = vld [vmem:[%s254 + $0x60] sm:$0xf]
        %v2556 = vld [vmem:[%s254 + $0x64] sm:$0xf]
        %v2557 = vld [vmem:[%s254 + $0x68] sm:$0xf]
        %v2558 = vld [vmem:[%s254 + $0x6c] sm:$0xf]
        %v2559 = vld [vmem:[%s254 + $0x70] sm:$0xf]
        %v2560 = vld [vmem:[%s254 + $0x74] sm:$0xf]
        %v2561 = vld [vmem:[%s254 + $0x78] sm:$0xf]
        %v2562 = vld [vmem:[%s254 + $0x7c] sm:$0xf]
        %v2563 = vld [vmem:[%s254 + $0x80] sm:$0xf]
        %v2564 = vld [vmem:[%s254 + $0x84] sm:$0xf]
        %v2565 = vld [vmem:[%s254 + $0x88] sm:$0xf]
        %v2566 = vld [vmem:[%s254 + $0x8c] sm:$0xf]
        %v2567 = vld [vmem:[%s254 + $0x90] sm:$0xf]
        %v2568 = vld [vmem:[%s254 + $0x94] sm:$0xf]
        %v2569 = vld [vmem:[%s254 + $0x98] sm:$0x1]
        %s2570 = scalar_lea.vmem [#allocation6], 256
        %v2571 = vld [vmem:[%s2570] sm:$0xf]
        %v2572 = vld [vmem:[%s2570 + $0x4] sm:$0xf]
        %v2573 = vld [vmem:[%s2570 + $0x8] sm:$0xf]
        %v2574 = vld [vmem:[%s2570 + $0xc] sm:$0xf]
        %v2575 = vld [vmem:[%s2570 + $0x10] sm:$0xf]
        %v2576 = vld [vmem:[%s2570 + $0x14] sm:$0xf]
        %v2577 = vld [vmem:[%s2570 + $0x18] sm:$0xf]
        %v2578 = vld [vmem:[%s2570 + $0x1c] sm:$0xf]
        %v2579 = vld [vmem:[%s2570 + $0x20] sm:$0xf]
        %v2580 = vld [vmem:[%s2570 + $0x24] sm:$0xf]
        %v2581 = vld [vmem:[%s2570 + $0x28] sm:$0xf]
        %v2582 = vld [vmem:[%s2570 + $0x2c] sm:$0xf]
        %v2583 = vld [vmem:[%s2570 + $0x30] sm:$0xf]
        %v2584 = vld [vmem:[%s2570 + $0x34] sm:$0xf]
        %v2585 = vld [vmem:[%s2570 + $0x38] sm:$0xf]
        %v2586 = vld [vmem:[%s2570 + $0x3c] sm:$0xf]
        %v2624 = vunpack.c.l.b16 %v2533
        %v2625 = vunpack.c.l.b16 %v2534
        %v2626 = vunpack.c.l.b16 %v2535
        %v2627 = vunpack.c.l.b16 %v2536
        %v2628 = vunpack.c.l.b16 %v2537
        %v2629 = vunpack.c.l.b16 %v2538
        %v2630 = vunpack.c.l.b16 %v2539
        %v2631 = vunpack.c.l.b16 %v2540
        %v2632 = vunpack.c.l.b16 %v2541
        %v2633 = vunpack.c.l.b16 %v2542
        %v2634 = vunpack.c.l.b16 %v2543
        %v2635 = vunpack.c.l.b16 %v2544
        %v2636 = vunpack.c.l.b16 %v2545
        %v2637 = vunpack.c.l.b16 %v2546
        %v2638 = vunpack.c.l.b16 %v2547
        %v2639 = vunpack.c.l.b16 %v2548
        %v2640 = vunpack.c.l.b16 %v2549
        %v2641 = vunpack.c.l.b16 %v2550
        %v2642 = vunpack.c.l.b16 %v2551
        %v2643 = vunpack.c.l.b16 %v2552
        %v2644 = vunpack.c.l.b16 %v2553
        %v2645 = vunpack.c.l.b16 %v2554
        %v2646 = vunpack.c.l.b16 %v2555
        %v2647 = vunpack.c.l.b16 %v2556
        %v2648 = vunpack.c.l.b16 %v2557
        %v2649 = vunpack.c.l.b16 %v2558
        %v2650 = vunpack.c.l.b16 %v2559
        %v2651 = vunpack.c.l.b16 %v2560
        %v2652 = vunpack.c.l.b16 %v2561
        %v2653 = vunpack.c.l.b16 %v2562
        %v2654 = vunpack.c.l.b16 %v2563
        %v2655 = vunpack.c.l.b16 %v2564
        %v2656 = vunpack.c.l.b16 %v2565
        %v2657 = vunpack.c.l.b16 %v2566
        %v2658 = vunpack.c.l.b16 %v2567
        %v2659 = vunpack.c.l.b16 %v2568
        %v2660 = vunpack.c.l.b16 %v2569
        %v2661 = vpack.c.b16 %v2625, %v2624
        %v2662 = vpack.c.b16 %v2627, %v2626
        %v2663 = vpack.c.b16 %v2629, %v2628
        %v2664 = vpack.c.b16 %v2631, %v2630
        %v2665 = vpack.c.b16 %v2633, %v2632
        %v2666 = vpack.c.b16 %v2635, %v2634
        %v2667 = vpack.c.b16 %v2637, %v2636
        %v2668 = vpack.c.b16 %v2639, %v2638
        %v2669 = vpack.c.b16 %v2641, %v2640
        %v2670 = vpack.c.b16 %v2643, %v2642
        %v2671 = vpack.c.b16 %v2645, %v2644
        %v2672 = vpack.c.b16 %v2647, %v2646
        %v2673 = vpack.c.b16 %v2649, %v2648
        %v2674 = vpack.c.b16 %v2651, %v2650
        %v2675 = vpack.c.b16 %v2653, %v2652
        %v2676 = vpack.c.b16 %v2655, %v2654
        %v2677 = vpack.c.b16 %v2657, %v2656
        %v2678 = vpack.c.b16 %v2659, %v2658
        %v2679 = vpack.c.b16 %v2660, %v2660
        %vm2680 = vsmask.f32 6400
        %v2682 = vshrl.u32 %v2661, 16
        %v2684 = vrot.slane %v2682, 1
        %v2685 = vshll.u32 %v2661, 16
        %v2687 = vrot.slane %v2685, 2
        %v2688 = vor.u32 %v2684, %v2687
        %v2690 = vshrl.u32 %v2662, 16
        %v2692 = vrot.slane %v2690, 1
        %v2693 = vshll.u32 %v2662, 16
        %v2695 = vrot.slane %v2693, 2
        %v2696 = vor.u32 %v2692, %v2695
        %v2697 = vsel %vm2680, %v2688, %v2696
        %v2699 = vshrl.u32 %v2663, 16
        %v2701 = vrot.slane %v2699, 1
        %v2702 = vshll.u32 %v2663, 16
        %v2704 = vrot.slane %v2702, 2
        %v2705 = vor.u32 %v2701, %v2704
        %v2706 = vsel %vm2680, %v2696, %v2705
        %v2708 = vshrl.u32 %v2664, 16
        %v2710 = vrot.slane %v2708, 1
        %v2711 = vshll.u32 %v2664, 16
        %v2713 = vrot.slane %v2711, 2
        %v2714 = vor.u32 %v2710, %v2713
        %v2715 = vsel %vm2680, %v2705, %v2714
        %v2717 = vshrl.u32 %v2665, 16
        %v2719 = vrot.slane %v2717, 1
        %v2720 = vshll.u32 %v2665, 16
        %v2722 = vrot.slane %v2720, 2
        %v2723 = vor.u32 %v2719, %v2722
        %v2724 = vsel %vm2680, %v2714, %v2723
        %v2726 = vshrl.u32 %v2666, 16
        %v2728 = vrot.slane %v2726, 1
        %v2729 = vshll.u32 %v2666, 16
        %v2731 = vrot.slane %v2729, 2
        %v2732 = vor.u32 %v2728, %v2731
        %v2733 = vsel %vm2680, %v2723, %v2732
        %v2735 = vshrl.u32 %v2667, 16
        %v2737 = vrot.slane %v2735, 1
        %v2738 = vshll.u32 %v2667, 16
        %v2740 = vrot.slane %v2738, 2
        %v2741 = vor.u32 %v2737, %v2740
        %v2742 = vsel %vm2680, %v2732, %v2741
        %v2744 = vshrl.u32 %v2668, 16
        %v2746 = vrot.slane %v2744, 1
        %v2747 = vshll.u32 %v2668, 16
        %v2749 = vrot.slane %v2747, 2
        %v2750 = vor.u32 %v2746, %v2749
        %v2751 = vsel %vm2680, %v2741, %v2750
        %v2753 = vshrl.u32 %v2669, 16
        %v2755 = vrot.slane %v2753, 1
        %v2756 = vshll.u32 %v2669, 16
        %v2758 = vrot.slane %v2756, 2
        %v2759 = vor.u32 %v2755, %v2758
        %v2760 = vsel %vm2680, %v2750, %v2759
        %v2762 = vshrl.u32 %v2670, 16
        %v2764 = vrot.slane %v2762, 1
        %v2765 = vshll.u32 %v2670, 16
        %v2767 = vrot.slane %v2765, 2
        %v2768 = vor.u32 %v2764, %v2767
        %v2769 = vsel %vm2680, %v2759, %v2768
        %v2771 = vshrl.u32 %v2671, 16
        %v2773 = vrot.slane %v2771, 1
        %v2774 = vshll.u32 %v2671, 16
        %v2776 = vrot.slane %v2774, 2
        %v2777 = vor.u32 %v2773, %v2776
        %v2778 = vsel %vm2680, %v2768, %v2777
        %v2780 = vshrl.u32 %v2672, 16
        %v2782 = vrot.slane %v2780, 1
        %v2783 = vshll.u32 %v2672, 16
        %v2785 = vrot.slane %v2783, 2
        %v2786 = vor.u32 %v2782, %v2785
        %v2787 = vsel %vm2680, %v2777, %v2786
        %v2789 = vshrl.u32 %v2673, 16
        %v2791 = vrot.slane %v2789, 1
        %v2792 = vshll.u32 %v2673, 16
        %v2794 = vrot.slane %v2792, 2
        %v2795 = vor.u32 %v2791, %v2794
        %v2796 = vsel %vm2680, %v2786, %v2795
        %v2798 = vshrl.u32 %v2674, 16
        %v2800 = vrot.slane %v2798, 1
        %v2801 = vshll.u32 %v2674, 16
        %v2803 = vrot.slane %v2801, 2
        %v2804 = vor.u32 %v2800, %v2803
        %v2805 = vsel %vm2680, %v2795, %v2804
        %v2807 = vshrl.u32 %v2675, 16
        %v2809 = vrot.slane %v2807, 1
        %v2810 = vshll.u32 %v2675, 16
        %v2812 = vrot.slane %v2810, 2
        %v2813 = vor.u32 %v2809, %v2812
        %v2814 = vsel %vm2680, %v2804, %v2813
        %v2816 = vshrl.u32 %v2676, 16
        %v2818 = vrot.slane %v2816, 1
        %v2819 = vshll.u32 %v2676, 16
        %v2821 = vrot.slane %v2819, 2
        %v2822 = vor.u32 %v2818, %v2821
        %v2823 = vsel %vm2680, %v2813, %v2822
        %v2825 = vshrl.u32 %v2677, 16
        %v2827 = vrot.slane %v2825, 1
        %v2828 = vshll.u32 %v2677, 16
        %v2830 = vrot.slane %v2828, 2
        %v2831 = vor.u32 %v2827, %v2830
        %v2832 = vsel %vm2680, %v2822, %v2831
        %v2834 = vshrl.u32 %v2678, 16
        %v2836 = vrot.slane %v2834, 1
        %v2837 = vshll.u32 %v2678, 16
        %v2839 = vrot.slane %v2837, 2
        %v2840 = vor.u32 %v2836, %v2839
        %v2841 = vsel %vm2680, %v2831, %v2840
        %v2843 = vshll.u32 %v2679, 16
        %v2845 = vrot.slane %v2843, 2
        %v2846 = vsel %vm2680, %v2840, %v2845
        %v2881 = vunpack.c.l.b16 %v2571
        %v2882 = vunpack.c.l.b16 %v2572
        %v2883 = vunpack.c.l.b16 %v2573
        %v2884 = vunpack.c.l.b16 %v2574
        %v2885 = vunpack.c.l.b16 %v2575
        %v2886 = vunpack.c.l.b16 %v2576
        %v2887 = vunpack.c.l.b16 %v2577
        %v2888 = vunpack.c.l.b16 %v2578
        %v2889 = vunpack.c.l.b16 %v2579
        %v2890 = vunpack.c.l.b16 %v2580
        %v2891 = vunpack.c.l.b16 %v2581
        %v2892 = vunpack.c.l.b16 %v2582
        %v2893 = vunpack.c.l.b16 %v2583
        %v2894 = vunpack.c.l.b16 %v2584
        %v2895 = vunpack.c.l.b16 %v2585
        %v2896 = vunpack.c.l.b16 %v2586
        %v2897 = vpack.c.b16 %v2882, %v2881
        %v2898 = vpack.c.b16 %v2884, %v2883
        %v2899 = vpack.c.b16 %v2886, %v2885
        %v2900 = vpack.c.b16 %v2888, %v2887
        %v2901 = vpack.c.b16 %v2890, %v2889
        %v2902 = vpack.c.b16 %v2892, %v2891
        %v2903 = vpack.c.b16 %v2894, %v2893
        %v2904 = vpack.c.b16 %v2896, %v2895
        %2913 = vmatprep.subr.bf16.mxu0 0
        %2914 = vmatpush1.bf16.msra.mxu0 %v2897
        %2915 = vmatprep.subr.bf16.mxu0 0
        %2916 = vmatpush1.bf16.msra.mxu0 %v2898
        %2917 = vmatprep.subr.bf16.mxu0 0
        %2918 = vmatpush1.bf16.msra.mxu0 %v2899
        %2919 = vmatprep.subr.bf16.mxu0 0
        %2920 = vmatpush1.bf16.msra.mxu0 %v2900
        %2921 = vmatprep.subr.bf16.mxu0 0
        %2922 = vmatpush1.bf16.msra.mxu0 %v2901
        %2923 = vmatprep.subr.bf16.mxu0 0
        %2924 = vmatpush1.bf16.msra.mxu0 %v2902
        %2925 = vmatprep.subr.bf16.mxu0 0
        %2926 = vmatpush1.bf16.msra.mxu0 %v2903
        %2927 = vmatprep.subr.bf16.mxu0 0
        %2928 = vmatpush1.bf16.msra.mxu0 %v2904
        %2929 = vmatprep.subr.bf16.mxu0 0
        %2930 = vmatpush1.bf16.msra.mxu0 0
        %2931 = vmatprep.subr.bf16.mxu0 0
        %2932 = vmatpush1.bf16.msra.mxu0 0
        %2933 = vmatprep.subr.bf16.mxu0 0
        %2934 = vmatpush1.bf16.msra.mxu0 0
        %2935 = vmatprep.subr.bf16.mxu0 0
        %2936 = vmatpush1.bf16.msra.mxu0 0
        %2937 = vmatprep.subr.bf16.mxu0 0
        %2938 = vmatpush1.bf16.msra.mxu0 0
        %2939 = vmatprep.subr.bf16.mxu0 0
        %2940 = vmatpush1.bf16.msra.mxu0 0
        %2941 = vmatprep.subr.bf16.mxu0 0
        %2942 = vmatpush1.bf16.msra.mxu0 0
        %2943 = vmatprep.subr.bf16.mxu0 0
        %2944 = vmatpush1.bf16.msra.mxu0 0
        %2945 = vmatprep.mubr.bf16.mxu0 0
        %2946 = vmatmul.mubr.bf16.gmra.mrb[0].mxu0 %v2697
        %v2947 = vpop.f32.mrb[0].mxu0
        %v2948 = vadd.f32 0.0, %v2947
        %v2949 = vpop.f32.mrb[0].mxu0
        %v2950 = vpop.f32.mrb[0].mxu0
        %v2951 = vadd.f32 0.0, %v2950
        %v2952 = vpop.f32.mrb[0].mxu0
        %2953 = vmatprep.mubr.bf16.mxu0 0
        %2954 = vmatmul.mubr.bf16.gmra.mrb[0].mxu0 %v2706
        %v2955 = vpop.f32.mrb[0].mxu0
        %v2956 = vadd.f32 0.0, %v2955
        %v2957 = vpop.f32.mrb[0].mxu0
        %v2958 = vpop.f32.mrb[0].mxu0
        %v2959 = vadd.f32 0.0, %v2958
        %v2960 = vpop.f32.mrb[0].mxu0
        %2961 = vmatprep.mubr.bf16.mxu0 0
        %2962 = vmatmul.mubr.bf16.gmra.mrb[0].mxu0 %v2715
        %v2963 = vpop.f32.mrb[0].mxu0
        %v2964 = vadd.f32 0.0, %v2963
        %v2965 = vpop.f32.mrb[0].mxu0
        %v2966 = vpop.f32.mrb[0].mxu0
        %v2967 = vadd.f32 0.0, %v2966
        %v2968 = vpop.f32.mrb[0].mxu0
        %2969 = vmatprep.mubr.bf16.mxu0 0
        %2970 = vmatmul.mubr.bf16.gmra.mrb[0].mxu0 %v2724
        %v2971 = vpop.f32.mrb[0].mxu0
        %v2972 = vadd.f32 0.0, %v2971
        %v2973 = vpop.f32.mrb[0].mxu0
        %v2974 = vpop.f32.mrb[0].mxu0
        %v2975 = vadd.f32 0.0, %v2974
        %v2976 = vpop.f32.mrb[0].mxu0
        %2977 = vmatprep.mubr.bf16.mxu0 0
        %2978 = vmatmul.mubr.bf16.gmra.mrb[0].mxu0 %v2733
        %v2979 = vpop.f32.mrb[0].mxu0
        %v2980 = vadd.f32 0.0, %v2979
        %v2981 = vpop.f32.mrb[0].mxu0
        %v2982 = vpop.f32.mrb[0].mxu0
        %v2983 = vadd.f32 0.0, %v2982
        %v2984 = vpop.f32.mrb[0].mxu0
        %2985 = vmatprep.mubr.bf16.mxu0 0
        %2986 = vmatmul.mubr.bf16.gmra.mrb[0].mxu0 %v2742
        %v2987 = vpop.f32.mrb[0].mxu0
        %v2988 = vadd.f32 0.0, %v2987
        %v2989 = vpop.f32.mrb[0].mxu0
        %v2990 = vpop.f32.mrb[0].mxu0
        %v2991 = vadd.f32 0.0, %v2990
        %v2992 = vpop.f32.mrb[0].mxu0
        %2993 = vmatprep.mubr.bf16.mxu0 0
        %2994 = vmatmul.mubr.bf16.gmra.mrb[0].mxu0 %v2751
        %v2995 = vpop.f32.mrb[0].mxu0
        %v2996 = vadd.f32 0.0, %v2995
        %v2997 = vpop.f32.mrb[0].mxu0
        %v2998 = vpop.f32.mrb[0].mxu0
        %v2999 = vadd.f32 0.0, %v2998
        %v3000 = vpop.f32.mrb[0].mxu0
        %3001 = vmatprep.mubr.bf16.mxu0 0
        %3002 = vmatmul.mubr.bf16.gmra.mrb[0].mxu0 %v2760
        %v3003 = vpop.f32.mrb[0].mxu0
        %v3004 = vadd.f32 0.0, %v3003
        %v3005 = vpop.f32.mrb[0].mxu0
        %v3006 = vpop.f32.mrb[0].mxu0
        %v3007 = vadd.f32 0.0, %v3006
        %v3008 = vpop.f32.mrb[0].mxu0
        %3009 = vmatprep.mubr.bf16.mxu0 0
        %3010 = vmatmul.mubr.bf16.gmra.mrb[0].mxu0 %v2769
        %v3011 = vpop.f32.mrb[0].mxu0
        %v3012 = vadd.f32 0.0, %v3011
        %v3013 = vpop.f32.mrb[0].mxu0
        %v3014 = vpop.f32.mrb[0].mxu0
        %v3015 = vadd.f32 0.0, %v3014
        %v3016 = vpop.f32.mrb[0].mxu0
        %3017 = vmatprep.mubr.bf16.mxu0 0
        %3018 = vmatmul.mubr.bf16.gmra.mrb[0].mxu0 %v2778
        %v3019 = vpop.f32.mrb[0].mxu0
        %v3020 = vadd.f32 0.0, %v3019
        %v3021 = vpop.f32.mrb[0].mxu0
        %v3022 = vpop.f32.mrb[0].mxu0
        %v3023 = vadd.f32 0.0, %v3022
        %v3024 = vpop.f32.mrb[0].mxu0
        %3025 = vmatprep.mubr.bf16.mxu0 0
        %3026 = vmatmul.mubr.bf16.gmra.mrb[0].mxu0 %v2787
        %v3027 = vpop.f32.mrb[0].mxu0
        %v3028 = vadd.f32 0.0, %v3027
        %v3029 = vpop.f32.mrb[0].mxu0
        %v3030 = vpop.f32.mrb[0].mxu0
        %v3031 = vadd.f32 0.0, %v3030
        %v3032 = vpop.f32.mrb[0].mxu0
        %3033 = vmatprep.mubr.bf16.mxu0 0
        %3034 = vmatmul.mubr.bf16.gmra.mrb[0].mxu0 %v2796
        %v3035 = vpop.f32.mrb[0].mxu0
        %v3036 = vadd.f32 0.0, %v3035
        %v3037 = vpop.f32.mrb[0].mxu0
        %v3038 = vpop.f32.mrb[0].mxu0
        %v3039 = vadd.f32 0.0, %v3038
        %v3040 = vpop.f32.mrb[0].mxu0
        %3041 = vmatprep.mubr.bf16.mxu0 0
        %3042 = vmatmul.mubr.bf16.gmra.mrb[0].mxu0 %v2805
        %v3043 = vpop.f32.mrb[0].mxu0
        %v3044 = vadd.f32 0.0, %v3043
        %v3045 = vpop.f32.mrb[0].mxu0
        %v3046 = vpop.f32.mrb[0].mxu0
        %v3047 = vadd.f32 0.0, %v3046
        %v3048 = vpop.f32.mrb[0].mxu0
        %3049 = vmatprep.mubr.bf16.mxu0 0
        %3050 = vmatmul.mubr.bf16.gmra.mrb[0].mxu0 %v2814
        %v3051 = vpop.f32.mrb[0].mxu0
        %v3052 = vadd.f32 0.0, %v3051
        %v3053 = vpop.f32.mrb[0].mxu0
        %v3054 = vpop.f32.mrb[0].mxu0
        %v3055 = vadd.f32 0.0, %v3054
        %v3056 = vpop.f32.mrb[0].mxu0
        %3057 = vmatprep.mubr.bf16.mxu0 0
        %3058 = vmatmul.mubr.bf16.gmra.mrb[0].mxu0 %v2823
        %v3059 = vpop.f32.mrb[0].mxu0
        %v3060 = vadd.f32 0.0, %v3059
        %v3061 = vpop.f32.mrb[0].mxu0
        %v3062 = vpop.f32.mrb[0].mxu0
        %v3063 = vadd.f32 0.0, %v3062
        %v3064 = vpop.f32.mrb[0].mxu0
        %3065 = vmatprep.mubr.bf16.mxu0 0
        %3066 = vmatmul.mubr.bf16.gmra.mrb[0].mxu0 %v2832
        %v3067 = vpop.f32.mrb[0].mxu0
        %v3068 = vadd.f32 0.0, %v3067
        %v3069 = vpop.f32.mrb[0].mxu0
        %v3070 = vpop.f32.mrb[0].mxu0
        %v3071 = vadd.f32 0.0, %v3070
        %v3072 = vpop.f32.mrb[0].mxu0
        %3073 = vmatprep.mubr.bf16.mxu0 0
        %3074 = vmatmul.mubr.bf16.gmra.mrb[0].mxu0 %v2841
        %v3075 = vpop.f32.mrb[0].mxu0
        %v3076 = vadd.f32 0.0, %v3075
        %v3077 = vpop.f32.mrb[0].mxu0
        %v3078 = vpop.f32.mrb[0].mxu0
        %v3079 = vadd.f32 0.0, %v3078
        %v3080 = vpop.f32.mrb[0].mxu0
        %3081 = vmatprep.mubr.bf16.mxu0 0
        %3082 = vmatmul.mubr.bf16.gmra.mrb[0].mxu0 %v2846
        %v3083 = vpop.f32.mrb[0].mxu0
        %v3084 = vadd.f32 0.0, %v3083
        %v3085 = vpop.f32.mrb[0].mxu0
        %v3086 = vpop.f32.mrb[0].mxu0
        %v3087 = vadd.f32 0.0, %v3086
        %v3088 = vpop.f32.mrb[0].mxu0
        %3089 = vdwg.mxu0
        %v3090 = vadd.f32 %v2497, %v2948
        %v3091 = vadd.f32 %v2498, %v2951
        %v3092 = vadd.f32 %v2499, %v2956
        %v3093 = vadd.f32 %v2500, %v2959
        %v3094 = vadd.f32 %v2501, %v2964
        %v3095 = vadd.f32 %v2502, %v2967
        %v3096 = vadd.f32 %v2503, %v2972
        %v3097 = vadd.f32 %v2504, %v2975
        %v3098 = vadd.f32 %v2505, %v2980
        %v3099 = vadd.f32 %v2506, %v2983
        %v3100 = vadd.f32 %v2507, %v2988
        %v3101 = vadd.f32 %v2508, %v2991
        %v3102 = vadd.f32 %v2509, %v2996
        %v3103 = vadd.f32 %v2510, %v2999
        %v3104 = vadd.f32 %v2511, %v3004
        %v3105 = vadd.f32 %v2512, %v3007
        %v3106 = vadd.f32 %v2513, %v3012
        %v3107 = vadd.f32 %v2514, %v3015
        %v3108 = vadd.f32 %v2515, %v3020
        %v3109 = vadd.f32 %v2516, %v3023
        %v3110 = vadd.f32 %v2517, %v3028
        %v3111 = vadd.f32 %v2518, %v3031
        %v3112 = vadd.f32 %v2519, %v3036
        %v3113 = vadd.f32 %v2520, %v3039
        %v3114 = vadd.f32 %v2521, %v3044
        %v3115 = vadd.f32 %v2522, %v3047
        %v3116 = vadd.f32 %v2523, %v3052
        %v3117 = vadd.f32 %v2524, %v3055
        %v3118 = vadd.f32 %v2525, %v3060
        %v3119 = vadd.f32 %v2526, %v3063
        %v3120 = vadd.f32 %v2527, %v3068
        %v3121 = vadd.f32 %v2528, %v3071
        %v3122 = vadd.f32 %v2529, %v3076
        %v3123 = vadd.f32 %v2530, %v3079
        %v3124 = vadd.f32 %v2531, %v3084
        %v3125 = vadd.f32 %v2532, %v3087
        %v3126 = vld [vmem:[%s254 + $0x8] sm:$0xc]
        %s3127 = scalar_lea.vmem [#allocation6], 320
        %v3128 = vld [vmem:[%s3127] sm:$0xf]
        %v3129 = vld [vmem:[%s3127 + $0x4] sm:$0xf]
        %v3130 = vld [vmem:[%s3127 + $0x8] sm:$0xf]
        %v3131 = vld [vmem:[%s3127 + $0xc] sm:$0xf]
        %v3132 = vld [vmem:[%s3127 + $0x10] sm:$0xf]
        %v3133 = vld [vmem:[%s3127 + $0x14] sm:$0xf]
        %v3134 = vld [vmem:[%s3127 + $0x18] sm:$0xf]
        %v3135 = vld [vmem:[%s3127 + $0x1c] sm:$0xf]
        %v3136 = vld [vmem:[%s3127 + $0x20] sm:$0xf]
        %v3137 = vld [vmem:[%s3127 + $0x24] sm:$0xf]
        %v3138 = vld [vmem:[%s3127 + $0x28] sm:$0xf]
        %v3139 = vld [vmem:[%s3127 + $0x2c] sm:$0xf]
        %v3140 = vld [vmem:[%s3127 + $0x30] sm:$0xf]
        %v3141 = vld [vmem:[%s3127 + $0x34] sm:$0xf]
        %v3142 = vld [vmem:[%s3127 + $0x38] sm:$0xf]
        %v3143 = vld [vmem:[%s3127 + $0x3c] sm:$0xf]
        %v3145 = vunpack.c.l.b16 %v3126
        %v3146 = vpack.c.b16 %v2625, %v3145
        %vm3147 = vcmask 1045504
        %v3148 = vrot.slane %v3146, 2
        %v3149 = vrot.slane %v2662, 2
        %v3150 = vsel %vm3147, %v3148, %v3149
        %v3151 = vrot.slane %v2663, 2
        %v3152 = vsel %vm3147, %v3149, %v3151
        %v3153 = vrot.slane %v2664, 2
        %v3154 = vsel %vm3147, %v3151, %v3153
        %v3155 = vrot.slane %v2665, 2
        %v3156 = vsel %vm3147, %v3153, %v3155
        %v3157 = vrot.slane %v2666, 2
        %v3158 = vsel %vm3147, %v3155, %v3157
        %v3159 = vrot.slane %v2667, 2
        %v3160 = vsel %vm3147, %v3157, %v3159
        %v3161 = vrot.slane %v2668, 2
        %v3162 = vsel %vm3147, %v3159, %v3161
        %v3163 = vrot.slane %v2669, 2
        %v3164 = vsel %vm3147, %v3161, %v3163
        %v3165 = vrot.slane %v2670, 2
        %v3166 = vsel %vm3147, %v3163, %v3165
        %v3167 = vrot.slane %v2671, 2
        %v3168 = vsel %vm3147, %v3165, %v3167
        %v3169 = vrot.slane %v2672, 2
        %v3170 = vsel %vm3147, %v3167, %v3169
        %v3171 = vrot.slane %v2673, 2
        %v3172 = vsel %vm3147, %v3169, %v3171
        %v3173 = vrot.slane %v2674, 2
        %v3174 = vsel %vm3147, %v3171, %v3173
        %v3175 = vrot.slane %v2675, 2
        %v3176 = vsel %vm3147, %v3173, %v3175
        %v3177 = vrot.slane %v2676, 2
        %v3178 = vsel %vm3147, %v3175, %v3177
        %v3179 = vrot.slane %v2677, 2
        %v3180 = vsel %vm3147, %v3177, %v3179
        %v3181 = vrot.slane %v2678, 2
        %v3182 = vsel %vm3147, %v3179, %v3181
        %v3183 = vrot.slane %v2679, 2
        %v3184 = vsel %vm3147, %v3181, %v3183
        %v3219 = vunpack.c.l.b16 %v3128
        %v3220 = vunpack.c.l.b16 %v3129
        %v3221 = vunpack.c.l.b16 %v3130
        %v3222 = vunpack.c.l.b16 %v3131
        %v3223 = vunpack.c.l.b16 %v3132
        %v3224 = vunpack.c.l.b16 %v3133
        %v3225 = vunpack.c.l.b16 %v3134
        %v3226 = vunpack.c.l.b16 %v3135
        %v3227 = vunpack.c.l.b16 %v3136
        %v3228 = vunpack.c.l.b16 %v3137
        %v3229 = vunpack.c.l.b16 %v3138
        %v3230 = vunpack.c.l.b16 %v3139
        %v3231 = vunpack.c.l.b16 %v3140
        %v3232 = vunpack.c.l.b16 %v3141
        %v3233 = vunpack.c.l.b16 %v3142
        %v3234 = vunpack.c.l.b16 %v3143
        %v3235 = vpack.c.b16 %v3220, %v3219
        %v3236 = vpack.c.b16 %v3222, %v3221
        %v3237 = vpack.c.b16 %v3224, %v3223
        %v3238 = vpack.c.b16 %v3226, %v3225
        %v3239 = vpack.c.b16 %v3228, %v3227
        %v3240 = vpack.c.b16 %v3230, %v3229
        %v3241 = vpack.c.b16 %v3232, %v3231
        %v3242 = vpack.c.b16 %v3234, %v3233
        %3251 = vmatprep.subr.bf16.mxu0 0
        %3252 = vmatpush1.bf16.msra.mxu0 %v3235
        %3253 = vmatprep.subr.bf16.mxu0 0
        %3254 = vmatpush1.bf16.msra.mxu0 %v3236
        %3255 = vmatprep.subr.bf16.mxu0 0
        %3256 = vmatpush1.bf16.msra.mxu0 %v3237
        %3257 = vmatprep.subr.bf16.mxu0 0
        %3258 = vmatpush1.bf16.msra.mxu0 %v3238
        %3259 = vmatprep.subr.bf16.mxu0 0
        %3260 = vmatpush1.bf16.msra.mxu0 %v3239
        %3261 = vmatprep.subr.bf16.mxu0 0
        %3262 = vmatpush1.bf16.msra.mxu0 %v3240
        %3263 = vmatprep.subr.bf16.mxu0 0
        %3264 = vmatpush1.bf16.msra.mxu0 %v3241
        %3265 = vmatprep.subr.bf16.mxu0 0
        %3266 = vmatpush1.bf16.msra.mxu0 %v3242
        %3267 = vmatprep.subr.bf16.mxu0 0
        %3268 = vmatpush1.bf16.msra.mxu0 0
        %3269 = vmatprep.subr.bf16.mxu0 0
        %3270 = vmatpush1.bf16.msra.mxu0 0
        %3271 = vmatprep.subr.bf16.mxu0 0
        %3272 = vmatpush1.bf16.msra.mxu0 0
        %3273 = vmatprep.subr.bf16.mxu0 0
        %3274 = vmatpush1.bf16.msra.mxu0 0
        %3275 = vmatprep.subr.bf16.mxu0 0
        %3276 = vmatpush1.bf16.msra.mxu0 0
        %3277 = vmatprep.subr.bf16.mxu0 0
        %3278 = vmatpush1.bf16.msra.mxu0 0
        %3279 = vmatprep.subr.bf16.mxu0 0
        %3280 = vmatpush1.bf16.msra.mxu0 0
        %3281 = vmatprep.subr.bf16.mxu0 0
        %3282 = vmatpush1.bf16.msra.mxu0 0
        %3283 = vmatprep.mubr.bf16.mxu0 0
        %3284 = vmatmul.mubr.bf16.gmra.mrb[0].mxu0 %v3150
        %v3285 = vpop.f32.mrb[0].mxu0
        %v3286 = vadd.f32 0.0, %v3285
        %v3287 = vpop.f32.mrb[0].mxu0
        %v3288 = vpop.f32.mrb[0].mxu0
        %v3289 = vadd.f32 0.0, %v3288
        %v3290 = vpop.f32.mrb[0].mxu0
        %3291 = vmatprep.mubr.bf16.mxu0 0
        %3292 = vmatmul.mubr.bf16.gmra.mrb[0].mxu0 %v3152
        %v3293 = vpop.f32.mrb[0].mxu0
        %v3294 = vadd.f32 0.0, %v3293
        %v3295 = vpop.f32.mrb[0].mxu0
        %v3296 = vpop.f32.mrb[0].mxu0
        %v3297 = vadd.f32 0.0, %v3296
        %v3298 = vpop.f32.mrb[0].mxu0
        %3299 = vmatprep.mubr.bf16.mxu0 0
        %3300 = vmatmul.mubr.bf16.gmra.mrb[0].mxu0 %v3154
        %v3301 = vpop.f32.mrb[0].mxu0
        %v3302 = vadd.f32 0.0, %v3301
        %v3303 = vpop.f32.mrb[0].mxu0
        %v3304 = vpop.f32.mrb[0].mxu0
        %v3305 = vadd.f32 0.0, %v3304
        %v3306 = vpop.f32.mrb[0].mxu0
        %3307 = vmatprep.mubr.bf16.mxu0 0
        %3308 = vmatmul.mubr.bf16.gmra.mrb[0].mxu0 %v3156
        %v3309 = vpop.f32.mrb[0].mxu0
        %v3310 = vadd.f32 0.0, %v3309
        %v3311 = vpop.f32.mrb[0].mxu0
        %v3312 = vpop.f32.mrb[0].mxu0
        %v3313 = vadd.f32 0.0, %v3312
        %v3314 = vpop.f32.mrb[0].mxu0
        %3315 = vmatprep.mubr.bf16.mxu0 0
        %3316 = vmatmul.mubr.bf16.gmra.mrb[0].mxu0 %v3158
        %v3317 = vpop.f32.mrb[0].mxu0
        %v3318 = vadd.f32 0.0, %v3317
        %v3319 = vpop.f32.mrb[0].mxu0
        %v3320 = vpop.f32.mrb[0].mxu0
        %v3321 = vadd.f32 0.0, %v3320
        %v3322 = vpop.f32.mrb[0].mxu0
        %3323 = vmatprep.mubr.bf16.mxu0 0
        %3324 = vmatmul.mubr.bf16.gmra.mrb[0].mxu0 %v3160
        %v3325 = vpop.f32.mrb[0].mxu0
        %v3326 = vadd.f32 0.0, %v3325
        %v3327 = vpop.f32.mrb[0].mxu0
        %v3328 = vpop.f32.mrb[0].mxu0
        %v3329 = vadd.f32 0.0, %v3328
        %v3330 = vpop.f32.mrb[0].mxu0
        %3331 = vmatprep.mubr.bf16.mxu0 0
        %3332 = vmatmul.mubr.bf16.gmra.mrb[0].mxu0 %v3162
        %v3333 = vpop.f32.mrb[0].mxu0
        %v3334 = vadd.f32 0.0, %v3333
        %v3335 = vpop.f32.mrb[0].mxu0
        %v3336 = vpop.f32.mrb[0].mxu0
        %v3337 = vadd.f32 0.0, %v3336
        %v3338 = vpop.f32.mrb[0].mxu0
        %3339 = vmatprep.mubr.bf16.mxu0 0
        %3340 = vmatmul.mubr.bf16.gmra.mrb[0].mxu0 %v3164
        %v3341 = vpop.f32.mrb[0].mxu0
        %v3342 = vadd.f32 0.0, %v3341
        %v3343 = vpop.f32.mrb[0].mxu0
        %v3344 = vpop.f32.mrb[0].mxu0
        %v3345 = vadd.f32 0.0, %v3344
        %v3346 = vpop.f32.mrb[0].mxu0
        %3347 = vmatprep.mubr.bf16.mxu0 0
        %3348 = vmatmul.mubr.bf16.gmra.mrb[0].mxu0 %v3166
        %v3349 = vpop.f32.mrb[0].mxu0
        %v3350 = vadd.f32 0.0, %v3349
        %v3351 = vpop.f32.mrb[0].mxu0
        %v3352 = vpop.f32.mrb[0].mxu0
        %v3353 = vadd.f32 0.0, %v3352
        %v3354 = vpop.f32.mrb[0].mxu0
        %3355 = vmatprep.mubr.bf16.mxu0 0
        %3356 = vmatmul.mubr.bf16.gmra.mrb[0].mxu0 %v3168
        %v3357 = vpop.f32.mrb[0].mxu0
        %v3358 = vadd.f32 0.0, %v3357
        %v3359 = vpop.f32.mrb[0].mxu0
        %v3360 = vpop.f32.mrb[0].mxu0
        %v3361 = vadd.f32 0.0, %v3360
        %v3362 = vpop.f32.mrb[0].mxu0
        %3363 = vmatprep.mubr.bf16.mxu0 0
        %3364 = vmatmul.mubr.bf16.gmra.mrb[0].mxu0 %v3170
        %v3365 = vpop.f32.mrb[0].mxu0
        %v3366 = vadd.f32 0.0, %v3365
        %v3367 = vpop.f32.mrb[0].mxu0
        %v3368 = vpop.f32.mrb[0].mxu0
        %v3369 = vadd.f32 0.0, %v3368
        %v3370 = vpop.f32.mrb[0].mxu0
        %3371 = vmatprep.mubr.bf16.mxu0 0
        %3372 = vmatmul.mubr.bf16.gmra.mrb[0].mxu0 %v3172
        %v3373 = vpop.f32.mrb[0].mxu0
        %v3374 = vadd.f32 0.0, %v3373
        %v3375 = vpop.f32.mrb[0].mxu0
        %v3376 = vpop.f32.mrb[0].mxu0
        %v3377 = vadd.f32 0.0, %v3376
        %v3378 = vpop.f32.mrb[0].mxu0
        %3379 = vmatprep.mubr.bf16.mxu0 0
        %3380 = vmatmul.mubr.bf16.gmra.mrb[0].mxu0 %v3174
        %v3381 = vpop.f32.mrb[0].mxu0
        %v3382 = vadd.f32 0.0, %v3381
        %v3383 = vpop.f32.mrb[0].mxu0
        %v3384 = vpop.f32.mrb[0].mxu0
        %v3385 = vadd.f32 0.0, %v3384
        %v3386 = vpop.f32.mrb[0].mxu0
        %3387 = vmatprep.mubr.bf16.mxu0 0
        %3388 = vmatmul.mubr.bf16.gmra.mrb[0].mxu0 %v3176
        %v3389 = vpop.f32.mrb[0].mxu0
        %v3390 = vadd.f32 0.0, %v3389
        %v3391 = vpop.f32.mrb[0].mxu0
        %v3392 = vpop.f32.mrb[0].mxu0
        %v3393 = vadd.f32 0.0, %v3392
        %v3394 = vpop.f32.mrb[0].mxu0
        %3395 = vmatprep.mubr.bf16.mxu0 0
        %3396 = vmatmul.mubr.bf16.gmra.mrb[0].mxu0 %v3178
        %v3397 = vpop.f32.mrb[0].mxu0
        %v3398 = vadd.f32 0.0, %v3397
        %v3399 = vpop.f32.mrb[0].mxu0
        %v3400 = vpop.f32.mrb[0].mxu0
        %v3401 = vadd.f32 0.0, %v3400
        %v3402 = vpop.f32.mrb[0].mxu0
        %3403 = vmatprep.mubr.bf16.mxu0 0
        %3404 = vmatmul.mubr.bf16.gmra.mrb[0].mxu0 %v3180
        %v3405 = vpop.f32.mrb[0].mxu0
        %v3406 = vadd.f32 0.0, %v3405
        %v3407 = vpop.f32.mrb[0].mxu0
        %v3408 = vpop.f32.mrb[0].mxu0
        %v3409 = vadd.f32 0.0, %v3408
        %v3410 = vpop.f32.mrb[0].mxu0
        %3411 = vmatprep.mubr.bf16.mxu0 0
        %3412 = vmatmul.mubr.bf16.gmra.mrb[0].mxu0 %v3182
        %v3413 = vpop.f32.mrb[0].mxu0
        %v3414 = vadd.f32 0.0, %v3413
        %v3415 = vpop.f32.mrb[0].mxu0
        %v3416 = vpop.f32.mrb[0].mxu0
        %v3417 = vadd.f32 0.0, %v3416
        %v3418 = vpop.f32.mrb[0].mxu0
        %3419 = vmatprep.mubr.bf16.mxu0 0
        %3420 = vmatmul.mubr.bf16.gmra.mrb[0].mxu0 %v3184
        %v3421 = vpop.f32.mrb[0].mxu0
        %v3422 = vadd.f32 0.0, %v3421
        %v3423 = vpop.f32.mrb[0].mxu0
        %v3424 = vpop.f32.mrb[0].mxu0
        %v3425 = vadd.f32 0.0, %v3424
        %v3426 = vpop.f32.mrb[0].mxu0
        %3427 = vdwg.mxu0
        %v3428 = vadd.f32 %v3090, %v3286
        %v3429 = vadd.f32 %v3091, %v3289
        %v3430 = vadd.f32 %v3092, %v3294
        %v3431 = vadd.f32 %v3093, %v3297
        %v3432 = vadd.f32 %v3094, %v3302
        %v3433 = vadd.f32 %v3095, %v3305
        %v3434 = vadd.f32 %v3096, %v3310
        %v3435 = vadd.f32 %v3097, %v3313
        %v3436 = vadd.f32 %v3098, %v3318
        %v3437 = vadd.f32 %v3099, %v3321
        %v3438 = vadd.f32 %v3100, %v3326
        %v3439 = vadd.f32 %v3101, %v3329
        %v3440 = vadd.f32 %v3102, %v3334
        %v3441 = vadd.f32 %v3103, %v3337
        %v3442 = vadd.f32 %v3104, %v3342
        %v3443 = vadd.f32 %v3105, %v3345
        %v3444 = vadd.f32 %v3106, %v3350
        %v3445 = vadd.f32 %v3107, %v3353
        %v3446 = vadd.f32 %v3108, %v3358
        %v3447 = vadd.f32 %v3109, %v3361
        %v3448 = vadd.f32 %v3110, %v3366
        %v3449 = vadd.f32 %v3111, %v3369
        %v3450 = vadd.f32 %v3112, %v3374
        %v3451 = vadd.f32 %v3113, %v3377
        %v3452 = vadd.f32 %v3114, %v3382
        %v3453 = vadd.f32 %v3115, %v3385
        %v3454 = vadd.f32 %v3116, %v3390
        %v3455 = vadd.f32 %v3117, %v3393
        %v3456 = vadd.f32 %v3118, %v3398
        %v3457 = vadd.f32 %v3119, %v3401
        %v3458 = vadd.f32 %v3120, %v3406
        %v3459 = vadd.f32 %v3121, %v3409
        %v3460 = vadd.f32 %v3122, %v3414
        %v3461 = vadd.f32 %v3123, %v3417
        %v3462 = vadd.f32 %v3124, %v3422
        %v3463 = vadd.f32 %v3125, %v3425
        %v3464 = vld [vmem:[%s254 + $0x10] sm:$0xc]
        %v3465 = vld [vmem:[%s254 + $0x14] sm:$0xf]
        %v3466 = vld [vmem:[%s254 + $0x18] sm:$0xf]
        %v3467 = vld [vmem:[%s254 + $0x1c] sm:$0xf]
        %v3468 = vld [vmem:[%s254 + $0x20] sm:$0xf]
        %v3469 = vld [vmem:[%s254 + $0x24] sm:$0xf]
        %v3470 = vld [vmem:[%s254 + $0x28] sm:$0xf]
        %v3471 = vld [vmem:[%s254 + $0x2c] sm:$0xf]
        %v3472 = vld [vmem:[%s254 + $0x30] sm:$0xf]
        %v3473 = vld [vmem:[%s254 + $0x34] sm:$0xf]
        %v3474 = vld [vmem:[%s254 + $0x38] sm:$0xf]
        %v3475 = vld [vmem:[%s254 + $0x3c] sm:$0xf]
        %v3476 = vld [vmem:[%s254 + $0x40] sm:$0xf]
        %v3477 = vld [vmem:[%s254 + $0x44] sm:$0xf]
        %v3478 = vld [vmem:[%s254 + $0x48] sm:$0xf]
        %v3479 = vld [vmem:[%s254 + $0x4c] sm:$0xf]
        %v3480 = vld [vmem:[%s254 + $0x50] sm:$0xf]
        %v3481 = vld [vmem:[%s254 + $0x54] sm:$0xf]
        %v3482 = vld [vmem:[%s254 + $0x58] sm:$0xf]
        %v3483 = vld [vmem:[%s254 + $0x5c] sm:$0xf]
        %v3484 = vld [vmem:[%s254 + $0x60] sm:$0xf]
        %v3485 = vld [vmem:[%s254 + $0x64] sm:$0xf]
        %v3486 = vld [vmem:[%s254 + $0x68] sm:$0xf]
        %v3487 = vld [vmem:[%s254 + $0x6c] sm:$0xf]
        %v3488 = vld [vmem:[%s254 + $0x70] sm:$0xf]
        %v3489 = vld [vmem:[%s254 + $0x74] sm:$0xf]
        %v3490 = vld [vmem:[%s254 + $0x78] sm:$0xf]
        %v3491 = vld [vmem:[%s254 + $0x7c] sm:$0xf]
        %v3492 = vld [vmem:[%s254 + $0x80] sm:$0xf]
        %v3493 = vld [vmem:[%s254 + $0x84] sm:$0xf]
        %v3494 = vld [vmem:[%s254 + $0x88] sm:$0xf]
        %v3495 = vld [vmem:[%s254 + $0x8c] sm:$0xf]
        %v3496 = vld [vmem:[%s254 + $0x90] sm:$0xf]
        %v3497 = vld [vmem:[%s254 + $0x94] sm:$0xf]
        %v3498 = vld [vmem:[%s254 + $0x98] sm:$0xf]
        %v3499 = vld [vmem:[%s254 + $0x9c] sm:$0xf]
        %v3500 = vld [vmem:[%s254 + $0xa0] sm:$0x1]
        %s3501 = scalar_lea.vmem [#allocation6], 384
        %v3502 = vld [vmem:[%s3501] sm:$0xf]
        %v3503 = vld [vmem:[%s3501 + $0x4] sm:$0xf]
        %v3504 = vld [vmem:[%s3501 + $0x8] sm:$0xf]
        %v3505 = vld [vmem:[%s3501 + $0xc] sm:$0xf]
        %v3506 = vld [vmem:[%s3501 + $0x10] sm:$0xf]
        %v3507 = vld [vmem:[%s3501 + $0x14] sm:$0xf]
        %v3508 = vld [vmem:[%s3501 + $0x18] sm:$0xf]
        %v3509 = vld [vmem:[%s3501 + $0x1c] sm:$0xf]
        %v3510 = vld [vmem:[%s3501 + $0x20] sm:$0xf]
        %v3511 = vld [vmem:[%s3501 + $0x24] sm:$0xf]
        %v3512 = vld [vmem:[%s3501 + $0x28] sm:$0xf]
        %v3513 = vld [vmem:[%s3501 + $0x2c] sm:$0xf]
        %v3514 = vld [vmem:[%s3501 + $0x30] sm:$0xf]
        %v3515 = vld [vmem:[%s3501 + $0x34] sm:$0xf]
        %v3516 = vld [vmem:[%s3501 + $0x38] sm:$0xf]
        %v3517 = vld [vmem:[%s3501 + $0x3c] sm:$0xf]
        %v3555 = vunpack.c.l.b16 %v3464
        %v3556 = vunpack.c.l.b16 %v3465
        %v3557 = vunpack.c.l.b16 %v3466
        %v3558 = vunpack.c.l.b16 %v3467
        %v3559 = vunpack.c.l.b16 %v3468
        %v3560 = vunpack.c.l.b16 %v3469
        %v3561 = vunpack.c.l.b16 %v3470
        %v3562 = vunpack.c.l.b16 %v3471
        %v3563 = vunpack.c.l.b16 %v3472
        %v3564 = vunpack.c.l.b16 %v3473
        %v3565 = vunpack.c.l.b16 %v3474
        %v3566 = vunpack.c.l.b16 %v3475
        %v3567 = vunpack.c.l.b16 %v3476
        %v3568 = vunpack.c.l.b16 %v3477
        %v3569 = vunpack.c.l.b16 %v3478
        %v3570 = vunpack.c.l.b16 %v3479
        %v3571 = vunpack.c.l.b16 %v3480
        %v3572 = vunpack.c.l.b16 %v3481
        %v3573 = vunpack.c.l.b16 %v3482
        %v3574 = vunpack.c.l.b16 %v3483
        %v3575 = vunpack.c.l.b16 %v3484
        %v3576 = vunpack.c.l.b16 %v3485
        %v3577 = vunpack.c.l.b16 %v3486
        %v3578 = vunpack.c.l.b16 %v3487
        %v3579 = vunpack.c.l.b16 %v3488
        %v3580 = vunpack.c.l.b16 %v3489
        %v3581 = vunpack.c.l.b16 %v3490
        %v3582 = vunpack.c.l.b16 %v3491
        %v3583 = vunpack.c.l.b16 %v3492
        %v3584 = vunpack.c.l.b16 %v3493
        %v3585 = vunpack.c.l.b16 %v3494
        %v3586 = vunpack.c.l.b16 %v3495
        %v3587 = vunpack.c.l.b16 %v3496
        %v3588 = vunpack.c.l.b16 %v3497
        %v3589 = vunpack.c.l.b16 %v3498
        %v3590 = vunpack.c.l.b16 %v3499
        %v3591 = vunpack.c.l.b16 %v3500
        %v3592 = vpack.c.b16 %v3556, %v3555
        %v3593 = vpack.c.b16 %v3558, %v3557
        %v3594 = vpack.c.b16 %v3560, %v3559
        %v3595 = vpack.c.b16 %v3562, %v3561
        %v3596 = vpack.c.b16 %v3564, %v3563
        %v3597 = vpack.c.b16 %v3566, %v3565
        %v3598 = vpack.c.b16 %v3568, %v3567
        %v3599 = vpack.c.b16 %v3570, %v3569
        %v3600 = vpack.c.b16 %v3572, %v3571
        %v3601 = vpack.c.b16 %v3574, %v3573
        %v3602 = vpack.c.b16 %v3576, %v3575
        %v3603 = vpack.c.b16 %v3578, %v3577
        %v3604 = vpack.c.b16 %v3580, %v3579
        %v3605 = vpack.c.b16 %v3582, %v3581
        %v3606 = vpack.c.b16 %v3584, %v3583
        %v3607 = vpack.c.b16 %v3586, %v3585
        %v3608 = vpack.c.b16 %v3588, %v3587
        %v3609 = vpack.c.b16 %v3590, %v3589
        %v3610 = vpack.c.b16 %v3591, %v3591
        %v3611 = vrot.slane %v3592, 2
        %v3612 = vrot.slane %v3593, 2
        %v3613 = vsel %vm3147, %v3611, %v3612
        %v3614 = vrot.slane %v3594, 2
        %v3615 = vsel %vm3147, %v3612, %v3614
        %v3616 = vrot.slane %v3595, 2
        %v3617 = vsel %vm3147, %v3614, %v3616
        %v3618 = vrot.slane %v3596, 2
        %v3619 = vsel %vm3147, %v3616, %v3618
        %v3620 = vrot.slane %v3597, 2
        %v3621 = vsel %vm3147, %v3618, %v3620
        %v3622 = vrot.slane %v3598, 2
        %v3623 = vsel %vm3147, %v3620, %v3622
        %v3624 = vrot.slane %v3599, 2
        %v3625 = vsel %vm3147, %v3622, %v3624
        %v3626 = vrot.slane %v3600, 2
        %v3627 = vsel %vm3147, %v3624, %v3626
        %v3628 = vrot.slane %v3601, 2
        %v3629 = vsel %vm3147, %v3626, %v3628
        %v3630 = vrot.slane %v3602, 2
        %v3631 = vsel %vm3147, %v3628, %v3630
        %v3632 = vrot.slane %v3603, 2
        %v3633 = vsel %vm3147, %v3630, %v3632
        %v3634 = vrot.slane %v3604, 2
        %v3635 = vsel %vm3147, %v3632, %v3634
        %v3636 = vrot.slane %v3605, 2
        %v3637 = vsel %vm3147, %v3634, %v3636
        %v3638 = vrot.slane %v3606, 2
        %v3639 = vsel %vm3147, %v3636, %v3638
        %v3640 = vrot.slane %v3607, 2
        %v3641 = vsel %vm3147, %v3638, %v3640
        %v3642 = vrot.slane %v3608, 2
        %v3643 = vsel %vm3147, %v3640, %v3642
        %v3644 = vrot.slane %v3609, 2
        %v3645 = vsel %vm3147, %v3642, %v3644
        %v3646 = vrot.slane %v3610, 2
        %v3647 = vsel %vm3147, %v3644, %v3646
        %v3682 = vunpack.c.l.b16 %v3502
        %v3683 = vunpack.c.l.b16 %v3503
        %v3684 = vunpack.c.l.b16 %v3504
        %v3685 = vunpack.c.l.b16 %v3505
        %v3686 = vunpack.c.l.b16 %v3506
        %v3687 = vunpack.c.l.b16 %v3507
        %v3688 = vunpack.c.l.b16 %v3508
        %v3689 = vunpack.c.l.b16 %v3509
        %v3690 = vunpack.c.l.b16 %v3510
        %v3691 = vunpack.c.l.b16 %v3511
        %v3692 = vunpack.c.l.b16 %v3512
        %v3693 = vunpack.c.l.b16 %v3513
        %v3694 = vunpack.c.l.b16 %v3514
        %v3695 = vunpack.c.l.b16 %v3515
        %v3696 = vunpack.c.l.b16 %v3516
        %v3697 = vunpack.c.l.b16 %v3517
        %v3698 = vpack.c.b16 %v3683, %v3682
        %v3699 = vpack.c.b16 %v3685, %v3684
        %v3700 = vpack.c.b16 %v3687, %v3686
        %v3701 = vpack.c.b16 %v3689, %v3688
        %v3702 = vpack.c.b16 %v3691, %v3690
        %v3703 = vpack.c.b16 %v3693, %v3692
        %v3704 = vpack.c.b16 %v3695, %v3694
        %v3705 = vpack.c.b16 %v3697, %v3696
        %3714 = vmatprep.subr.bf16.mxu0 0
        %3715 = vmatpush1.bf16.msra.mxu0 %v3698
        %3716 = vmatprep.subr.bf16.mxu0 0
        %3717 = vmatpush1.bf16.msra.mxu0 %v3699
        %3718 = vmatprep.subr.bf16.mxu0 0
        %3719 = vmatpush1.bf16.msra.mxu0 %v3700
        %3720 = vmatprep.subr.bf16.mxu0 0
        %3721 = vmatpush1.bf16.msra.mxu0 %v3701
        %3722 = vmatprep.subr.bf16.mxu0 0
        %3723 = vmatpush1.bf16.msra.mxu0 %v3702
        %3724 = vmatprep.subr.bf16.mxu0 0
        %3725 = vmatpush1.bf16.msra.mxu0 %v3703
        %3726 = vmatprep.subr.bf16.mxu0 0
        %3727 = vmatpush1.bf16.msra.mxu0 %v3704
        %3728 = vmatprep.subr.bf16.mxu0 0
        %3729 = vmatpush1.bf16.msra.mxu0 %v3705
        %3730 = vmatprep.subr.bf16.mxu0 0
        %3731 = vmatpush1.bf16.msra.mxu0 0
        %3732 = vmatprep.subr.bf16.mxu0 0
        %3733 = vmatpush1.bf16.msra.mxu0 0
        %3734 = vmatprep.subr.bf16.mxu0 0
        %3735 = vmatpush1.bf16.msra.mxu0 0
        %3736 = vmatprep.subr.bf16.mxu0 0
        %3737 = vmatpush1.bf16.msra.mxu0 0
        %3738 = vmatprep.subr.bf16.mxu0 0
        %3739 = vmatpush1.bf16.msra.mxu0 0
        %3740 = vmatprep.subr.bf16.mxu0 0
        %3741 = vmatpush1.bf16.msra.mxu0 0
        %3742 = vmatprep.subr.bf16.mxu0 0
        %3743 = vmatpush1.bf16.msra.mxu0 0
        %3744 = vmatprep.subr.bf16.mxu0 0
        %3745 = vmatpush1.bf16.msra.mxu0 0
        %3746 = vmatprep.mubr.bf16.mxu0 0
        %3747 = vmatmul.mubr.bf16.gmra.mrb[0].mxu0 %v3613
        %v3748 = vpop.f32.mrb[0].mxu0
        %v3749 = vadd.f32 0.0, %v3748
        %v3750 = vpop.f32.mrb[0].mxu0
        %v3751 = vpop.f32.mrb[0].mxu0
        %v3752 = vadd.f32 0.0, %v3751
        %v3753 = vpop.f32.mrb[0].mxu0
        %3754 = vmatprep.mubr.bf16.mxu0 0
        %3755 = vmatmul.mubr.bf16.gmra.mrb[0].mxu0 %v3615
        %v3756 = vpop.f32.mrb[0].mxu0
        %v3757 = vadd.f32 0.0, %v3756
        %v3758 = vpop.f32.mrb[0].mxu0
        %v3759 = vpop.f32.mrb[0].mxu0
        %v3760 = vadd.f32 0.0, %v3759
        %v3761 = vpop.f32.mrb[0].mxu0
        %3762 = vmatprep.mubr.bf16.mxu0 0
        %3763 = vmatmul.mubr.bf16.gmra.mrb[0].mxu0 %v3617
        %v3764 = vpop.f32.mrb[0].mxu0
        %v3765 = vadd.f32 0.0, %v3764
        %v3766 = vpop.f32.mrb[0].mxu0
        %v3767 = vpop.f32.mrb[0].mxu0
        %v3768 = vadd.f32 0.0, %v3767
        %v3769 = vpop.f32.mrb[0].mxu0
        %3770 = vmatprep.mubr.bf16.mxu0 0
        %3771 = vmatmul.mubr.bf16.gmra.mrb[0].mxu0 %v3619
        %v3772 = vpop.f32.mrb[0].mxu0
        %v3773 = vadd.f32 0.0, %v3772
        %v3774 = vpop.f32.mrb[0].mxu0
        %v3775 = vpop.f32.mrb[0].mxu0
        %v3776 = vadd.f32 0.0, %v3775
        %v3777 = vpop.f32.mrb[0].mxu0
        %3778 = vmatprep.mubr.bf16.mxu0 0
        %3779 = vmatmul.mubr.bf16.gmra.mrb[0].mxu0 %v3621
        %v3780 = vpop.f32.mrb[0].mxu0
        %v3781 = vadd.f32 0.0, %v3780
        %v3782 = vpop.f32.mrb[0].mxu0
        %v3783 = vpop.f32.mrb[0].mxu0
        %v3784 = vadd.f32 0.0, %v3783
        %v3785 = vpop.f32.mrb[0].mxu0
        %3786 = vmatprep.mubr.bf16.mxu0 0
        %3787 = vmatmul.mubr.bf16.gmra.mrb[0].mxu0 %v3623
        %v3788 = vpop.f32.mrb[0].mxu0
        %v3789 = vadd.f32 0.0, %v3788
        %v3790 = vpop.f32.mrb[0].mxu0
        %v3791 = vpop.f32.mrb[0].mxu0
        %v3792 = vadd.f32 0.0, %v3791
        %v3793 = vpop.f32.mrb[0].mxu0
        %3794 = vmatprep.mubr.bf16.mxu0 0
        %3795 = vmatmul.mubr.bf16.gmra.mrb[0].mxu0 %v3625
        %v3796 = vpop.f32.mrb[0].mxu0
        %v3797 = vadd.f32 0.0, %v3796
        %v3798 = vpop.f32.mrb[0].mxu0
        %v3799 = vpop.f32.mrb[0].mxu0
        %v3800 = vadd.f32 0.0, %v3799
        %v3801 = vpop.f32.mrb[0].mxu0
        %3802 = vmatprep.mubr.bf16.mxu0 0
        %3803 = vmatmul.mubr.bf16.gmra.mrb[0].mxu0 %v3627
        %v3804 = vpop.f32.mrb[0].mxu0
        %v3805 = vadd.f32 0.0, %v3804
        %v3806 = vpop.f32.mrb[0].mxu0
        %v3807 = vpop.f32.mrb[0].mxu0
        %v3808 = vadd.f32 0.0, %v3807
        %v3809 = vpop.f32.mrb[0].mxu0
        %3810 = vmatprep.mubr.bf16.mxu0 0
        %3811 = vmatmul.mubr.bf16.gmra.mrb[0].mxu0 %v3629
        %v3812 = vpop.f32.mrb[0].mxu0
        %v3813 = vadd.f32 0.0, %v3812
        %v3814 = vpop.f32.mrb[0].mxu0
        %v3815 = vpop.f32.mrb[0].mxu0
        %v3816 = vadd.f32 0.0, %v3815
        %v3817 = vpop.f32.mrb[0].mxu0
        %3818 = vmatprep.mubr.bf16.mxu0 0
        %3819 = vmatmul.mubr.bf16.gmra.mrb[0].mxu0 %v3631
        %v3820 = vpop.f32.mrb[0].mxu0
        %v3821 = vadd.f32 0.0, %v3820
        %v3822 = vpop.f32.mrb[0].mxu0
        %v3823 = vpop.f32.mrb[0].mxu0
        %v3824 = vadd.f32 0.0, %v3823
        %v3825 = vpop.f32.mrb[0].mxu0
        %3826 = vmatprep.mubr.bf16.mxu0 0
        %3827 = vmatmul.mubr.bf16.gmra.mrb[0].mxu0 %v3633
        %v3828 = vpop.f32.mrb[0].mxu0
        %v3829 = vadd.f32 0.0, %v3828
        %v3830 = vpop.f32.mrb[0].mxu0
        %v3831 = vpop.f32.mrb[0].mxu0
        %v3832 = vadd.f32 0.0, %v3831
        %v3833 = vpop.f32.mrb[0].mxu0
        %3834 = vmatprep.mubr.bf16.mxu0 0
        %3835 = vmatmul.mubr.bf16.gmra.mrb[0].mxu0 %v3635
        %v3836 = vpop.f32.mrb[0].mxu0
        %v3837 = vadd.f32 0.0, %v3836
        %v3838 = vpop.f32.mrb[0].mxu0
        %v3839 = vpop.f32.mrb[0].mxu0
        %v3840 = vadd.f32 0.0, %v3839
        %v3841 = vpop.f32.mrb[0].mxu0
        %3842 = vmatprep.mubr.bf16.mxu0 0
        %3843 = vmatmul.mubr.bf16.gmra.mrb[0].mxu0 %v3637
        %v3844 = vpop.f32.mrb[0].mxu0
        %v3845 = vadd.f32 0.0, %v3844
        %v3846 = vpop.f32.mrb[0].mxu0
        %v3847 = vpop.f32.mrb[0].mxu0
        %v3848 = vadd.f32 0.0, %v3847
        %v3849 = vpop.f32.mrb[0].mxu0
        %3850 = vmatprep.mubr.bf16.mxu0 0
        %3851 = vmatmul.mubr.bf16.gmra.mrb[0].mxu0 %v3639
        %v3852 = vpop.f32.mrb[0].mxu0
        %v3853 = vadd.f32 0.0, %v3852
        %v3854 = vpop.f32.mrb[0].mxu0
        %v3855 = vpop.f32.mrb[0].mxu0
        %v3856 = vadd.f32 0.0, %v3855
        %v3857 = vpop.f32.mrb[0].mxu0
        %3858 = vmatprep.mubr.bf16.mxu0 0
        %3859 = vmatmul.mubr.bf16.gmra.mrb[0].mxu0 %v3641
        %v3860 = vpop.f32.mrb[0].mxu0
        %v3861 = vadd.f32 0.0, %v3860
        %v3862 = vpop.f32.mrb[0].mxu0
        %v3863 = vpop.f32.mrb[0].mxu0
        %v3864 = vadd.f32 0.0, %v3863
        %v3865 = vpop.f32.mrb[0].mxu0
        %3866 = vmatprep.mubr.bf16.mxu0 0
        %3867 = vmatmul.mubr.bf16.gmra.mrb[0].mxu0 %v3643
        %v3868 = vpop.f32.mrb[0].mxu0
        %v3869 = vadd.f32 0.0, %v3868
        %v3870 = vpop.f32.mrb[0].mxu0
        %v3871 = vpop.f32.mrb[0].mxu0
        %v3872 = vadd.f32 0.0, %v3871
        %v3873 = vpop.f32.mrb[0].mxu0
        %3874 = vmatprep.mubr.bf16.mxu0 0
        %3875 = vmatmul.mubr.bf16.gmra.mrb[0].mxu0 %v3645
        %v3876 = vpop.f32.mrb[0].mxu0
        %v3877 = vadd.f32 0.0, %v3876
        %v3878 = vpop.f32.mrb[0].mxu0
        %v3879 = vpop.f32.mrb[0].mxu0
        %v3880 = vadd.f32 0.0, %v3879
        %v3881 = vpop.f32.mrb[0].mxu0
        %3882 = vmatprep.mubr.bf16.mxu0 0
        %3883 = vmatmul.mubr.bf16.gmra.mrb[0].mxu0 %v3647
        %v3884 = vpop.f32.mrb[0].mxu0
        %v3885 = vadd.f32 0.0, %v3884
        %v3886 = vpop.f32.mrb[0].mxu0
        %v3887 = vpop.f32.mrb[0].mxu0
        %v3888 = vadd.f32 0.0, %v3887
        %v3889 = vpop.f32.mrb[0].mxu0
        %3890 = vdwg.mxu0
        %v3891 = vadd.f32 %v3428, %v3749
        %v3892 = vadd.f32 %v3429, %v3752
        %v3893 = vadd.f32 %v3430, %v3757
        %v3894 = vadd.f32 %v3431, %v3760
        %v3895 = vadd.f32 %v3432, %v3765
        %v3896 = vadd.f32 %v3433, %v3768
        %v3897 = vadd.f32 %v3434, %v3773
        %v3898 = vadd.f32 %v3435, %v3776
        %v3899 = vadd.f32 %v3436, %v3781
        %v3900 = vadd.f32 %v3437, %v3784
        %v3901 = vadd.f32 %v3438, %v3789
        %v3902 = vadd.f32 %v3439, %v3792
        %v3903 = vadd.f32 %v3440, %v3797
        %v3904 = vadd.f32 %v3441, %v3800
        %v3905 = vadd.f32 %v3442, %v3805
        %v3906 = vadd.f32 %v3443, %v3808
        %v3907 = vadd.f32 %v3444, %v3813
        %v3908 = vadd.f32 %v3445, %v3816
        %v3909 = vadd.f32 %v3446, %v3821
        %v3910 = vadd.f32 %v3447, %v3824
        %v3911 = vadd.f32 %v3448, %v3829
        %v3912 = vadd.f32 %v3449, %v3832
        %v3913 = vadd.f32 %v3450, %v3837
        %v3914 = vadd.f32 %v3451, %v3840
        %v3915 = vadd.f32 %v3452, %v3845
        %v3916 = vadd.f32 %v3453, %v3848
        %v3917 = vadd.f32 %v3454, %v3853
        %v3918 = vadd.f32 %v3455, %v3856
        %v3919 = vadd.f32 %v3456, %v3861
        %v3920 = vadd.f32 %v3457, %v3864
        %v3921 = vadd.f32 %v3458, %v3869
        %v3922 = vadd.f32 %v3459, %v3872
        %v3923 = vadd.f32 %v3460, %v3877
        %v3924 = vadd.f32 %v3461, %v3880
        %v3925 = vadd.f32 %v3462, %v3885
        %v3926 = vadd.f32 %v3463, %v3888
        %v3927 = vld [vmem:[%s254 + $0xa0] sm:$0x3]
        %s3928 = scalar_lea.vmem [#allocation6], 448
        %v3929 = vld [vmem:[%s3928] sm:$0xf]
        %v3930 = vld [vmem:[%s3928 + $0x4] sm:$0xf]
        %v3931 = vld [vmem:[%s3928 + $0x8] sm:$0xf]
        %v3932 = vld [vmem:[%s3928 + $0xc] sm:$0xf]
        %v3933 = vld [vmem:[%s3928 + $0x10] sm:$0xf]
        %v3934 = vld [vmem:[%s3928 + $0x14] sm:$0xf]
        %v3935 = vld [vmem:[%s3928 + $0x18] sm:$0xf]
        %v3936 = vld [vmem:[%s3928 + $0x1c] sm:$0xf]
        %v3937 = vld [vmem:[%s3928 + $0x20] sm:$0xf]
        %v3938 = vld [vmem:[%s3928 + $0x24] sm:$0xf]
        %v3939 = vld [vmem:[%s3928 + $0x28] sm:$0xf]
        %v3940 = vld [vmem:[%s3928 + $0x2c] sm:$0xf]
        %v3941 = vld [vmem:[%s3928 + $0x30] sm:$0xf]
        %v3942 = vld [vmem:[%s3928 + $0x34] sm:$0xf]
        %v3943 = vld [vmem:[%s3928 + $0x38] sm:$0xf]
        %v3944 = vld [vmem:[%s3928 + $0x3c] sm:$0xf]
        %v3946 = vunpack.c.l.b16 %v3927
        %v3947 = vpack.c.b16 %v3946, %v3946
        %vm3948 = vsmask.f32 5376
        %v3950 = vshrl.u32 %v3592, 16
        %v3952 = vrot.slane %v3950, 2
        %v3953 = vshll.u32 %v3592, 16
        %v3955 = vrot.slane %v3953, 3
        %v3956 = vor.u32 %v3952, %v3955
        %v3958 = vshrl.u32 %v3593, 16
        %v3960 = vrot.slane %v3958, 2
        %v3961 = vshll.u32 %v3593, 16
        %v3963 = vrot.slane %v3961, 3
        %v3964 = vor.u32 %v3960, %v3963
        %v3965 = vsel %vm3948, %v3956, %v3964
        %v3967 = vshrl.u32 %v3594, 16
        %v3969 = vrot.slane %v3967, 2
        %v3970 = vshll.u32 %v3594, 16
        %v3972 = vrot.slane %v3970, 3
        %v3973 = vor.u32 %v3969, %v3972
        %v3974 = vsel %vm3948, %v3964, %v3973
        %v3976 = vshrl.u32 %v3595, 16
        %v3978 = vrot.slane %v3976, 2
        %v3979 = vshll.u32 %v3595, 16
        %v3981 = vrot.slane %v3979, 3
        %v3982 = vor.u32 %v3978, %v3981
        %v3983 = vsel %vm3948, %v3973, %v3982
        %v3985 = vshrl.u32 %v3596, 16
        %v3987 = vrot.slane %v3985, 2
        %v3988 = vshll.u32 %v3596, 16
        %v3990 = vrot.slane %v3988, 3
        %v3991 = vor.u32 %v3987, %v3990
        %v3992 = vsel %vm3948, %v3982, %v3991
        %v3994 = vshrl.u32 %v3597, 16
        %v3996 = vrot.slane %v3994, 2
        %v3997 = vshll.u32 %v3597, 16
        %v3999 = vrot.slane %v3997, 3
        %v4000 = vor.u32 %v3996, %v3999
        %v4001 = vsel %vm3948, %v3991, %v4000
        %v4003 = vshrl.u32 %v3598, 16
        %v4005 = vrot.slane %v4003, 2
        %v4006 = vshll.u32 %v3598, 16
        %v4008 = vrot.slane %v4006, 3
        %v4009 = vor.u32 %v4005, %v4008
        %v4010 = vsel %vm3948, %v4000, %v4009
        %v4012 = vshrl.u32 %v3599, 16
        %v4014 = vrot.slane %v4012, 2
        %v4015 = vshll.u32 %v3599, 16
        %v4017 = vrot.slane %v4015, 3
        %v4018 = vor.u32 %v4014, %v4017
        %v4019 = vsel %vm3948, %v4009, %v4018
        %v4021 = vshrl.u32 %v3600, 16
        %v4023 = vrot.slane %v4021, 2
        %v4024 = vshll.u32 %v3600, 16
        %v4026 = vrot.slane %v4024, 3
        %v4027 = vor.u32 %v4023, %v4026
        %v4028 = vsel %vm3948, %v4018, %v4027
        %v4030 = vshrl.u32 %v3601, 16
        %v4032 = vrot.slane %v4030, 2
        %v4033 = vshll.u32 %v3601, 16
        %v4035 = vrot.slane %v4033, 3
        %v4036 = vor.u32 %v4032, %v4035
        %v4037 = vsel %vm3948, %v4027, %v4036
        %v4039 = vshrl.u32 %v3602, 16
        %v4041 = vrot.slane %v4039, 2
        %v4042 = vshll.u32 %v3602, 16
        %v4044 = vrot.slane %v4042, 3
        %v4045 = vor.u32 %v4041, %v4044
        %v4046 = vsel %vm3948, %v4036, %v4045
        %v4048 = vshrl.u32 %v3603, 16
        %v4050 = vrot.slane %v4048, 2
        %v4051 = vshll.u32 %v3603, 16
        %v4053 = vrot.slane %v4051, 3
        %v4054 = vor.u32 %v4050, %v4053
        %v4055 = vsel %vm3948, %v4045, %v4054
        %v4057 = vshrl.u32 %v3604, 16
        %v4059 = vrot.slane %v4057, 2
        %v4060 = vshll.u32 %v3604, 16
        %v4062 = vrot.slane %v4060, 3
        %v4063 = vor.u32 %v4059, %v4062
        %v4064 = vsel %vm3948, %v4054, %v4063
        %v4066 = vshrl.u32 %v3605, 16
        %v4068 = vrot.slane %v4066, 2
        %v4069 = vshll.u32 %v3605, 16
        %v4071 = vrot.slane %v4069, 3
        %v4072 = vor.u32 %v4068, %v4071
        %v4073 = vsel %vm3948, %v4063, %v4072
        %v4075 = vshrl.u32 %v3606, 16
        %v4077 = vrot.slane %v4075, 2
        %v4078 = vshll.u32 %v3606, 16
        %v4080 = vrot.slane %v4078, 3
        %v4081 = vor.u32 %v4077, %v4080
        %v4082 = vsel %vm3948, %v4072, %v4081
        %v4084 = vshrl.u32 %v3607, 16
        %v4086 = vrot.slane %v4084, 2
        %v4087 = vshll.u32 %v3607, 16
        %v4089 = vrot.slane %v4087, 3
        %v4090 = vor.u32 %v4086, %v4089
        %v4091 = vsel %vm3948, %v4081, %v4090
        %v4093 = vshrl.u32 %v3608, 16
        %v4095 = vrot.slane %v4093, 2
        %v4096 = vshll.u32 %v3608, 16
        %v4098 = vrot.slane %v4096, 3
        %v4099 = vor.u32 %v4095, %v4098
        %v4100 = vsel %vm3948, %v4090, %v4099
        %v4102 = vshrl.u32 %v3609, 16
        %v4104 = vrot.slane %v4102, 2
        %v4105 = vshll.u32 %v3609, 16
        %v4107 = vrot.slane %v4105, 3
        %v4108 = vor.u32 %v4104, %v4107
        %v4109 = vsel %vm3948, %v4099, %v4108
        %v4111 = vshrl.u32 %v3947, 16
        %v4113 = vrot.slane %v4111, 2
        %v4114 = vshll.u32 %v3947, 16
        %v4116 = vrot.slane %v4114, 3
        %v4117 = vor.u32 %v4113, %v4116
        %v4118 = vsel %vm3948, %v4108, %v4117
        %v4153 = vunpack.c.l.b16 %v3929
        %v4154 = vunpack.c.l.b16 %v3930
        %v4155 = vunpack.c.l.b16 %v3931
        %v4156 = vunpack.c.l.b16 %v3932
        %v4157 = vunpack.c.l.b16 %v3933
        %v4158 = vunpack.c.l.b16 %v3934
        %v4159 = vunpack.c.l.b16 %v3935
        %v4160 = vunpack.c.l.b16 %v3936
        %v4161 = vunpack.c.l.b16 %v3937
        %v4162 = vunpack.c.l.b16 %v3938
        %v4163 = vunpack.c.l.b16 %v3939
        %v4164 = vunpack.c.l.b16 %v3940
        %v4165 = vunpack.c.l.b16 %v3941
        %v4166 = vunpack.c.l.b16 %v3942
        %v4167 = vunpack.c.l.b16 %v3943
        %v4168 = vunpack.c.l.b16 %v3944
        %v4169 = vpack.c.b16 %v4154, %v4153
        %v4170 = vpack.c.b16 %v4156, %v4155
        %v4171 = vpack.c.b16 %v4158, %v4157
        %v4172 = vpack.c.b16 %v4160, %v4159
        %v4173 = vpack.c.b16 %v4162, %v4161
        %v4174 = vpack.c.b16 %v4164, %v4163
        %v4175 = vpack.c.b16 %v4166, %v4165
        %v4176 = vpack.c.b16 %v4168, %v4167
        %4185 = vmatprep.subr.bf16.mxu0 0
        %4186 = vmatpush1.bf16.msra.mxu0 %v4169
        %4187 = vmatprep.subr.bf16.mxu0 0
        %4188 = vmatpush1.bf16.msra.mxu0 %v4170
        %4189 = vmatprep.subr.bf16.mxu0 0
        %4190 = vmatpush1.bf16.msra.mxu0 %v4171
        %4191 = vmatprep.subr.bf16.mxu0 0
        %4192 = vmatpush1.bf16.msra.mxu0 %v4172
        %4193 = vmatprep.subr.bf16.mxu0 0
        %4194 = vmatpush1.bf16.msra.mxu0 %v4173
        %4195 = vmatprep.subr.bf16.mxu0 0
        %4196 = vmatpush1.bf16.msra.mxu0 %v4174
        %4197 = vmatprep.subr.bf16.mxu0 0
        %4198 = vmatpush1.bf16.msra.mxu0 %v4175
        %4199 = vmatprep.subr.bf16.mxu0 0
        %4200 = vmatpush1.bf16.msra.mxu0 %v4176
        %4201 = vmatprep.subr.bf16.mxu0 0
        %4202 = vmatpush1.bf16.msra.mxu0 0
        %4203 = vmatprep.subr.bf16.mxu0 0
        %4204 = vmatpush1.bf16.msra.mxu0 0
        %4205 = vmatprep.subr.bf16.mxu0 0
        %4206 = vmatpush1.bf16.msra.mxu0 0
        %4207 = vmatprep.subr.bf16.mxu0 0
        %4208 = vmatpush1.bf16.msra.mxu0 0
        %4209 = vmatprep.subr.bf16.mxu0 0
        %4210 = vmatpush1.bf16.msra.mxu0 0
        %4211 = vmatprep.subr.bf16.mxu0 0
        %4212 = vmatpush1.bf16.msra.mxu0 0
        %4213 = vmatprep.subr.bf16.mxu0 0
        %4214 = vmatpush1.bf16.msra.mxu0 0
        %4215 = vmatprep.subr.bf16.mxu0 0
        %4216 = vmatpush1.bf16.msra.mxu0 0
        %4217 = vmatprep.mubr.bf16.mxu0 0
        %4218 = vmatmul.mubr.bf16.gmra.mrb[0].mxu0 %v3965
        %v4219 = vpop.f32.mrb[0].mxu0
        %v4220 = vadd.f32 0.0, %v4219
        %v4221 = vpop.f32.mrb[0].mxu0
        %v4222 = vpop.f32.mrb[0].mxu0
        %v4223 = vadd.f32 0.0, %v4222
        %v4224 = vpop.f32.mrb[0].mxu0
        %4225 = vmatprep.mubr.bf16.mxu0 0
        %4226 = vmatmul.mubr.bf16.gmra.mrb[0].mxu0 %v3974
        %v4227 = vpop.f32.mrb[0].mxu0
        %v4228 = vadd.f32 0.0, %v4227
        %v4229 = vpop.f32.mrb[0].mxu0
        %v4230 = vpop.f32.mrb[0].mxu0
        %v4231 = vadd.f32 0.0, %v4230
        %v4232 = vpop.f32.mrb[0].mxu0
        %4233 = vmatprep.mubr.bf16.mxu0 0
        %4234 = vmatmul.mubr.bf16.gmra.mrb[0].mxu0 %v3983
        %v4235 = vpop.f32.mrb[0].mxu0
        %v4236 = vadd.f32 0.0, %v4235
        %v4237 = vpop.f32.mrb[0].mxu0
        %v4238 = vpop.f32.mrb[0].mxu0
        %v4239 = vadd.f32 0.0, %v4238
        %v4240 = vpop.f32.mrb[0].mxu0
        %4241 = vmatprep.mubr.bf16.mxu0 0
        %4242 = vmatmul.mubr.bf16.gmra.mrb[0].mxu0 %v3992
        %v4243 = vpop.f32.mrb[0].mxu0
        %v4244 = vadd.f32 0.0, %v4243
        %v4245 = vpop.f32.mrb[0].mxu0
        %v4246 = vpop.f32.mrb[0].mxu0
        %v4247 = vadd.f32 0.0, %v4246
        %v4248 = vpop.f32.mrb[0].mxu0
        %4249 = vmatprep.mubr.bf16.mxu0 0
        %4250 = vmatmul.mubr.bf16.gmra.mrb[0].mxu0 %v4001
        %v4251 = vpop.f32.mrb[0].mxu0
        %v4252 = vadd.f32 0.0, %v4251
        %v4253 = vpop.f32.mrb[0].mxu0
        %v4254 = vpop.f32.mrb[0].mxu0
        %v4255 = vadd.f32 0.0, %v4254
        %v4256 = vpop.f32.mrb[0].mxu0
        %4257 = vmatprep.mubr.bf16.mxu0 0
        %4258 = vmatmul.mubr.bf16.gmra.mrb[0].mxu0 %v4010
        %v4259 = vpop.f32.mrb[0].mxu0
        %v4260 = vadd.f32 0.0, %v4259
        %v4261 = vpop.f32.mrb[0].mxu0
        %v4262 = vpop.f32.mrb[0].mxu0
        %v4263 = vadd.f32 0.0, %v4262
        %v4264 = vpop.f32.mrb[0].mxu0
        %4265 = vmatprep.mubr.bf16.mxu0 0
        %4266 = vmatmul.mubr.bf16.gmra.mrb[0].mxu0 %v4019
        %v4267 = vpop.f32.mrb[0].mxu0
        %v4268 = vadd.f32 0.0, %v4267
        %v4269 = vpop.f32.mrb[0].mxu0
        %v4270 = vpop.f32.mrb[0].mxu0
        %v4271 = vadd.f32 0.0, %v4270
        %v4272 = vpop.f32.mrb[0].mxu0
        %4273 = vmatprep.mubr.bf16.mxu0 0
        %4274 = vmatmul.mubr.bf16.gmra.mrb[0].mxu0 %v4028
        %v4275 = vpop.f32.mrb[0].mxu0
        %v4276 = vadd.f32 0.0, %v4275
        %v4277 = vpop.f32.mrb[0].mxu0
        %v4278 = vpop.f32.mrb[0].mxu0
        %v4279 = vadd.f32 0.0, %v4278
        %v4280 = vpop.f32.mrb[0].mxu0
        %4281 = vmatprep.mubr.bf16.mxu0 0
        %4282 = vmatmul.mubr.bf16.gmra.mrb[0].mxu0 %v4037
        %v4283 = vpop.f32.mrb[0].mxu0
        %v4284 = vadd.f32 0.0, %v4283
        %v4285 = vpop.f32.mrb[0].mxu0
        %v4286 = vpop.f32.mrb[0].mxu0
        %v4287 = vadd.f32 0.0, %v4286
        %v4288 = vpop.f32.mrb[0].mxu0
        %4289 = vmatprep.mubr.bf16.mxu0 0
        %4290 = vmatmul.mubr.bf16.gmra.mrb[0].mxu0 %v4046
        %v4291 = vpop.f32.mrb[0].mxu0
        %v4292 = vadd.f32 0.0, %v4291
        %v4293 = vpop.f32.mrb[0].mxu0
        %v4294 = vpop.f32.mrb[0].mxu0
        %v4295 = vadd.f32 0.0, %v4294
        %v4296 = vpop.f32.mrb[0].mxu0
        %4297 = vmatprep.mubr.bf16.mxu0 0
        %4298 = vmatmul.mubr.bf16.gmra.mrb[0].mxu0 %v4055
        %v4299 = vpop.f32.mrb[0].mxu0
        %v4300 = vadd.f32 0.0, %v4299
        %v4301 = vpop.f32.mrb[0].mxu0
        %v4302 = vpop.f32.mrb[0].mxu0
        %v4303 = vadd.f32 0.0, %v4302
        %v4304 = vpop.f32.mrb[0].mxu0
        %4305 = vmatprep.mubr.bf16.mxu0 0
        %4306 = vmatmul.mubr.bf16.gmra.mrb[0].mxu0 %v4064
        %v4307 = vpop.f32.mrb[0].mxu0
        %v4308 = vadd.f32 0.0, %v4307
        %v4309 = vpop.f32.mrb[0].mxu0
        %v4310 = vpop.f32.mrb[0].mxu0
        %v4311 = vadd.f32 0.0, %v4310
        %v4312 = vpop.f32.mrb[0].mxu0
        %4313 = vmatprep.mubr.bf16.mxu0 0
        %4314 = vmatmul.mubr.bf16.gmra.mrb[0].mxu0 %v4073
        %v4315 = vpop.f32.mrb[0].mxu0
        %v4316 = vadd.f32 0.0, %v4315
        %v4317 = vpop.f32.mrb[0].mxu0
        %v4318 = vpop.f32.mrb[0].mxu0
        %v4319 = vadd.f32 0.0, %v4318
        %v4320 = vpop.f32.mrb[0].mxu0
        %4321 = vmatprep.mubr.bf16.mxu0 0
        %4322 = vmatmul.mubr.bf16.gmra.mrb[0].mxu0 %v4082
        %v4323 = vpop.f32.mrb[0].mxu0
        %v4324 = vadd.f32 0.0, %v4323
        %v4325 = vpop.f32.mrb[0].mxu0
        %v4326 = vpop.f32.mrb[0].mxu0
        %v4327 = vadd.f32 0.0, %v4326
        %v4328 = vpop.f32.mrb[0].mxu0
        %4329 = vmatprep.mubr.bf16.mxu0 0
        %4330 = vmatmul.mubr.bf16.gmra.mrb[0].mxu0 %v4091
        %v4331 = vpop.f32.mrb[0].mxu0
        %v4332 = vadd.f32 0.0, %v4331
        %v4333 = vpop.f32.mrb[0].mxu0
        %v4334 = vpop.f32.mrb[0].mxu0
        %v4335 = vadd.f32 0.0, %v4334
        %v4336 = vpop.f32.mrb[0].mxu0
        %4337 = vmatprep.mubr.bf16.mxu0 0
        %4338 = vmatmul.mubr.bf16.gmra.mrb[0].mxu0 %v4100
        %v4339 = vpop.f32.mrb[0].mxu0
        %v4340 = vadd.f32 0.0, %v4339
        %v4341 = vpop.f32.mrb[0].mxu0
        %v4342 = vpop.f32.mrb[0].mxu0
        %v4343 = vadd.f32 0.0, %v4342
        %v4344 = vpop.f32.mrb[0].mxu0
        %4345 = vmatprep.mubr.bf16.mxu0 0
        %4346 = vmatmul.mubr.bf16.gmra.mrb[0].mxu0 %v4109
        %v4347 = vpop.f32.mrb[0].mxu0
        %v4348 = vadd.f32 0.0, %v4347
        %v4349 = vpop.f32.mrb[0].mxu0
        %v4350 = vpop.f32.mrb[0].mxu0
        %v4351 = vadd.f32 0.0, %v4350
        %v4352 = vpop.f32.mrb[0].mxu0
        %4353 = vmatprep.mubr.bf16.mxu0 0
        %4354 = vmatmul.mubr.bf16.gmra.mrb[0].mxu0 %v4118
        %v4355 = vpop.f32.mrb[0].mxu0
        %v4356 = vadd.f32 0.0, %v4355
        %v4357 = vpop.f32.mrb[0].mxu0
        %v4358 = vpop.f32.mrb[0].mxu0
        %v4359 = vadd.f32 0.0, %v4358
        %v4360 = vpop.f32.mrb[0].mxu0
        %4361 = vdwg.mxu0
        %v4362 = vadd.f32 %v3891, %v4220
        %v4363 = vadd.f32 %v3892, %v4223
        %v4364 = vadd.f32 %v3893, %v4228
        %v4365 = vadd.f32 %v3894, %v4231
        %v4366 = vadd.f32 %v3895, %v4236
        %v4367 = vadd.f32 %v3896, %v4239
        %v4368 = vadd.f32 %v3897, %v4244
        %v4369 = vadd.f32 %v3898, %v4247
        %v4370 = vadd.f32 %v3899, %v4252
        %v4371 = vadd.f32 %v3900, %v4255
        %v4372 = vadd.f32 %v3901, %v4260
        %v4373 = vadd.f32 %v3902, %v4263
        %v4374 = vadd.f32 %v3903, %v4268
        %v4375 = vadd.f32 %v3904, %v4271
        %v4376 = vadd.f32 %v3905, %v4276
        %v4377 = vadd.f32 %v3906, %v4279
        %v4378 = vadd.f32 %v3907, %v4284
        %v4379 = vadd.f32 %v3908, %v4287
        %v4380 = vadd.f32 %v3909, %v4292
        %v4381 = vadd.f32 %v3910, %v4295
        %v4382 = vadd.f32 %v3911, %v4300
        %v4383 = vadd.f32 %v3912, %v4303
        %v4384 = vadd.f32 %v3913, %v4308
        %v4385 = vadd.f32 %v3914, %v4311
        %v4386 = vadd.f32 %v3915, %v4316
        %v4387 = vadd.f32 %v3916, %v4319
        %v4388 = vadd.f32 %v3917, %v4324
        %v4389 = vadd.f32 %v3918, %v4327
        %v4390 = vadd.f32 %v3919, %v4332
        %v4391 = vadd.f32 %v3920, %v4335
        %v4392 = vadd.f32 %v3921, %v4340
        %v4393 = vadd.f32 %v3922, %v4343
        %v4394 = vadd.f32 %v3923, %v4348
        %v4395 = vadd.f32 %v3924, %v4351
        %v4396 = vadd.f32 %v3925, %v4356
        %v4397 = vadd.f32 %v3926, %v4359
        %v4398 = vld [vmem:[%s254 + $0x10] sm:$0x8]
        %s4399 = scalar_lea.vmem [#allocation6], 512
        %v4400 = vld [vmem:[%s4399] sm:$0xf]
        %v4401 = vld [vmem:[%s4399 + $0x4] sm:$0xf]
        %v4402 = vld [vmem:[%s4399 + $0x8] sm:$0xf]
        %v4403 = vld [vmem:[%s4399 + $0xc] sm:$0xf]
        %v4404 = vld [vmem:[%s4399 + $0x10] sm:$0xf]
        %v4405 = vld [vmem:[%s4399 + $0x14] sm:$0xf]
        %v4406 = vld [vmem:[%s4399 + $0x18] sm:$0xf]
        %v4407 = vld [vmem:[%s4399 + $0x1c] sm:$0xf]
        %v4408 = vld [vmem:[%s4399 + $0x20] sm:$0xf]
        %v4409 = vld [vmem:[%s4399 + $0x24] sm:$0xf]
        %v4410 = vld [vmem:[%s4399 + $0x28] sm:$0xf]
        %v4411 = vld [vmem:[%s4399 + $0x2c] sm:$0xf]
        %v4412 = vld [vmem:[%s4399 + $0x30] sm:$0xf]
        %v4413 = vld [vmem:[%s4399 + $0x34] sm:$0xf]
        %v4414 = vld [vmem:[%s4399 + $0x38] sm:$0xf]
        %v4415 = vld [vmem:[%s4399 + $0x3c] sm:$0xf]
        %v4417 = vunpack.c.l.b16 %v4398
        %v4418 = vpack.c.b16 %v3556, %v4417
        %vm4419 = vcmask 1044480
        %v4420 = vrot.slane %v4418, 3
        %v4421 = vrot.slane %v3593, 3
        %v4422 = vsel %vm4419, %v4420, %v4421
        %v4423 = vrot.slane %v3594, 3
        %v4424 = vsel %vm4419, %v4421, %v4423
        %v4425 = vrot.slane %v3595, 3
        %v4426 = vsel %vm4419, %v4423, %v4425
        %v4427 = vrot.slane %v3596, 3
        %v4428 = vsel %vm4419, %v4425, %v4427
        %v4429 = vrot.slane %v3597, 3
        %v4430 = vsel %vm4419, %v4427, %v4429
        %v4431 = vrot.slane %v3598, 3
        %v4432 = vsel %vm4419, %v4429, %v4431
        %v4433 = vrot.slane %v3599, 3
        %v4434 = vsel %vm4419, %v4431, %v4433
        %v4435 = vrot.slane %v3600, 3
        %v4436 = vsel %vm4419, %v4433, %v4435
        %v4437 = vrot.slane %v3601, 3
        %v4438 = vsel %vm4419, %v4435, %v4437
        %v4439 = vrot.slane %v3602, 3
        %v4440 = vsel %vm4419, %v4437, %v4439
        %v4441 = vrot.slane %v3603, 3
        %v4442 = vsel %vm4419, %v4439, %v4441
        %v4443 = vrot.slane %v3604, 3
        %v4444 = vsel %vm4419, %v4441, %v4443
        %v4445 = vrot.slane %v3605, 3
        %v4446 = vsel %vm4419, %v4443, %v4445
        %v4447 = vrot.slane %v3606, 3
        %v4448 = vsel %vm4419, %v4445, %v4447
        %v4449 = vrot.slane %v3607, 3
        %v4450 = vsel %vm4419, %v4447, %v4449
        %v4451 = vrot.slane %v3608, 3
        %v4452 = vsel %vm4419, %v4449, %v4451
        %v4453 = vrot.slane %v3609, 3
        %v4454 = vsel %vm4419, %v4451, %v4453
        %v4455 = vrot.slane %v3947, 3
        %v4456 = vsel %vm4419, %v4453, %v4455
        %v4491 = vunpack.c.l.b16 %v4400
        %v4492 = vunpack.c.l.b16 %v4401
        %v4493 = vunpack.c.l.b16 %v4402
        %v4494 = vunpack.c.l.b16 %v4403
        %v4495 = vunpack.c.l.b16 %v4404
        %v4496 = vunpack.c.l.b16 %v4405
        %v4497 = vunpack.c.l.b16 %v4406
        %v4498 = vunpack.c.l.b16 %v4407
        %v4499 = vunpack.c.l.b16 %v4408
        %v4500 = vunpack.c.l.b16 %v4409
        %v4501 = vunpack.c.l.b16 %v4410
        %v4502 = vunpack.c.l.b16 %v4411
        %v4503 = vunpack.c.l.b16 %v4412
        %v4504 = vunpack.c.l.b16 %v4413
        %v4505 = vunpack.c.l.b16 %v4414
        %v4506 = vunpack.c.l.b16 %v4415
        %v4507 = vpack.c.b16 %v4492, %v4491
        %v4508 = vpack.c.b16 %v4494, %v4493
        %v4509 = vpack.c.b16 %v4496, %v4495
        %v4510 = vpack.c.b16 %v4498, %v4497
        %v4511 = vpack.c.b16 %v4500, %v4499
        %v4512 = vpack.c.b16 %v4502, %v4501
        %v4513 = vpack.c.b16 %v4504, %v4503
        %v4514 = vpack.c.b16 %v4506, %v4505
        %4523 = vmatprep.subr.bf16.mxu0 0
        %4524 = vmatpush1.bf16.msra.mxu0 %v4507
        %4525 = vmatprep.subr.bf16.mxu0 0
        %4526 = vmatpush1.bf16.msra.mxu0 %v4508
        %4527 = vmatprep.subr.bf16.mxu0 0
        %4528 = vmatpush1.bf16.msra.mxu0 %v4509
        %4529 = vmatprep.subr.bf16.mxu0 0
        %4530 = vmatpush1.bf16.msra.mxu0 %v4510
        %4531 = vmatprep.subr.bf16.mxu0 0
        %4532 = vmatpush1.bf16.msra.mxu0 %v4511
        %4533 = vmatprep.subr.bf16.mxu0 0
        %4534 = vmatpush1.bf16.msra.mxu0 %v4512
        %4535 = vmatprep.subr.bf16.mxu0 0
        %4536 = vmatpush1.bf16.msra.mxu0 %v4513
        %4537 = vmatprep.subr.bf16.mxu0 0
        %4538 = vmatpush1.bf16.msra.mxu0 %v4514
        %4539 = vmatprep.subr.bf16.mxu0 0
        %4540 = vmatpush1.bf16.msra.mxu0 0
        %4541 = vmatprep.subr.bf16.mxu0 0
        %4542 = vmatpush1.bf16.msra.mxu0 0
        %4543 = vmatprep.subr.bf16.mxu0 0
        %4544 = vmatpush1.bf16.msra.mxu0 0
        %4545 = vmatprep.subr.bf16.mxu0 0
        %4546 = vmatpush1.bf16.msra.mxu0 0
        %4547 = vmatprep.subr.bf16.mxu0 0
        %4548 = vmatpush1.bf16.msra.mxu0 0
        %4549 = vmatprep.subr.bf16.mxu0 0
        %4550 = vmatpush1.bf16.msra.mxu0 0
        %4551 = vmatprep.subr.bf16.mxu0 0
        %4552 = vmatpush1.bf16.msra.mxu0 0
        %4553 = vmatprep.subr.bf16.mxu0 0
        %4554 = vmatpush1.bf16.msra.mxu0 0
        %4555 = vmatprep.mubr.bf16.mxu0 0
        %4556 = vmatmul.mubr.bf16.gmra.mrb[0].mxu0 %v4422
        %v4557 = vpop.f32.mrb[0].mxu0
        %v4558 = vadd.f32 0.0, %v4557
        %v4559 = vpop.f32.mrb[0].mxu0
        %v4560 = vpop.f32.mrb[0].mxu0
        %v4561 = vadd.f32 0.0, %v4560
        %v4562 = vpop.f32.mrb[0].mxu0
        %4563 = vmatprep.mubr.bf16.mxu0 0
        %4564 = vmatmul.mubr.bf16.gmra.mrb[0].mxu0 %v4424
        %v4565 = vpop.f32.mrb[0].mxu0
        %v4566 = vadd.f32 0.0, %v4565
        %v4567 = vpop.f32.mrb[0].mxu0
        %v4568 = vpop.f32.mrb[0].mxu0
        %v4569 = vadd.f32 0.0, %v4568
        %v4570 = vpop.f32.mrb[0].mxu0
        %4571 = vmatprep.mubr.bf16.mxu0 0
        %4572 = vmatmul.mubr.bf16.gmra.mrb[0].mxu0 %v4426
        %v4573 = vpop.f32.mrb[0].mxu0
        %v4574 = vadd.f32 0.0, %v4573
        %v4575 = vpop.f32.mrb[0].mxu0
        %v4576 = vpop.f32.mrb[0].mxu0
        %v4577 = vadd.f32 0.0, %v4576
        %v4578 = vpop.f32.mrb[0].mxu0
        %4579 = vmatprep.mubr.bf16.mxu0 0
        %4580 = vmatmul.mubr.bf16.gmra.mrb[0].mxu0 %v4428
        %v4581 = vpop.f32.mrb[0].mxu0
        %v4582 = vadd.f32 0.0, %v4581
        %v4583 = vpop.f32.mrb[0].mxu0
        %v4584 = vpop.f32.mrb[0].mxu0
        %v4585 = vadd.f32 0.0, %v4584
        %v4586 = vpop.f32.mrb[0].mxu0
        %4587 = vmatprep.mubr.bf16.mxu0 0
        %4588 = vmatmul.mubr.bf16.gmra.mrb[0].mxu0 %v4430
        %v4589 = vpop.f32.mrb[0].mxu0
        %v4590 = vadd.f32 0.0, %v4589
        %v4591 = vpop.f32.mrb[0].mxu0
        %v4592 = vpop.f32.mrb[0].mxu0
        %v4593 = vadd.f32 0.0, %v4592
        %v4594 = vpop.f32.mrb[0].mxu0
        %4595 = vmatprep.mubr.bf16.mxu0 0
        %4596 = vmatmul.mubr.bf16.gmra.mrb[0].mxu0 %v4432
        %v4597 = vpop.f32.mrb[0].mxu0
        %v4598 = vadd.f32 0.0, %v4597
        %v4599 = vpop.f32.mrb[0].mxu0
        %v4600 = vpop.f32.mrb[0].mxu0
        %v4601 = vadd.f32 0.0, %v4600
        %v4602 = vpop.f32.mrb[0].mxu0
        %4603 = vmatprep.mubr.bf16.mxu0 0
        %4604 = vmatmul.mubr.bf16.gmra.mrb[0].mxu0 %v4434
        %v4605 = vpop.f32.mrb[0].mxu0
        %v4606 = vadd.f32 0.0, %v4605
        %v4607 = vpop.f32.mrb[0].mxu0
        %v4608 = vpop.f32.mrb[0].mxu0
        %v4609 = vadd.f32 0.0, %v4608
        %v4610 = vpop.f32.mrb[0].mxu0
        %4611 = vmatprep.mubr.bf16.mxu0 0
        %4612 = vmatmul.mubr.bf16.gmra.mrb[0].mxu0 %v4436
        %v4613 = vpop.f32.mrb[0].mxu0
        %v4614 = vadd.f32 0.0, %v4613
        %v4615 = vpop.f32.mrb[0].mxu0
        %v4616 = vpop.f32.mrb[0].mxu0
        %v4617 = vadd.f32 0.0, %v4616
        %v4618 = vpop.f32.mrb[0].mxu0
        %4619 = vmatprep.mubr.bf16.mxu0 0
        %4620 = vmatmul.mubr.bf16.gmra.mrb[0].mxu0 %v4438
        %v4621 = vpop.f32.mrb[0].mxu0
        %v4622 = vadd.f32 0.0, %v4621
        %v4623 = vpop.f32.mrb[0].mxu0
        %v4624 = vpop.f32.mrb[0].mxu0
        %v4625 = vadd.f32 0.0, %v4624
        %v4626 = vpop.f32.mrb[0].mxu0
        %4627 = vmatprep.mubr.bf16.mxu0 0
        %4628 = vmatmul.mubr.bf16.gmra.mrb[0].mxu0 %v4440
        %v4629 = vpop.f32.mrb[0].mxu0
        %v4630 = vadd.f32 0.0, %v4629
        %v4631 = vpop.f32.mrb[0].mxu0
        %v4632 = vpop.f32.mrb[0].mxu0
        %v4633 = vadd.f32 0.0, %v4632
        %v4634 = vpop.f32.mrb[0].mxu0
        %4635 = vmatprep.mubr.bf16.mxu0 0
        %4636 = vmatmul.mubr.bf16.gmra.mrb[0].mxu0 %v4442
        %v4637 = vpop.f32.mrb[0].mxu0
        %v4638 = vadd.f32 0.0, %v4637
        %v4639 = vpop.f32.mrb[0].mxu0
        %v4640 = vpop.f32.mrb[0].mxu0
        %v4641 = vadd.f32 0.0, %v4640
        %v4642 = vpop.f32.mrb[0].mxu0
        %4643 = vmatprep.mubr.bf16.mxu0 0
        %4644 = vmatmul.mubr.bf16.gmra.mrb[0].mxu0 %v4444
        %v4645 = vpop.f32.mrb[0].mxu0
        %v4646 = vadd.f32 0.0, %v4645
        %v4647 = vpop.f32.mrb[0].mxu0
        %v4648 = vpop.f32.mrb[0].mxu0
        %v4649 = vadd.f32 0.0, %v4648
        %v4650 = vpop.f32.mrb[0].mxu0
        %4651 = vmatprep.mubr.bf16.mxu0 0
        %4652 = vmatmul.mubr.bf16.gmra.mrb[0].mxu0 %v4446
        %v4653 = vpop.f32.mrb[0].mxu0
        %v4654 = vadd.f32 0.0, %v4653
        %v4655 = vpop.f32.mrb[0].mxu0
        %v4656 = vpop.f32.mrb[0].mxu0
        %v4657 = vadd.f32 0.0, %v4656
        %v4658 = vpop.f32.mrb[0].mxu0
        %4659 = vmatprep.mubr.bf16.mxu0 0
        %4660 = vmatmul.mubr.bf16.gmra.mrb[0].mxu0 %v4448
        %v4661 = vpop.f32.mrb[0].mxu0
        %v4662 = vadd.f32 0.0, %v4661
        %v4663 = vpop.f32.mrb[0].mxu0
        %v4664 = vpop.f32.mrb[0].mxu0
        %v4665 = vadd.f32 0.0, %v4664
        %v4666 = vpop.f32.mrb[0].mxu0
        %4667 = vmatprep.mubr.bf16.mxu0 0
        %4668 = vmatmul.mubr.bf16.gmra.mrb[0].mxu0 %v4450
        %v4669 = vpop.f32.mrb[0].mxu0
        %v4670 = vadd.f32 0.0, %v4669
        %v4671 = vpop.f32.mrb[0].mxu0
        %v4672 = vpop.f32.mrb[0].mxu0
        %v4673 = vadd.f32 0.0, %v4672
        %v4674 = vpop.f32.mrb[0].mxu0
        %4675 = vmatprep.mubr.bf16.mxu0 0
        %4676 = vmatmul.mubr.bf16.gmra.mrb[0].mxu0 %v4452
        %v4677 = vpop.f32.mrb[0].mxu0
        %v4678 = vadd.f32 0.0, %v4677
        %v4679 = vpop.f32.mrb[0].mxu0
        %v4680 = vpop.f32.mrb[0].mxu0
        %v4681 = vadd.f32 0.0, %v4680
        %v4682 = vpop.f32.mrb[0].mxu0
        %4683 = vmatprep.mubr.bf16.mxu0 0
        %4684 = vmatmul.mubr.bf16.gmra.mrb[0].mxu0 %v4454
        %v4685 = vpop.f32.mrb[0].mxu0
        %v4686 = vadd.f32 0.0, %v4685
        %v4687 = vpop.f32.mrb[0].mxu0
        %v4688 = vpop.f32.mrb[0].mxu0
        %v4689 = vadd.f32 0.0, %v4688
        %v4690 = vpop.f32.mrb[0].mxu0
        %4691 = vmatprep.mubr.bf16.mxu0 0
        %4692 = vmatmul.mubr.bf16.gmra.mrb[0].mxu0 %v4456
        %v4693 = vpop.f32.mrb[0].mxu0
        %v4694 = vadd.f32 0.0, %v4693
        %v4695 = vpop.f32.mrb[0].mxu0
        %v4696 = vpop.f32.mrb[0].mxu0
        %v4697 = vadd.f32 0.0, %v4696
        %v4698 = vpop.f32.mrb[0].mxu0
        %4699 = vdwg.mxu0
        %v4700 = vadd.f32 %v4362, %v4558
        %v4701 = vadd.f32 %v4363, %v4561
        %v4702 = vadd.f32 %v4364, %v4566
        %v4703 = vadd.f32 %v4365, %v4569
        %v4704 = vadd.f32 %v4366, %v4574
        %v4705 = vadd.f32 %v4367, %v4577
        %v4706 = vadd.f32 %v4368, %v4582
        %v4707 = vadd.f32 %v4369, %v4585
        %v4708 = vadd.f32 %v4370, %v4590
        %v4709 = vadd.f32 %v4371, %v4593
        %v4710 = vadd.f32 %v4372, %v4598
        %v4711 = vadd.f32 %v4373, %v4601
        %v4712 = vadd.f32 %v4374, %v4606
        %v4713 = vadd.f32 %v4375, %v4609
        %v4714 = vadd.f32 %v4376, %v4614
        %v4715 = vadd.f32 %v4377, %v4617
        %v4716 = vadd.f32 %v4378, %v4622
        %v4717 = vadd.f32 %v4379, %v4625
        %v4718 = vadd.f32 %v4380, %v4630
        %v4719 = vadd.f32 %v4381, %v4633
        %v4720 = vadd.f32 %v4382, %v4638
        %v4721 = vadd.f32 %v4383, %v4641
        %v4722 = vadd.f32 %v4384, %v4646
        %v4723 = vadd.f32 %v4385, %v4649
        %v4724 = vadd.f32 %v4386, %v4654
        %v4725 = vadd.f32 %v4387, %v4657
        %v4726 = vadd.f32 %v4388, %v4662
        %v4727 = vadd.f32 %v4389, %v4665
        %v4728 = vadd.f32 %v4390, %v4670
        %v4729 = vadd.f32 %v4391, %v4673
        %v4730 = vadd.f32 %v4392, %v4678
        %v4731 = vadd.f32 %v4393, %v4681
        %v4732 = vadd.f32 %v4394, %v4686
        %v4733 = vadd.f32 %v4395, %v4689
        %v4734 = vadd.f32 %v4396, %v4694
        %v4735 = vadd.f32 %v4397, %v4697
        %v4736 = vld [vmem:[#allocation8] sm:$0x1]
        %v4738 = vlaneseq
        %v4739 = vshrl.u32 %v4738, 7
        %v4740 = vsub.s32 0, %v4739
        %v4741 = vrot.slane %v4736, %v4740
        %v4743 = vadd.f32 %v4700, %v4741
        %v4744 = vadd.f32 %v4701, %v4741
        %v4745 = vadd.f32 %v4702, %v4741
        %v4746 = vadd.f32 %v4703, %v4741
        %v4747 = vadd.f32 %v4704, %v4741
        %v4748 = vadd.f32 %v4705, %v4741
        %v4749 = vadd.f32 %v4706, %v4741
        %v4750 = vadd.f32 %v4707, %v4741
        %v4751 = vadd.f32 %v4708, %v4741
        %v4752 = vadd.f32 %v4709, %v4741
        %v4753 = vadd.f32 %v4710, %v4741
        %v4754 = vadd.f32 %v4711, %v4741
        %v4755 = vadd.f32 %v4712, %v4741
        %v4756 = vadd.f32 %v4713, %v4741
        %v4757 = vadd.f32 %v4714, %v4741
        %v4758 = vadd.f32 %v4715, %v4741
        %v4759 = vadd.f32 %v4716, %v4741
        %v4760 = vadd.f32 %v4717, %v4741
        %v4761 = vadd.f32 %v4718, %v4741
        %v4762 = vadd.f32 %v4719, %v4741
        %v4763 = vadd.f32 %v4720, %v4741
        %v4764 = vadd.f32 %v4721, %v4741
        %v4765 = vadd.f32 %v4722, %v4741
        %v4766 = vadd.f32 %v4723, %v4741
        %v4767 = vadd.f32 %v4724, %v4741
        %v4768 = vadd.f32 %v4725, %v4741
        %v4769 = vadd.f32 %v4726, %v4741
        %v4770 = vadd.f32 %v4727, %v4741
        %v4771 = vadd.f32 %v4728, %v4741
        %v4772 = vadd.f32 %v4729, %v4741
        %v4773 = vadd.f32 %v4730, %v4741
        %v4774 = vadd.f32 %v4731, %v4741
        %v4775 = vadd.f32 %v4732, %v4741
        %v4776 = vadd.f32 %v4733, %v4741
        %v4777 = vadd.f32 %v4734, %v4741
        %v4778 = vadd.f32 %v4735, %v4741
        %v4779 = vmax.f32 %v4743, 0.0
        %v4780 = vmax.f32 %v4744, 0.0
        %v4781 = vmax.f32 %v4745, 0.0
        %v4782 = vmax.f32 %v4746, 0.0
        %v4783 = vmax.f32 %v4747, 0.0
        %v4784 = vmax.f32 %v4748, 0.0
        %v4785 = vmax.f32 %v4749, 0.0
        %v4786 = vmax.f32 %v4750, 0.0
        %v4787 = vmax.f32 %v4751, 0.0
        %v4788 = vmax.f32 %v4752, 0.0
        %v4789 = vmax.f32 %v4753, 0.0
        %v4790 = vmax.f32 %v4754, 0.0
        %v4791 = vmax.f32 %v4755, 0.0
        %v4792 = vmax.f32 %v4756, 0.0
        %v4793 = vmax.f32 %v4757, 0.0
        %v4794 = vmax.f32 %v4758, 0.0
        %v4795 = vmax.f32 %v4759, 0.0
        %v4796 = vmax.f32 %v4760, 0.0
        %v4797 = vmax.f32 %v4761, 0.0
        %v4798 = vmax.f32 %v4762, 0.0
        %v4799 = vmax.f32 %v4763, 0.0
        %v4800 = vmax.f32 %v4764, 0.0
        %v4801 = vmax.f32 %v4765, 0.0
        %v4802 = vmax.f32 %v4766, 0.0
        %v4803 = vmax.f32 %v4767, 0.0
        %v4804 = vmax.f32 %v4768, 0.0
        %v4805 = vmax.f32 %v4769, 0.0
        %v4806 = vmax.f32 %v4770, 0.0
        %v4807 = vmax.f32 %v4771, 0.0
        %v4808 = vmax.f32 %v4772, 0.0
        %v4809 = vmax.f32 %v4773, 0.0
        %v4810 = vmax.f32 %v4774, 0.0
        %v4811 = vmax.f32 %v4775, 0.0
        %v4812 = vmax.f32 %v4776, 0.0
        %v4813 = vmax.f32 %v4777, 0.0
        %v4814 = vmax.f32 %v4778, 0.0
        %v4815 = vsel %vm911, 1, 0
        %v4816 = vsel %vm912, 1, 0
        %v4817 = vsel %vm913, 1, 0
        %v4818 = vsel %vm914, 1, 0
        %v4819 = vsel %vm915, 1, 0
        %v4820 = vsel %vm916, 1, 0
        %v4821 = vsel %vm917, 1, 0
        %v4822 = vsel %vm918, 1, 0
        %v4823 = vsel %vm919, 1, 0
        %v4824 = vsel %vm920, 1, 0
        %v4825 = vsel %vm921, 1, 0
        %v4826 = vsel %vm922, 1, 0
        %v4827 = vsel %vm923, 1, 0
        %v4828 = vsel %vm924, 1, 0
        %v4829 = vsel %vm925, 1, 0
        %v4830 = vsel %vm926, 1, 0
        %v4831 = vsel %vm927, 1, 0
        %v4832 = vsel %vm928, 1, 0
        %v4833 = vsel %vm929, 1, 0
        %v4834 = vsel %vm930, 1, 0
        %v4835 = vsel %vm931, 1, 0
        %v4836 = vsel %vm932, 1, 0
        %v4837 = vsel %vm933, 1, 0
        %v4838 = vsel %vm934, 1, 0
        %v4839 = vsel %vm935, 1, 0
        %v4840 = vsel %vm936, 1, 0
        %v4841 = vsel %vm937, 1, 0
        %v4842 = vsel %vm938, 1, 0
        %v4843 = vsel %vm939, 1, 0
        %v4844 = vsel %vm940, 1, 0
        %v4845 = vsel %vm941, 1, 0
        %v4846 = vsel %vm942, 1, 0
        %v4847 = vsel %vm943, 1, 0
        %v4848 = vsel %vm944, 1, 0
        %v4849 = vsel %vm945, 1, 0
        %v4850 = vsel %vm946, 1, 0
        %vm4851 = vcmp.eq.s32.totalorder %v4815, 1
        %vm4852 = vcmp.eq.s32.totalorder %v4816, 1
        %vm4853 = vcmp.eq.s32.totalorder %v4817, 1
        %vm4854 = vcmp.eq.s32.totalorder %v4818, 1
        %vm4855 = vcmp.eq.s32.totalorder %v4819, 1
        %vm4856 = vcmp.eq.s32.totalorder %v4820, 1
        %vm4857 = vcmp.eq.s32.totalorder %v4821, 1
        %vm4858 = vcmp.eq.s32.totalorder %v4822, 1
        %vm4859 = vcmp.eq.s32.totalorder %v4823, 1
        %vm4860 = vcmp.eq.s32.totalorder %v4824, 1
        %vm4861 = vcmp.eq.s32.totalorder %v4825, 1
        %vm4862 = vcmp.eq.s32.totalorder %v4826, 1
        %vm4863 = vcmp.eq.s32.totalorder %v4827, 1
        %vm4864 = vcmp.eq.s32.totalorder %v4828, 1
        %vm4865 = vcmp.eq.s32.totalorder %v4829, 1
        %vm4866 = vcmp.eq.s32.totalorder %v4830, 1
        %vm4867 = vcmp.eq.s32.totalorder %v4831, 1
        %vm4868 = vcmp.eq.s32.totalorder %v4832, 1
        %vm4869 = vcmp.eq.s32.totalorder %v4833, 1
        %vm4870 = vcmp.eq.s32.totalorder %v4834, 1
        %vm4871 = vcmp.eq.s32.totalorder %v4835, 1
        %vm4872 = vcmp.eq.s32.totalorder %v4836, 1
        %vm4873 = vcmp.eq.s32.totalorder %v4837, 1
        %vm4874 = vcmp.eq.s32.totalorder %v4838, 1
        %vm4875 = vcmp.eq.s32.totalorder %v4839, 1
        %vm4876 = vcmp.eq.s32.totalorder %v4840, 1
        %vm4877 = vcmp.eq.s32.totalorder %v4841, 1
        %vm4878 = vcmp.eq.s32.totalorder %v4842, 1
        %vm4879 = vcmp.eq.s32.totalorder %v4843, 1
        %vm4880 = vcmp.eq.s32.totalorder %v4844, 1
        %vm4881 = vcmp.eq.s32.totalorder %v4845, 1
        %vm4882 = vcmp.eq.s32.totalorder %v4846, 1
        %vm4883 = vcmp.eq.s32.totalorder %v4847, 1
        %vm4884 = vcmp.eq.s32.totalorder %v4848, 1
        %vm4885 = vcmp.eq.s32.totalorder %v4849, 1
        %vm4886 = vcmp.eq.s32.totalorder %v4850, 1
        %v4887 = vsel %vm4851, %v4779, 0.0
        %v4888 = vsel %vm4852, %v4780, 0.0
        %v4889 = vsel %vm4853, %v4781, 0.0
        %v4890 = vsel %vm4854, %v4782, 0.0
        %v4891 = vsel %vm4855, %v4783, 0.0
        %v4892 = vsel %vm4856, %v4784, 0.0
        %v4893 = vsel %vm4857, %v4785, 0.0
        %v4894 = vsel %vm4858, %v4786, 0.0
        %v4895 = vsel %vm4859, %v4787, 0.0
        %v4896 = vsel %vm4860, %v4788, 0.0
        %v4897 = vsel %vm4861, %v4789, 0.0
        %v4898 = vsel %vm4862, %v4790, 0.0
        %v4899 = vsel %vm4863, %v4791, 0.0
        %v4900 = vsel %vm4864, %v4792, 0.0
        %v4901 = vsel %vm4865, %v4793, 0.0
        %v4902 = vsel %vm4866, %v4794, 0.0
        %v4903 = vsel %vm4867, %v4795, 0.0
        %v4904 = vsel %vm4868, %v4796, 0.0
        %v4905 = vsel %vm4869, %v4797, 0.0
        %v4906 = vsel %vm4870, %v4798, 0.0
        %v4907 = vsel %vm4871, %v4799, 0.0
        %v4908 = vsel %vm4872, %v4800, 0.0
        %v4909 = vsel %vm4873, %v4801, 0.0
        %v4910 = vsel %vm4874, %v4802, 0.0
        %v4911 = vsel %vm4875, %v4803, 0.0
        %v4912 = vsel %vm4876, %v4804, 0.0
        %v4913 = vsel %vm4877, %v4805, 0.0
        %v4914 = vsel %vm4878, %v4806, 0.0
        %v4915 = vsel %vm4879, %v4807, 0.0
        %v4916 = vsel %vm4880, %v4808, 0.0
        %v4917 = vsel %vm4881, %v4809, 0.0
        %v4918 = vsel %vm4882, %v4810, 0.0
        %v4919 = vsel %vm4883, %v4811, 0.0
        %v4920 = vsel %vm4884, %v4812, 0.0
        %v4921 = vsel %vm4885, %v4813, 0.0
        %v4922 = vsel %vm4886, %v4814, 0.0
        %v4923 = vpack.c.bf16 %v4888, %v4887
        %v4924 = vpack.c.bf16 %v4890, %v4889
        %v4925 = vpack.c.bf16 %v4892, %v4891
        %v4926 = vpack.c.bf16 %v4894, %v4893
        %v4927 = vpack.c.bf16 %v4896, %v4895
        %v4928 = vpack.c.bf16 %v4898, %v4897
        %v4929 = vpack.c.bf16 %v4900, %v4899
        %v4930 = vpack.c.bf16 %v4902, %v4901
        %v4931 = vpack.c.bf16 %v4904, %v4903
        %v4932 = vpack.c.bf16 %v4906, %v4905
        %v4933 = vpack.c.bf16 %v4908, %v4907
        %v4934 = vpack.c.bf16 %v4910, %v4909
        %v4935 = vpack.c.bf16 %v4912, %v4911
        %v4936 = vpack.c.bf16 %v4914, %v4913
        %v4937 = vpack.c.bf16 %v4916, %v4915
        %v4938 = vpack.c.bf16 %v4918, %v4917
        %v4939 = vpack.c.bf16 %v4920, %v4919
        %v4940 = vpack.c.bf16 %v4922, %v4921
        %4941 = vst [vmem:[#allocation2] sm:$0xf] 0
        %4942 = vst [vmem:[#allocation2 + $0x4] sm:$0xf] 0
        %vm4943 = vcmask 1041408
        %vm4944 = vsmask.f32 1280
        %vm4945 = vmand %vm4943, %vm4944
        %v4946 = vld [vmem:[#allocation2 + $0x8] sm:$0x3]
        %v4947 = vsel %vm4945, 0, %v4946
        %4948 = vst [vmem:[#allocation2 + $0x8] sm:$0x3] %v4947
        %vm4949 = vcmask 1043456
        %vm4950 = vsmask.f32 7938
        %vm4951 = vmand %vm4949, %vm4950
        %v4952 = vld [vmem:[#allocation2 + $0x98] sm:$0xf]
        %v4953 = vsel %vm4951, 0, %v4952
        %4954 = vst [vmem:[#allocation2 + $0x98] sm:$0xf] %v4953
        %4955 = vst [vmem:[#allocation2 + $0x9c] sm:$0xf] 0
        %4956 = vst [vmem:[#allocation2 + $0xa0] sm:$0x3] 0
        %v4975 = vunpack.c.l.b16 %v4923
        %v4976 = vunpack.c.h.b16 %v4923
        %v4977 = vunpack.c.l.b16 %v4924
        %v4978 = vunpack.c.h.b16 %v4924
        %v4979 = vunpack.c.l.b16 %v4925
        %v4980 = vunpack.c.h.b16 %v4925
        %v4981 = vunpack.c.l.b16 %v4926
        %v4982 = vunpack.c.h.b16 %v4926
        %v4983 = vunpack.c.l.b16 %v4927
        %v4984 = vunpack.c.h.b16 %v4927
        %v4985 = vunpack.c.l.b16 %v4928
        %v4986 = vunpack.c.h.b16 %v4928
        %v4987 = vunpack.c.l.b16 %v4929
        %v4988 = vunpack.c.h.b16 %v4929
        %v4989 = vunpack.c.l.b16 %v4930
        %v4990 = vunpack.c.h.b16 %v4930
        %v4991 = vunpack.c.l.b16 %v4931
        %v4992 = vunpack.c.h.b16 %v4931
        %v4993 = vunpack.c.l.b16 %v4932
        %v4994 = vunpack.c.h.b16 %v4932
        %v4995 = vunpack.c.l.b16 %v4933
        %v4996 = vunpack.c.h.b16 %v4933
        %v4997 = vunpack.c.l.b16 %v4934
        %v4998 = vunpack.c.h.b16 %v4934
        %v4999 = vunpack.c.l.b16 %v4935
        %v5000 = vunpack.c.h.b16 %v4935
        %v5001 = vunpack.c.l.b16 %v4936
        %v5002 = vunpack.c.h.b16 %v4936
        %v5003 = vunpack.c.l.b16 %v4937
        %v5004 = vunpack.c.h.b16 %v4937
        %v5005 = vunpack.c.l.b16 %v4938
        %v5006 = vunpack.c.h.b16 %v4938
        %v5007 = vunpack.c.l.b16 %v4939
        %v5008 = vunpack.c.h.b16 %v4939
        %v5009 = vunpack.c.l.b16 %v4940
        %v5010 = vunpack.c.h.b16 %v4940
        %v5011 = vpack.c.b16 %v4975, %v4975
        %v5012 = vpack.c.b16 %v4976, %v4976
        %v5013 = vpack.c.b16 %v4977, %v4977
        %v5014 = vpack.c.b16 %v4978, %v4978
        %v5015 = vpack.c.b16 %v4979, %v4979
        %v5016 = vpack.c.b16 %v4980, %v4980
        %v5017 = vpack.c.b16 %v4981, %v4981
        %v5018 = vpack.c.b16 %v4982, %v4982
        %v5019 = vpack.c.b16 %v4983, %v4983
        %v5020 = vpack.c.b16 %v4984, %v4984
        %v5021 = vpack.c.b16 %v4985, %v4985
        %v5022 = vpack.c.b16 %v4986, %v4986
        %v5023 = vpack.c.b16 %v4987, %v4987
        %v5024 = vpack.c.b16 %v4988, %v4988
        %v5025 = vpack.c.b16 %v4989, %v4989
        %v5026 = vpack.c.b16 %v4990, %v4990
        %v5027 = vpack.c.b16 %v4991, %v4991
        %v5028 = vpack.c.b16 %v4992, %v4992
        %v5029 = vpack.c.b16 %v4993, %v4993
        %v5030 = vpack.c.b16 %v4994, %v4994
        %v5031 = vpack.c.b16 %v4995, %v4995
        %v5032 = vpack.c.b16 %v4996, %v4996
        %v5033 = vpack.c.b16 %v4997, %v4997
        %v5034 = vpack.c.b16 %v4998, %v4998
        %v5035 = vpack.c.b16 %v4999, %v4999
        %v5036 = vpack.c.b16 %v5000, %v5000
        %v5037 = vpack.c.b16 %v5001, %v5001
        %v5038 = vpack.c.b16 %v5002, %v5002
        %v5039 = vpack.c.b16 %v5003, %v5003
        %v5040 = vpack.c.b16 %v5004, %v5004
        %v5041 = vpack.c.b16 %v5005, %v5005
        %v5042 = vpack.c.b16 %v5006, %v5006
        %v5043 = vpack.c.b16 %v5007, %v5007
        %v5044 = vpack.c.b16 %v5008, %v5008
        %v5045 = vpack.c.b16 %v5009, %v5009
        %v5046 = vpack.c.b16 %v5010, %v5010
        %vm5047 = vsmask.f32 5392
        %vm5048 = vmor %vm4944, %vm5047
        %v5050 = vshrl.u32 %v5011, 16
        %v5052 = vrot.slane %v5050, 6
        %v5053 = vshll.u32 %v5011, 16
        %v5055 = vrot.slane %v5053, 7
        %v5056 = vor.u32 %v5052, %v5055
        %v5057 = vrot.slane %v5056, 4
        %v5059 = vshrl.u32 %v5012, 16
        %v5061 = vrot.slane %v5059, 6
        %v5062 = vshll.u32 %v5012, 16
        %v5064 = vrot.slane %v5062, 7
        %v5065 = vor.u32 %v5061, %v5064
        %v5066 = vsel %vm5048, %v5057, %v5065
        %v5067 = vrot.slane %v5065, 4
        %v5069 = vshrl.u32 %v5013, 16
        %v5071 = vrot.slane %v5069, 6
        %v5072 = vshll.u32 %v5013, 16
        %v5074 = vrot.slane %v5072, 7
        %v5075 = vor.u32 %v5071, %v5074
        %v5076 = vsel %vm5048, %v5067, %v5075
        %v5077 = vrot.slane %v5075, 4
        %v5079 = vshrl.u32 %v5014, 16
        %v5081 = vrot.slane %v5079, 6
        %v5082 = vshll.u32 %v5014, 16
        %v5084 = vrot.slane %v5082, 7
        %v5085 = vor.u32 %v5081, %v5084
        %v5086 = vsel %vm5048, %v5077, %v5085
        %v5087 = vrot.slane %v5085, 4
        %v5089 = vshrl.u32 %v5015, 16
        %v5091 = vrot.slane %v5089, 6
        %v5092 = vshll.u32 %v5015, 16
        %v5094 = vrot.slane %v5092, 7
        %v5095 = vor.u32 %v5091, %v5094
        %v5096 = vsel %vm5048, %v5087, %v5095
        %v5097 = vrot.slane %v5095, 4
        %v5099 = vshrl.u32 %v5016, 16
        %v5101 = vrot.slane %v5099, 6
        %v5102 = vshll.u32 %v5016, 16
        %v5104 = vrot.slane %v5102, 7
        %v5105 = vor.u32 %v5101, %v5104
        %v5106 = vsel %vm5048, %v5097, %v5105
        %v5107 = vrot.slane %v5105, 4
        %v5109 = vshrl.u32 %v5017, 16
        %v5111 = vrot.slane %v5109, 6
        %v5112 = vshll.u32 %v5017, 16
        %v5114 = vrot.slane %v5112, 7
        %v5115 = vor.u32 %v5111, %v5114
        %v5116 = vsel %vm5048, %v5107, %v5115
        %v5117 = vrot.slane %v5115, 4
        %v5119 = vshrl.u32 %v5018, 16
        %v5121 = vrot.slane %v5119, 6
        %v5122 = vshll.u32 %v5018, 16
        %v5124 = vrot.slane %v5122, 7
        %v5125 = vor.u32 %v5121, %v5124
        %v5126 = vsel %vm5048, %v5117, %v5125
        %v5127 = vrot.slane %v5125, 4
        %v5129 = vshrl.u32 %v5019, 16
        %v5131 = vrot.slane %v5129, 6
        %v5132 = vshll.u32 %v5019, 16
        %v5134 = vrot.slane %v5132, 7
        %v5135 = vor.u32 %v5131, %v5134
        %v5136 = vsel %vm5048, %v5127, %v5135
        %v5137 = vrot.slane %v5135, 4
        %v5139 = vshrl.u32 %v5020, 16
        %v5141 = vrot.slane %v5139, 6
        %v5142 = vshll.u32 %v5020, 16
        %v5144 = vrot.slane %v5142, 7
        %v5145 = vor.u32 %v5141, %v5144
        %v5146 = vsel %vm5048, %v5137, %v5145
        %v5147 = vrot.slane %v5145, 4
        %v5149 = vshrl.u32 %v5021, 16
        %v5151 = vrot.slane %v5149, 6
        %v5152 = vshll.u32 %v5021, 16
        %v5154 = vrot.slane %v5152, 7
        %v5155 = vor.u32 %v5151, %v5154
        %v5156 = vsel %vm5048, %v5147, %v5155
        %v5157 = vrot.slane %v5155, 4
        %v5159 = vshrl.u32 %v5022, 16
        %v5161 = vrot.slane %v5159, 6
        %v5162 = vshll.u32 %v5022, 16
        %v5164 = vrot.slane %v5162, 7
        %v5165 = vor.u32 %v5161, %v5164
        %v5166 = vsel %vm5048, %v5157, %v5165
        %v5167 = vrot.slane %v5165, 4
        %v5169 = vshrl.u32 %v5023, 16
        %v5171 = vrot.slane %v5169, 6
        %v5172 = vshll.u32 %v5023, 16
        %v5174 = vrot.slane %v5172, 7
        %v5175 = vor.u32 %v5171, %v5174
        %v5176 = vsel %vm5048, %v5167, %v5175
        %v5177 = vrot.slane %v5175, 4
        %v5179 = vshrl.u32 %v5024, 16
        %v5181 = vrot.slane %v5179, 6
        %v5182 = vshll.u32 %v5024, 16
        %v5184 = vrot.slane %v5182, 7
        %v5185 = vor.u32 %v5181, %v5184
        %v5186 = vsel %vm5048, %v5177, %v5185
        %v5187 = vrot.slane %v5185, 4
        %v5189 = vshrl.u32 %v5025, 16
        %v5191 = vrot.slane %v5189, 6
        %v5192 = vshll.u32 %v5025, 16
        %v5194 = vrot.slane %v5192, 7
        %v5195 = vor.u32 %v5191, %v5194
        %v5196 = vsel %vm5048, %v5187, %v5195
        %v5197 = vrot.slane %v5195, 4
        %v5199 = vshrl.u32 %v5026, 16
        %v5201 = vrot.slane %v5199, 6
        %v5202 = vshll.u32 %v5026, 16
        %v5204 = vrot.slane %v5202, 7
        %v5205 = vor.u32 %v5201, %v5204
        %v5206 = vsel %vm5048, %v5197, %v5205
        %v5207 = vrot.slane %v5205, 4
        %v5209 = vshrl.u32 %v5027, 16
        %v5211 = vrot.slane %v5209, 6
        %v5212 = vshll.u32 %v5027, 16
        %v5214 = vrot.slane %v5212, 7
        %v5215 = vor.u32 %v5211, %v5214
        %v5216 = vsel %vm5048, %v5207, %v5215
        %v5217 = vrot.slane %v5215, 4
        %v5219 = vshrl.u32 %v5028, 16
        %v5221 = vrot.slane %v5219, 6
        %v5222 = vshll.u32 %v5028, 16
        %v5224 = vrot.slane %v5222, 7
        %v5225 = vor.u32 %v5221, %v5224
        %v5226 = vsel %vm5048, %v5217, %v5225
        %v5227 = vrot.slane %v5225, 4
        %v5229 = vshrl.u32 %v5029, 16
        %v5231 = vrot.slane %v5229, 6
        %v5232 = vshll.u32 %v5029, 16
        %v5234 = vrot.slane %v5232, 7
        %v5235 = vor.u32 %v5231, %v5234
        %v5236 = vsel %vm5048, %v5227, %v5235
        %v5237 = vrot.slane %v5235, 4
        %v5239 = vshrl.u32 %v5030, 16
        %v5241 = vrot.slane %v5239, 6
        %v5242 = vshll.u32 %v5030, 16
        %v5244 = vrot.slane %v5242, 7
        %v5245 = vor.u32 %v5241, %v5244
        %v5246 = vsel %vm5048, %v5237, %v5245
        %v5247 = vrot.slane %v5245, 4
        %v5249 = vshrl.u32 %v5031, 16
        %v5251 = vrot.slane %v5249, 6
        %v5252 = vshll.u32 %v5031, 16
        %v5254 = vrot.slane %v5252, 7
        %v5255 = vor.u32 %v5251, %v5254
        %v5256 = vsel %vm5048, %v5247, %v5255
        %v5257 = vrot.slane %v5255, 4
        %v5259 = vshrl.u32 %v5032, 16
        %v5261 = vrot.slane %v5259, 6
        %v5262 = vshll.u32 %v5032, 16
        %v5264 = vrot.slane %v5262, 7
        %v5265 = vor.u32 %v5261, %v5264
        %v5266 = vsel %vm5048, %v5257, %v5265
        %v5267 = vrot.slane %v5265, 4
        %v5269 = vshrl.u32 %v5033, 16
        %v5271 = vrot.slane %v5269, 6
        %v5272 = vshll.u32 %v5033, 16
        %v5274 = vrot.slane %v5272, 7
        %v5275 = vor.u32 %v5271, %v5274
        %v5276 = vsel %vm5048, %v5267, %v5275
        %v5277 = vrot.slane %v5275, 4
        %v5279 = vshrl.u32 %v5034, 16
        %v5281 = vrot.slane %v5279, 6
        %v5282 = vshll.u32 %v5034, 16
        %v5284 = vrot.slane %v5282, 7
        %v5285 = vor.u32 %v5281, %v5284
        %v5286 = vsel %vm5048, %v5277, %v5285
        %v5287 = vrot.slane %v5285, 4
        %v5289 = vshrl.u32 %v5035, 16
        %v5291 = vrot.slane %v5289, 6
        %v5292 = vshll.u32 %v5035, 16
        %v5294 = vrot.slane %v5292, 7
        %v5295 = vor.u32 %v5291, %v5294
        %v5296 = vsel %vm5048, %v5287, %v5295
        %v5297 = vrot.slane %v5295, 4
        %v5299 = vshrl.u32 %v5036, 16
        %v5301 = vrot.slane %v5299, 6
        %v5302 = vshll.u32 %v5036, 16
        %v5304 = vrot.slane %v5302, 7
        %v5305 = vor.u32 %v5301, %v5304
        %v5306 = vsel %vm5048, %v5297, %v5305
        %v5307 = vrot.slane %v5305, 4
        %v5309 = vshrl.u32 %v5037, 16
        %v5311 = vrot.slane %v5309, 6
        %v5312 = vshll.u32 %v5037, 16
        %v5314 = vrot.slane %v5312, 7
        %v5315 = vor.u32 %v5311, %v5314
        %v5316 = vsel %vm5048, %v5307, %v5315
        %v5317 = vrot.slane %v5315, 4
        %v5319 = vshrl.u32 %v5038, 16
        %v5321 = vrot.slane %v5319, 6
        %v5322 = vshll.u32 %v5038, 16
        %v5324 = vrot.slane %v5322, 7
        %v5325 = vor.u32 %v5321, %v5324
        %v5326 = vsel %vm5048, %v5317, %v5325
        %v5327 = vrot.slane %v5325, 4
        %v5329 = vshrl.u32 %v5039, 16
        %v5331 = vrot.slane %v5329, 6
        %v5332 = vshll.u32 %v5039, 16
        %v5334 = vrot.slane %v5332, 7
        %v5335 = vor.u32 %v5331, %v5334
        %v5336 = vsel %vm5048, %v5327, %v5335
        %v5337 = vrot.slane %v5335, 4
        %v5339 = vshrl.u32 %v5040, 16
        %v5341 = vrot.slane %v5339, 6
        %v5342 = vshll.u32 %v5040, 16
        %v5344 = vrot.slane %v5342, 7
        %v5345 = vor.u32 %v5341, %v5344
        %v5346 = vsel %vm5048, %v5337, %v5345
        %v5347 = vrot.slane %v5345, 4
        %v5349 = vshrl.u32 %v5041, 16
        %v5351 = vrot.slane %v5349, 6
        %v5352 = vshll.u32 %v5041, 16
        %v5354 = vrot.slane %v5352, 7
        %v5355 = vor.u32 %v5351, %v5354
        %v5356 = vsel %vm5048, %v5347, %v5355
        %v5357 = vrot.slane %v5355, 4
        %v5359 = vshrl.u32 %v5042, 16
        %v5361 = vrot.slane %v5359, 6
        %v5362 = vshll.u32 %v5042, 16
        %v5364 = vrot.slane %v5362, 7
        %v5365 = vor.u32 %v5361, %v5364
        %v5366 = vsel %vm5048, %v5357, %v5365
        %v5367 = vrot.slane %v5365, 4
        %v5369 = vshrl.u32 %v5043, 16
        %v5371 = vrot.slane %v5369, 6
        %v5372 = vshll.u32 %v5043, 16
        %v5374 = vrot.slane %v5372, 7
        %v5375 = vor.u32 %v5371, %v5374
        %v5376 = vsel %vm5048, %v5367, %v5375
        %v5377 = vrot.slane %v5375, 4
        %v5379 = vshrl.u32 %v5044, 16
        %v5381 = vrot.slane %v5379, 6
        %v5382 = vshll.u32 %v5044, 16
        %v5384 = vrot.slane %v5382, 7
        %v5385 = vor.u32 %v5381, %v5384
        %v5386 = vsel %vm5048, %v5377, %v5385
        %v5387 = vrot.slane %v5385, 4
        %v5389 = vshrl.u32 %v5045, 16
        %v5391 = vrot.slane %v5389, 6
        %v5392 = vshll.u32 %v5045, 16
        %v5394 = vrot.slane %v5392, 7
        %v5395 = vor.u32 %v5391, %v5394
        %v5396 = vsel %vm5048, %v5387, %v5395
        %v5397 = vrot.slane %v5395, 4
        %v5399 = vshrl.u32 %v5046, 16
        %v5401 = vrot.slane %v5399, 6
        %v5402 = vshll.u32 %v5046, 16
        %v5404 = vrot.slane %v5402, 7
        %v5405 = vor.u32 %v5401, %v5404
        %v5406 = vsel %vm5048, %v5397, %v5405
        %v5407 = vrot.slane %v5401, 4
        %vm5445 = vcmask 1043457
        %vm5446 = vsmask.f32 7942
        %vm5447 = vmand %vm5445, %vm5446
        %v5448 = vld [vmem:[#allocation2 + $0x8] sm:$0xe]
        %v5449 = vsel %vm5447, %v5056, %v5448
        %5450 = vst [vmem:[#allocation2 + $0x8] sm:$0xe] %v5449
        %5451 = vst [vmem:[#allocation2 + $0xc] sm:$0xf] %v5066
        %5452 = vst [vmem:[#allocation2 + $0x10] sm:$0xf] %v5076
        %5453 = vst [vmem:[#allocation2 + $0x14] sm:$0xf] %v5086
        %5454 = vst [vmem:[#allocation2 + $0x18] sm:$0xf] %v5096
        %5455 = vst [vmem:[#allocation2 + $0x1c] sm:$0xf] %v5106
        %5456 = vst [vmem:[#allocation2 + $0x20] sm:$0xf] %v5116
        %5457 = vst [vmem:[#allocation2 + $0x24] sm:$0xf] %v5126
        %5458 = vst [vmem:[#allocation2 + $0x28] sm:$0xf] %v5136
        %5459 = vst [vmem:[#allocation2 + $0x2c] sm:$0xf] %v5146
        %5460 = vst [vmem:[#allocation2 + $0x30] sm:$0xf] %v5156
        %5461 = vst [vmem:[#allocation2 + $0x34] sm:$0xf] %v5166
        %5462 = vst [vmem:[#allocation2 + $0x38] sm:$0xf] %v5176
        %5463 = vst [vmem:[#allocation2 + $0x3c] sm:$0xf] %v5186
        %5464 = vst [vmem:[#allocation2 + $0x40] sm:$0xf] %v5196
        %5465 = vst [vmem:[#allocation2 + $0x44] sm:$0xf] %v5206
        %5466 = vst [vmem:[#allocation2 + $0x48] sm:$0xf] %v5216
        %5467 = vst [vmem:[#allocation2 + $0x4c] sm:$0xf] %v5226
        %5468 = vst [vmem:[#allocation2 + $0x50] sm:$0xf] %v5236
        %5469 = vst [vmem:[#allocation2 + $0x54] sm:$0xf] %v5246
        %5470 = vst [vmem:[#allocation2 + $0x58] sm:$0xf] %v5256
        %5471 = vst [vmem:[#allocation2 + $0x5c] sm:$0xf] %v5266
        %5472 = vst [vmem:[#allocation2 + $0x60] sm:$0xf] %v5276
        %5473 = vst [vmem:[#allocation2 + $0x64] sm:$0xf] %v5286
        %5474 = vst [vmem:[#allocation2 + $0x68] sm:$0xf] %v5296
        %5475 = vst [vmem:[#allocation2 + $0x6c] sm:$0xf] %v5306
        %5476 = vst [vmem:[#allocation2 + $0x70] sm:$0xf] %v5316
        %5477 = vst [vmem:[#allocation2 + $0x74] sm:$0xf] %v5326
        %5478 = vst [vmem:[#allocation2 + $0x78] sm:$0xf] %v5336
        %5479 = vst [vmem:[#allocation2 + $0x7c] sm:$0xf] %v5346
        %5480 = vst [vmem:[#allocation2 + $0x80] sm:$0xf] %v5356
        %5481 = vst [vmem:[#allocation2 + $0x84] sm:$0xf] %v5366
        %5482 = vst [vmem:[#allocation2 + $0x88] sm:$0xf] %v5376
        %5483 = vst [vmem:[#allocation2 + $0x8c] sm:$0xf] %v5386
        %5484 = vst [vmem:[#allocation2 + $0x90] sm:$0xf] %v5396
        %5485 = vst [vmem:[#allocation2 + $0x94] sm:$0xf] %v5406
        %vm5486 = vcmask 1040384
        %vm5487 = vsmask.f32 256
        %vm5488 = vmand %vm5486, %vm5487
        %v5489 = vld [vmem:[#allocation2 + $0x98] sm:$0x1]
        %v5490 = vsel %vm5488, %v5407, %v5489
        %5491 = vst [vmem:[#allocation2 + $0x98] sm:$0x1] %v5490
        %v5492 = vld [vmem:[#allocation2] sm:$0xf]
        %v5493 = vld [vmem:[#allocation2 + $0x4] sm:$0xf]
        %v5494 = vld [vmem:[#allocation2 + $0x8] sm:$0xf]
        %v5495 = vld [vmem:[#allocation2 + $0xc] sm:$0xf]
        %v5496 = vld [vmem:[#allocation2 + $0x10] sm:$0xf]
        %v5497 = vld [vmem:[#allocation2 + $0x14] sm:$0xf]
        %v5498 = vld [vmem:[#allocation2 + $0x18] sm:$0xf]
        %v5499 = vld [vmem:[#allocation2 + $0x1c] sm:$0xf]
        %v5500 = vld [vmem:[#allocation2 + $0x20] sm:$0xf]
        %v5501 = vld [vmem:[#allocation2 + $0x24] sm:$0xf]
        %v5502 = vld [vmem:[#allocation2 + $0x28] sm:$0xf]
        %v5503 = vld [vmem:[#allocation2 + $0x2c] sm:$0xf]
        %v5504 = vld [vmem:[#allocation2 + $0x30] sm:$0xf]
        %v5505 = vld [vmem:[#allocation2 + $0x34] sm:$0xf]
        %v5506 = vld [vmem:[#allocation2 + $0x38] sm:$0xf]
        %v5507 = vld [vmem:[#allocation2 + $0x3c] sm:$0xf]
        %v5508 = vld [vmem:[#allocation2 + $0x40] sm:$0xf]
        %v5509 = vld [vmem:[#allocation2 + $0x44] sm:$0xf]
        %v5510 = vld [vmem:[#allocation2 + $0x48] sm:$0xf]
        %v5511 = vld [vmem:[#allocation2 + $0x4c] sm:$0xf]
        %v5512 = vld [vmem:[#allocation2 + $0x50] sm:$0xf]
        %v5513 = vld [vmem:[#allocation2 + $0x54] sm:$0xf]
        %v5514 = vld [vmem:[#allocation2 + $0x58] sm:$0xf]
        %v5515 = vld [vmem:[#allocation2 + $0x5c] sm:$0xf]
        %v5516 = vld [vmem:[#allocation2 + $0x60] sm:$0xf]
        %v5517 = vld [vmem:[#allocation2 + $0x64] sm:$0xf]
        %v5518 = vld [vmem:[#allocation2 + $0x68] sm:$0xf]
        %v5519 = vld [vmem:[#allocation2 + $0x6c] sm:$0xf]
        %v5520 = vld [vmem:[#allocation2 + $0x70] sm:$0xf]
        %v5521 = vld [vmem:[#allocation2 + $0x74] sm:$0xf]
        %v5522 = vld [vmem:[#allocation2 + $0x78] sm:$0xf]
        %v5523 = vld [vmem:[#allocation2 + $0x7c] sm:$0xf]
        %v5524 = vld [vmem:[#allocation2 + $0x80] sm:$0xf]
        %v5525 = vld [vmem:[#allocation2 + $0x84] sm:$0xf]
        %v5526 = vld [vmem:[#allocation2 + $0x88] sm:$0xf]
        %v5527 = vld [vmem:[#allocation2 + $0x8c] sm:$0x7]
        %v5528 = vld [vmem:[#allocation9] sm:$0xf]
        %v5529 = vld [vmem:[#allocation9 + $0x4] sm:$0xf]
        %v5530 = vld [vmem:[#allocation9 + $0x8] sm:$0xf]
        %v5531 = vld [vmem:[#allocation9 + $0xc] sm:$0xf]
        %v5532 = vld [vmem:[#allocation9 + $0x10] sm:$0xf]
        %v5533 = vld [vmem:[#allocation9 + $0x14] sm:$0xf]
        %v5534 = vld [vmem:[#allocation9 + $0x18] sm:$0xf]
        %v5535 = vld [vmem:[#allocation9 + $0x1c] sm:$0xf]
        %v5536 = vld [vmem:[#allocation9 + $0x20] sm:$0xf]
        %v5537 = vld [vmem:[#allocation9 + $0x24] sm:$0xf]
        %v5538 = vld [vmem:[#allocation9 + $0x28] sm:$0xf]
        %v5539 = vld [vmem:[#allocation9 + $0x2c] sm:$0xf]
        %v5540 = vld [vmem:[#allocation9 + $0x30] sm:$0xf]
        %v5541 = vld [vmem:[#allocation9 + $0x34] sm:$0xf]
        %v5542 = vld [vmem:[#allocation9 + $0x38] sm:$0xf]
        %v5543 = vld [vmem:[#allocation9 + $0x3c] sm:$0xf]
        %v5544 = vld [vmem:[#allocation2 + $0x8c] sm:$0xf]
        %s5545 = scalar_lea.vmem [#allocation9], 64
        %v5546 = vld [vmem:[%s5545] sm:$0xf]
        %v5547 = vld [vmem:[%s5545 + $0x4] sm:$0xf]
        %v5548 = vld [vmem:[%s5545 + $0x8] sm:$0xf]
        %v5549 = vld [vmem:[%s5545 + $0xc] sm:$0xf]
        %v5550 = vld [vmem:[%s5545 + $0x10] sm:$0xf]
        %v5551 = vld [vmem:[%s5545 + $0x14] sm:$0xf]
        %v5552 = vld [vmem:[%s5545 + $0x18] sm:$0xf]
        %v5553 = vld [vmem:[%s5545 + $0x1c] sm:$0xf]
        %v5554 = vld [vmem:[%s5545 + $0x20] sm:$0xf]
        %v5555 = vld [vmem:[%s5545 + $0x24] sm:$0xf]
        %v5556 = vld [vmem:[%s5545 + $0x28] sm:$0xf]
        %v5557 = vld [vmem:[%s5545 + $0x2c] sm:$0xf]
        %v5558 = vld [vmem:[%s5545 + $0x30] sm:$0xf]
        %v5559 = vld [vmem:[%s5545 + $0x34] sm:$0xf]
        %v5560 = vld [vmem:[%s5545 + $0x38] sm:$0xf]
        %v5561 = vld [vmem:[%s5545 + $0x3c] sm:$0xf]
        %v5598 = vunpack.c.l.b16 %v5492
        %v5599 = vunpack.c.l.b16 %v5493
        %v5600 = vunpack.c.l.b16 %v5494
        %v5601 = vunpack.c.l.b16 %v5495
        %v5602 = vunpack.c.l.b16 %v5496
        %v5603 = vunpack.c.l.b16 %v5497
        %v5604 = vunpack.c.l.b16 %v5498
        %v5605 = vunpack.c.l.b16 %v5499
        %v5606 = vunpack.c.l.b16 %v5500
        %v5607 = vunpack.c.l.b16 %v5501
        %v5608 = vunpack.c.l.b16 %v5502
        %v5609 = vunpack.c.l.b16 %v5503
        %v5610 = vunpack.c.l.b16 %v5504
        %v5611 = vunpack.c.l.b16 %v5505
        %v5612 = vunpack.c.l.b16 %v5506
        %v5613 = vunpack.c.l.b16 %v5507
        %v5614 = vunpack.c.l.b16 %v5508
        %v5615 = vunpack.c.l.b16 %v5509
        %v5616 = vunpack.c.l.b16 %v5510
        %v5617 = vunpack.c.l.b16 %v5511
        %v5618 = vunpack.c.l.b16 %v5512
        %v5619 = vunpack.c.l.b16 %v5513
        %v5620 = vunpack.c.l.b16 %v5514
        %v5621 = vunpack.c.l.b16 %v5515
        %v5622 = vunpack.c.l.b16 %v5516
        %v5623 = vunpack.c.l.b16 %v5517
        %v5624 = vunpack.c.l.b16 %v5518
        %v5625 = vunpack.c.l.b16 %v5519
        %v5626 = vunpack.c.l.b16 %v5520
        %v5627 = vunpack.c.l.b16 %v5521
        %v5628 = vunpack.c.l.b16 %v5522
        %v5629 = vunpack.c.l.b16 %v5523
        %v5630 = vunpack.c.l.b16 %v5524
        %v5631 = vunpack.c.l.b16 %v5525
        %v5632 = vunpack.c.l.b16 %v5526
        %v5633 = vunpack.c.l.b16 %v5544
        %v5634 = vpack.c.b16 %v5599, %v5598
        %v5635 = vpack.c.b16 %v5601, %v5600
        %v5636 = vpack.c.b16 %v5603, %v5602
        %v5637 = vpack.c.b16 %v5605, %v5604
        %v5638 = vpack.c.b16 %v5607, %v5606
        %v5639 = vpack.c.b16 %v5609, %v5608
        %v5640 = vpack.c.b16 %v5611, %v5610
        %v5641 = vpack.c.b16 %v5613, %v5612
        %v5642 = vpack.c.b16 %v5615, %v5614
        %v5643 = vpack.c.b16 %v5617, %v5616
        %v5644 = vpack.c.b16 %v5619, %v5618
        %v5645 = vpack.c.b16 %v5621, %v5620
        %v5646 = vpack.c.b16 %v5623, %v5622
        %v5647 = vpack.c.b16 %v5625, %v5624
        %v5648 = vpack.c.b16 %v5627, %v5626
        %v5649 = vpack.c.b16 %v5629, %v5628
        %v5650 = vpack.c.b16 %v5631, %v5630
        %v5651 = vpack.c.b16 %v5633, %v5632
        %v5653 = vshrl.u32 %v5634, 16
        %v5655 = vshll.u32 %v5634, 16
        %v5657 = vrot.slane %v5655, 1
        %v5658 = vor.u32 %v5653, %v5657
        %v5660 = vshll.u32 %v5635, 16
        %v5662 = vrot.slane %v5660, 1
        %v5663 = vsel %vm1107, %v5658, %v5662
        %v5664 = vshrl.u32 %v5635, 16
        %v5666 = vor.u32 %v5664, %v5662
        %v5668 = vshll.u32 %v5636, 16
        %v5670 = vrot.slane %v5668, 1
        %v5671 = vsel %vm1107, %v5666, %v5670
        %v5672 = vshrl.u32 %v5636, 16
        %v5674 = vor.u32 %v5672, %v5670
        %v5676 = vshll.u32 %v5637, 16
        %v5678 = vrot.slane %v5676, 1
        %v5679 = vsel %vm1107, %v5674, %v5678
        %v5680 = vshrl.u32 %v5637, 16
        %v5682 = vor.u32 %v5680, %v5678
        %v5684 = vshll.u32 %v5638, 16
        %v5686 = vrot.slane %v5684, 1
        %v5687 = vsel %vm1107, %v5682, %v5686
        %v5688 = vshrl.u32 %v5638, 16
        %v5690 = vor.u32 %v5688, %v5686
        %v5692 = vshll.u32 %v5639, 16
        %v5694 = vrot.slane %v5692, 1
        %v5695 = vsel %vm1107, %v5690, %v5694
        %v5696 = vshrl.u32 %v5639, 16
        %v5698 = vor.u32 %v5696, %v5694
        %v5700 = vshll.u32 %v5640, 16
        %v5702 = vrot.slane %v5700, 1
        %v5703 = vsel %vm1107, %v5698, %v5702
        %v5704 = vshrl.u32 %v5640, 16
        %v5706 = vor.u32 %v5704, %v5702
        %v5708 = vshll.u32 %v5641, 16
        %v5710 = vrot.slane %v5708, 1
        %v5711 = vsel %vm1107, %v5706, %v5710
        %v5712 = vshrl.u32 %v5641, 16
        %v5714 = vor.u32 %v5712, %v5710
        %v5716 = vshll.u32 %v5642, 16
        %v5718 = vrot.slane %v5716, 1
        %v5719 = vsel %vm1107, %v5714, %v5718
        %v5720 = vshrl.u32 %v5642, 16
        %v5722 = vor.u32 %v5720, %v5718
        %v5724 = vshll.u32 %v5643, 16
        %v5726 = vrot.slane %v5724, 1
        %v5727 = vsel %vm1107, %v5722, %v5726
        %v5728 = vshrl.u32 %v5643, 16
        %v5730 = vor.u32 %v5728, %v5726
        %v5732 = vshll.u32 %v5644, 16
        %v5734 = vrot.slane %v5732, 1
        %v5735 = vsel %vm1107, %v5730, %v5734
        %v5736 = vshrl.u32 %v5644, 16
        %v5738 = vor.u32 %v5736, %v5734
        %v5740 = vshll.u32 %v5645, 16
        %v5742 = vrot.slane %v5740, 1
        %v5743 = vsel %vm1107, %v5738, %v5742
        %v5744 = vshrl.u32 %v5645, 16
        %v5746 = vor.u32 %v5744, %v5742
        %v5748 = vshll.u32 %v5646, 16
        %v5750 = vrot.slane %v5748, 1
        %v5751 = vsel %vm1107, %v5746, %v5750
        %v5752 = vshrl.u32 %v5646, 16
        %v5754 = vor.u32 %v5752, %v5750
        %v5756 = vshll.u32 %v5647, 16
        %v5758 = vrot.slane %v5756, 1
        %v5759 = vsel %vm1107, %v5754, %v5758
        %v5760 = vshrl.u32 %v5647, 16
        %v5762 = vor.u32 %v5760, %v5758
        %v5764 = vshll.u32 %v5648, 16
        %v5766 = vrot.slane %v5764, 1
        %v5767 = vsel %vm1107, %v5762, %v5766
        %v5768 = vshrl.u32 %v5648, 16
        %v5770 = vor.u32 %v5768, %v5766
        %v5772 = vshll.u32 %v5649, 16
        %v5774 = vrot.slane %v5772, 1
        %v5775 = vsel %vm1107, %v5770, %v5774
        %v5776 = vshrl.u32 %v5649, 16
        %v5778 = vor.u32 %v5776, %v5774
        %v5780 = vshll.u32 %v5650, 16
        %v5782 = vrot.slane %v5780, 1
        %v5783 = vsel %vm1107, %v5778, %v5782
        %v5784 = vshrl.u32 %v5650, 16
        %v5786 = vor.u32 %v5784, %v5782
        %v5788 = vshll.u32 %v5651, 16
        %v5790 = vrot.slane %v5788, 1
        %v5791 = vsel %vm1107, %v5786, %v5790
        %v5792 = vshrl.u32 %v5651, 16
        %v5794 = vor.u32 %v5792, %v5790
        %v5829 = vunpack.c.l.b16 %v5546
        %v5830 = vunpack.c.l.b16 %v5547
        %v5831 = vunpack.c.l.b16 %v5548
        %v5832 = vunpack.c.l.b16 %v5549
        %v5833 = vunpack.c.l.b16 %v5550
        %v5834 = vunpack.c.l.b16 %v5551
        %v5835 = vunpack.c.l.b16 %v5552
        %v5836 = vunpack.c.l.b16 %v5553
        %v5837 = vunpack.c.l.b16 %v5554
        %v5838 = vunpack.c.l.b16 %v5555
        %v5839 = vunpack.c.l.b16 %v5556
        %v5840 = vunpack.c.l.b16 %v5557
        %v5841 = vunpack.c.l.b16 %v5558
        %v5842 = vunpack.c.l.b16 %v5559
        %v5843 = vunpack.c.l.b16 %v5560
        %v5844 = vunpack.c.l.b16 %v5561
        %v5845 = vpack.c.b16 %v5830, %v5829
        %v5846 = vpack.c.b16 %v5832, %v5831
        %v5847 = vpack.c.b16 %v5834, %v5833
        %v5848 = vpack.c.b16 %v5836, %v5835
        %v5849 = vpack.c.b16 %v5838, %v5837
        %v5850 = vpack.c.b16 %v5840, %v5839
        %v5851 = vpack.c.b16 %v5842, %v5841
        %v5852 = vpack.c.b16 %v5844, %v5843
        %5861 = vmatprep.subr.bf16.mxu0 0
        %5862 = vmatpush1.bf16.msra.mxu0 %v5845
        %5863 = vmatprep.subr.bf16.mxu0 0
        %5864 = vmatpush1.bf16.msra.mxu0 %v5846
        %5865 = vmatprep.subr.bf16.mxu0 0
        %5866 = vmatpush1.bf16.msra.mxu0 %v5847
        %5867 = vmatprep.subr.bf16.mxu0 0
        %5868 = vmatpush1.bf16.msra.mxu0 %v5848
        %5869 = vmatprep.subr.bf16.mxu0 0
        %5870 = vmatpush1.bf16.msra.mxu0 %v5849
        %5871 = vmatprep.subr.bf16.mxu0 0
        %5872 = vmatpush1.bf16.msra.mxu0 %v5850
        %5873 = vmatprep.subr.bf16.mxu0 0
        %5874 = vmatpush1.bf16.msra.mxu0 %v5851
        %5875 = vmatprep.subr.bf16.mxu0 0
        %5876 = vmatpush1.bf16.msra.mxu0 %v5852
        %5877 = vmatprep.subr.bf16.mxu0 0
        %5878 = vmatpush1.bf16.msra.mxu0 0
        %5879 = vmatprep.subr.bf16.mxu0 0
        %5880 = vmatpush1.bf16.msra.mxu0 0
        %5881 = vmatprep.subr.bf16.mxu0 0
        %5882 = vmatpush1.bf16.msra.mxu0 0
        %5883 = vmatprep.subr.bf16.mxu0 0
        %5884 = vmatpush1.bf16.msra.mxu0 0
        %5885 = vmatprep.subr.bf16.mxu0 0
        %5886 = vmatpush1.bf16.msra.mxu0 0
        %5887 = vmatprep.subr.bf16.mxu0 0
        %5888 = vmatpush1.bf16.msra.mxu0 0
        %5889 = vmatprep.subr.bf16.mxu0 0
        %5890 = vmatpush1.bf16.msra.mxu0 0
        %5891 = vmatprep.subr.bf16.mxu0 0
        %5892 = vmatpush1.bf16.msra.mxu0 0
        %5893 = vmatprep.mubr.bf16.mxu0 0
        %5894 = vmatmul.mubr.bf16.gmra.mrb[0].mxu0 %v5663
        %v5895 = vpop.f32.mrb[0].mxu0
        %v5896 = vadd.f32 0.0, %v5895
        %v5897 = vpop.f32.mrb[0].mxu0
        %v5898 = vpop.f32.mrb[0].mxu0
        %v5899 = vadd.f32 0.0, %v5898
        %v5900 = vpop.f32.mrb[0].mxu0
        %5901 = vmatprep.mubr.bf16.mxu0 0
        %5902 = vmatmul.mubr.bf16.gmra.mrb[0].mxu0 %v5671
        %v5903 = vpop.f32.mrb[0].mxu0
        %v5904 = vadd.f32 0.0, %v5903
        %v5905 = vpop.f32.mrb[0].mxu0
        %v5906 = vpop.f32.mrb[0].mxu0
        %v5907 = vadd.f32 0.0, %v5906
        %v5908 = vpop.f32.mrb[0].mxu0
        %5909 = vmatprep.mubr.bf16.mxu0 0
        %5910 = vmatmul.mubr.bf16.gmra.mrb[0].mxu0 %v5679
        %v5911 = vpop.f32.mrb[0].mxu0
        %v5912 = vadd.f32 0.0, %v5911
        %v5913 = vpop.f32.mrb[0].mxu0
        %v5914 = vpop.f32.mrb[0].mxu0
        %v5915 = vadd.f32 0.0, %v5914
        %v5916 = vpop.f32.mrb[0].mxu0
        %5917 = vmatprep.mubr.bf16.mxu0 0
        %5918 = vmatmul.mubr.bf16.gmra.mrb[0].mxu0 %v5687
        %v5919 = vpop.f32.mrb[0].mxu0
        %v5920 = vadd.f32 0.0, %v5919
        %v5921 = vpop.f32.mrb[0].mxu0
        %v5922 = vpop.f32.mrb[0].mxu0
        %v5923 = vadd.f32 0.0, %v5922
        %v5924 = vpop.f32.mrb[0].mxu0
        %5925 = vmatprep.mubr.bf16.mxu0 0
        %5926 = vmatmul.mubr.bf16.gmra.mrb[0].mxu0 %v5695
        %v5927 = vpop.f32.mrb[0].mxu0
        %v5928 = vadd.f32 0.0, %v5927
        %v5929 = vpop.f32.mrb[0].mxu0
        %v5930 = vpop.f32.mrb[0].mxu0
        %v5931 = vadd.f32 0.0, %v5930
        %v5932 = vpop.f32.mrb[0].mxu0
        %5933 = vmatprep.mubr.bf16.mxu0 0
        %5934 = vmatmul.mubr.bf16.gmra.mrb[0].mxu0 %v5703
        %v5935 = vpop.f32.mrb[0].mxu0
        %v5936 = vadd.f32 0.0, %v5935
        %v5937 = vpop.f32.mrb[0].mxu0
        %v5938 = vpop.f32.mrb[0].mxu0
        %v5939 = vadd.f32 0.0, %v5938
        %v5940 = vpop.f32.mrb[0].mxu0
        %5941 = vmatprep.mubr.bf16.mxu0 0
        %5942 = vmatmul.mubr.bf16.gmra.mrb[0].mxu0 %v5711
        %v5943 = vpop.f32.mrb[0].mxu0
        %v5944 = vadd.f32 0.0, %v5943
        %v5945 = vpop.f32.mrb[0].mxu0
        %v5946 = vpop.f32.mrb[0].mxu0
        %v5947 = vadd.f32 0.0, %v5946
        %v5948 = vpop.f32.mrb[0].mxu0
        %5949 = vmatprep.mubr.bf16.mxu0 0
        %5950 = vmatmul.mubr.bf16.gmra.mrb[0].mxu0 %v5719
        %v5951 = vpop.f32.mrb[0].mxu0
        %v5952 = vadd.f32 0.0, %v5951
        %v5953 = vpop.f32.mrb[0].mxu0
        %v5954 = vpop.f32.mrb[0].mxu0
        %v5955 = vadd.f32 0.0, %v5954
        %v5956 = vpop.f32.mrb[0].mxu0
        %5957 = vmatprep.mubr.bf16.mxu0 0
        %5958 = vmatmul.mubr.bf16.gmra.mrb[0].mxu0 %v5727
        %v5959 = vpop.f32.mrb[0].mxu0
        %v5960 = vadd.f32 0.0, %v5959
        %v5961 = vpop.f32.mrb[0].mxu0
        %v5962 = vpop.f32.mrb[0].mxu0
        %v5963 = vadd.f32 0.0, %v5962
        %v5964 = vpop.f32.mrb[0].mxu0
        %5965 = vmatprep.mubr.bf16.mxu0 0
        %5966 = vmatmul.mubr.bf16.gmra.mrb[0].mxu0 %v5735
        %v5967 = vpop.f32.mrb[0].mxu0
        %v5968 = vadd.f32 0.0, %v5967
        %v5969 = vpop.f32.mrb[0].mxu0
        %v5970 = vpop.f32.mrb[0].mxu0
        %v5971 = vadd.f32 0.0, %v5970
        %v5972 = vpop.f32.mrb[0].mxu0
        %5973 = vmatprep.mubr.bf16.mxu0 0
        %5974 = vmatmul.mubr.bf16.gmra.mrb[0].mxu0 %v5743
        %v5975 = vpop.f32.mrb[0].mxu0
        %v5976 = vadd.f32 0.0, %v5975
        %v5977 = vpop.f32.mrb[0].mxu0
        %v5978 = vpop.f32.mrb[0].mxu0
        %v5979 = vadd.f32 0.0, %v5978
        %v5980 = vpop.f32.mrb[0].mxu0
        %5981 = vmatprep.mubr.bf16.mxu0 0
        %5982 = vmatmul.mubr.bf16.gmra.mrb[0].mxu0 %v5751
        %v5983 = vpop.f32.mrb[0].mxu0
        %v5984 = vadd.f32 0.0, %v5983
        %v5985 = vpop.f32.mrb[0].mxu0
        %v5986 = vpop.f32.mrb[0].mxu0
        %v5987 = vadd.f32 0.0, %v5986
        %v5988 = vpop.f32.mrb[0].mxu0
        %5989 = vmatprep.mubr.bf16.mxu0 0
        %5990 = vmatmul.mubr.bf16.gmra.mrb[0].mxu0 %v5759
        %v5991 = vpop.f32.mrb[0].mxu0
        %v5992 = vadd.f32 0.0, %v5991
        %v5993 = vpop.f32.mrb[0].mxu0
        %v5994 = vpop.f32.mrb[0].mxu0
        %v5995 = vadd.f32 0.0, %v5994
        %v5996 = vpop.f32.mrb[0].mxu0
        %5997 = vmatprep.mubr.bf16.mxu0 0
        %5998 = vmatmul.mubr.bf16.gmra.mrb[0].mxu0 %v5767
        %v5999 = vpop.f32.mrb[0].mxu0
        %v6000 = vadd.f32 0.0, %v5999
        %v6001 = vpop.f32.mrb[0].mxu0
        %v6002 = vpop.f32.mrb[0].mxu0
        %v6003 = vadd.f32 0.0, %v6002
        %v6004 = vpop.f32.mrb[0].mxu0
        %6005 = vmatprep.mubr.bf16.mxu0 0
        %6006 = vmatmul.mubr.bf16.gmra.mrb[0].mxu0 %v5775
        %v6007 = vpop.f32.mrb[0].mxu0
        %v6008 = vadd.f32 0.0, %v6007
        %v6009 = vpop.f32.mrb[0].mxu0
        %v6010 = vpop.f32.mrb[0].mxu0
        %v6011 = vadd.f32 0.0, %v6010
        %v6012 = vpop.f32.mrb[0].mxu0
        %6013 = vmatprep.mubr.bf16.mxu0 0
        %6014 = vmatmul.mubr.bf16.gmra.mrb[0].mxu0 %v5783
        %v6015 = vpop.f32.mrb[0].mxu0
        %v6016 = vadd.f32 0.0, %v6015
        %v6017 = vpop.f32.mrb[0].mxu0
        %v6018 = vpop.f32.mrb[0].mxu0
        %v6019 = vadd.f32 0.0, %v6018
        %v6020 = vpop.f32.mrb[0].mxu0
        %6021 = vmatprep.mubr.bf16.mxu0 0
        %6022 = vmatmul.mubr.bf16.gmra.mrb[0].mxu0 %v5791
        %v6023 = vpop.f32.mrb[0].mxu0
        %v6024 = vadd.f32 0.0, %v6023
        %v6025 = vpop.f32.mrb[0].mxu0
        %v6026 = vpop.f32.mrb[0].mxu0
        %v6027 = vadd.f32 0.0, %v6026
        %v6028 = vpop.f32.mrb[0].mxu0
        %6029 = vmatprep.mubr.bf16.mxu0 0
        %6030 = vmatmul.mubr.bf16.gmra.mrb[0].mxu0 %v5794
        %v6031 = vpop.f32.mrb[0].mxu0
        %v6032 = vadd.f32 0.0, %v6031
        %v6033 = vpop.f32.mrb[0].mxu0
        %v6034 = vpop.f32.mrb[0].mxu0
        %v6035 = vadd.f32 0.0, %v6034
        %v6036 = vpop.f32.mrb[0].mxu0
        %6037 = vdwg.mxu0
        %v6039 = vunpack.c.l.b16 %v5527
        %v6040 = vpack.c.b16 %v6039, %v5632
        %v6075 = vunpack.c.l.b16 %v5528
        %v6076 = vunpack.c.l.b16 %v5529
        %v6077 = vunpack.c.l.b16 %v5530
        %v6078 = vunpack.c.l.b16 %v5531
        %v6079 = vunpack.c.l.b16 %v5532
        %v6080 = vunpack.c.l.b16 %v5533
        %v6081 = vunpack.c.l.b16 %v5534
        %v6082 = vunpack.c.l.b16 %v5535
        %v6083 = vunpack.c.l.b16 %v5536
        %v6084 = vunpack.c.l.b16 %v5537
        %v6085 = vunpack.c.l.b16 %v5538
        %v6086 = vunpack.c.l.b16 %v5539
        %v6087 = vunpack.c.l.b16 %v5540
        %v6088 = vunpack.c.l.b16 %v5541
        %v6089 = vunpack.c.l.b16 %v5542
        %v6090 = vunpack.c.l.b16 %v5543
        %v6091 = vpack.c.b16 %v6076, %v6075
        %v6092 = vpack.c.b16 %v6078, %v6077
        %v6093 = vpack.c.b16 %v6080, %v6079
        %v6094 = vpack.c.b16 %v6082, %v6081
        %v6095 = vpack.c.b16 %v6084, %v6083
        %v6096 = vpack.c.b16 %v6086, %v6085
        %v6097 = vpack.c.b16 %v6088, %v6087
        %v6098 = vpack.c.b16 %v6090, %v6089
        %6107 = vmatprep.subr.bf16.mxu0 0
        %6108 = vmatpush1.bf16.msra.mxu0 %v6091
        %6109 = vmatprep.subr.bf16.mxu0 0
        %6110 = vmatpush1.bf16.msra.mxu0 %v6092
        %6111 = vmatprep.subr.bf16.mxu0 0
        %6112 = vmatpush1.bf16.msra.mxu0 %v6093
        %6113 = vmatprep.subr.bf16.mxu0 0
        %6114 = vmatpush1.bf16.msra.mxu0 %v6094
        %6115 = vmatprep.subr.bf16.mxu0 0
        %6116 = vmatpush1.bf16.msra.mxu0 %v6095
        %6117 = vmatprep.subr.bf16.mxu0 0
        %6118 = vmatpush1.bf16.msra.mxu0 %v6096
        %6119 = vmatprep.subr.bf16.mxu0 0
        %6120 = vmatpush1.bf16.msra.mxu0 %v6097
        %6121 = vmatprep.subr.bf16.mxu0 0
        %6122 = vmatpush1.bf16.msra.mxu0 %v6098
        %6123 = vmatprep.subr.bf16.mxu0 0
        %6124 = vmatpush1.bf16.msra.mxu0 0
        %6125 = vmatprep.subr.bf16.mxu0 0
        %6126 = vmatpush1.bf16.msra.mxu0 0
        %6127 = vmatprep.subr.bf16.mxu0 0
        %6128 = vmatpush1.bf16.msra.mxu0 0
        %6129 = vmatprep.subr.bf16.mxu0 0
        %6130 = vmatpush1.bf16.msra.mxu0 0
        %6131 = vmatprep.subr.bf16.mxu0 0
        %6132 = vmatpush1.bf16.msra.mxu0 0
        %6133 = vmatprep.subr.bf16.mxu0 0
        %6134 = vmatpush1.bf16.msra.mxu0 0
        %6135 = vmatprep.subr.bf16.mxu0 0
        %6136 = vmatpush1.bf16.msra.mxu0 0
        %6137 = vmatprep.subr.bf16.mxu0 0
        %6138 = vmatpush1.bf16.msra.mxu0 0
        %6139 = vmatprep.mubr.bf16.mxu0 0
        %6140 = vmatmul.mubr.bf16.gmra.mrb[0].mxu0 %v5634
        %v6141 = vpop.f32.mrb[0].mxu0
        %v6142 = vadd.f32 %v5896, %v6141
        %v6143 = vpop.f32.mrb[0].mxu0
        %v6144 = vpop.f32.mrb[0].mxu0
        %v6145 = vadd.f32 %v5899, %v6144
        %v6146 = vpop.f32.mrb[0].mxu0
        %6147 = vmatprep.mubr.bf16.mxu0 0
        %6148 = vmatmul.mubr.bf16.gmra.mrb[0].mxu0 %v5635
        %v6149 = vpop.f32.mrb[0].mxu0
        %v6150 = vadd.f32 %v5904, %v6149
        %v6151 = vpop.f32.mrb[0].mxu0
        %v6152 = vpop.f32.mrb[0].mxu0
        %v6153 = vadd.f32 %v5907, %v6152
        %v6154 = vpop.f32.mrb[0].mxu0
        %6155 = vmatprep.mubr.bf16.mxu0 0
        %6156 = vmatmul.mubr.bf16.gmra.mrb[0].mxu0 %v5636
        %v6157 = vpop.f32.mrb[0].mxu0
        %v6158 = vadd.f32 %v5912, %v6157
        %v6159 = vpop.f32.mrb[0].mxu0
        %v6160 = vpop.f32.mrb[0].mxu0
        %v6161 = vadd.f32 %v5915, %v6160
        %v6162 = vpop.f32.mrb[0].mxu0
        %6163 = vmatprep.mubr.bf16.mxu0 0
        %6164 = vmatmul.mubr.bf16.gmra.mrb[0].mxu0 %v5637
        %v6165 = vpop.f32.mrb[0].mxu0
        %v6166 = vadd.f32 %v5920, %v6165
        %v6167 = vpop.f32.mrb[0].mxu0
        %v6168 = vpop.f32.mrb[0].mxu0
        %v6169 = vadd.f32 %v5923, %v6168
        %v6170 = vpop.f32.mrb[0].mxu0
        %6171 = vmatprep.mubr.bf16.mxu0 0
        %6172 = vmatmul.mubr.bf16.gmra.mrb[0].mxu0 %v5638
        %v6173 = vpop.f32.mrb[0].mxu0
        %v6174 = vadd.f32 %v5928, %v6173
        %v6175 = vpop.f32.mrb[0].mxu0
        %v6176 = vpop.f32.mrb[0].mxu0
        %v6177 = vadd.f32 %v5931, %v6176
        %v6178 = vpop.f32.mrb[0].mxu0
        %6179 = vmatprep.mubr.bf16.mxu0 0
        %6180 = vmatmul.mubr.bf16.gmra.mrb[0].mxu0 %v5639
        %v6181 = vpop.f32.mrb[0].mxu0
        %v6182 = vadd.f32 %v5936, %v6181
        %v6183 = vpop.f32.mrb[0].mxu0
        %v6184 = vpop.f32.mrb[0].mxu0
        %v6185 = vadd.f32 %v5939, %v6184
        %v6186 = vpop.f32.mrb[0].mxu0
        %6187 = vmatprep.mubr.bf16.mxu0 0
        %6188 = vmatmul.mubr.bf16.gmra.mrb[0].mxu0 %v5640
        %v6189 = vpop.f32.mrb[0].mxu0
        %v6190 = vadd.f32 %v5944, %v6189
        %v6191 = vpop.f32.mrb[0].mxu0
        %v6192 = vpop.f32.mrb[0].mxu0
        %v6193 = vadd.f32 %v5947, %v6192
        %v6194 = vpop.f32.mrb[0].mxu0
        %6195 = vmatprep.mubr.bf16.mxu0 0
        %6196 = vmatmul.mubr.bf16.gmra.mrb[0].mxu0 %v5641
        %v6197 = vpop.f32.mrb[0].mxu0
        %v6198 = vadd.f32 %v5952, %v6197
        %v6199 = vpop.f32.mrb[0].mxu0
        %v6200 = vpop.f32.mrb[0].mxu0
        %v6201 = vadd.f32 %v5955, %v6200
        %v6202 = vpop.f32.mrb[0].mxu0
        %6203 = vmatprep.mubr.bf16.mxu0 0
        %6204 = vmatmul.mubr.bf16.gmra.mrb[0].mxu0 %v5642
        %v6205 = vpop.f32.mrb[0].mxu0
        %v6206 = vadd.f32 %v5960, %v6205
        %v6207 = vpop.f32.mrb[0].mxu0
        %v6208 = vpop.f32.mrb[0].mxu0
        %v6209 = vadd.f32 %v5963, %v6208
        %v6210 = vpop.f32.mrb[0].mxu0
        %6211 = vmatprep.mubr.bf16.mxu0 0
        %6212 = vmatmul.mubr.bf16.gmra.mrb[0].mxu0 %v5643
        %v6213 = vpop.f32.mrb[0].mxu0
        %v6214 = vadd.f32 %v5968, %v6213
        %v6215 = vpop.f32.mrb[0].mxu0
        %v6216 = vpop.f32.mrb[0].mxu0
        %v6217 = vadd.f32 %v5971, %v6216
        %v6218 = vpop.f32.mrb[0].mxu0
        %6219 = vmatprep.mubr.bf16.mxu0 0
        %6220 = vmatmul.mubr.bf16.gmra.mrb[0].mxu0 %v5644
        %v6221 = vpop.f32.mrb[0].mxu0
        %v6222 = vadd.f32 %v5976, %v6221
        %v6223 = vpop.f32.mrb[0].mxu0
        %v6224 = vpop.f32.mrb[0].mxu0
        %v6225 = vadd.f32 %v5979, %v6224
        %v6226 = vpop.f32.mrb[0].mxu0
        %6227 = vmatprep.mubr.bf16.mxu0 0
        %6228 = vmatmul.mubr.bf16.gmra.mrb[0].mxu0 %v5645
        %v6229 = vpop.f32.mrb[0].mxu0
        %v6230 = vadd.f32 %v5984, %v6229
        %v6231 = vpop.f32.mrb[0].mxu0
        %v6232 = vpop.f32.mrb[0].mxu0
        %v6233 = vadd.f32 %v5987, %v6232
        %v6234 = vpop.f32.mrb[0].mxu0
        %6235 = vmatprep.mubr.bf16.mxu0 0
        %6236 = vmatmul.mubr.bf16.gmra.mrb[0].mxu0 %v5646
        %v6237 = vpop.f32.mrb[0].mxu0
        %v6238 = vadd.f32 %v5992, %v6237
        %v6239 = vpop.f32.mrb[0].mxu0
        %v6240 = vpop.f32.mrb[0].mxu0
        %v6241 = vadd.f32 %v5995, %v6240
        %v6242 = vpop.f32.mrb[0].mxu0
        %6243 = vmatprep.mubr.bf16.mxu0 0
        %6244 = vmatmul.mubr.bf16.gmra.mrb[0].mxu0 %v5647
        %v6245 = vpop.f32.mrb[0].mxu0
        %v6246 = vadd.f32 %v6000, %v6245
        %v6247 = vpop.f32.mrb[0].mxu0
        %v6248 = vpop.f32.mrb[0].mxu0
        %v6249 = vadd.f32 %v6003, %v6248
        %v6250 = vpop.f32.mrb[0].mxu0
        %6251 = vmatprep.mubr.bf16.mxu0 0
        %6252 = vmatmul.mubr.bf16.gmra.mrb[0].mxu0 %v5648
        %v6253 = vpop.f32.mrb[0].mxu0
        %v6254 = vadd.f32 %v6008, %v6253
        %v6255 = vpop.f32.mrb[0].mxu0
        %v6256 = vpop.f32.mrb[0].mxu0
        %v6257 = vadd.f32 %v6011, %v6256
        %v6258 = vpop.f32.mrb[0].mxu0
        %6259 = vmatprep.mubr.bf16.mxu0 0
        %6260 = vmatmul.mubr.bf16.gmra.mrb[0].mxu0 %v5649
        %v6261 = vpop.f32.mrb[0].mxu0
        %v6262 = vadd.f32 %v6016, %v6261
        %v6263 = vpop.f32.mrb[0].mxu0
        %v6264 = vpop.f32.mrb[0].mxu0
        %v6265 = vadd.f32 %v6019, %v6264
        %v6266 = vpop.f32.mrb[0].mxu0
        %6267 = vmatprep.mubr.bf16.mxu0 0
        %6268 = vmatmul.mubr.bf16.gmra.mrb[0].mxu0 %v5650
        %v6269 = vpop.f32.mrb[0].mxu0
        %v6270 = vadd.f32 %v6024, %v6269
        %v6271 = vpop.f32.mrb[0].mxu0
        %v6272 = vpop.f32.mrb[0].mxu0
        %v6273 = vadd.f32 %v6027, %v6272
        %v6274 = vpop.f32.mrb[0].mxu0
        %6275 = vmatprep.mubr.bf16.mxu0 0
        %6276 = vmatmul.mubr.bf16.gmra.mrb[0].mxu0 %v6040
        %v6277 = vpop.f32.mrb[0].mxu0
        %v6278 = vadd.f32 %v6032, %v6277
        %v6279 = vpop.f32.mrb[0].mxu0
        %v6280 = vpop.f32.mrb[0].mxu0
        %v6281 = vadd.f32 %v6035, %v6280
        %v6282 = vpop.f32.mrb[0].mxu0
        %6283 = vdwg.mxu0
        %v6284 = vld [vmem:[#allocation2] sm:$0xe]
        %s6285 = scalar_lea.vmem [#allocation9], 128
        %v6286 = vld [vmem:[%s6285] sm:$0xf]
        %v6287 = vld [vmem:[%s6285 + $0x4] sm:$0xf]
        %v6288 = vld [vmem:[%s6285 + $0x8] sm:$0xf]
        %v6289 = vld [vmem:[%s6285 + $0xc] sm:$0xf]
        %v6290 = vld [vmem:[%s6285 + $0x10] sm:$0xf]
        %v6291 = vld [vmem:[%s6285 + $0x14] sm:$0xf]
        %v6292 = vld [vmem:[%s6285 + $0x18] sm:$0xf]
        %v6293 = vld [vmem:[%s6285 + $0x1c] sm:$0xf]
        %v6294 = vld [vmem:[%s6285 + $0x20] sm:$0xf]
        %v6295 = vld [vmem:[%s6285 + $0x24] sm:$0xf]
        %v6296 = vld [vmem:[%s6285 + $0x28] sm:$0xf]
        %v6297 = vld [vmem:[%s6285 + $0x2c] sm:$0xf]
        %v6298 = vld [vmem:[%s6285 + $0x30] sm:$0xf]
        %v6299 = vld [vmem:[%s6285 + $0x34] sm:$0xf]
        %v6300 = vld [vmem:[%s6285 + $0x38] sm:$0xf]
        %v6301 = vld [vmem:[%s6285 + $0x3c] sm:$0xf]
        %v6303 = vunpack.c.l.b16 %v6284
        %v6304 = vpack.c.b16 %v5599, %v6303
        %v6305 = vrot.slane %v6304, 1
        %v6306 = vrot.slane %v5635, 1
        %v6307 = vsel %vm1761, %v6305, %v6306
        %v6308 = vrot.slane %v5636, 1
        %v6309 = vsel %vm1761, %v6306, %v6308
        %v6310 = vrot.slane %v5637, 1
        %v6311 = vsel %vm1761, %v6308, %v6310
        %v6312 = vrot.slane %v5638, 1
        %v6313 = vsel %vm1761, %v6310, %v6312
        %v6314 = vrot.slane %v5639, 1
        %v6315 = vsel %vm1761, %v6312, %v6314
        %v6316 = vrot.slane %v5640, 1
        %v6317 = vsel %vm1761, %v6314, %v6316
        %v6318 = vrot.slane %v5641, 1
        %v6319 = vsel %vm1761, %v6316, %v6318
        %v6320 = vrot.slane %v5642, 1
        %v6321 = vsel %vm1761, %v6318, %v6320
        %v6322 = vrot.slane %v5643, 1
        %v6323 = vsel %vm1761, %v6320, %v6322
        %v6324 = vrot.slane %v5644, 1
        %v6325 = vsel %vm1761, %v6322, %v6324
        %v6326 = vrot.slane %v5645, 1
        %v6327 = vsel %vm1761, %v6324, %v6326
        %v6328 = vrot.slane %v5646, 1
        %v6329 = vsel %vm1761, %v6326, %v6328
        %v6330 = vrot.slane %v5647, 1
        %v6331 = vsel %vm1761, %v6328, %v6330
        %v6332 = vrot.slane %v5648, 1
        %v6333 = vsel %vm1761, %v6330, %v6332
        %v6334 = vrot.slane %v5649, 1
        %v6335 = vsel %vm1761, %v6332, %v6334
        %v6336 = vrot.slane %v5650, 1
        %v6337 = vsel %vm1761, %v6334, %v6336
        %v6338 = vrot.slane %v5651, 1
        %v6339 = vsel %vm1761, %v6336, %v6338
        %v6374 = vunpack.c.l.b16 %v6286
        %v6375 = vunpack.c.l.b16 %v6287
        %v6376 = vunpack.c.l.b16 %v6288
        %v6377 = vunpack.c.l.b16 %v6289
        %v6378 = vunpack.c.l.b16 %v6290
        %v6379 = vunpack.c.l.b16 %v6291
        %v6380 = vunpack.c.l.b16 %v6292
        %v6381 = vunpack.c.l.b16 %v6293
        %v6382 = vunpack.c.l.b16 %v6294
        %v6383 = vunpack.c.l.b16 %v6295
        %v6384 = vunpack.c.l.b16 %v6296
        %v6385 = vunpack.c.l.b16 %v6297
        %v6386 = vunpack.c.l.b16 %v6298
        %v6387 = vunpack.c.l.b16 %v6299
        %v6388 = vunpack.c.l.b16 %v6300
        %v6389 = vunpack.c.l.b16 %v6301
        %v6390 = vpack.c.b16 %v6375, %v6374
        %v6391 = vpack.c.b16 %v6377, %v6376
        %v6392 = vpack.c.b16 %v6379, %v6378
        %v6393 = vpack.c.b16 %v6381, %v6380
        %v6394 = vpack.c.b16 %v6383, %v6382
        %v6395 = vpack.c.b16 %v6385, %v6384
        %v6396 = vpack.c.b16 %v6387, %v6386
        %v6397 = vpack.c.b16 %v6389, %v6388
        %6406 = vmatprep.subr.bf16.mxu0 0
        %6407 = vmatpush1.bf16.msra.mxu0 %v6390
        %6408 = vmatprep.subr.bf16.mxu0 0
        %6409 = vmatpush1.bf16.msra.mxu0 %v6391
        %6410 = vmatprep.subr.bf16.mxu0 0
        %6411 = vmatpush1.bf16.msra.mxu0 %v6392
        %6412 = vmatprep.subr.bf16.mxu0 0
        %6413 = vmatpush1.bf16.msra.mxu0 %v6393
        %6414 = vmatprep.subr.bf16.mxu0 0
        %6415 = vmatpush1.bf16.msra.mxu0 %v6394
        %6416 = vmatprep.subr.bf16.mxu0 0
        %6417 = vmatpush1.bf16.msra.mxu0 %v6395
        %6418 = vmatprep.subr.bf16.mxu0 0
        %6419 = vmatpush1.bf16.msra.mxu0 %v6396
        %6420 = vmatprep.subr.bf16.mxu0 0
        %6421 = vmatpush1.bf16.msra.mxu0 %v6397
        %6422 = vmatprep.subr.bf16.mxu0 0
        %6423 = vmatpush1.bf16.msra.mxu0 0
        %6424 = vmatprep.subr.bf16.mxu0 0
        %6425 = vmatpush1.bf16.msra.mxu0 0
        %6426 = vmatprep.subr.bf16.mxu0 0
        %6427 = vmatpush1.bf16.msra.mxu0 0
        %6428 = vmatprep.subr.bf16.mxu0 0
        %6429 = vmatpush1.bf16.msra.mxu0 0
        %6430 = vmatprep.subr.bf16.mxu0 0
        %6431 = vmatpush1.bf16.msra.mxu0 0
        %6432 = vmatprep.subr.bf16.mxu0 0
        %6433 = vmatpush1.bf16.msra.mxu0 0
        %6434 = vmatprep.subr.bf16.mxu0 0
        %6435 = vmatpush1.bf16.msra.mxu0 0
        %6436 = vmatprep.subr.bf16.mxu0 0
        %6437 = vmatpush1.bf16.msra.mxu0 0
        %6438 = vmatprep.mubr.bf16.mxu0 0
        %6439 = vmatmul.mubr.bf16.gmra.mrb[0].mxu0 %v6307
        %v6440 = vpop.f32.mrb[0].mxu0
        %v6441 = vadd.f32 0.0, %v6440
        %v6442 = vpop.f32.mrb[0].mxu0
        %v6443 = vpop.f32.mrb[0].mxu0
        %v6444 = vadd.f32 0.0, %v6443
        %v6445 = vpop.f32.mrb[0].mxu0
        %6446 = vmatprep.mubr.bf16.mxu0 0
        %6447 = vmatmul.mubr.bf16.gmra.mrb[0].mxu0 %v6309
        %v6448 = vpop.f32.mrb[0].mxu0
        %v6449 = vadd.f32 0.0, %v6448
        %v6450 = vpop.f32.mrb[0].mxu0
        %v6451 = vpop.f32.mrb[0].mxu0
        %v6452 = vadd.f32 0.0, %v6451
        %v6453 = vpop.f32.mrb[0].mxu0
        %6454 = vmatprep.mubr.bf16.mxu0 0
        %6455 = vmatmul.mubr.bf16.gmra.mrb[0].mxu0 %v6311
        %v6456 = vpop.f32.mrb[0].mxu0
        %v6457 = vadd.f32 0.0, %v6456
        %v6458 = vpop.f32.mrb[0].mxu0
        %v6459 = vpop.f32.mrb[0].mxu0
        %v6460 = vadd.f32 0.0, %v6459
        %v6461 = vpop.f32.mrb[0].mxu0
        %6462 = vmatprep.mubr.bf16.mxu0 0
        %6463 = vmatmul.mubr.bf16.gmra.mrb[0].mxu0 %v6313
        %v6464 = vpop.f32.mrb[0].mxu0
        %v6465 = vadd.f32 0.0, %v6464
        %v6466 = vpop.f32.mrb[0].mxu0
        %v6467 = vpop.f32.mrb[0].mxu0
        %v6468 = vadd.f32 0.0, %v6467
        %v6469 = vpop.f32.mrb[0].mxu0
        %6470 = vmatprep.mubr.bf16.mxu0 0
        %6471 = vmatmul.mubr.bf16.gmra.mrb[0].mxu0 %v6315
        %v6472 = vpop.f32.mrb[0].mxu0
        %v6473 = vadd.f32 0.0, %v6472
        %v6474 = vpop.f32.mrb[0].mxu0
        %v6475 = vpop.f32.mrb[0].mxu0
        %v6476 = vadd.f32 0.0, %v6475
        %v6477 = vpop.f32.mrb[0].mxu0
        %6478 = vmatprep.mubr.bf16.mxu0 0
        %6479 = vmatmul.mubr.bf16.gmra.mrb[0].mxu0 %v6317
        %v6480 = vpop.f32.mrb[0].mxu0
        %v6481 = vadd.f32 0.0, %v6480
        %v6482 = vpop.f32.mrb[0].mxu0
        %v6483 = vpop.f32.mrb[0].mxu0
        %v6484 = vadd.f32 0.0, %v6483
        %v6485 = vpop.f32.mrb[0].mxu0
        %6486 = vmatprep.mubr.bf16.mxu0 0
        %6487 = vmatmul.mubr.bf16.gmra.mrb[0].mxu0 %v6319
        %v6488 = vpop.f32.mrb[0].mxu0
        %v6489 = vadd.f32 0.0, %v6488
        %v6490 = vpop.f32.mrb[0].mxu0
        %v6491 = vpop.f32.mrb[0].mxu0
        %v6492 = vadd.f32 0.0, %v6491
        %v6493 = vpop.f32.mrb[0].mxu0
        %6494 = vmatprep.mubr.bf16.mxu0 0
        %6495 = vmatmul.mubr.bf16.gmra.mrb[0].mxu0 %v6321
        %v6496 = vpop.f32.mrb[0].mxu0
        %v6497 = vadd.f32 0.0, %v6496
        %v6498 = vpop.f32.mrb[0].mxu0
        %v6499 = vpop.f32.mrb[0].mxu0
        %v6500 = vadd.f32 0.0, %v6499
        %v6501 = vpop.f32.mrb[0].mxu0
        %6502 = vmatprep.mubr.bf16.mxu0 0
        %6503 = vmatmul.mubr.bf16.gmra.mrb[0].mxu0 %v6323
        %v6504 = vpop.f32.mrb[0].mxu0
        %v6505 = vadd.f32 0.0, %v6504
        %v6506 = vpop.f32.mrb[0].mxu0
        %v6507 = vpop.f32.mrb[0].mxu0
        %v6508 = vadd.f32 0.0, %v6507
        %v6509 = vpop.f32.mrb[0].mxu0
        %6510 = vmatprep.mubr.bf16.mxu0 0
        %6511 = vmatmul.mubr.bf16.gmra.mrb[0].mxu0 %v6325
        %v6512 = vpop.f32.mrb[0].mxu0
        %v6513 = vadd.f32 0.0, %v6512
        %v6514 = vpop.f32.mrb[0].mxu0
        %v6515 = vpop.f32.mrb[0].mxu0
        %v6516 = vadd.f32 0.0, %v6515
        %v6517 = vpop.f32.mrb[0].mxu0
        %6518 = vmatprep.mubr.bf16.mxu0 0
        %6519 = vmatmul.mubr.bf16.gmra.mrb[0].mxu0 %v6327
        %v6520 = vpop.f32.mrb[0].mxu0
        %v6521 = vadd.f32 0.0, %v6520
        %v6522 = vpop.f32.mrb[0].mxu0
        %v6523 = vpop.f32.mrb[0].mxu0
        %v6524 = vadd.f32 0.0, %v6523
        %v6525 = vpop.f32.mrb[0].mxu0
        %6526 = vmatprep.mubr.bf16.mxu0 0
        %6527 = vmatmul.mubr.bf16.gmra.mrb[0].mxu0 %v6329
        %v6528 = vpop.f32.mrb[0].mxu0
        %v6529 = vadd.f32 0.0, %v6528
        %v6530 = vpop.f32.mrb[0].mxu0
        %v6531 = vpop.f32.mrb[0].mxu0
        %v6532 = vadd.f32 0.0, %v6531
        %v6533 = vpop.f32.mrb[0].mxu0
        %6534 = vmatprep.mubr.bf16.mxu0 0
        %6535 = vmatmul.mubr.bf16.gmra.mrb[0].mxu0 %v6331
        %v6536 = vpop.f32.mrb[0].mxu0
        %v6537 = vadd.f32 0.0, %v6536
        %v6538 = vpop.f32.mrb[0].mxu0
        %v6539 = vpop.f32.mrb[0].mxu0
        %v6540 = vadd.f32 0.0, %v6539
        %v6541 = vpop.f32.mrb[0].mxu0
        %6542 = vmatprep.mubr.bf16.mxu0 0
        %6543 = vmatmul.mubr.bf16.gmra.mrb[0].mxu0 %v6333
        %v6544 = vpop.f32.mrb[0].mxu0
        %v6545 = vadd.f32 0.0, %v6544
        %v6546 = vpop.f32.mrb[0].mxu0
        %v6547 = vpop.f32.mrb[0].mxu0
        %v6548 = vadd.f32 0.0, %v6547
        %v6549 = vpop.f32.mrb[0].mxu0
        %6550 = vmatprep.mubr.bf16.mxu0 0
        %6551 = vmatmul.mubr.bf16.gmra.mrb[0].mxu0 %v6335
        %v6552 = vpop.f32.mrb[0].mxu0
        %v6553 = vadd.f32 0.0, %v6552
        %v6554 = vpop.f32.mrb[0].mxu0
        %v6555 = vpop.f32.mrb[0].mxu0
        %v6556 = vadd.f32 0.0, %v6555
        %v6557 = vpop.f32.mrb[0].mxu0
        %6558 = vmatprep.mubr.bf16.mxu0 0
        %6559 = vmatmul.mubr.bf16.gmra.mrb[0].mxu0 %v6337
        %v6560 = vpop.f32.mrb[0].mxu0
        %v6561 = vadd.f32 0.0, %v6560
        %v6562 = vpop.f32.mrb[0].mxu0
        %v6563 = vpop.f32.mrb[0].mxu0
        %v6564 = vadd.f32 0.0, %v6563
        %v6565 = vpop.f32.mrb[0].mxu0
        %6566 = vmatprep.mubr.bf16.mxu0 0
        %6567 = vmatmul.mubr.bf16.gmra.mrb[0].mxu0 %v6339
        %v6568 = vpop.f32.mrb[0].mxu0
        %v6569 = vadd.f32 0.0, %v6568
        %v6570 = vpop.f32.mrb[0].mxu0
        %v6571 = vpop.f32.mrb[0].mxu0
        %v6572 = vadd.f32 0.0, %v6571
        %v6573 = vpop.f32.mrb[0].mxu0
        %6574 = vmatprep.mubr.bf16.mxu0 0
        %6575 = vmatmul.mubr.bf16.gmra.mrb[0].mxu0 %v6338
        %v6576 = vpop.f32.mrb[0].mxu0
        %v6577 = vadd.f32 0.0, %v6576
        %v6578 = vpop.f32.mrb[0].mxu0
        %v6579 = vpop.f32.mrb[0].mxu0
        %v6580 = vadd.f32 0.0, %v6579
        %v6581 = vpop.f32.mrb[0].mxu0
        %6582 = vdwg.mxu0
        %v6583 = vadd.f32 %v6142, %v6441
        %v6584 = vadd.f32 %v6145, %v6444
        %v6585 = vadd.f32 %v6150, %v6449
        %v6586 = vadd.f32 %v6153, %v6452
        %v6587 = vadd.f32 %v6158, %v6457
        %v6588 = vadd.f32 %v6161, %v6460
        %v6589 = vadd.f32 %v6166, %v6465
        %v6590 = vadd.f32 %v6169, %v6468
        %v6591 = vadd.f32 %v6174, %v6473
        %v6592 = vadd.f32 %v6177, %v6476
        %v6593 = vadd.f32 %v6182, %v6481
        %v6594 = vadd.f32 %v6185, %v6484
        %v6595 = vadd.f32 %v6190, %v6489
        %v6596 = vadd.f32 %v6193, %v6492
        %v6597 = vadd.f32 %v6198, %v6497
        %v6598 = vadd.f32 %v6201, %v6500
        %v6599 = vadd.f32 %v6206, %v6505
        %v6600 = vadd.f32 %v6209, %v6508
        %v6601 = vadd.f32 %v6214, %v6513
        %v6602 = vadd.f32 %v6217, %v6516
        %v6603 = vadd.f32 %v6222, %v6521
        %v6604 = vadd.f32 %v6225, %v6524
        %v6605 = vadd.f32 %v6230, %v6529
        %v6606 = vadd.f32 %v6233, %v6532
        %v6607 = vadd.f32 %v6238, %v6537
        %v6608 = vadd.f32 %v6241, %v6540
        %v6609 = vadd.f32 %v6246, %v6545
        %v6610 = vadd.f32 %v6249, %v6548
        %v6611 = vadd.f32 %v6254, %v6553
        %v6612 = vadd.f32 %v6257, %v6556
        %v6613 = vadd.f32 %v6262, %v6561
        %v6614 = vadd.f32 %v6265, %v6564
        %v6615 = vadd.f32 %v6270, %v6569
        %v6616 = vadd.f32 %v6273, %v6572
        %v6617 = vadd.f32 %v6278, %v6577
        %v6618 = vadd.f32 %v6281, %v6580
        %v6619 = vld [vmem:[#allocation2 + $0x8] sm:$0xe]
        %v6620 = vld [vmem:[#allocation2 + $0xc] sm:$0xf]
        %v6621 = vld [vmem:[#allocation2 + $0x10] sm:$0xf]
        %v6622 = vld [vmem:[#allocation2 + $0x14] sm:$0xf]
        %v6623 = vld [vmem:[#allocation2 + $0x18] sm:$0xf]
        %v6624 = vld [vmem:[#allocation2 + $0x1c] sm:$0xf]
        %v6625 = vld [vmem:[#allocation2 + $0x20] sm:$0xf]
        %v6626 = vld [vmem:[#allocation2 + $0x24] sm:$0xf]
        %v6627 = vld [vmem:[#allocation2 + $0x28] sm:$0xf]
        %v6628 = vld [vmem:[#allocation2 + $0x2c] sm:$0xf]
        %v6629 = vld [vmem:[#allocation2 + $0x30] sm:$0xf]
        %v6630 = vld [vmem:[#allocation2 + $0x34] sm:$0xf]
        %v6631 = vld [vmem:[#allocation2 + $0x38] sm:$0xf]
        %v6632 = vld [vmem:[#allocation2 + $0x3c] sm:$0xf]
        %v6633 = vld [vmem:[#allocation2 + $0x40] sm:$0xf]
        %v6634 = vld [vmem:[#allocation2 + $0x44] sm:$0xf]
        %v6635 = vld [vmem:[#allocation2 + $0x48] sm:$0xf]
        %v6636 = vld [vmem:[#allocation2 + $0x4c] sm:$0xf]
        %v6637 = vld [vmem:[#allocation2 + $0x50] sm:$0xf]
        %v6638 = vld [vmem:[#allocation2 + $0x54] sm:$0xf]
        %v6639 = vld [vmem:[#allocation2 + $0x58] sm:$0xf]
        %v6640 = vld [vmem:[#allocation2 + $0x5c] sm:$0xf]
        %v6641 = vld [vmem:[#allocation2 + $0x60] sm:$0xf]
        %v6642 = vld [vmem:[#allocation2 + $0x64] sm:$0xf]
        %v6643 = vld [vmem:[#allocation2 + $0x68] sm:$0xf]
        %v6644 = vld [vmem:[#allocation2 + $0x6c] sm:$0xf]
        %v6645 = vld [vmem:[#allocation2 + $0x70] sm:$0xf]
        %v6646 = vld [vmem:[#allocation2 + $0x74] sm:$0xf]
        %v6647 = vld [vmem:[#allocation2 + $0x78] sm:$0xf]
        %v6648 = vld [vmem:[#allocation2 + $0x7c] sm:$0xf]
        %v6649 = vld [vmem:[#allocation2 + $0x80] sm:$0xf]
        %v6650 = vld [vmem:[#allocation2 + $0x84] sm:$0xf]
        %v6651 = vld [vmem:[#allocation2 + $0x88] sm:$0xf]
        %v6652 = vld [vmem:[#allocation2 + $0x8c] sm:$0xf]
        %v6653 = vld [vmem:[#allocation2 + $0x90] sm:$0xf]
        %v6654 = vld [vmem:[#allocation2 + $0x94] sm:$0xf]
        %s6655 = scalar_lea.vmem [#allocation9], 192
        %v6656 = vld [vmem:[%s6655] sm:$0xf]
        %v6657 = vld [vmem:[%s6655 + $0x4] sm:$0xf]
        %v6658 = vld [vmem:[%s6655 + $0x8] sm:$0xf]
        %v6659 = vld [vmem:[%s6655 + $0xc] sm:$0xf]
        %v6660 = vld [vmem:[%s6655 + $0x10] sm:$0xf]
        %v6661 = vld [vmem:[%s6655 + $0x14] sm:$0xf]
        %v6662 = vld [vmem:[%s6655 + $0x18] sm:$0xf]
        %v6663 = vld [vmem:[%s6655 + $0x1c] sm:$0xf]
        %v6664 = vld [vmem:[%s6655 + $0x20] sm:$0xf]
        %v6665 = vld [vmem:[%s6655 + $0x24] sm:$0xf]
        %v6666 = vld [vmem:[%s6655 + $0x28] sm:$0xf]
        %v6667 = vld [vmem:[%s6655 + $0x2c] sm:$0xf]
        %v6668 = vld [vmem:[%s6655 + $0x30] sm:$0xf]
        %v6669 = vld [vmem:[%s6655 + $0x34] sm:$0xf]
        %v6670 = vld [vmem:[%s6655 + $0x38] sm:$0xf]
        %v6671 = vld [vmem:[%s6655 + $0x3c] sm:$0xf]
        %v6708 = vunpack.c.l.b16 %v6619
        %v6709 = vunpack.c.l.b16 %v6620
        %v6710 = vunpack.c.l.b16 %v6621
        %v6711 = vunpack.c.l.b16 %v6622
        %v6712 = vunpack.c.l.b16 %v6623
        %v6713 = vunpack.c.l.b16 %v6624
        %v6714 = vunpack.c.l.b16 %v6625
        %v6715 = vunpack.c.l.b16 %v6626
        %v6716 = vunpack.c.l.b16 %v6627
        %v6717 = vunpack.c.l.b16 %v6628
        %v6718 = vunpack.c.l.b16 %v6629
        %v6719 = vunpack.c.l.b16 %v6630
        %v6720 = vunpack.c.l.b16 %v6631
        %v6721 = vunpack.c.l.b16 %v6632
        %v6722 = vunpack.c.l.b16 %v6633
        %v6723 = vunpack.c.l.b16 %v6634
        %v6724 = vunpack.c.l.b16 %v6635
        %v6725 = vunpack.c.l.b16 %v6636
        %v6726 = vunpack.c.l.b16 %v6637
        %v6727 = vunpack.c.l.b16 %v6638
        %v6728 = vunpack.c.l.b16 %v6639
        %v6729 = vunpack.c.l.b16 %v6640
        %v6730 = vunpack.c.l.b16 %v6641
        %v6731 = vunpack.c.l.b16 %v6642
        %v6732 = vunpack.c.l.b16 %v6643
        %v6733 = vunpack.c.l.b16 %v6644
        %v6734 = vunpack.c.l.b16 %v6645
        %v6735 = vunpack.c.l.b16 %v6646
        %v6736 = vunpack.c.l.b16 %v6647
        %v6737 = vunpack.c.l.b16 %v6648
        %v6738 = vunpack.c.l.b16 %v6649
        %v6739 = vunpack.c.l.b16 %v6650
        %v6740 = vunpack.c.l.b16 %v6651
        %v6741 = vunpack.c.l.b16 %v6652
        %v6742 = vunpack.c.l.b16 %v6653
        %v6743 = vunpack.c.l.b16 %v6654
        %v6744 = vpack.c.b16 %v6709, %v6708
        %v6745 = vpack.c.b16 %v6711, %v6710
        %v6746 = vpack.c.b16 %v6713, %v6712
        %v6747 = vpack.c.b16 %v6715, %v6714
        %v6748 = vpack.c.b16 %v6717, %v6716
        %v6749 = vpack.c.b16 %v6719, %v6718
        %v6750 = vpack.c.b16 %v6721, %v6720
        %v6751 = vpack.c.b16 %v6723, %v6722
        %v6752 = vpack.c.b16 %v6725, %v6724
        %v6753 = vpack.c.b16 %v6727, %v6726
        %v6754 = vpack.c.b16 %v6729, %v6728
        %v6755 = vpack.c.b16 %v6731, %v6730
        %v6756 = vpack.c.b16 %v6733, %v6732
        %v6757 = vpack.c.b16 %v6735, %v6734
        %v6758 = vpack.c.b16 %v6737, %v6736
        %v6759 = vpack.c.b16 %v6739, %v6738
        %v6760 = vpack.c.b16 %v6741, %v6740
        %v6761 = vpack.c.b16 %v6743, %v6742
        %v6762 = vrot.slane %v6744, 1
        %v6763 = vrot.slane %v6745, 1
        %v6764 = vsel %vm1761, %v6762, %v6763
        %v6765 = vrot.slane %v6746, 1
        %v6766 = vsel %vm1761, %v6763, %v6765
        %v6767 = vrot.slane %v6747, 1
        %v6768 = vsel %vm1761, %v6765, %v6767
        %v6769 = vrot.slane %v6748, 1
        %v6770 = vsel %vm1761, %v6767, %v6769
        %v6771 = vrot.slane %v6749, 1
        %v6772 = vsel %vm1761, %v6769, %v6771
        %v6773 = vrot.slane %v6750, 1
        %v6774 = vsel %vm1761, %v6771, %v6773
        %v6775 = vrot.slane %v6751, 1
        %v6776 = vsel %vm1761, %v6773, %v6775
        %v6777 = vrot.slane %v6752, 1
        %v6778 = vsel %vm1761, %v6775, %v6777
        %v6779 = vrot.slane %v6753, 1
        %v6780 = vsel %vm1761, %v6777, %v6779
        %v6781 = vrot.slane %v6754, 1
        %v6782 = vsel %vm1761, %v6779, %v6781
        %v6783 = vrot.slane %v6755, 1
        %v6784 = vsel %vm1761, %v6781, %v6783
        %v6785 = vrot.slane %v6756, 1
        %v6786 = vsel %vm1761, %v6783, %v6785
        %v6787 = vrot.slane %v6757, 1
        %v6788 = vsel %vm1761, %v6785, %v6787
        %v6789 = vrot.slane %v6758, 1
        %v6790 = vsel %vm1761, %v6787, %v6789
        %v6791 = vrot.slane %v6759, 1
        %v6792 = vsel %vm1761, %v6789, %v6791
        %v6793 = vrot.slane %v6760, 1
        %v6794 = vsel %vm1761, %v6791, %v6793
        %v6795 = vrot.slane %v6761, 1
        %v6796 = vsel %vm1761, %v6793, %v6795
        %v6831 = vunpack.c.l.b16 %v6656
        %v6832 = vunpack.c.l.b16 %v6657
        %v6833 = vunpack.c.l.b16 %v6658
        %v6834 = vunpack.c.l.b16 %v6659
        %v6835 = vunpack.c.l.b16 %v6660
        %v6836 = vunpack.c.l.b16 %v6661
        %v6837 = vunpack.c.l.b16 %v6662
        %v6838 = vunpack.c.l.b16 %v6663
        %v6839 = vunpack.c.l.b16 %v6664
        %v6840 = vunpack.c.l.b16 %v6665
        %v6841 = vunpack.c.l.b16 %v6666
        %v6842 = vunpack.c.l.b16 %v6667
        %v6843 = vunpack.c.l.b16 %v6668
        %v6844 = vunpack.c.l.b16 %v6669
        %v6845 = vunpack.c.l.b16 %v6670
        %v6846 = vunpack.c.l.b16 %v6671
        %v6847 = vpack.c.b16 %v6832, %v6831
        %v6848 = vpack.c.b16 %v6834, %v6833
        %v6849 = vpack.c.b16 %v6836, %v6835
        %v6850 = vpack.c.b16 %v6838, %v6837
        %v6851 = vpack.c.b16 %v6840, %v6839
        %v6852 = vpack.c.b16 %v6842, %v6841
        %v6853 = vpack.c.b16 %v6844, %v6843
        %v6854 = vpack.c.b16 %v6846, %v6845
        %6863 = vmatprep.subr.bf16.mxu0 0
        %6864 = vmatpush1.bf16.msra.mxu0 %v6847
        %6865 = vmatprep.subr.bf16.mxu0 0
        %6866 = vmatpush1.bf16.msra.mxu0 %v6848
        %6867 = vmatprep.subr.bf16.mxu0 0
        %6868 = vmatpush1.bf16.msra.mxu0 %v6849
        %6869 = vmatprep.subr.bf16.mxu0 0
        %6870 = vmatpush1.bf16.msra.mxu0 %v6850
        %6871 = vmatprep.subr.bf16.mxu0 0
        %6872 = vmatpush1.bf16.msra.mxu0 %v6851
        %6873 = vmatprep.subr.bf16.mxu0 0
        %6874 = vmatpush1.bf16.msra.mxu0 %v6852
        %6875 = vmatprep.subr.bf16.mxu0 0
        %6876 = vmatpush1.bf16.msra.mxu0 %v6853
        %6877 = vmatprep.subr.bf16.mxu0 0
        %6878 = vmatpush1.bf16.msra.mxu0 %v6854
        %6879 = vmatprep.subr.bf16.mxu0 0
        %6880 = vmatpush1.bf16.msra.mxu0 0
        %6881 = vmatprep.subr.bf16.mxu0 0
        %6882 = vmatpush1.bf16.msra.mxu0 0
        %6883 = vmatprep.subr.bf16.mxu0 0
        %6884 = vmatpush1.bf16.msra.mxu0 0
        %6885 = vmatprep.subr.bf16.mxu0 0
        %6886 = vmatpush1.bf16.msra.mxu0 0
        %6887 = vmatprep.subr.bf16.mxu0 0
        %6888 = vmatpush1.bf16.msra.mxu0 0
        %6889 = vmatprep.subr.bf16.mxu0 0
        %6890 = vmatpush1.bf16.msra.mxu0 0
        %6891 = vmatprep.subr.bf16.mxu0 0
        %6892 = vmatpush1.bf16.msra.mxu0 0
        %6893 = vmatprep.subr.bf16.mxu0 0
        %6894 = vmatpush1.bf16.msra.mxu0 0
        %6895 = vmatprep.mubr.bf16.mxu0 0
        %6896 = vmatmul.mubr.bf16.gmra.mrb[0].mxu0 %v6764
        %v6897 = vpop.f32.mrb[0].mxu0
        %v6898 = vadd.f32 0.0, %v6897
        %v6899 = vpop.f32.mrb[0].mxu0
        %v6900 = vpop.f32.mrb[0].mxu0
        %v6901 = vadd.f32 0.0, %v6900
        %v6902 = vpop.f32.mrb[0].mxu0
        %6903 = vmatprep.mubr.bf16.mxu0 0
        %6904 = vmatmul.mubr.bf16.gmra.mrb[0].mxu0 %v6766
        %v6905 = vpop.f32.mrb[0].mxu0
        %v6906 = vadd.f32 0.0, %v6905
        %v6907 = vpop.f32.mrb[0].mxu0
        %v6908 = vpop.f32.mrb[0].mxu0
        %v6909 = vadd.f32 0.0, %v6908
        %v6910 = vpop.f32.mrb[0].mxu0
        %6911 = vmatprep.mubr.bf16.mxu0 0
        %6912 = vmatmul.mubr.bf16.gmra.mrb[0].mxu0 %v6768
        %v6913 = vpop.f32.mrb[0].mxu0
        %v6914 = vadd.f32 0.0, %v6913
        %v6915 = vpop.f32.mrb[0].mxu0
        %v6916 = vpop.f32.mrb[0].mxu0
        %v6917 = vadd.f32 0.0, %v6916
        %v6918 = vpop.f32.mrb[0].mxu0
        %6919 = vmatprep.mubr.bf16.mxu0 0
        %6920 = vmatmul.mubr.bf16.gmra.mrb[0].mxu0 %v6770
        %v6921 = vpop.f32.mrb[0].mxu0
        %v6922 = vadd.f32 0.0, %v6921
        %v6923 = vpop.f32.mrb[0].mxu0
        %v6924 = vpop.f32.mrb[0].mxu0
        %v6925 = vadd.f32 0.0, %v6924
        %v6926 = vpop.f32.mrb[0].mxu0
        %6927 = vmatprep.mubr.bf16.mxu0 0
        %6928 = vmatmul.mubr.bf16.gmra.mrb[0].mxu0 %v6772
        %v6929 = vpop.f32.mrb[0].mxu0
        %v6930 = vadd.f32 0.0, %v6929
        %v6931 = vpop.f32.mrb[0].mxu0
        %v6932 = vpop.f32.mrb[0].mxu0
        %v6933 = vadd.f32 0.0, %v6932
        %v6934 = vpop.f32.mrb[0].mxu0
        %6935 = vmatprep.mubr.bf16.mxu0 0
        %6936 = vmatmul.mubr.bf16.gmra.mrb[0].mxu0 %v6774
        %v6937 = vpop.f32.mrb[0].mxu0
        %v6938 = vadd.f32 0.0, %v6937
        %v6939 = vpop.f32.mrb[0].mxu0
        %v6940 = vpop.f32.mrb[0].mxu0
        %v6941 = vadd.f32 0.0, %v6940
        %v6942 = vpop.f32.mrb[0].mxu0
        %6943 = vmatprep.mubr.bf16.mxu0 0
        %6944 = vmatmul.mubr.bf16.gmra.mrb[0].mxu0 %v6776
        %v6945 = vpop.f32.mrb[0].mxu0
        %v6946 = vadd.f32 0.0, %v6945
        %v6947 = vpop.f32.mrb[0].mxu0
        %v6948 = vpop.f32.mrb[0].mxu0
        %v6949 = vadd.f32 0.0, %v6948
        %v6950 = vpop.f32.mrb[0].mxu0
        %6951 = vmatprep.mubr.bf16.mxu0 0
        %6952 = vmatmul.mubr.bf16.gmra.mrb[0].mxu0 %v6778
        %v6953 = vpop.f32.mrb[0].mxu0
        %v6954 = vadd.f32 0.0, %v6953
        %v6955 = vpop.f32.mrb[0].mxu0
        %v6956 = vpop.f32.mrb[0].mxu0
        %v6957 = vadd.f32 0.0, %v6956
        %v6958 = vpop.f32.mrb[0].mxu0
        %6959 = vmatprep.mubr.bf16.mxu0 0
        %6960 = vmatmul.mubr.bf16.gmra.mrb[0].mxu0 %v6780
        %v6961 = vpop.f32.mrb[0].mxu0
        %v6962 = vadd.f32 0.0, %v6961
        %v6963 = vpop.f32.mrb[0].mxu0
        %v6964 = vpop.f32.mrb[0].mxu0
        %v6965 = vadd.f32 0.0, %v6964
        %v6966 = vpop.f32.mrb[0].mxu0
        %6967 = vmatprep.mubr.bf16.mxu0 0
        %6968 = vmatmul.mubr.bf16.gmra.mrb[0].mxu0 %v6782
        %v6969 = vpop.f32.mrb[0].mxu0
        %v6970 = vadd.f32 0.0, %v6969
        %v6971 = vpop.f32.mrb[0].mxu0
        %v6972 = vpop.f32.mrb[0].mxu0
        %v6973 = vadd.f32 0.0, %v6972
        %v6974 = vpop.f32.mrb[0].mxu0
        %6975 = vmatprep.mubr.bf16.mxu0 0
        %6976 = vmatmul.mubr.bf16.gmra.mrb[0].mxu0 %v6784
        %v6977 = vpop.f32.mrb[0].mxu0
        %v6978 = vadd.f32 0.0, %v6977
        %v6979 = vpop.f32.mrb[0].mxu0
        %v6980 = vpop.f32.mrb[0].mxu0
        %v6981 = vadd.f32 0.0, %v6980
        %v6982 = vpop.f32.mrb[0].mxu0
        %6983 = vmatprep.mubr.bf16.mxu0 0
        %6984 = vmatmul.mubr.bf16.gmra.mrb[0].mxu0 %v6786
        %v6985 = vpop.f32.mrb[0].mxu0
        %v6986 = vadd.f32 0.0, %v6985
        %v6987 = vpop.f32.mrb[0].mxu0
        %v6988 = vpop.f32.mrb[0].mxu0
        %v6989 = vadd.f32 0.0, %v6988
        %v6990 = vpop.f32.mrb[0].mxu0
        %6991 = vmatprep.mubr.bf16.mxu0 0
        %6992 = vmatmul.mubr.bf16.gmra.mrb[0].mxu0 %v6788
        %v6993 = vpop.f32.mrb[0].mxu0
        %v6994 = vadd.f32 0.0, %v6993
        %v6995 = vpop.f32.mrb[0].mxu0
        %v6996 = vpop.f32.mrb[0].mxu0
        %v6997 = vadd.f32 0.0, %v6996
        %v6998 = vpop.f32.mrb[0].mxu0
        %6999 = vmatprep.mubr.bf16.mxu0 0
        %7000 = vmatmul.mubr.bf16.gmra.mrb[0].mxu0 %v6790
        %v7001 = vpop.f32.mrb[0].mxu0
        %v7002 = vadd.f32 0.0, %v7001
        %v7003 = vpop.f32.mrb[0].mxu0
        %v7004 = vpop.f32.mrb[0].mxu0
        %v7005 = vadd.f32 0.0, %v7004
        %v7006 = vpop.f32.mrb[0].mxu0
        %7007 = vmatprep.mubr.bf16.mxu0 0
        %7008 = vmatmul.mubr.bf16.gmra.mrb[0].mxu0 %v6792
        %v7009 = vpop.f32.mrb[0].mxu0
        %v7010 = vadd.f32 0.0, %v7009
        %v7011 = vpop.f32.mrb[0].mxu0
        %v7012 = vpop.f32.mrb[0].mxu0
        %v7013 = vadd.f32 0.0, %v7012
        %v7014 = vpop.f32.mrb[0].mxu0
        %7015 = vmatprep.mubr.bf16.mxu0 0
        %7016 = vmatmul.mubr.bf16.gmra.mrb[0].mxu0 %v6794
        %v7017 = vpop.f32.mrb[0].mxu0
        %v7018 = vadd.f32 0.0, %v7017
        %v7019 = vpop.f32.mrb[0].mxu0
        %v7020 = vpop.f32.mrb[0].mxu0
        %v7021 = vadd.f32 0.0, %v7020
        %v7022 = vpop.f32.mrb[0].mxu0
        %7023 = vmatprep.mubr.bf16.mxu0 0
        %7024 = vmatmul.mubr.bf16.gmra.mrb[0].mxu0 %v6796
        %v7025 = vpop.f32.mrb[0].mxu0
        %v7026 = vadd.f32 0.0, %v7025
        %v7027 = vpop.f32.mrb[0].mxu0
        %v7028 = vpop.f32.mrb[0].mxu0
        %v7029 = vadd.f32 0.0, %v7028
        %v7030 = vpop.f32.mrb[0].mxu0
        %7031 = vmatprep.mubr.bf16.mxu0 0
        %7032 = vmatmul.mubr.bf16.gmra.mrb[0].mxu0 %v6795
        %v7033 = vpop.f32.mrb[0].mxu0
        %v7034 = vadd.f32 0.0, %v7033
        %v7035 = vpop.f32.mrb[0].mxu0
        %v7036 = vpop.f32.mrb[0].mxu0
        %v7037 = vadd.f32 0.0, %v7036
        %v7038 = vpop.f32.mrb[0].mxu0
        %7039 = vdwg.mxu0
        %v7040 = vadd.f32 %v6583, %v6898
        %v7041 = vadd.f32 %v6584, %v6901
        %v7042 = vadd.f32 %v6585, %v6906
        %v7043 = vadd.f32 %v6586, %v6909
        %v7044 = vadd.f32 %v6587, %v6914
        %v7045 = vadd.f32 %v6588, %v6917
        %v7046 = vadd.f32 %v6589, %v6922
        %v7047 = vadd.f32 %v6590, %v6925
        %v7048 = vadd.f32 %v6591, %v6930
        %v7049 = vadd.f32 %v6592, %v6933
        %v7050 = vadd.f32 %v6593, %v6938
        %v7051 = vadd.f32 %v6594, %v6941
        %v7052 = vadd.f32 %v6595, %v6946
        %v7053 = vadd.f32 %v6596, %v6949
        %v7054 = vadd.f32 %v6597, %v6954
        %v7055 = vadd.f32 %v6598, %v6957
        %v7056 = vadd.f32 %v6599, %v6962
        %v7057 = vadd.f32 %v6600, %v6965
        %v7058 = vadd.f32 %v6601, %v6970
        %v7059 = vadd.f32 %v6602, %v6973
        %v7060 = vadd.f32 %v6603, %v6978
        %v7061 = vadd.f32 %v6604, %v6981
        %v7062 = vadd.f32 %v6605, %v6986
        %v7063 = vadd.f32 %v6606, %v6989
        %v7064 = vadd.f32 %v6607, %v6994
        %v7065 = vadd.f32 %v6608, %v6997
        %v7066 = vadd.f32 %v6609, %v7002
        %v7067 = vadd.f32 %v6610, %v7005
        %v7068 = vadd.f32 %v6611, %v7010
        %v7069 = vadd.f32 %v6612, %v7013
        %v7070 = vadd.f32 %v6613, %v7018
        %v7071 = vadd.f32 %v6614, %v7021
        %v7072 = vadd.f32 %v6615, %v7026
        %v7073 = vadd.f32 %v6616, %v7029
        %v7074 = vadd.f32 %v6617, %v7034
        %v7075 = vadd.f32 %v6618, %v7037
        %v7076 = vld [vmem:[#allocation2 + $0x8] sm:$0xe]
        %v7077 = vld [vmem:[#allocation2 + $0xc] sm:$0xf]
        %v7078 = vld [vmem:[#allocation2 + $0x10] sm:$0xf]
        %v7079 = vld [vmem:[#allocation2 + $0x14] sm:$0xf]
        %v7080 = vld [vmem:[#allocation2 + $0x18] sm:$0xf]
        %v7081 = vld [vmem:[#allocation2 + $0x1c] sm:$0xf]
        %v7082 = vld [vmem:[#allocation2 + $0x20] sm:$0xf]
        %v7083 = vld [vmem:[#allocation2 + $0x24] sm:$0xf]
        %v7084 = vld [vmem:[#allocation2 + $0x28] sm:$0xf]
        %v7085 = vld [vmem:[#allocation2 + $0x2c] sm:$0xf]
        %v7086 = vld [vmem:[#allocation2 + $0x30] sm:$0xf]
        %v7087 = vld [vmem:[#allocation2 + $0x34] sm:$0xf]
        %v7088 = vld [vmem:[#allocation2 + $0x38] sm:$0xf]
        %v7089 = vld [vmem:[#allocation2 + $0x3c] sm:$0xf]
        %v7090 = vld [vmem:[#allocation2 + $0x40] sm:$0xf]
        %v7091 = vld [vmem:[#allocation2 + $0x44] sm:$0xf]
        %v7092 = vld [vmem:[#allocation2 + $0x48] sm:$0xf]
        %v7093 = vld [vmem:[#allocation2 + $0x4c] sm:$0xf]
        %v7094 = vld [vmem:[#allocation2 + $0x50] sm:$0xf]
        %v7095 = vld [vmem:[#allocation2 + $0x54] sm:$0xf]
        %v7096 = vld [vmem:[#allocation2 + $0x58] sm:$0xf]
        %v7097 = vld [vmem:[#allocation2 + $0x5c] sm:$0xf]
        %v7098 = vld [vmem:[#allocation2 + $0x60] sm:$0xf]
        %v7099 = vld [vmem:[#allocation2 + $0x64] sm:$0xf]
        %v7100 = vld [vmem:[#allocation2 + $0x68] sm:$0xf]
        %v7101 = vld [vmem:[#allocation2 + $0x6c] sm:$0xf]
        %v7102 = vld [vmem:[#allocation2 + $0x70] sm:$0xf]
        %v7103 = vld [vmem:[#allocation2 + $0x74] sm:$0xf]
        %v7104 = vld [vmem:[#allocation2 + $0x78] sm:$0xf]
        %v7105 = vld [vmem:[#allocation2 + $0x7c] sm:$0xf]
        %v7106 = vld [vmem:[#allocation2 + $0x80] sm:$0xf]
        %v7107 = vld [vmem:[#allocation2 + $0x84] sm:$0xf]
        %v7108 = vld [vmem:[#allocation2 + $0x88] sm:$0xf]
        %v7109 = vld [vmem:[#allocation2 + $0x8c] sm:$0xf]
        %v7110 = vld [vmem:[#allocation2 + $0x90] sm:$0xf]
        %v7111 = vld [vmem:[#allocation2 + $0x94] sm:$0xf]
        %v7112 = vld [vmem:[#allocation2 + $0x98] sm:$0x1]
        %s7113 = scalar_lea.vmem [#allocation9], 256
        %v7114 = vld [vmem:[%s7113] sm:$0xf]
        %v7115 = vld [vmem:[%s7113 + $0x4] sm:$0xf]
        %v7116 = vld [vmem:[%s7113 + $0x8] sm:$0xf]
        %v7117 = vld [vmem:[%s7113 + $0xc] sm:$0xf]
        %v7118 = vld [vmem:[%s7113 + $0x10] sm:$0xf]
        %v7119 = vld [vmem:[%s7113 + $0x14] sm:$0xf]
        %v7120 = vld [vmem:[%s7113 + $0x18] sm:$0xf]
        %v7121 = vld [vmem:[%s7113 + $0x1c] sm:$0xf]
        %v7122 = vld [vmem:[%s7113 + $0x20] sm:$0xf]
        %v7123 = vld [vmem:[%s7113 + $0x24] sm:$0xf]
        %v7124 = vld [vmem:[%s7113 + $0x28] sm:$0xf]
        %v7125 = vld [vmem:[%s7113 + $0x2c] sm:$0xf]
        %v7126 = vld [vmem:[%s7113 + $0x30] sm:$0xf]
        %v7127 = vld [vmem:[%s7113 + $0x34] sm:$0xf]
        %v7128 = vld [vmem:[%s7113 + $0x38] sm:$0xf]
        %v7129 = vld [vmem:[%s7113 + $0x3c] sm:$0xf]
        %v7167 = vunpack.c.l.b16 %v7076
        %v7168 = vunpack.c.l.b16 %v7077
        %v7169 = vunpack.c.l.b16 %v7078
        %v7170 = vunpack.c.l.b16 %v7079
        %v7171 = vunpack.c.l.b16 %v7080
        %v7172 = vunpack.c.l.b16 %v7081
        %v7173 = vunpack.c.l.b16 %v7082
        %v7174 = vunpack.c.l.b16 %v7083
        %v7175 = vunpack.c.l.b16 %v7084
        %v7176 = vunpack.c.l.b16 %v7085
        %v7177 = vunpack.c.l.b16 %v7086
        %v7178 = vunpack.c.l.b16 %v7087
        %v7179 = vunpack.c.l.b16 %v7088
        %v7180 = vunpack.c.l.b16 %v7089
        %v7181 = vunpack.c.l.b16 %v7090
        %v7182 = vunpack.c.l.b16 %v7091
        %v7183 = vunpack.c.l.b16 %v7092
        %v7184 = vunpack.c.l.b16 %v7093
        %v7185 = vunpack.c.l.b16 %v7094
        %v7186 = vunpack.c.l.b16 %v7095
        %v7187 = vunpack.c.l.b16 %v7096
        %v7188 = vunpack.c.l.b16 %v7097
        %v7189 = vunpack.c.l.b16 %v7098
        %v7190 = vunpack.c.l.b16 %v7099
        %v7191 = vunpack.c.l.b16 %v7100
        %v7192 = vunpack.c.l.b16 %v7101
        %v7193 = vunpack.c.l.b16 %v7102
        %v7194 = vunpack.c.l.b16 %v7103
        %v7195 = vunpack.c.l.b16 %v7104
        %v7196 = vunpack.c.l.b16 %v7105
        %v7197 = vunpack.c.l.b16 %v7106
        %v7198 = vunpack.c.l.b16 %v7107
        %v7199 = vunpack.c.l.b16 %v7108
        %v7200 = vunpack.c.l.b16 %v7109
        %v7201 = vunpack.c.l.b16 %v7110
        %v7202 = vunpack.c.l.b16 %v7111
        %v7203 = vunpack.c.l.b16 %v7112
        %v7204 = vpack.c.b16 %v7168, %v7167
        %v7205 = vpack.c.b16 %v7170, %v7169
        %v7206 = vpack.c.b16 %v7172, %v7171
        %v7207 = vpack.c.b16 %v7174, %v7173
        %v7208 = vpack.c.b16 %v7176, %v7175
        %v7209 = vpack.c.b16 %v7178, %v7177
        %v7210 = vpack.c.b16 %v7180, %v7179
        %v7211 = vpack.c.b16 %v7182, %v7181
        %v7212 = vpack.c.b16 %v7184, %v7183
        %v7213 = vpack.c.b16 %v7186, %v7185
        %v7214 = vpack.c.b16 %v7188, %v7187
        %v7215 = vpack.c.b16 %v7190, %v7189
        %v7216 = vpack.c.b16 %v7192, %v7191
        %v7217 = vpack.c.b16 %v7194, %v7193
        %v7218 = vpack.c.b16 %v7196, %v7195
        %v7219 = vpack.c.b16 %v7198, %v7197
        %v7220 = vpack.c.b16 %v7200, %v7199
        %v7221 = vpack.c.b16 %v7202, %v7201
        %v7222 = vpack.c.b16 %v7203, %v7203
        %v7224 = vshrl.u32 %v7204, 16
        %v7226 = vrot.slane %v7224, 1
        %v7227 = vshll.u32 %v7204, 16
        %v7229 = vrot.slane %v7227, 2
        %v7230 = vor.u32 %v7226, %v7229
        %v7232 = vshrl.u32 %v7205, 16
        %v7234 = vrot.slane %v7232, 1
        %v7235 = vshll.u32 %v7205, 16
        %v7237 = vrot.slane %v7235, 2
        %v7238 = vor.u32 %v7234, %v7237
        %v7239 = vsel %vm2680, %v7230, %v7238
        %v7241 = vshrl.u32 %v7206, 16
        %v7243 = vrot.slane %v7241, 1
        %v7244 = vshll.u32 %v7206, 16
        %v7246 = vrot.slane %v7244, 2
        %v7247 = vor.u32 %v7243, %v7246
        %v7248 = vsel %vm2680, %v7238, %v7247
        %v7250 = vshrl.u32 %v7207, 16
        %v7252 = vrot.slane %v7250, 1
        %v7253 = vshll.u32 %v7207, 16
        %v7255 = vrot.slane %v7253, 2
        %v7256 = vor.u32 %v7252, %v7255
        %v7257 = vsel %vm2680, %v7247, %v7256
        %v7259 = vshrl.u32 %v7208, 16
        %v7261 = vrot.slane %v7259, 1
        %v7262 = vshll.u32 %v7208, 16
        %v7264 = vrot.slane %v7262, 2
        %v7265 = vor.u32 %v7261, %v7264
        %v7266 = vsel %vm2680, %v7256, %v7265
        %v7268 = vshrl.u32 %v7209, 16
        %v7270 = vrot.slane %v7268, 1
        %v7271 = vshll.u32 %v7209, 16
        %v7273 = vrot.slane %v7271, 2
        %v7274 = vor.u32 %v7270, %v7273
        %v7275 = vsel %vm2680, %v7265, %v7274
        %v7277 = vshrl.u32 %v7210, 16
        %v7279 = vrot.slane %v7277, 1
        %v7280 = vshll.u32 %v7210, 16
        %v7282 = vrot.slane %v7280, 2
        %v7283 = vor.u32 %v7279, %v7282
        %v7284 = vsel %vm2680, %v7274, %v7283
        %v7286 = vshrl.u32 %v7211, 16
        %v7288 = vrot.slane %v7286, 1
        %v7289 = vshll.u32 %v7211, 16
        %v7291 = vrot.slane %v7289, 2
        %v7292 = vor.u32 %v7288, %v7291
        %v7293 = vsel %vm2680, %v7283, %v7292
        %v7295 = vshrl.u32 %v7212, 16
        %v7297 = vrot.slane %v7295, 1
        %v7298 = vshll.u32 %v7212, 16
        %v7300 = vrot.slane %v7298, 2
        %v7301 = vor.u32 %v7297, %v7300
        %v7302 = vsel %vm2680, %v7292, %v7301
        %v7304 = vshrl.u32 %v7213, 16
        %v7306 = vrot.slane %v7304, 1
        %v7307 = vshll.u32 %v7213, 16
        %v7309 = vrot.slane %v7307, 2
        %v7310 = vor.u32 %v7306, %v7309
        %v7311 = vsel %vm2680, %v7301, %v7310
        %v7313 = vshrl.u32 %v7214, 16
        %v7315 = vrot.slane %v7313, 1
        %v7316 = vshll.u32 %v7214, 16
        %v7318 = vrot.slane %v7316, 2
        %v7319 = vor.u32 %v7315, %v7318
        %v7320 = vsel %vm2680, %v7310, %v7319
        %v7322 = vshrl.u32 %v7215, 16
        %v7324 = vrot.slane %v7322, 1
        %v7325 = vshll.u32 %v7215, 16
        %v7327 = vrot.slane %v7325, 2
        %v7328 = vor.u32 %v7324, %v7327
        %v7329 = vsel %vm2680, %v7319, %v7328
        %v7331 = vshrl.u32 %v7216, 16
        %v7333 = vrot.slane %v7331, 1
        %v7334 = vshll.u32 %v7216, 16
        %v7336 = vrot.slane %v7334, 2
        %v7337 = vor.u32 %v7333, %v7336
        %v7338 = vsel %vm2680, %v7328, %v7337
        %v7340 = vshrl.u32 %v7217, 16
        %v7342 = vrot.slane %v7340, 1
        %v7343 = vshll.u32 %v7217, 16
        %v7345 = vrot.slane %v7343, 2
        %v7346 = vor.u32 %v7342, %v7345
        %v7347 = vsel %vm2680, %v7337, %v7346
        %v7349 = vshrl.u32 %v7218, 16
        %v7351 = vrot.slane %v7349, 1
        %v7352 = vshll.u32 %v7218, 16
        %v7354 = vrot.slane %v7352, 2
        %v7355 = vor.u32 %v7351, %v7354
        %v7356 = vsel %vm2680, %v7346, %v7355
        %v7358 = vshrl.u32 %v7219, 16
        %v7360 = vrot.slane %v7358, 1
        %v7361 = vshll.u32 %v7219, 16
        %v7363 = vrot.slane %v7361, 2
        %v7364 = vor.u32 %v7360, %v7363
        %v7365 = vsel %vm2680, %v7355, %v7364
        %v7367 = vshrl.u32 %v7220, 16
        %v7369 = vrot.slane %v7367, 1
        %v7370 = vshll.u32 %v7220, 16
        %v7372 = vrot.slane %v7370, 2
        %v7373 = vor.u32 %v7369, %v7372
        %v7374 = vsel %vm2680, %v7364, %v7373
        %v7376 = vshrl.u32 %v7221, 16
        %v7378 = vrot.slane %v7376, 1
        %v7379 = vshll.u32 %v7221, 16
        %v7381 = vrot.slane %v7379, 2
        %v7382 = vor.u32 %v7378, %v7381
        %v7383 = vsel %vm2680, %v7373, %v7382
        %v7385 = vshll.u32 %v7222, 16
        %v7387 = vrot.slane %v7385, 2
        %v7388 = vsel %vm2680, %v7382, %v7387
        %v7423 = vunpack.c.l.b16 %v7114
        %v7424 = vunpack.c.l.b16 %v7115
        %v7425 = vunpack.c.l.b16 %v7116
        %v7426 = vunpack.c.l.b16 %v7117
        %v7427 = vunpack.c.l.b16 %v7118
        %v7428 = vunpack.c.l.b16 %v7119
        %v7429 = vunpack.c.l.b16 %v7120
        %v7430 = vunpack.c.l.b16 %v7121
        %v7431 = vunpack.c.l.b16 %v7122
        %v7432 = vunpack.c.l.b16 %v7123
        %v7433 = vunpack.c.l.b16 %v7124
        %v7434 = vunpack.c.l.b16 %v7125
        %v7435 = vunpack.c.l.b16 %v7126
        %v7436 = vunpack.c.l.b16 %v7127
        %v7437 = vunpack.c.l.b16 %v7128
        %v7438 = vunpack.c.l.b16 %v7129
        %v7439 = vpack.c.b16 %v7424, %v7423
        %v7440 = vpack.c.b16 %v7426, %v7425
        %v7441 = vpack.c.b16 %v7428, %v7427
        %v7442 = vpack.c.b16 %v7430, %v7429
        %v7443 = vpack.c.b16 %v7432, %v7431
        %v7444 = vpack.c.b16 %v7434, %v7433
        %v7445 = vpack.c.b16 %v7436, %v7435
        %v7446 = vpack.c.b16 %v7438, %v7437
        %7455 = vmatprep.subr.bf16.mxu0 0
        %7456 = vmatpush1.bf16.msra.mxu0 %v7439
        %7457 = vmatprep.subr.bf16.mxu0 0
        %7458 = vmatpush1.bf16.msra.mxu0 %v7440
        %7459 = vmatprep.subr.bf16.mxu0 0
        %7460 = vmatpush1.bf16.msra.mxu0 %v7441
        %7461 = vmatprep.subr.bf16.mxu0 0
        %7462 = vmatpush1.bf16.msra.mxu0 %v7442
        %7463 = vmatprep.subr.bf16.mxu0 0
        %7464 = vmatpush1.bf16.msra.mxu0 %v7443
        %7465 = vmatprep.subr.bf16.mxu0 0
        %7466 = vmatpush1.bf16.msra.mxu0 %v7444
        %7467 = vmatprep.subr.bf16.mxu0 0
        %7468 = vmatpush1.bf16.msra.mxu0 %v7445
        %7469 = vmatprep.subr.bf16.mxu0 0
        %7470 = vmatpush1.bf16.msra.mxu0 %v7446
        %7471 = vmatprep.subr.bf16.mxu0 0
        %7472 = vmatpush1.bf16.msra.mxu0 0
        %7473 = vmatprep.subr.bf16.mxu0 0
        %7474 = vmatpush1.bf16.msra.mxu0 0
        %7475 = vmatprep.subr.bf16.mxu0 0
        %7476 = vmatpush1.bf16.msra.mxu0 0
        %7477 = vmatprep.subr.bf16.mxu0 0
        %7478 = vmatpush1.bf16.msra.mxu0 0
        %7479 = vmatprep.subr.bf16.mxu0 0
        %7480 = vmatpush1.bf16.msra.mxu0 0
        %7481 = vmatprep.subr.bf16.mxu0 0
        %7482 = vmatpush1.bf16.msra.mxu0 0
        %7483 = vmatprep.subr.bf16.mxu0 0
        %7484 = vmatpush1.bf16.msra.mxu0 0
        %7485 = vmatprep.subr.bf16.mxu0 0
        %7486 = vmatpush1.bf16.msra.mxu0 0
        %7487 = vmatprep.mubr.bf16.mxu0 0
        %7488 = vmatmul.mubr.bf16.gmra.mrb[0].mxu0 %v7239
        %v7489 = vpop.f32.mrb[0].mxu0
        %v7490 = vadd.f32 0.0, %v7489
        %v7491 = vpop.f32.mrb[0].mxu0
        %v7492 = vpop.f32.mrb[0].mxu0
        %v7493 = vadd.f32 0.0, %v7492
        %v7494 = vpop.f32.mrb[0].mxu0
        %7495 = vmatprep.mubr.bf16.mxu0 0
        %7496 = vmatmul.mubr.bf16.gmra.mrb[0].mxu0 %v7248
        %v7497 = vpop.f32.mrb[0].mxu0
        %v7498 = vadd.f32 0.0, %v7497
        %v7499 = vpop.f32.mrb[0].mxu0
        %v7500 = vpop.f32.mrb[0].mxu0
        %v7501 = vadd.f32 0.0, %v7500
        %v7502 = vpop.f32.mrb[0].mxu0
        %7503 = vmatprep.mubr.bf16.mxu0 0
        %7504 = vmatmul.mubr.bf16.gmra.mrb[0].mxu0 %v7257
        %v7505 = vpop.f32.mrb[0].mxu0
        %v7506 = vadd.f32 0.0, %v7505
        %v7507 = vpop.f32.mrb[0].mxu0
        %v7508 = vpop.f32.mrb[0].mxu0
        %v7509 = vadd.f32 0.0, %v7508
        %v7510 = vpop.f32.mrb[0].mxu0
        %7511 = vmatprep.mubr.bf16.mxu0 0
        %7512 = vmatmul.mubr.bf16.gmra.mrb[0].mxu0 %v7266
        %v7513 = vpop.f32.mrb[0].mxu0
        %v7514 = vadd.f32 0.0, %v7513
        %v7515 = vpop.f32.mrb[0].mxu0
        %v7516 = vpop.f32.mrb[0].mxu0
        %v7517 = vadd.f32 0.0, %v7516
        %v7518 = vpop.f32.mrb[0].mxu0
        %7519 = vmatprep.mubr.bf16.mxu0 0
        %7520 = vmatmul.mubr.bf16.gmra.mrb[0].mxu0 %v7275
        %v7521 = vpop.f32.mrb[0].mxu0
        %v7522 = vadd.f32 0.0, %v7521
        %v7523 = vpop.f32.mrb[0].mxu0
        %v7524 = vpop.f32.mrb[0].mxu0
        %v7525 = vadd.f32 0.0, %v7524
        %v7526 = vpop.f32.mrb[0].mxu0
        %7527 = vmatprep.mubr.bf16.mxu0 0
        %7528 = vmatmul.mubr.bf16.gmra.mrb[0].mxu0 %v7284
        %v7529 = vpop.f32.mrb[0].mxu0
        %v7530 = vadd.f32 0.0, %v7529
        %v7531 = vpop.f32.mrb[0].mxu0
        %v7532 = vpop.f32.mrb[0].mxu0
        %v7533 = vadd.f32 0.0, %v7532
        %v7534 = vpop.f32.mrb[0].mxu0
        %7535 = vmatprep.mubr.bf16.mxu0 0
        %7536 = vmatmul.mubr.bf16.gmra.mrb[0].mxu0 %v7293
        %v7537 = vpop.f32.mrb[0].mxu0
        %v7538 = vadd.f32 0.0, %v7537
        %v7539 = vpop.f32.mrb[0].mxu0
        %v7540 = vpop.f32.mrb[0].mxu0
        %v7541 = vadd.f32 0.0, %v7540
        %v7542 = vpop.f32.mrb[0].mxu0
        %7543 = vmatprep.mubr.bf16.mxu0 0
        %7544 = vmatmul.mubr.bf16.gmra.mrb[0].mxu0 %v7302
        %v7545 = vpop.f32.mrb[0].mxu0
        %v7546 = vadd.f32 0.0, %v7545
        %v7547 = vpop.f32.mrb[0].mxu0
        %v7548 = vpop.f32.mrb[0].mxu0
        %v7549 = vadd.f32 0.0, %v7548
        %v7550 = vpop.f32.mrb[0].mxu0
        %7551 = vmatprep.mubr.bf16.mxu0 0
        %7552 = vmatmul.mubr.bf16.gmra.mrb[0].mxu0 %v7311
        %v7553 = vpop.f32.mrb[0].mxu0
        %v7554 = vadd.f32 0.0, %v7553
        %v7555 = vpop.f32.mrb[0].mxu0
        %v7556 = vpop.f32.mrb[0].mxu0
        %v7557 = vadd.f32 0.0, %v7556
        %v7558 = vpop.f32.mrb[0].mxu0
        %7559 = vmatprep.mubr.bf16.mxu0 0
        %7560 = vmatmul.mubr.bf16.gmra.mrb[0].mxu0 %v7320
        %v7561 = vpop.f32.mrb[0].mxu0
        %v7562 = vadd.f32 0.0, %v7561
        %v7563 = vpop.f32.mrb[0].mxu0
        %v7564 = vpop.f32.mrb[0].mxu0
        %v7565 = vadd.f32 0.0, %v7564
        %v7566 = vpop.f32.mrb[0].mxu0
        %7567 = vmatprep.mubr.bf16.mxu0 0
        %7568 = vmatmul.mubr.bf16.gmra.mrb[0].mxu0 %v7329
        %v7569 = vpop.f32.mrb[0].mxu0
        %v7570 = vadd.f32 0.0, %v7569
        %v7571 = vpop.f32.mrb[0].mxu0
        %v7572 = vpop.f32.mrb[0].mxu0
        %v7573 = vadd.f32 0.0, %v7572
        %v7574 = vpop.f32.mrb[0].mxu0
        %7575 = vmatprep.mubr.bf16.mxu0 0
        %7576 = vmatmul.mubr.bf16.gmra.mrb[0].mxu0 %v7338
        %v7577 = vpop.f32.mrb[0].mxu0
        %v7578 = vadd.f32 0.0, %v7577
        %v7579 = vpop.f32.mrb[0].mxu0
        %v7580 = vpop.f32.mrb[0].mxu0
        %v7581 = vadd.f32 0.0, %v7580
        %v7582 = vpop.f32.mrb[0].mxu0
        %7583 = vmatprep.mubr.bf16.mxu0 0
        %7584 = vmatmul.mubr.bf16.gmra.mrb[0].mxu0 %v7347
        %v7585 = vpop.f32.mrb[0].mxu0
        %v7586 = vadd.f32 0.0, %v7585
        %v7587 = vpop.f32.mrb[0].mxu0
        %v7588 = vpop.f32.mrb[0].mxu0
        %v7589 = vadd.f32 0.0, %v7588
        %v7590 = vpop.f32.mrb[0].mxu0
        %7591 = vmatprep.mubr.bf16.mxu0 0
        %7592 = vmatmul.mubr.bf16.gmra.mrb[0].mxu0 %v7356
        %v7593 = vpop.f32.mrb[0].mxu0
        %v7594 = vadd.f32 0.0, %v7593
        %v7595 = vpop.f32.mrb[0].mxu0
        %v7596 = vpop.f32.mrb[0].mxu0
        %v7597 = vadd.f32 0.0, %v7596
        %v7598 = vpop.f32.mrb[0].mxu0
        %7599 = vmatprep.mubr.bf16.mxu0 0
        %7600 = vmatmul.mubr.bf16.gmra.mrb[0].mxu0 %v7365
        %v7601 = vpop.f32.mrb[0].mxu0
        %v7602 = vadd.f32 0.0, %v7601
        %v7603 = vpop.f32.mrb[0].mxu0
        %v7604 = vpop.f32.mrb[0].mxu0
        %v7605 = vadd.f32 0.0, %v7604
        %v7606 = vpop.f32.mrb[0].mxu0
        %7607 = vmatprep.mubr.bf16.mxu0 0
        %7608 = vmatmul.mubr.bf16.gmra.mrb[0].mxu0 %v7374
        %v7609 = vpop.f32.mrb[0].mxu0
        %v7610 = vadd.f32 0.0, %v7609
        %v7611 = vpop.f32.mrb[0].mxu0
        %v7612 = vpop.f32.mrb[0].mxu0
        %v7613 = vadd.f32 0.0, %v7612
        %v7614 = vpop.f32.mrb[0].mxu0
        %7615 = vmatprep.mubr.bf16.mxu0 0
        %7616 = vmatmul.mubr.bf16.gmra.mrb[0].mxu0 %v7383
        %v7617 = vpop.f32.mrb[0].mxu0
        %v7618 = vadd.f32 0.0, %v7617
        %v7619 = vpop.f32.mrb[0].mxu0
        %v7620 = vpop.f32.mrb[0].mxu0
        %v7621 = vadd.f32 0.0, %v7620
        %v7622 = vpop.f32.mrb[0].mxu0
        %7623 = vmatprep.mubr.bf16.mxu0 0
        %7624 = vmatmul.mubr.bf16.gmra.mrb[0].mxu0 %v7388
        %v7625 = vpop.f32.mrb[0].mxu0
        %v7626 = vadd.f32 0.0, %v7625
        %v7627 = vpop.f32.mrb[0].mxu0
        %v7628 = vpop.f32.mrb[0].mxu0
        %v7629 = vadd.f32 0.0, %v7628
        %v7630 = vpop.f32.mrb[0].mxu0
        %7631 = vdwg.mxu0
        %v7632 = vadd.f32 %v7040, %v7490
        %v7633 = vadd.f32 %v7041, %v7493
        %v7634 = vadd.f32 %v7042, %v7498
        %v7635 = vadd.f32 %v7043, %v7501
        %v7636 = vadd.f32 %v7044, %v7506
        %v7637 = vadd.f32 %v7045, %v7509
        %v7638 = vadd.f32 %v7046, %v7514
        %v7639 = vadd.f32 %v7047, %v7517
        %v7640 = vadd.f32 %v7048, %v7522
        %v7641 = vadd.f32 %v7049, %v7525
        %v7642 = vadd.f32 %v7050, %v7530
        %v7643 = vadd.f32 %v7051, %v7533
        %v7644 = vadd.f32 %v7052, %v7538
        %v7645 = vadd.f32 %v7053, %v7541
        %v7646 = vadd.f32 %v7054, %v7546
        %v7647 = vadd.f32 %v7055, %v7549
        %v7648 = vadd.f32 %v7056, %v7554
        %v7649 = vadd.f32 %v7057, %v7557
        %v7650 = vadd.f32 %v7058, %v7562
        %v7651 = vadd.f32 %v7059, %v7565
        %v7652 = vadd.f32 %v7060, %v7570
        %v7653 = vadd.f32 %v7061, %v7573
        %v7654 = vadd.f32 %v7062, %v7578
        %v7655 = vadd.f32 %v7063, %v7581
        %v7656 = vadd.f32 %v7064, %v7586
        %v7657 = vadd.f32 %v7065, %v7589
        %v7658 = vadd.f32 %v7066, %v7594
        %v7659 = vadd.f32 %v7067, %v7597
        %v7660 = vadd.f32 %v7068, %v7602
        %v7661 = vadd.f32 %v7069, %v7605
        %v7662 = vadd.f32 %v7070, %v7610
        %v7663 = vadd.f32 %v7071, %v7613
        %v7664 = vadd.f32 %v7072, %v7618
        %v7665 = vadd.f32 %v7073, %v7621
        %v7666 = vadd.f32 %v7074, %v7626
        %v7667 = vadd.f32 %v7075, %v7629
        %v7668 = vld [vmem:[#allocation2 + $0x8] sm:$0xc]
        %s7669 = scalar_lea.vmem [#allocation9], 320
        %v7670 = vld [vmem:[%s7669] sm:$0xf]
        %v7671 = vld [vmem:[%s7669 + $0x4] sm:$0xf]
        %v7672 = vld [vmem:[%s7669 + $0x8] sm:$0xf]
        %v7673 = vld [vmem:[%s7669 + $0xc] sm:$0xf]
        %v7674 = vld [vmem:[%s7669 + $0x10] sm:$0xf]
        %v7675 = vld [vmem:[%s7669 + $0x14] sm:$0xf]
        %v7676 = vld [vmem:[%s7669 + $0x18] sm:$0xf]
        %v7677 = vld [vmem:[%s7669 + $0x1c] sm:$0xf]
        %v7678 = vld [vmem:[%s7669 + $0x20] sm:$0xf]
        %v7679 = vld [vmem:[%s7669 + $0x24] sm:$0xf]
        %v7680 = vld [vmem:[%s7669 + $0x28] sm:$0xf]
        %v7681 = vld [vmem:[%s7669 + $0x2c] sm:$0xf]
        %v7682 = vld [vmem:[%s7669 + $0x30] sm:$0xf]
        %v7683 = vld [vmem:[%s7669 + $0x34] sm:$0xf]
        %v7684 = vld [vmem:[%s7669 + $0x38] sm:$0xf]
        %v7685 = vld [vmem:[%s7669 + $0x3c] sm:$0xf]
        %v7687 = vunpack.c.l.b16 %v7668
        %v7688 = vpack.c.b16 %v7168, %v7687
        %v7689 = vrot.slane %v7688, 2
        %v7690 = vrot.slane %v7205, 2
        %v7691 = vsel %vm3147, %v7689, %v7690
        %v7692 = vrot.slane %v7206, 2
        %v7693 = vsel %vm3147, %v7690, %v7692
        %v7694 = vrot.slane %v7207, 2
        %v7695 = vsel %vm3147, %v7692, %v7694
        %v7696 = vrot.slane %v7208, 2
        %v7697 = vsel %vm3147, %v7694, %v7696
        %v7698 = vrot.slane %v7209, 2
        %v7699 = vsel %vm3147, %v7696, %v7698
        %v7700 = vrot.slane %v7210, 2
        %v7701 = vsel %vm3147, %v7698, %v7700
        %v7702 = vrot.slane %v7211, 2
        %v7703 = vsel %vm3147, %v7700, %v7702
        %v7704 = vrot.slane %v7212, 2
        %v7705 = vsel %vm3147, %v7702, %v7704
        %v7706 = vrot.slane %v7213, 2
        %v7707 = vsel %vm3147, %v7704, %v7706
        %v7708 = vrot.slane %v7214, 2
        %v7709 = vsel %vm3147, %v7706, %v7708
        %v7710 = vrot.slane %v7215, 2
        %v7711 = vsel %vm3147, %v7708, %v7710
        %v7712 = vrot.slane %v7216, 2
        %v7713 = vsel %vm3147, %v7710, %v7712
        %v7714 = vrot.slane %v7217, 2
        %v7715 = vsel %vm3147, %v7712, %v7714
        %v7716 = vrot.slane %v7218, 2
        %v7717 = vsel %vm3147, %v7714, %v7716
        %v7718 = vrot.slane %v7219, 2
        %v7719 = vsel %vm3147, %v7716, %v7718
        %v7720 = vrot.slane %v7220, 2
        %v7721 = vsel %vm3147, %v7718, %v7720
        %v7722 = vrot.slane %v7221, 2
        %v7723 = vsel %vm3147, %v7720, %v7722
        %v7724 = vrot.slane %v7222, 2
        %v7725 = vsel %vm3147, %v7722, %v7724
        %v7760 = vunpack.c.l.b16 %v7670
        %v7761 = vunpack.c.l.b16 %v7671
        %v7762 = vunpack.c.l.b16 %v7672
        %v7763 = vunpack.c.l.b16 %v7673
        %v7764 = vunpack.c.l.b16 %v7674
        %v7765 = vunpack.c.l.b16 %v7675
        %v7766 = vunpack.c.l.b16 %v7676
        %v7767 = vunpack.c.l.b16 %v7677
        %v7768 = vunpack.c.l.b16 %v7678
        %v7769 = vunpack.c.l.b16 %v7679
        %v7770 = vunpack.c.l.b16 %v7680
        %v7771 = vunpack.c.l.b16 %v7681
        %v7772 = vunpack.c.l.b16 %v7682
        %v7773 = vunpack.c.l.b16 %v7683
        %v7774 = vunpack.c.l.b16 %v7684
        %v7775 = vunpack.c.l.b16 %v7685
        %v7776 = vpack.c.b16 %v7761, %v7760
        %v7777 = vpack.c.b16 %v7763, %v7762
        %v7778 = vpack.c.b16 %v7765, %v7764
        %v7779 = vpack.c.b16 %v7767, %v7766
        %v7780 = vpack.c.b16 %v7769, %v7768
        %v7781 = vpack.c.b16 %v7771, %v7770
        %v7782 = vpack.c.b16 %v7773, %v7772
        %v7783 = vpack.c.b16 %v7775, %v7774
        %7792 = vmatprep.subr.bf16.mxu0 0
        %7793 = vmatpush1.bf16.msra.mxu0 %v7776
        %7794 = vmatprep.subr.bf16.mxu0 0
        %7795 = vmatpush1.bf16.msra.mxu0 %v7777
        %7796 = vmatprep.subr.bf16.mxu0 0
        %7797 = vmatpush1.bf16.msra.mxu0 %v7778
        %7798 = vmatprep.subr.bf16.mxu0 0
        %7799 = vmatpush1.bf16.msra.mxu0 %v7779
        %7800 = vmatprep.subr.bf16.mxu0 0
        %7801 = vmatpush1.bf16.msra.mxu0 %v7780
        %7802 = vmatprep.subr.bf16.mxu0 0
        %7803 = vmatpush1.bf16.msra.mxu0 %v7781
        %7804 = vmatprep.subr.bf16.mxu0 0
        %7805 = vmatpush1.bf16.msra.mxu0 %v7782
        %7806 = vmatprep.subr.bf16.mxu0 0
        %7807 = vmatpush1.bf16.msra.mxu0 %v7783
        %7808 = vmatprep.subr.bf16.mxu0 0
        %7809 = vmatpush1.bf16.msra.mxu0 0
        %7810 = vmatprep.subr.bf16.mxu0 0
        %7811 = vmatpush1.bf16.msra.mxu0 0
        %7812 = vmatprep.subr.bf16.mxu0 0
        %7813 = vmatpush1.bf16.msra.mxu0 0
        %7814 = vmatprep.subr.bf16.mxu0 0
        %7815 = vmatpush1.bf16.msra.mxu0 0
        %7816 = vmatprep.subr.bf16.mxu0 0
        %7817 = vmatpush1.bf16.msra.mxu0 0
        %7818 = vmatprep.subr.bf16.mxu0 0
        %7819 = vmatpush1.bf16.msra.mxu0 0
        %7820 = vmatprep.subr.bf16.mxu0 0
        %7821 = vmatpush1.bf16.msra.mxu0 0
        %7822 = vmatprep.subr.bf16.mxu0 0
        %7823 = vmatpush1.bf16.msra.mxu0 0
        %7824 = vmatprep.mubr.bf16.mxu0 0
        %7825 = vmatmul.mubr.bf16.gmra.mrb[0].mxu0 %v7691
        %v7826 = vpop.f32.mrb[0].mxu0
        %v7827 = vadd.f32 0.0, %v7826
        %v7828 = vpop.f32.mrb[0].mxu0
        %v7829 = vpop.f32.mrb[0].mxu0
        %v7830 = vadd.f32 0.0, %v7829
        %v7831 = vpop.f32.mrb[0].mxu0
        %7832 = vmatprep.mubr.bf16.mxu0 0
        %7833 = vmatmul.mubr.bf16.gmra.mrb[0].mxu0 %v7693
        %v7834 = vpop.f32.mrb[0].mxu0
        %v7835 = vadd.f32 0.0, %v7834
        %v7836 = vpop.f32.mrb[0].mxu0
        %v7837 = vpop.f32.mrb[0].mxu0
        %v7838 = vadd.f32 0.0, %v7837
        %v7839 = vpop.f32.mrb[0].mxu0
        %7840 = vmatprep.mubr.bf16.mxu0 0
        %7841 = vmatmul.mubr.bf16.gmra.mrb[0].mxu0 %v7695
        %v7842 = vpop.f32.mrb[0].mxu0
        %v7843 = vadd.f32 0.0, %v7842
        %v7844 = vpop.f32.mrb[0].mxu0
        %v7845 = vpop.f32.mrb[0].mxu0
        %v7846 = vadd.f32 0.0, %v7845
        %v7847 = vpop.f32.mrb[0].mxu0
        %7848 = vmatprep.mubr.bf16.mxu0 0
        %7849 = vmatmul.mubr.bf16.gmra.mrb[0].mxu0 %v7697
        %v7850 = vpop.f32.mrb[0].mxu0
        %v7851 = vadd.f32 0.0, %v7850
        %v7852 = vpop.f32.mrb[0].mxu0
        %v7853 = vpop.f32.mrb[0].mxu0
        %v7854 = vadd.f32 0.0, %v7853
        %v7855 = vpop.f32.mrb[0].mxu0
        %7856 = vmatprep.mubr.bf16.mxu0 0
        %7857 = vmatmul.mubr.bf16.gmra.mrb[0].mxu0 %v7699
        %v7858 = vpop.f32.mrb[0].mxu0
        %v7859 = vadd.f32 0.0, %v7858
        %v7860 = vpop.f32.mrb[0].mxu0
        %v7861 = vpop.f32.mrb[0].mxu0
        %v7862 = vadd.f32 0.0, %v7861
        %v7863 = vpop.f32.mrb[0].mxu0
        %7864 = vmatprep.mubr.bf16.mxu0 0
        %7865 = vmatmul.mubr.bf16.gmra.mrb[0].mxu0 %v7701
        %v7866 = vpop.f32.mrb[0].mxu0
        %v7867 = vadd.f32 0.0, %v7866
        %v7868 = vpop.f32.mrb[0].mxu0
        %v7869 = vpop.f32.mrb[0].mxu0
        %v7870 = vadd.f32 0.0, %v7869
        %v7871 = vpop.f32.mrb[0].mxu0
        %7872 = vmatprep.mubr.bf16.mxu0 0
        %7873 = vmatmul.mubr.bf16.gmra.mrb[0].mxu0 %v7703
        %v7874 = vpop.f32.mrb[0].mxu0
        %v7875 = vadd.f32 0.0, %v7874
        %v7876 = vpop.f32.mrb[0].mxu0
        %v7877 = vpop.f32.mrb[0].mxu0
        %v7878 = vadd.f32 0.0, %v7877
        %v7879 = vpop.f32.mrb[0].mxu0
        %7880 = vmatprep.mubr.bf16.mxu0 0
        %7881 = vmatmul.mubr.bf16.gmra.mrb[0].mxu0 %v7705
        %v7882 = vpop.f32.mrb[0].mxu0
        %v7883 = vadd.f32 0.0, %v7882
        %v7884 = vpop.f32.mrb[0].mxu0
        %v7885 = vpop.f32.mrb[0].mxu0
        %v7886 = vadd.f32 0.0, %v7885
        %v7887 = vpop.f32.mrb[0].mxu0
        %7888 = vmatprep.mubr.bf16.mxu0 0
        %7889 = vmatmul.mubr.bf16.gmra.mrb[0].mxu0 %v7707
        %v7890 = vpop.f32.mrb[0].mxu0
        %v7891 = vadd.f32 0.0, %v7890
        %v7892 = vpop.f32.mrb[0].mxu0
        %v7893 = vpop.f32.mrb[0].mxu0
        %v7894 = vadd.f32 0.0, %v7893
        %v7895 = vpop.f32.mrb[0].mxu0
        %7896 = vmatprep.mubr.bf16.mxu0 0
        %7897 = vmatmul.mubr.bf16.gmra.mrb[0].mxu0 %v7709
        %v7898 = vpop.f32.mrb[0].mxu0
        %v7899 = vadd.f32 0.0, %v7898
        %v7900 = vpop.f32.mrb[0].mxu0
        %v7901 = vpop.f32.mrb[0].mxu0
        %v7902 = vadd.f32 0.0, %v7901
        %v7903 = vpop.f32.mrb[0].mxu0
        %7904 = vmatprep.mubr.bf16.mxu0 0
        %7905 = vmatmul.mubr.bf16.gmra.mrb[0].mxu0 %v7711
        %v7906 = vpop.f32.mrb[0].mxu0
        %v7907 = vadd.f32 0.0, %v7906
        %v7908 = vpop.f32.mrb[0].mxu0
        %v7909 = vpop.f32.mrb[0].mxu0
        %v7910 = vadd.f32 0.0, %v7909
        %v7911 = vpop.f32.mrb[0].mxu0
        %7912 = vmatprep.mubr.bf16.mxu0 0
        %7913 = vmatmul.mubr.bf16.gmra.mrb[0].mxu0 %v7713
        %v7914 = vpop.f32.mrb[0].mxu0
        %v7915 = vadd.f32 0.0, %v7914
        %v7916 = vpop.f32.mrb[0].mxu0
        %v7917 = vpop.f32.mrb[0].mxu0
        %v7918 = vadd.f32 0.0, %v7917
        %v7919 = vpop.f32.mrb[0].mxu0
        %7920 = vmatprep.mubr.bf16.mxu0 0
        %7921 = vmatmul.mubr.bf16.gmra.mrb[0].mxu0 %v7715
        %v7922 = vpop.f32.mrb[0].mxu0
        %v7923 = vadd.f32 0.0, %v7922
        %v7924 = vpop.f32.mrb[0].mxu0
        %v7925 = vpop.f32.mrb[0].mxu0
        %v7926 = vadd.f32 0.0, %v7925
        %v7927 = vpop.f32.mrb[0].mxu0
        %7928 = vmatprep.mubr.bf16.mxu0 0
        %7929 = vmatmul.mubr.bf16.gmra.mrb[0].mxu0 %v7717
        %v7930 = vpop.f32.mrb[0].mxu0
        %v7931 = vadd.f32 0.0, %v7930
        %v7932 = vpop.f32.mrb[0].mxu0
        %v7933 = vpop.f32.mrb[0].mxu0
        %v7934 = vadd.f32 0.0, %v7933
        %v7935 = vpop.f32.mrb[0].mxu0
        %7936 = vmatprep.mubr.bf16.mxu0 0
        %7937 = vmatmul.mubr.bf16.gmra.mrb[0].mxu0 %v7719
        %v7938 = vpop.f32.mrb[0].mxu0
        %v7939 = vadd.f32 0.0, %v7938
        %v7940 = vpop.f32.mrb[0].mxu0
        %v7941 = vpop.f32.mrb[0].mxu0
        %v7942 = vadd.f32 0.0, %v7941
        %v7943 = vpop.f32.mrb[0].mxu0
        %7944 = vmatprep.mubr.bf16.mxu0 0
        %7945 = vmatmul.mubr.bf16.gmra.mrb[0].mxu0 %v7721
        %v7946 = vpop.f32.mrb[0].mxu0
        %v7947 = vadd.f32 0.0, %v7946
        %v7948 = vpop.f32.mrb[0].mxu0
        %v7949 = vpop.f32.mrb[0].mxu0
        %v7950 = vadd.f32 0.0, %v7949
        %v7951 = vpop.f32.mrb[0].mxu0
        %7952 = vmatprep.mubr.bf16.mxu0 0
        %7953 = vmatmul.mubr.bf16.gmra.mrb[0].mxu0 %v7723
        %v7954 = vpop.f32.mrb[0].mxu0
        %v7955 = vadd.f32 0.0, %v7954
        %v7956 = vpop.f32.mrb[0].mxu0
        %v7957 = vpop.f32.mrb[0].mxu0
        %v7958 = vadd.f32 0.0, %v7957
        %v7959 = vpop.f32.mrb[0].mxu0
        %7960 = vmatprep.mubr.bf16.mxu0 0
        %7961 = vmatmul.mubr.bf16.gmra.mrb[0].mxu0 %v7725
        %v7962 = vpop.f32.mrb[0].mxu0
        %v7963 = vadd.f32 0.0, %v7962
        %v7964 = vpop.f32.mrb[0].mxu0
        %v7965 = vpop.f32.mrb[0].mxu0
        %v7966 = vadd.f32 0.0, %v7965
        %v7967 = vpop.f32.mrb[0].mxu0
        %7968 = vdwg.mxu0
        %v7969 = vadd.f32 %v7632, %v7827
        %v7970 = vadd.f32 %v7633, %v7830
        %v7971 = vadd.f32 %v7634, %v7835
        %v7972 = vadd.f32 %v7635, %v7838
        %v7973 = vadd.f32 %v7636, %v7843
        %v7974 = vadd.f32 %v7637, %v7846
        %v7975 = vadd.f32 %v7638, %v7851
        %v7976 = vadd.f32 %v7639, %v7854
        %v7977 = vadd.f32 %v7640, %v7859
        %v7978 = vadd.f32 %v7641, %v7862
        %v7979 = vadd.f32 %v7642, %v7867
        %v7980 = vadd.f32 %v7643, %v7870
        %v7981 = vadd.f32 %v7644, %v7875
        %v7982 = vadd.f32 %v7645, %v7878
        %v7983 = vadd.f32 %v7646, %v7883
        %v7984 = vadd.f32 %v7647, %v7886
        %v7985 = vadd.f32 %v7648, %v7891
        %v7986 = vadd.f32 %v7649, %v7894
        %v7987 = vadd.f32 %v7650, %v7899
        %v7988 = vadd.f32 %v7651, %v7902
        %v7989 = vadd.f32 %v7652, %v7907
        %v7990 = vadd.f32 %v7653, %v7910
        %v7991 = vadd.f32 %v7654, %v7915
        %v7992 = vadd.f32 %v7655, %v7918
        %v7993 = vadd.f32 %v7656, %v7923
        %v7994 = vadd.f32 %v7657, %v7926
        %v7995 = vadd.f32 %v7658, %v7931
        %v7996 = vadd.f32 %v7659, %v7934
        %v7997 = vadd.f32 %v7660, %v7939
        %v7998 = vadd.f32 %v7661, %v7942
        %v7999 = vadd.f32 %v7662, %v7947
        %v8000 = vadd.f32 %v7663, %v7950
        %v8001 = vadd.f32 %v7664, %v7955
        %v8002 = vadd.f32 %v7665, %v7958
        %v8003 = vadd.f32 %v7666, %v7963
        %v8004 = vadd.f32 %v7667, %v7966
        %v8005 = vld [vmem:[#allocation2 + $0x10] sm:$0xc]
        %v8006 = vld [vmem:[#allocation2 + $0x14] sm:$0xf]
        %v8007 = vld [vmem:[#allocation2 + $0x18] sm:$0xf]
        %v8008 = vld [vmem:[#allocation2 + $0x1c] sm:$0xf]
        %v8009 = vld [vmem:[#allocation2 + $0x20] sm:$0xf]
        %v8010 = vld [vmem:[#allocation2 + $0x24] sm:$0xf]
        %v8011 = vld [vmem:[#allocation2 + $0x28] sm:$0xf]
        %v8012 = vld [vmem:[#allocation2 + $0x2c] sm:$0xf]
        %v8013 = vld [vmem:[#allocation2 + $0x30] sm:$0xf]
        %v8014 = vld [vmem:[#allocation2 + $0x34] sm:$0xf]
        %v8015 = vld [vmem:[#allocation2 + $0x38] sm:$0xf]
        %v8016 = vld [vmem:[#allocation2 + $0x3c] sm:$0xf]
        %v8017 = vld [vmem:[#allocation2 + $0x40] sm:$0xf]
        %v8018 = vld [vmem:[#allocation2 + $0x44] sm:$0xf]
        %v8019 = vld [vmem:[#allocation2 + $0x48] sm:$0xf]
        %v8020 = vld [vmem:[#allocation2 + $0x4c] sm:$0xf]
        %v8021 = vld [vmem:[#allocation2 + $0x50] sm:$0xf]
        %v8022 = vld [vmem:[#allocation2 + $0x54] sm:$0xf]
        %v8023 = vld [vmem:[#allocation2 + $0x58] sm:$0xf]
        %v8024 = vld [vmem:[#allocation2 + $0x5c] sm:$0xf]
        %v8025 = vld [vmem:[#allocation2 + $0x60] sm:$0xf]
        %v8026 = vld [vmem:[#allocation2 + $0x64] sm:$0xf]
        %v8027 = vld [vmem:[#allocation2 + $0x68] sm:$0xf]
        %v8028 = vld [vmem:[#allocation2 + $0x6c] sm:$0xf]
        %v8029 = vld [vmem:[#allocation2 + $0x70] sm:$0xf]
        %v8030 = vld [vmem:[#allocation2 + $0x74] sm:$0xf]
        %v8031 = vld [vmem:[#allocation2 + $0x78] sm:$0xf]
        %v8032 = vld [vmem:[#allocation2 + $0x7c] sm:$0xf]
        %v8033 = vld [vmem:[#allocation2 + $0x80] sm:$0xf]
        %v8034 = vld [vmem:[#allocation2 + $0x84] sm:$0xf]
        %v8035 = vld [vmem:[#allocation2 + $0x88] sm:$0xf]
        %v8036 = vld [vmem:[#allocation2 + $0x8c] sm:$0xf]
        %v8037 = vld [vmem:[#allocation2 + $0x90] sm:$0xf]
        %v8038 = vld [vmem:[#allocation2 + $0x94] sm:$0xf]
        %v8039 = vld [vmem:[#allocation2 + $0x98] sm:$0xf]
        %v8040 = vld [vmem:[#allocation2 + $0x9c] sm:$0xf]
        %v8041 = vld [vmem:[#allocation2 + $0xa0] sm:$0x1]
        %s8042 = scalar_lea.vmem [#allocation9], 384
        %v8043 = vld [vmem:[%s8042] sm:$0xf]
        %v8044 = vld [vmem:[%s8042 + $0x4] sm:$0xf]
        %v8045 = vld [vmem:[%s8042 + $0x8] sm:$0xf]
        %v8046 = vld [vmem:[%s8042 + $0xc] sm:$0xf]
        %v8047 = vld [vmem:[%s8042 + $0x10] sm:$0xf]
        %v8048 = vld [vmem:[%s8042 + $0x14] sm:$0xf]
        %v8049 = vld [vmem:[%s8042 + $0x18] sm:$0xf]
        %v8050 = vld [vmem:[%s8042 + $0x1c] sm:$0xf]
        %v8051 = vld [vmem:[%s8042 + $0x20] sm:$0xf]
        %v8052 = vld [vmem:[%s8042 + $0x24] sm:$0xf]
        %v8053 = vld [vmem:[%s8042 + $0x28] sm:$0xf]
        %v8054 = vld [vmem:[%s8042 + $0x2c] sm:$0xf]
        %v8055 = vld [vmem:[%s8042 + $0x30] sm:$0xf]
        %v8056 = vld [vmem:[%s8042 + $0x34] sm:$0xf]
        %v8057 = vld [vmem:[%s8042 + $0x38] sm:$0xf]
        %v8058 = vld [vmem:[%s8042 + $0x3c] sm:$0xf]
        %v8096 = vunpack.c.l.b16 %v8005
        %v8097 = vunpack.c.l.b16 %v8006
        %v8098 = vunpack.c.l.b16 %v8007
        %v8099 = vunpack.c.l.b16 %v8008
        %v8100 = vunpack.c.l.b16 %v8009
        %v8101 = vunpack.c.l.b16 %v8010
        %v8102 = vunpack.c.l.b16 %v8011
        %v8103 = vunpack.c.l.b16 %v8012
        %v8104 = vunpack.c.l.b16 %v8013
        %v8105 = vunpack.c.l.b16 %v8014
        %v8106 = vunpack.c.l.b16 %v8015
        %v8107 = vunpack.c.l.b16 %v8016
        %v8108 = vunpack.c.l.b16 %v8017
        %v8109 = vunpack.c.l.b16 %v8018
        %v8110 = vunpack.c.l.b16 %v8019
        %v8111 = vunpack.c.l.b16 %v8020
        %v8112 = vunpack.c.l.b16 %v8021
        %v8113 = vunpack.c.l.b16 %v8022
        %v8114 = vunpack.c.l.b16 %v8023
        %v8115 = vunpack.c.l.b16 %v8024
        %v8116 = vunpack.c.l.b16 %v8025
        %v8117 = vunpack.c.l.b16 %v8026
        %v8118 = vunpack.c.l.b16 %v8027
        %v8119 = vunpack.c.l.b16 %v8028
        %v8120 = vunpack.c.l.b16 %v8029
        %v8121 = vunpack.c.l.b16 %v8030
        %v8122 = vunpack.c.l.b16 %v8031
        %v8123 = vunpack.c.l.b16 %v8032
        %v8124 = vunpack.c.l.b16 %v8033
        %v8125 = vunpack.c.l.b16 %v8034
        %v8126 = vunpack.c.l.b16 %v8035
        %v8127 = vunpack.c.l.b16 %v8036
        %v8128 = vunpack.c.l.b16 %v8037
        %v8129 = vunpack.c.l.b16 %v8038
        %v8130 = vunpack.c.l.b16 %v8039
        %v8131 = vunpack.c.l.b16 %v8040
        %v8132 = vunpack.c.l.b16 %v8041
        %v8133 = vpack.c.b16 %v8097, %v8096
        %v8134 = vpack.c.b16 %v8099, %v8098
        %v8135 = vpack.c.b16 %v8101, %v8100
        %v8136 = vpack.c.b16 %v8103, %v8102
        %v8137 = vpack.c.b16 %v8105, %v8104
        %v8138 = vpack.c.b16 %v8107, %v8106
        %v8139 = vpack.c.b16 %v8109, %v8108
        %v8140 = vpack.c.b16 %v8111, %v8110
        %v8141 = vpack.c.b16 %v8113, %v8112
        %v8142 = vpack.c.b16 %v8115, %v8114
        %v8143 = vpack.c.b16 %v8117, %v8116
        %v8144 = vpack.c.b16 %v8119, %v8118
        %v8145 = vpack.c.b16 %v8121, %v8120
        %v8146 = vpack.c.b16 %v8123, %v8122
        %v8147 = vpack.c.b16 %v8125, %v8124
        %v8148 = vpack.c.b16 %v8127, %v8126
        %v8149 = vpack.c.b16 %v8129, %v8128
        %v8150 = vpack.c.b16 %v8131, %v8130
        %v8151 = vpack.c.b16 %v8132, %v8132
        %v8152 = vrot.slane %v8133, 2
        %v8153 = vrot.slane %v8134, 2
        %v8154 = vsel %vm3147, %v8152, %v8153
        %v8155 = vrot.slane %v8135, 2
        %v8156 = vsel %vm3147, %v8153, %v8155
        %v8157 = vrot.slane %v8136, 2
        %v8158 = vsel %vm3147, %v8155, %v8157
        %v8159 = vrot.slane %v8137, 2
        %v8160 = vsel %vm3147, %v8157, %v8159
        %v8161 = vrot.slane %v8138, 2
        %v8162 = vsel %vm3147, %v8159, %v8161
        %v8163 = vrot.slane %v8139, 2
        %v8164 = vsel %vm3147, %v8161, %v8163
        %v8165 = vrot.slane %v8140, 2
        %v8166 = vsel %vm3147, %v8163, %v8165
        %v8167 = vrot.slane %v8141, 2
        %v8168 = vsel %vm3147, %v8165, %v8167
        %v8169 = vrot.slane %v8142, 2
        %v8170 = vsel %vm3147, %v8167, %v8169
        %v8171 = vrot.slane %v8143, 2
        %v8172 = vsel %vm3147, %v8169, %v8171
        %v8173 = vrot.slane %v8144, 2
        %v8174 = vsel %vm3147, %v8171, %v8173
        %v8175 = vrot.slane %v8145, 2
        %v8176 = vsel %vm3147, %v8173, %v8175
        %v8177 = vrot.slane %v8146, 2
        %v8178 = vsel %vm3147, %v8175, %v8177
        %v8179 = vrot.slane %v8147, 2
        %v8180 = vsel %vm3147, %v8177, %v8179
        %v8181 = vrot.slane %v8148, 2
        %v8182 = vsel %vm3147, %v8179, %v8181
        %v8183 = vrot.slane %v8149, 2
        %v8184 = vsel %vm3147, %v8181, %v8183
        %v8185 = vrot.slane %v8150, 2
        %v8186 = vsel %vm3147, %v8183, %v8185
        %v8187 = vrot.slane %v8151, 2
        %v8188 = vsel %vm3147, %v8185, %v8187
        %v8223 = vunpack.c.l.b16 %v8043
        %v8224 = vunpack.c.l.b16 %v8044
        %v8225 = vunpack.c.l.b16 %v8045
        %v8226 = vunpack.c.l.b16 %v8046
        %v8227 = vunpack.c.l.b16 %v8047
        %v8228 = vunpack.c.l.b16 %v8048
        %v8229 = vunpack.c.l.b16 %v8049
        %v8230 = vunpack.c.l.b16 %v8050
        %v8231 = vunpack.c.l.b16 %v8051
        %v8232 = vunpack.c.l.b16 %v8052
        %v8233 = vunpack.c.l.b16 %v8053
        %v8234 = vunpack.c.l.b16 %v8054
        %v8235 = vunpack.c.l.b16 %v8055
        %v8236 = vunpack.c.l.b16 %v8056
        %v8237 = vunpack.c.l.b16 %v8057
        %v8238 = vunpack.c.l.b16 %v8058
        %v8239 = vpack.c.b16 %v8224, %v8223
        %v8240 = vpack.c.b16 %v8226, %v8225
        %v8241 = vpack.c.b16 %v8228, %v8227
        %v8242 = vpack.c.b16 %v8230, %v8229
        %v8243 = vpack.c.b16 %v8232, %v8231
        %v8244 = vpack.c.b16 %v8234, %v8233
        %v8245 = vpack.c.b16 %v8236, %v8235
        %v8246 = vpack.c.b16 %v8238, %v8237
        %8255 = vmatprep.subr.bf16.mxu0 0
        %8256 = vmatpush1.bf16.msra.mxu0 %v8239
        %8257 = vmatprep.subr.bf16.mxu0 0
        %8258 = vmatpush1.bf16.msra.mxu0 %v8240
        %8259 = vmatprep.subr.bf16.mxu0 0
        %8260 = vmatpush1.bf16.msra.mxu0 %v8241
        %8261 = vmatprep.subr.bf16.mxu0 0
        %8262 = vmatpush1.bf16.msra.mxu0 %v8242
        %8263 = vmatprep.subr.bf16.mxu0 0
        %8264 = vmatpush1.bf16.msra.mxu0 %v8243
        %8265 = vmatprep.subr.bf16.mxu0 0
        %8266 = vmatpush1.bf16.msra.mxu0 %v8244
        %8267 = vmatprep.subr.bf16.mxu0 0
        %8268 = vmatpush1.bf16.msra.mxu0 %v8245
        %8269 = vmatprep.subr.bf16.mxu0 0
        %8270 = vmatpush1.bf16.msra.mxu0 %v8246
        %8271 = vmatprep.subr.bf16.mxu0 0
        %8272 = vmatpush1.bf16.msra.mxu0 0
        %8273 = vmatprep.subr.bf16.mxu0 0
        %8274 = vmatpush1.bf16.msra.mxu0 0
        %8275 = vmatprep.subr.bf16.mxu0 0
        %8276 = vmatpush1.bf16.msra.mxu0 0
        %8277 = vmatprep.subr.bf16.mxu0 0
        %8278 = vmatpush1.bf16.msra.mxu0 0
        %8279 = vmatprep.subr.bf16.mxu0 0
        %8280 = vmatpush1.bf16.msra.mxu0 0
        %8281 = vmatprep.subr.bf16.mxu0 0
        %8282 = vmatpush1.bf16.msra.mxu0 0
        %8283 = vmatprep.subr.bf16.mxu0 0
        %8284 = vmatpush1.bf16.msra.mxu0 0
        %8285 = vmatprep.subr.bf16.mxu0 0
        %8286 = vmatpush1.bf16.msra.mxu0 0
        %8287 = vmatprep.mubr.bf16.mxu0 0
        %8288 = vmatmul.mubr.bf16.gmra.mrb[0].mxu0 %v8154
        %v8289 = vpop.f32.mrb[0].mxu0
        %v8290 = vadd.f32 0.0, %v8289
        %v8291 = vpop.f32.mrb[0].mxu0
        %v8292 = vpop.f32.mrb[0].mxu0
        %v8293 = vadd.f32 0.0, %v8292
        %v8294 = vpop.f32.mrb[0].mxu0
        %8295 = vmatprep.mubr.bf16.mxu0 0
        %8296 = vmatmul.mubr.bf16.gmra.mrb[0].mxu0 %v8156
        %v8297 = vpop.f32.mrb[0].mxu0
        %v8298 = vadd.f32 0.0, %v8297
        %v8299 = vpop.f32.mrb[0].mxu0
        %v8300 = vpop.f32.mrb[0].mxu0
        %v8301 = vadd.f32 0.0, %v8300
        %v8302 = vpop.f32.mrb[0].mxu0
        %8303 = vmatprep.mubr.bf16.mxu0 0
        %8304 = vmatmul.mubr.bf16.gmra.mrb[0].mxu0 %v8158
        %v8305 = vpop.f32.mrb[0].mxu0
        %v8306 = vadd.f32 0.0, %v8305
        %v8307 = vpop.f32.mrb[0].mxu0
        %v8308 = vpop.f32.mrb[0].mxu0
        %v8309 = vadd.f32 0.0, %v8308
        %v8310 = vpop.f32.mrb[0].mxu0
        %8311 = vmatprep.mubr.bf16.mxu0 0
        %8312 = vmatmul.mubr.bf16.gmra.mrb[0].mxu0 %v8160
        %v8313 = vpop.f32.mrb[0].mxu0
        %v8314 = vadd.f32 0.0, %v8313
        %v8315 = vpop.f32.mrb[0].mxu0
        %v8316 = vpop.f32.mrb[0].mxu0
        %v8317 = vadd.f32 0.0, %v8316
        %v8318 = vpop.f32.mrb[0].mxu0
        %8319 = vmatprep.mubr.bf16.mxu0 0
        %8320 = vmatmul.mubr.bf16.gmra.mrb[0].mxu0 %v8162
        %v8321 = vpop.f32.mrb[0].mxu0
        %v8322 = vadd.f32 0.0, %v8321
        %v8323 = vpop.f32.mrb[0].mxu0
        %v8324 = vpop.f32.mrb[0].mxu0
        %v8325 = vadd.f32 0.0, %v8324
        %v8326 = vpop.f32.mrb[0].mxu0
        %8327 = vmatprep.mubr.bf16.mxu0 0
        %8328 = vmatmul.mubr.bf16.gmra.mrb[0].mxu0 %v8164
        %v8329 = vpop.f32.mrb[0].mxu0
        %v8330 = vadd.f32 0.0, %v8329
        %v8331 = vpop.f32.mrb[0].mxu0
        %v8332 = vpop.f32.mrb[0].mxu0
        %v8333 = vadd.f32 0.0, %v8332
        %v8334 = vpop.f32.mrb[0].mxu0
        %8335 = vmatprep.mubr.bf16.mxu0 0
        %8336 = vmatmul.mubr.bf16.gmra.mrb[0].mxu0 %v8166
        %v8337 = vpop.f32.mrb[0].mxu0
        %v8338 = vadd.f32 0.0, %v8337
        %v8339 = vpop.f32.mrb[0].mxu0
        %v8340 = vpop.f32.mrb[0].mxu0
        %v8341 = vadd.f32 0.0, %v8340
        %v8342 = vpop.f32.mrb[0].mxu0
        %8343 = vmatprep.mubr.bf16.mxu0 0
        %8344 = vmatmul.mubr.bf16.gmra.mrb[0].mxu0 %v8168
        %v8345 = vpop.f32.mrb[0].mxu0
        %v8346 = vadd.f32 0.0, %v8345
        %v8347 = vpop.f32.mrb[0].mxu0
        %v8348 = vpop.f32.mrb[0].mxu0
        %v8349 = vadd.f32 0.0, %v8348
        %v8350 = vpop.f32.mrb[0].mxu0
        %8351 = vmatprep.mubr.bf16.mxu0 0
        %8352 = vmatmul.mubr.bf16.gmra.mrb[0].mxu0 %v8170
        %v8353 = vpop.f32.mrb[0].mxu0
        %v8354 = vadd.f32 0.0, %v8353
        %v8355 = vpop.f32.mrb[0].mxu0
        %v8356 = vpop.f32.mrb[0].mxu0
        %v8357 = vadd.f32 0.0, %v8356
        %v8358 = vpop.f32.mrb[0].mxu0
        %8359 = vmatprep.mubr.bf16.mxu0 0
        %8360 = vmatmul.mubr.bf16.gmra.mrb[0].mxu0 %v8172
        %v8361 = vpop.f32.mrb[0].mxu0
        %v8362 = vadd.f32 0.0, %v8361
        %v8363 = vpop.f32.mrb[0].mxu0
        %v8364 = vpop.f32.mrb[0].mxu0
        %v8365 = vadd.f32 0.0, %v8364
        %v8366 = vpop.f32.mrb[0].mxu0
        %8367 = vmatprep.mubr.bf16.mxu0 0
        %8368 = vmatmul.mubr.bf16.gmra.mrb[0].mxu0 %v8174
        %v8369 = vpop.f32.mrb[0].mxu0
        %v8370 = vadd.f32 0.0, %v8369
        %v8371 = vpop.f32.mrb[0].mxu0
        %v8372 = vpop.f32.mrb[0].mxu0
        %v8373 = vadd.f32 0.0, %v8372
        %v8374 = vpop.f32.mrb[0].mxu0
        %8375 = vmatprep.mubr.bf16.mxu0 0
        %8376 = vmatmul.mubr.bf16.gmra.mrb[0].mxu0 %v8176
        %v8377 = vpop.f32.mrb[0].mxu0
        %v8378 = vadd.f32 0.0, %v8377
        %v8379 = vpop.f32.mrb[0].mxu0
        %v8380 = vpop.f32.mrb[0].mxu0
        %v8381 = vadd.f32 0.0, %v8380
        %v8382 = vpop.f32.mrb[0].mxu0
        %8383 = vmatprep.mubr.bf16.mxu0 0
        %8384 = vmatmul.mubr.bf16.gmra.mrb[0].mxu0 %v8178
        %v8385 = vpop.f32.mrb[0].mxu0
        %v8386 = vadd.f32 0.0, %v8385
        %v8387 = vpop.f32.mrb[0].mxu0
        %v8388 = vpop.f32.mrb[0].mxu0
        %v8389 = vadd.f32 0.0, %v8388
        %v8390 = vpop.f32.mrb[0].mxu0
        %8391 = vmatprep.mubr.bf16.mxu0 0
        %8392 = vmatmul.mubr.bf16.gmra.mrb[0].mxu0 %v8180
        %v8393 = vpop.f32.mrb[0].mxu0
        %v8394 = vadd.f32 0.0, %v8393
        %v8395 = vpop.f32.mrb[0].mxu0
        %v8396 = vpop.f32.mrb[0].mxu0
        %v8397 = vadd.f32 0.0, %v8396
        %v8398 = vpop.f32.mrb[0].mxu0
        %8399 = vmatprep.mubr.bf16.mxu0 0
        %8400 = vmatmul.mubr.bf16.gmra.mrb[0].mxu0 %v8182
        %v8401 = vpop.f32.mrb[0].mxu0
        %v8402 = vadd.f32 0.0, %v8401
        %v8403 = vpop.f32.mrb[0].mxu0
        %v8404 = vpop.f32.mrb[0].mxu0
        %v8405 = vadd.f32 0.0, %v8404
        %v8406 = vpop.f32.mrb[0].mxu0
        %8407 = vmatprep.mubr.bf16.mxu0 0
        %8408 = vmatmul.mubr.bf16.gmra.mrb[0].mxu0 %v8184
        %v8409 = vpop.f32.mrb[0].mxu0
        %v8410 = vadd.f32 0.0, %v8409
        %v8411 = vpop.f32.mrb[0].mxu0
        %v8412 = vpop.f32.mrb[0].mxu0
        %v8413 = vadd.f32 0.0, %v8412
        %v8414 = vpop.f32.mrb[0].mxu0
        %8415 = vmatprep.mubr.bf16.mxu0 0
        %8416 = vmatmul.mubr.bf16.gmra.mrb[0].mxu0 %v8186
        %v8417 = vpop.f32.mrb[0].mxu0
        %v8418 = vadd.f32 0.0, %v8417
        %v8419 = vpop.f32.mrb[0].mxu0
        %v8420 = vpop.f32.mrb[0].mxu0
        %v8421 = vadd.f32 0.0, %v8420
        %v8422 = vpop.f32.mrb[0].mxu0
        %8423 = vmatprep.mubr.bf16.mxu0 0
        %8424 = vmatmul.mubr.bf16.gmra.mrb[0].mxu0 %v8188
        %v8425 = vpop.f32.mrb[0].mxu0
        %v8426 = vadd.f32 0.0, %v8425
        %v8427 = vpop.f32.mrb[0].mxu0
        %v8428 = vpop.f32.mrb[0].mxu0
        %v8429 = vadd.f32 0.0, %v8428
        %v8430 = vpop.f32.mrb[0].mxu0
        %8431 = vdwg.mxu0
        %v8432 = vadd.f32 %v7969, %v8290
        %v8433 = vadd.f32 %v7970, %v8293
        %v8434 = vadd.f32 %v7971, %v8298
        %v8435 = vadd.f32 %v7972, %v8301
        %v8436 = vadd.f32 %v7973, %v8306
        %v8437 = vadd.f32 %v7974, %v8309
        %v8438 = vadd.f32 %v7975, %v8314
        %v8439 = vadd.f32 %v7976, %v8317
        %v8440 = vadd.f32 %v7977, %v8322
        %v8441 = vadd.f32 %v7978, %v8325
        %v8442 = vadd.f32 %v7979, %v8330
        %v8443 = vadd.f32 %v7980, %v8333
        %v8444 = vadd.f32 %v7981, %v8338
        %v8445 = vadd.f32 %v7982, %v8341
        %v8446 = vadd.f32 %v7983, %v8346
        %v8447 = vadd.f32 %v7984, %v8349
        %v8448 = vadd.f32 %v7985, %v8354
        %v8449 = vadd.f32 %v7986, %v8357
        %v8450 = vadd.f32 %v7987, %v8362
        %v8451 = vadd.f32 %v7988, %v8365
        %v8452 = vadd.f32 %v7989, %v8370
        %v8453 = vadd.f32 %v7990, %v8373
        %v8454 = vadd.f32 %v7991, %v8378
        %v8455 = vadd.f32 %v7992, %v8381
        %v8456 = vadd.f32 %v7993, %v8386
        %v8457 = vadd.f32 %v7994, %v8389
        %v8458 = vadd.f32 %v7995, %v8394
        %v8459 = vadd.f32 %v7996, %v8397
        %v8460 = vadd.f32 %v7997, %v8402
        %v8461 = vadd.f32 %v7998, %v8405
        %v8462 = vadd.f32 %v7999, %v8410
        %v8463 = vadd.f32 %v8000, %v8413
        %v8464 = vadd.f32 %v8001, %v8418
        %v8465 = vadd.f32 %v8002, %v8421
        %v8466 = vadd.f32 %v8003, %v8426
        %v8467 = vadd.f32 %v8004, %v8429
        %v8468 = vld [vmem:[#allocation2 + $0xa0] sm:$0x3]
        %s8469 = scalar_lea.vmem [#allocation9], 448
        %v8470 = vld [vmem:[%s8469] sm:$0xf]
        %v8471 = vld [vmem:[%s8469 + $0x4] sm:$0xf]
        %v8472 = vld [vmem:[%s8469 + $0x8] sm:$0xf]
        %v8473 = vld [vmem:[%s8469 + $0xc] sm:$0xf]
        %v8474 = vld [vmem:[%s8469 + $0x10] sm:$0xf]
        %v8475 = vld [vmem:[%s8469 + $0x14] sm:$0xf]
        %v8476 = vld [vmem:[%s8469 + $0x18] sm:$0xf]
        %v8477 = vld [vmem:[%s8469 + $0x1c] sm:$0xf]
        %v8478 = vld [vmem:[%s8469 + $0x20] sm:$0xf]
        %v8479 = vld [vmem:[%s8469 + $0x24] sm:$0xf]
        %v8480 = vld [vmem:[%s8469 + $0x28] sm:$0xf]
        %v8481 = vld [vmem:[%s8469 + $0x2c] sm:$0xf]
        %v8482 = vld [vmem:[%s8469 + $0x30] sm:$0xf]
        %v8483 = vld [vmem:[%s8469 + $0x34] sm:$0xf]
        %v8484 = vld [vmem:[%s8469 + $0x38] sm:$0xf]
        %v8485 = vld [vmem:[%s8469 + $0x3c] sm:$0xf]
        %v8487 = vunpack.c.l.b16 %v8468
        %v8488 = vpack.c.b16 %v8487, %v8487
        %v8490 = vshrl.u32 %v8133, 16
        %v8492 = vrot.slane %v8490, 2
        %v8493 = vshll.u32 %v8133, 16
        %v8495 = vrot.slane %v8493, 3
        %v8496 = vor.u32 %v8492, %v8495
        %v8498 = vshrl.u32 %v8134, 16
        %v8500 = vrot.slane %v8498, 2
        %v8501 = vshll.u32 %v8134, 16
        %v8503 = vrot.slane %v8501, 3
        %v8504 = vor.u32 %v8500, %v8503
        %v8505 = vsel %vm3948, %v8496, %v8504
        %v8507 = vshrl.u32 %v8135, 16
        %v8509 = vrot.slane %v8507, 2
        %v8510 = vshll.u32 %v8135, 16
        %v8512 = vrot.slane %v8510, 3
        %v8513 = vor.u32 %v8509, %v8512
        %v8514 = vsel %vm3948, %v8504, %v8513
        %v8516 = vshrl.u32 %v8136, 16
        %v8518 = vrot.slane %v8516, 2
        %v8519 = vshll.u32 %v8136, 16
        %v8521 = vrot.slane %v8519, 3
        %v8522 = vor.u32 %v8518, %v8521
        %v8523 = vsel %vm3948, %v8513, %v8522
        %v8525 = vshrl.u32 %v8137, 16
        %v8527 = vrot.slane %v8525, 2
        %v8528 = vshll.u32 %v8137, 16
        %v8530 = vrot.slane %v8528, 3
        %v8531 = vor.u32 %v8527, %v8530
        %v8532 = vsel %vm3948, %v8522, %v8531
        %v8534 = vshrl.u32 %v8138, 16
        %v8536 = vrot.slane %v8534, 2
        %v8537 = vshll.u32 %v8138, 16
        %v8539 = vrot.slane %v8537, 3
        %v8540 = vor.u32 %v8536, %v8539
        %v8541 = vsel %vm3948, %v8531, %v8540
        %v8543 = vshrl.u32 %v8139, 16
        %v8545 = vrot.slane %v8543, 2
        %v8546 = vshll.u32 %v8139, 16
        %v8548 = vrot.slane %v8546, 3
        %v8549 = vor.u32 %v8545, %v8548
        %v8550 = vsel %vm3948, %v8540, %v8549
        %v8552 = vshrl.u32 %v8140, 16
        %v8554 = vrot.slane %v8552, 2
        %v8555 = vshll.u32 %v8140, 16
        %v8557 = vrot.slane %v8555, 3
        %v8558 = vor.u32 %v8554, %v8557
        %v8559 = vsel %vm3948, %v8549, %v8558
        %v8561 = vshrl.u32 %v8141, 16
        %v8563 = vrot.slane %v8561, 2
        %v8564 = vshll.u32 %v8141, 16
        %v8566 = vrot.slane %v8564, 3
        %v8567 = vor.u32 %v8563, %v8566
        %v8568 = vsel %vm3948, %v8558, %v8567
        %v8570 = vshrl.u32 %v8142, 16
        %v8572 = vrot.slane %v8570, 2
        %v8573 = vshll.u32 %v8142, 16
        %v8575 = vrot.slane %v8573, 3
        %v8576 = vor.u32 %v8572, %v8575
        %v8577 = vsel %vm3948, %v8567, %v8576
        %v8579 = vshrl.u32 %v8143, 16
        %v8581 = vrot.slane %v8579, 2
        %v8582 = vshll.u32 %v8143, 16
        %v8584 = vrot.slane %v8582, 3
        %v8585 = vor.u32 %v8581, %v8584
        %v8586 = vsel %vm3948, %v8576, %v8585
        %v8588 = vshrl.u32 %v8144, 16
        %v8590 = vrot.slane %v8588, 2
        %v8591 = vshll.u32 %v8144, 16
        %v8593 = vrot.slane %v8591, 3
        %v8594 = vor.u32 %v8590, %v8593
        %v8595 = vsel %vm3948, %v8585, %v8594
        %v8597 = vshrl.u32 %v8145, 16
        %v8599 = vrot.slane %v8597, 2
        %v8600 = vshll.u32 %v8145, 16
        %v8602 = vrot.slane %v8600, 3
        %v8603 = vor.u32 %v8599, %v8602
        %v8604 = vsel %vm3948, %v8594, %v8603
        %v8606 = vshrl.u32 %v8146, 16
        %v8608 = vrot.slane %v8606, 2
        %v8609 = vshll.u32 %v8146, 16
        %v8611 = vrot.slane %v8609, 3
        %v8612 = vor.u32 %v8608, %v8611
        %v8613 = vsel %vm3948, %v8603, %v8612
        %v8615 = vshrl.u32 %v8147, 16
        %v8617 = vrot.slane %v8615, 2
        %v8618 = vshll.u32 %v8147, 16
        %v8620 = vrot.slane %v8618, 3
        %v8621 = vor.u32 %v8617, %v8620
        %v8622 = vsel %vm3948, %v8612, %v8621
        %v8624 = vshrl.u32 %v8148, 16
        %v8626 = vrot.slane %v8624, 2
        %v8627 = vshll.u32 %v8148, 16
        %v8629 = vrot.slane %v8627, 3
        %v8630 = vor.u32 %v8626, %v8629
        %v8631 = vsel %vm3948, %v8621, %v8630
        %v8633 = vshrl.u32 %v8149, 16
        %v8635 = vrot.slane %v8633, 2
        %v8636 = vshll.u32 %v8149, 16
        %v8638 = vrot.slane %v8636, 3
        %v8639 = vor.u32 %v8635, %v8638
        %v8640 = vsel %vm3948, %v8630, %v8639
        %v8642 = vshrl.u32 %v8150, 16
        %v8644 = vrot.slane %v8642, 2
        %v8645 = vshll.u32 %v8150, 16
        %v8647 = vrot.slane %v8645, 3
        %v8648 = vor.u32 %v8644, %v8647
        %v8649 = vsel %vm3948, %v8639, %v8648
        %v8651 = vshrl.u32 %v8488, 16
        %v8653 = vrot.slane %v8651, 2
        %v8654 = vshll.u32 %v8488, 16
        %v8656 = vrot.slane %v8654, 3
        %v8657 = vor.u32 %v8653, %v8656
        %v8658 = vsel %vm3948, %v8648, %v8657
        %v8693 = vunpack.c.l.b16 %v8470
        %v8694 = vunpack.c.l.b16 %v8471
        %v8695 = vunpack.c.l.b16 %v8472
        %v8696 = vunpack.c.l.b16 %v8473
        %v8697 = vunpack.c.l.b16 %v8474
        %v8698 = vunpack.c.l.b16 %v8475
        %v8699 = vunpack.c.l.b16 %v8476
        %v8700 = vunpack.c.l.b16 %v8477
        %v8701 = vunpack.c.l.b16 %v8478
        %v8702 = vunpack.c.l.b16 %v8479
        %v8703 = vunpack.c.l.b16 %v8480
        %v8704 = vunpack.c.l.b16 %v8481
        %v8705 = vunpack.c.l.b16 %v8482
        %v8706 = vunpack.c.l.b16 %v8483
        %v8707 = vunpack.c.l.b16 %v8484
        %v8708 = vunpack.c.l.b16 %v8485
        %v8709 = vpack.c.b16 %v8694, %v8693
        %v8710 = vpack.c.b16 %v8696, %v8695
        %v8711 = vpack.c.b16 %v8698, %v8697
        %v8712 = vpack.c.b16 %v8700, %v8699
        %v8713 = vpack.c.b16 %v8702, %v8701
        %v8714 = vpack.c.b16 %v8704, %v8703
        %v8715 = vpack.c.b16 %v8706, %v8705
        %v8716 = vpack.c.b16 %v8708, %v8707
        %8725 = vmatprep.subr.bf16.mxu0 0
        %8726 = vmatpush1.bf16.msra.mxu0 %v8709
        %8727 = vmatprep.subr.bf16.mxu0 0
        %8728 = vmatpush1.bf16.msra.mxu0 %v8710
        %8729 = vmatprep.subr.bf16.mxu0 0
        %8730 = vmatpush1.bf16.msra.mxu0 %v8711
        %8731 = vmatprep.subr.bf16.mxu0 0
        %8732 = vmatpush1.bf16.msra.mxu0 %v8712
        %8733 = vmatprep.subr.bf16.mxu0 0
        %8734 = vmatpush1.bf16.msra.mxu0 %v8713
        %8735 = vmatprep.subr.bf16.mxu0 0
        %8736 = vmatpush1.bf16.msra.mxu0 %v8714
        %8737 = vmatprep.subr.bf16.mxu0 0
        %8738 = vmatpush1.bf16.msra.mxu0 %v8715
        %8739 = vmatprep.subr.bf16.mxu0 0
        %8740 = vmatpush1.bf16.msra.mxu0 %v8716
        %8741 = vmatprep.subr.bf16.mxu0 0
        %8742 = vmatpush1.bf16.msra.mxu0 0
        %8743 = vmatprep.subr.bf16.mxu0 0
        %8744 = vmatpush1.bf16.msra.mxu0 0
        %8745 = vmatprep.subr.bf16.mxu0 0
        %8746 = vmatpush1.bf16.msra.mxu0 0
        %8747 = vmatprep.subr.bf16.mxu0 0
        %8748 = vmatpush1.bf16.msra.mxu0 0
        %8749 = vmatprep.subr.bf16.mxu0 0
        %8750 = vmatpush1.bf16.msra.mxu0 0
        %8751 = vmatprep.subr.bf16.mxu0 0
        %8752 = vmatpush1.bf16.msra.mxu0 0
        %8753 = vmatprep.subr.bf16.mxu0 0
        %8754 = vmatpush1.bf16.msra.mxu0 0
        %8755 = vmatprep.subr.bf16.mxu0 0
        %8756 = vmatpush1.bf16.msra.mxu0 0
        %8757 = vmatprep.mubr.bf16.mxu0 0
        %8758 = vmatmul.mubr.bf16.gmra.mrb[0].mxu0 %v8505
        %v8759 = vpop.f32.mrb[0].mxu0
        %v8760 = vadd.f32 0.0, %v8759
        %v8761 = vpop.f32.mrb[0].mxu0
        %v8762 = vpop.f32.mrb[0].mxu0
        %v8763 = vadd.f32 0.0, %v8762
        %v8764 = vpop.f32.mrb[0].mxu0
        %8765 = vmatprep.mubr.bf16.mxu0 0
        %8766 = vmatmul.mubr.bf16.gmra.mrb[0].mxu0 %v8514
        %v8767 = vpop.f32.mrb[0].mxu0
        %v8768 = vadd.f32 0.0, %v8767
        %v8769 = vpop.f32.mrb[0].mxu0
        %v8770 = vpop.f32.mrb[0].mxu0
        %v8771 = vadd.f32 0.0, %v8770
        %v8772 = vpop.f32.mrb[0].mxu0
        %8773 = vmatprep.mubr.bf16.mxu0 0
        %8774 = vmatmul.mubr.bf16.gmra.mrb[0].mxu0 %v8523
        %v8775 = vpop.f32.mrb[0].mxu0
        %v8776 = vadd.f32 0.0, %v8775
        %v8777 = vpop.f32.mrb[0].mxu0
        %v8778 = vpop.f32.mrb[0].mxu0
        %v8779 = vadd.f32 0.0, %v8778
        %v8780 = vpop.f32.mrb[0].mxu0
        %8781 = vmatprep.mubr.bf16.mxu0 0
        %8782 = vmatmul.mubr.bf16.gmra.mrb[0].mxu0 %v8532
        %v8783 = vpop.f32.mrb[0].mxu0
        %v8784 = vadd.f32 0.0, %v8783
        %v8785 = vpop.f32.mrb[0].mxu0
        %v8786 = vpop.f32.mrb[0].mxu0
        %v8787 = vadd.f32 0.0, %v8786
        %v8788 = vpop.f32.mrb[0].mxu0
        %8789 = vmatprep.mubr.bf16.mxu0 0
        %8790 = vmatmul.mubr.bf16.gmra.mrb[0].mxu0 %v8541
        %v8791 = vpop.f32.mrb[0].mxu0
        %v8792 = vadd.f32 0.0, %v8791
        %v8793 = vpop.f32.mrb[0].mxu0
        %v8794 = vpop.f32.mrb[0].mxu0
        %v8795 = vadd.f32 0.0, %v8794
        %v8796 = vpop.f32.mrb[0].mxu0
        %8797 = vmatprep.mubr.bf16.mxu0 0
        %8798 = vmatmul.mubr.bf16.gmra.mrb[0].mxu0 %v8550
        %v8799 = vpop.f32.mrb[0].mxu0
        %v8800 = vadd.f32 0.0, %v8799
        %v8801 = vpop.f32.mrb[0].mxu0
        %v8802 = vpop.f32.mrb[0].mxu0
        %v8803 = vadd.f32 0.0, %v8802
        %v8804 = vpop.f32.mrb[0].mxu0
        %8805 = vmatprep.mubr.bf16.mxu0 0
        %8806 = vmatmul.mubr.bf16.gmra.mrb[0].mxu0 %v8559
        %v8807 = vpop.f32.mrb[0].mxu0
        %v8808 = vadd.f32 0.0, %v8807
        %v8809 = vpop.f32.mrb[0].mxu0
        %v8810 = vpop.f32.mrb[0].mxu0
        %v8811 = vadd.f32 0.0, %v8810
        %v8812 = vpop.f32.mrb[0].mxu0
        %8813 = vmatprep.mubr.bf16.mxu0 0
        %8814 = vmatmul.mubr.bf16.gmra.mrb[0].mxu0 %v8568
        %v8815 = vpop.f32.mrb[0].mxu0
        %v8816 = vadd.f32 0.0, %v8815
        %v8817 = vpop.f32.mrb[0].mxu0
        %v8818 = vpop.f32.mrb[0].mxu0
        %v8819 = vadd.f32 0.0, %v8818
        %v8820 = vpop.f32.mrb[0].mxu0
        %8821 = vmatprep.mubr.bf16.mxu0 0
        %8822 = vmatmul.mubr.bf16.gmra.mrb[0].mxu0 %v8577
        %v8823 = vpop.f32.mrb[0].mxu0
        %v8824 = vadd.f32 0.0, %v8823
        %v8825 = vpop.f32.mrb[0].mxu0
        %v8826 = vpop.f32.mrb[0].mxu0
        %v8827 = vadd.f32 0.0, %v8826
        %v8828 = vpop.f32.mrb[0].mxu0
        %8829 = vmatprep.mubr.bf16.mxu0 0
        %8830 = vmatmul.mubr.bf16.gmra.mrb[0].mxu0 %v8586
        %v8831 = vpop.f32.mrb[0].mxu0
        %v8832 = vadd.f32 0.0, %v8831
        %v8833 = vpop.f32.mrb[0].mxu0
        %v8834 = vpop.f32.mrb[0].mxu0
        %v8835 = vadd.f32 0.0, %v8834
        %v8836 = vpop.f32.mrb[0].mxu0
        %8837 = vmatprep.mubr.bf16.mxu0 0
        %8838 = vmatmul.mubr.bf16.gmra.mrb[0].mxu0 %v8595
        %v8839 = vpop.f32.mrb[0].mxu0
        %v8840 = vadd.f32 0.0, %v8839
        %v8841 = vpop.f32.mrb[0].mxu0
        %v8842 = vpop.f32.mrb[0].mxu0
        %v8843 = vadd.f32 0.0, %v8842
        %v8844 = vpop.f32.mrb[0].mxu0
        %8845 = vmatprep.mubr.bf16.mxu0 0
        %8846 = vmatmul.mubr.bf16.gmra.mrb[0].mxu0 %v8604
        %v8847 = vpop.f32.mrb[0].mxu0
        %v8848 = vadd.f32 0.0, %v8847
        %v8849 = vpop.f32.mrb[0].mxu0
        %v8850 = vpop.f32.mrb[0].mxu0
        %v8851 = vadd.f32 0.0, %v8850
        %v8852 = vpop.f32.mrb[0].mxu0
        %8853 = vmatprep.mubr.bf16.mxu0 0
        %8854 = vmatmul.mubr.bf16.gmra.mrb[0].mxu0 %v8613
        %v8855 = vpop.f32.mrb[0].mxu0
        %v8856 = vadd.f32 0.0, %v8855
        %v8857 = vpop.f32.mrb[0].mxu0
        %v8858 = vpop.f32.mrb[0].mxu0
        %v8859 = vadd.f32 0.0, %v8858
        %v8860 = vpop.f32.mrb[0].mxu0
        %8861 = vmatprep.mubr.bf16.mxu0 0
        %8862 = vmatmul.mubr.bf16.gmra.mrb[0].mxu0 %v8622
        %v8863 = vpop.f32.mrb[0].mxu0
        %v8864 = vadd.f32 0.0, %v8863
        %v8865 = vpop.f32.mrb[0].mxu0
        %v8866 = vpop.f32.mrb[0].mxu0
        %v8867 = vadd.f32 0.0, %v8866
        %v8868 = vpop.f32.mrb[0].mxu0
        %8869 = vmatprep.mubr.bf16.mxu0 0
        %8870 = vmatmul.mubr.bf16.gmra.mrb[0].mxu0 %v8631
        %v8871 = vpop.f32.mrb[0].mxu0
        %v8872 = vadd.f32 0.0, %v8871
        %v8873 = vpop.f32.mrb[0].mxu0
        %v8874 = vpop.f32.mrb[0].mxu0
        %v8875 = vadd.f32 0.0, %v8874
        %v8876 = vpop.f32.mrb[0].mxu0
        %8877 = vmatprep.mubr.bf16.mxu0 0
        %8878 = vmatmul.mubr.bf16.gmra.mrb[0].mxu0 %v8640
        %v8879 = vpop.f32.mrb[0].mxu0
        %v8880 = vadd.f32 0.0, %v8879
        %v8881 = vpop.f32.mrb[0].mxu0
        %v8882 = vpop.f32.mrb[0].mxu0
        %v8883 = vadd.f32 0.0, %v8882
        %v8884 = vpop.f32.mrb[0].mxu0
        %8885 = vmatprep.mubr.bf16.mxu0 0
        %8886 = vmatmul.mubr.bf16.gmra.mrb[0].mxu0 %v8649
        %v8887 = vpop.f32.mrb[0].mxu0
        %v8888 = vadd.f32 0.0, %v8887
        %v8889 = vpop.f32.mrb[0].mxu0
        %v8890 = vpop.f32.mrb[0].mxu0
        %v8891 = vadd.f32 0.0, %v8890
        %v8892 = vpop.f32.mrb[0].mxu0
        %8893 = vmatprep.mubr.bf16.mxu0 0
        %8894 = vmatmul.mubr.bf16.gmra.mrb[0].mxu0 %v8658
        %v8895 = vpop.f32.mrb[0].mxu0
        %v8896 = vadd.f32 0.0, %v8895
        %v8897 = vpop.f32.mrb[0].mxu0
        %v8898 = vpop.f32.mrb[0].mxu0
        %v8899 = vadd.f32 0.0, %v8898
        %v8900 = vpop.f32.mrb[0].mxu0
        %8901 = vdwg.mxu0
        %v8902 = vadd.f32 %v8432, %v8760
        %v8903 = vadd.f32 %v8433, %v8763
        %v8904 = vadd.f32 %v8434, %v8768
        %v8905 = vadd.f32 %v8435, %v8771
        %v8906 = vadd.f32 %v8436, %v8776
        %v8907 = vadd.f32 %v8437, %v8779
        %v8908 = vadd.f32 %v8438, %v8784
        %v8909 = vadd.f32 %v8439, %v8787
        %v8910 = vadd.f32 %v8440, %v8792
        %v8911 = vadd.f32 %v8441, %v8795
        %v8912 = vadd.f32 %v8442, %v8800
        %v8913 = vadd.f32 %v8443, %v8803
        %v8914 = vadd.f32 %v8444, %v8808
        %v8915 = vadd.f32 %v8445, %v8811
        %v8916 = vadd.f32 %v8446, %v8816
        %v8917 = vadd.f32 %v8447, %v8819
        %v8918 = vadd.f32 %v8448, %v8824
        %v8919 = vadd.f32 %v8449, %v8827
        %v8920 = vadd.f32 %v8450, %v8832
        %v8921 = vadd.f32 %v8451, %v8835
        %v8922 = vadd.f32 %v8452, %v8840
        %v8923 = vadd.f32 %v8453, %v8843
        %v8924 = vadd.f32 %v8454, %v8848
        %v8925 = vadd.f32 %v8455, %v8851
        %v8926 = vadd.f32 %v8456, %v8856
        %v8927 = vadd.f32 %v8457, %v8859
        %v8928 = vadd.f32 %v8458, %v8864
        %v8929 = vadd.f32 %v8459, %v8867
        %v8930 = vadd.f32 %v8460, %v8872
        %v8931 = vadd.f32 %v8461, %v8875
        %v8932 = vadd.f32 %v8462, %v8880
        %v8933 = vadd.f32 %v8463, %v8883
        %v8934 = vadd.f32 %v8464, %v8888
        %v8935 = vadd.f32 %v8465, %v8891
        %v8936 = vadd.f32 %v8466, %v8896
        %v8937 = vadd.f32 %v8467, %v8899
        %v8938 = vld [vmem:[#allocation2 + $0x10] sm:$0x8]
        %s8939 = scalar_lea.vmem [#allocation9], 512
        %v8940 = vld [vmem:[%s8939] sm:$0xf]
        %v8941 = vld [vmem:[%s8939 + $0x4] sm:$0xf]
        %v8942 = vld [vmem:[%s8939 + $0x8] sm:$0xf]
        %v8943 = vld [vmem:[%s8939 + $0xc] sm:$0xf]
        %v8944 = vld [vmem:[%s8939 + $0x10] sm:$0xf]
        %v8945 = vld [vmem:[%s8939 + $0x14] sm:$0xf]
        %v8946 = vld [vmem:[%s8939 + $0x18] sm:$0xf]
        %v8947 = vld [vmem:[%s8939 + $0x1c] sm:$0xf]
        %v8948 = vld [vmem:[%s8939 + $0x20] sm:$0xf]
        %v8949 = vld [vmem:[%s8939 + $0x24] sm:$0xf]
        %v8950 = vld [vmem:[%s8939 + $0x28] sm:$0xf]
        %v8951 = vld [vmem:[%s8939 + $0x2c] sm:$0xf]
        %v8952 = vld [vmem:[%s8939 + $0x30] sm:$0xf]
        %v8953 = vld [vmem:[%s8939 + $0x34] sm:$0xf]
        %v8954 = vld [vmem:[%s8939 + $0x38] sm:$0xf]
        %v8955 = vld [vmem:[%s8939 + $0x3c] sm:$0xf]
        %v8957 = vunpack.c.l.b16 %v8938
        %v8958 = vpack.c.b16 %v8097, %v8957
        %v8959 = vrot.slane %v8958, 3
        %v8960 = vrot.slane %v8134, 3
        %v8961 = vsel %vm4419, %v8959, %v8960
        %v8962 = vrot.slane %v8135, 3
        %v8963 = vsel %vm4419, %v8960, %v8962
        %v8964 = vrot.slane %v8136, 3
        %v8965 = vsel %vm4419, %v8962, %v8964
        %v8966 = vrot.slane %v8137, 3
        %v8967 = vsel %vm4419, %v8964, %v8966
        %v8968 = vrot.slane %v8138, 3
        %v8969 = vsel %vm4419, %v8966, %v8968
        %v8970 = vrot.slane %v8139, 3
        %v8971 = vsel %vm4419, %v8968, %v8970
        %v8972 = vrot.slane %v8140, 3
        %v8973 = vsel %vm4419, %v8970, %v8972
        %v8974 = vrot.slane %v8141, 3
        %v8975 = vsel %vm4419, %v8972, %v8974
        %v8976 = vrot.slane %v8142, 3
        %v8977 = vsel %vm4419, %v8974, %v8976
        %v8978 = vrot.slane %v8143, 3
        %v8979 = vsel %vm4419, %v8976, %v8978
        %v8980 = vrot.slane %v8144, 3
        %v8981 = vsel %vm4419, %v8978, %v8980
        %v8982 = vrot.slane %v8145, 3
        %v8983 = vsel %vm4419, %v8980, %v8982
        %v8984 = vrot.slane %v8146, 3
        %v8985 = vsel %vm4419, %v8982, %v8984
        %v8986 = vrot.slane %v8147, 3
        %v8987 = vsel %vm4419, %v8984, %v8986
        %v8988 = vrot.slane %v8148, 3
        %v8989 = vsel %vm4419, %v8986, %v8988
        %v8990 = vrot.slane %v8149, 3
        %v8991 = vsel %vm4419, %v8988, %v8990
        %v8992 = vrot.slane %v8150, 3
        %v8993 = vsel %vm4419, %v8990, %v8992
        %v8994 = vrot.slane %v8488, 3
        %v8995 = vsel %vm4419, %v8992, %v8994
        %v9030 = vunpack.c.l.b16 %v8940
        %v9031 = vunpack.c.l.b16 %v8941
        %v9032 = vunpack.c.l.b16 %v8942
        %v9033 = vunpack.c.l.b16 %v8943
        %v9034 = vunpack.c.l.b16 %v8944
        %v9035 = vunpack.c.l.b16 %v8945
        %v9036 = vunpack.c.l.b16 %v8946
        %v9037 = vunpack.c.l.b16 %v8947
        %v9038 = vunpack.c.l.b16 %v8948
        %v9039 = vunpack.c.l.b16 %v8949
        %v9040 = vunpack.c.l.b16 %v8950
        %v9041 = vunpack.c.l.b16 %v8951
        %v9042 = vunpack.c.l.b16 %v8952
        %v9043 = vunpack.c.l.b16 %v8953
        %v9044 = vunpack.c.l.b16 %v8954
        %v9045 = vunpack.c.l.b16 %v8955
        %v9046 = vpack.c.b16 %v9031, %v9030
        %v9047 = vpack.c.b16 %v9033, %v9032
        %v9048 = vpack.c.b16 %v9035, %v9034
        %v9049 = vpack.c.b16 %v9037, %v9036
        %v9050 = vpack.c.b16 %v9039, %v9038
        %v9051 = vpack.c.b16 %v9041, %v9040
        %v9052 = vpack.c.b16 %v9043, %v9042
        %v9053 = vpack.c.b16 %v9045, %v9044
        %9062 = vmatprep.subr.bf16.mxu0 0
        %9063 = vmatpush1.bf16.msra.mxu0 %v9046
        %9064 = vmatprep.subr.bf16.mxu0 0
        %9065 = vmatpush1.bf16.msra.mxu0 %v9047
        %9066 = vmatprep.subr.bf16.mxu0 0
        %9067 = vmatpush1.bf16.msra.mxu0 %v9048
        %9068 = vmatprep.subr.bf16.mxu0 0
        %9069 = vmatpush1.bf16.msra.mxu0 %v9049
        %9070 = vmatprep.subr.bf16.mxu0 0
        %9071 = vmatpush1.bf16.msra.mxu0 %v9050
        %9072 = vmatprep.subr.bf16.mxu0 0
        %9073 = vmatpush1.bf16.msra.mxu0 %v9051
        %9074 = vmatprep.subr.bf16.mxu0 0
        %9075 = vmatpush1.bf16.msra.mxu0 %v9052
        %9076 = vmatprep.subr.bf16.mxu0 0
        %9077 = vmatpush1.bf16.msra.mxu0 %v9053
        %9078 = vmatprep.subr.bf16.mxu0 0
        %9079 = vmatpush1.bf16.msra.mxu0 0
        %9080 = vmatprep.subr.bf16.mxu0 0
        %9081 = vmatpush1.bf16.msra.mxu0 0
        %9082 = vmatprep.subr.bf16.mxu0 0
        %9083 = vmatpush1.bf16.msra.mxu0 0
        %9084 = vmatprep.subr.bf16.mxu0 0
        %9085 = vmatpush1.bf16.msra.mxu0 0
        %9086 = vmatprep.subr.bf16.mxu0 0
        %9087 = vmatpush1.bf16.msra.mxu0 0
        %9088 = vmatprep.subr.bf16.mxu0 0
        %9089 = vmatpush1.bf16.msra.mxu0 0
        %9090 = vmatprep.subr.bf16.mxu0 0
        %9091 = vmatpush1.bf16.msra.mxu0 0
        %9092 = vmatprep.subr.bf16.mxu0 0
        %9093 = vmatpush1.bf16.msra.mxu0 0
        %9094 = vmatprep.mubr.bf16.mxu0 0
        %9095 = vmatmul.mubr.bf16.gmra.mrb[0].mxu0 %v8961
        %v9096 = vpop.f32.mrb[0].mxu0
        %v9097 = vadd.f32 0.0, %v9096
        %v9098 = vpop.f32.mrb[0].mxu0
        %v9099 = vpop.f32.mrb[0].mxu0
        %v9100 = vadd.f32 0.0, %v9099
        %v9101 = vpop.f32.mrb[0].mxu0
        %9102 = vmatprep.mubr.bf16.mxu0 0
        %9103 = vmatmul.mubr.bf16.gmra.mrb[0].mxu0 %v8963
        %v9104 = vpop.f32.mrb[0].mxu0
        %v9105 = vadd.f32 0.0, %v9104
        %v9106 = vpop.f32.mrb[0].mxu0
        %v9107 = vpop.f32.mrb[0].mxu0
        %v9108 = vadd.f32 0.0, %v9107
        %v9109 = vpop.f32.mrb[0].mxu0
        %9110 = vmatprep.mubr.bf16.mxu0 0
        %9111 = vmatmul.mubr.bf16.gmra.mrb[0].mxu0 %v8965
        %v9112 = vpop.f32.mrb[0].mxu0
        %v9113 = vadd.f32 0.0, %v9112
        %v9114 = vpop.f32.mrb[0].mxu0
        %v9115 = vpop.f32.mrb[0].mxu0
        %v9116 = vadd.f32 0.0, %v9115
        %v9117 = vpop.f32.mrb[0].mxu0
        %9118 = vmatprep.mubr.bf16.mxu0 0
        %9119 = vmatmul.mubr.bf16.gmra.mrb[0].mxu0 %v8967
        %v9120 = vpop.f32.mrb[0].mxu0
        %v9121 = vadd.f32 0.0, %v9120
        %v9122 = vpop.f32.mrb[0].mxu0
        %v9123 = vpop.f32.mrb[0].mxu0
        %v9124 = vadd.f32 0.0, %v9123
        %v9125 = vpop.f32.mrb[0].mxu0
        %9126 = vmatprep.mubr.bf16.mxu0 0
        %9127 = vmatmul.mubr.bf16.gmra.mrb[0].mxu0 %v8969
        %v9128 = vpop.f32.mrb[0].mxu0
        %v9129 = vadd.f32 0.0, %v9128
        %v9130 = vpop.f32.mrb[0].mxu0
        %v9131 = vpop.f32.mrb[0].mxu0
        %v9132 = vadd.f32 0.0, %v9131
        %v9133 = vpop.f32.mrb[0].mxu0
        %9134 = vmatprep.mubr.bf16.mxu0 0
        %9135 = vmatmul.mubr.bf16.gmra.mrb[0].mxu0 %v8971
        %v9136 = vpop.f32.mrb[0].mxu0
        %v9137 = vadd.f32 0.0, %v9136
        %v9138 = vpop.f32.mrb[0].mxu0
        %v9139 = vpop.f32.mrb[0].mxu0
        %v9140 = vadd.f32 0.0, %v9139
        %v9141 = vpop.f32.mrb[0].mxu0
        %9142 = vmatprep.mubr.bf16.mxu0 0
        %9143 = vmatmul.mubr.bf16.gmra.mrb[0].mxu0 %v8973
        %v9144 = vpop.f32.mrb[0].mxu0
        %v9145 = vadd.f32 0.0, %v9144
        %v9146 = vpop.f32.mrb[0].mxu0
        %v9147 = vpop.f32.mrb[0].mxu0
        %v9148 = vadd.f32 0.0, %v9147
        %v9149 = vpop.f32.mrb[0].mxu0
        %9150 = vmatprep.mubr.bf16.mxu0 0
        %9151 = vmatmul.mubr.bf16.gmra.mrb[0].mxu0 %v8975
        %v9152 = vpop.f32.mrb[0].mxu0
        %v9153 = vadd.f32 0.0, %v9152
        %v9154 = vpop.f32.mrb[0].mxu0
        %v9155 = vpop.f32.mrb[0].mxu0
        %v9156 = vadd.f32 0.0, %v9155
        %v9157 = vpop.f32.mrb[0].mxu0
        %9158 = vmatprep.mubr.bf16.mxu0 0
        %9159 = vmatmul.mubr.bf16.gmra.mrb[0].mxu0 %v8977
        %v9160 = vpop.f32.mrb[0].mxu0
        %v9161 = vadd.f32 0.0, %v9160
        %v9162 = vpop.f32.mrb[0].mxu0
        %v9163 = vpop.f32.mrb[0].mxu0
        %v9164 = vadd.f32 0.0, %v9163
        %v9165 = vpop.f32.mrb[0].mxu0
        %9166 = vmatprep.mubr.bf16.mxu0 0
        %9167 = vmatmul.mubr.bf16.gmra.mrb[0].mxu0 %v8979
        %v9168 = vpop.f32.mrb[0].mxu0
        %v9169 = vadd.f32 0.0, %v9168
        %v9170 = vpop.f32.mrb[0].mxu0
        %v9171 = vpop.f32.mrb[0].mxu0
        %v9172 = vadd.f32 0.0, %v9171
        %v9173 = vpop.f32.mrb[0].mxu0
        %9174 = vmatprep.mubr.bf16.mxu0 0
        %9175 = vmatmul.mubr.bf16.gmra.mrb[0].mxu0 %v8981
        %v9176 = vpop.f32.mrb[0].mxu0
        %v9177 = vadd.f32 0.0, %v9176
        %v9178 = vpop.f32.mrb[0].mxu0
        %v9179 = vpop.f32.mrb[0].mxu0
        %v9180 = vadd.f32 0.0, %v9179
        %v9181 = vpop.f32.mrb[0].mxu0
        %9182 = vmatprep.mubr.bf16.mxu0 0
        %9183 = vmatmul.mubr.bf16.gmra.mrb[0].mxu0 %v8983
        %v9184 = vpop.f32.mrb[0].mxu0
        %v9185 = vadd.f32 0.0, %v9184
        %v9186 = vpop.f32.mrb[0].mxu0
        %v9187 = vpop.f32.mrb[0].mxu0
        %v9188 = vadd.f32 0.0, %v9187
        %v9189 = vpop.f32.mrb[0].mxu0
        %9190 = vmatprep.mubr.bf16.mxu0 0
        %9191 = vmatmul.mubr.bf16.gmra.mrb[0].mxu0 %v8985
        %v9192 = vpop.f32.mrb[0].mxu0
        %v9193 = vadd.f32 0.0, %v9192
        %v9194 = vpop.f32.mrb[0].mxu0
        %v9195 = vpop.f32.mrb[0].mxu0
        %v9196 = vadd.f32 0.0, %v9195
        %v9197 = vpop.f32.mrb[0].mxu0
        %9198 = vmatprep.mubr.bf16.mxu0 0
        %9199 = vmatmul.mubr.bf16.gmra.mrb[0].mxu0 %v8987
        %v9200 = vpop.f32.mrb[0].mxu0
        %v9201 = vadd.f32 0.0, %v9200
        %v9202 = vpop.f32.mrb[0].mxu0
        %v9203 = vpop.f32.mrb[0].mxu0
        %v9204 = vadd.f32 0.0, %v9203
        %v9205 = vpop.f32.mrb[0].mxu0
        %9206 = vmatprep.mubr.bf16.mxu0 0
        %9207 = vmatmul.mubr.bf16.gmra.mrb[0].mxu0 %v8989
        %v9208 = vpop.f32.mrb[0].mxu0
        %v9209 = vadd.f32 0.0, %v9208
        %v9210 = vpop.f32.mrb[0].mxu0
        %v9211 = vpop.f32.mrb[0].mxu0
        %v9212 = vadd.f32 0.0, %v9211
        %v9213 = vpop.f32.mrb[0].mxu0
        %9214 = vmatprep.mubr.bf16.mxu0 0
        %9215 = vmatmul.mubr.bf16.gmra.mrb[0].mxu0 %v8991
        %v9216 = vpop.f32.mrb[0].mxu0
        %v9217 = vadd.f32 0.0, %v9216
        %v9218 = vpop.f32.mrb[0].mxu0
        %v9219 = vpop.f32.mrb[0].mxu0
        %v9220 = vadd.f32 0.0, %v9219
        %v9221 = vpop.f32.mrb[0].mxu0
        %9222 = vmatprep.mubr.bf16.mxu0 0
        %9223 = vmatmul.mubr.bf16.gmra.mrb[0].mxu0 %v8993
        %v9224 = vpop.f32.mrb[0].mxu0
        %v9225 = vadd.f32 0.0, %v9224
        %v9226 = vpop.f32.mrb[0].mxu0
        %v9227 = vpop.f32.mrb[0].mxu0
        %v9228 = vadd.f32 0.0, %v9227
        %v9229 = vpop.f32.mrb[0].mxu0
        %9230 = vmatprep.mubr.bf16.mxu0 0
        %9231 = vmatmul.mubr.bf16.gmra.mrb[0].mxu0 %v8995
        %v9232 = vpop.f32.mrb[0].mxu0
        %v9233 = vadd.f32 0.0, %v9232
        %v9234 = vpop.f32.mrb[0].mxu0
        %v9235 = vpop.f32.mrb[0].mxu0
        %v9236 = vadd.f32 0.0, %v9235
        %v9237 = vpop.f32.mrb[0].mxu0
        %9238 = vdwg.mxu0
        %v9239 = vadd.f32 %v8902, %v9097
        %v9240 = vadd.f32 %v8903, %v9100
        %v9241 = vadd.f32 %v8904, %v9105
        %v9242 = vadd.f32 %v8905, %v9108
        %v9243 = vadd.f32 %v8906, %v9113
        %v9244 = vadd.f32 %v8907, %v9116
        %v9245 = vadd.f32 %v8908, %v9121
        %v9246 = vadd.f32 %v8909, %v9124
        %v9247 = vadd.f32 %v8910, %v9129
        %v9248 = vadd.f32 %v8911, %v9132
        %v9249 = vadd.f32 %v8912, %v9137
        %v9250 = vadd.f32 %v8913, %v9140
        %v9251 = vadd.f32 %v8914, %v9145
        %v9252 = vadd.f32 %v8915, %v9148
        %v9253 = vadd.f32 %v8916, %v9153
        %v9254 = vadd.f32 %v8917, %v9156
        %v9255 = vadd.f32 %v8918, %v9161
        %v9256 = vadd.f32 %v8919, %v9164
        %v9257 = vadd.f32 %v8920, %v9169
        %v9258 = vadd.f32 %v8921, %v9172
        %v9259 = vadd.f32 %v8922, %v9177
        %v9260 = vadd.f32 %v8923, %v9180
        %v9261 = vadd.f32 %v8924, %v9185
        %v9262 = vadd.f32 %v8925, %v9188
        %v9263 = vadd.f32 %v8926, %v9193
        %v9264 = vadd.f32 %v8927, %v9196
        %v9265 = vadd.f32 %v8928, %v9201
        %v9266 = vadd.f32 %v8929, %v9204
        %v9267 = vadd.f32 %v8930, %v9209
        %v9268 = vadd.f32 %v8931, %v9212
        %v9269 = vadd.f32 %v8932, %v9217
        %v9270 = vadd.f32 %v8933, %v9220
        %v9271 = vadd.f32 %v8934, %v9225
        %v9272 = vadd.f32 %v8935, %v9228
        %v9273 = vadd.f32 %v8936, %v9233
        %v9274 = vadd.f32 %v8937, %v9236
        %v9275 = vld [vmem:[#allocation11] sm:$0x1]
        %v9277 = vlaneseq
        %v9278 = vshrl.u32 %v9277, 7
        %v9279 = vsub.s32 0, %v9278
        %v9280 = vrot.slane %v9275, %v9279
        %v9282 = vadd.f32 %v9239, %v9280
        %v9283 = vadd.f32 %v9240, %v9280
        %v9284 = vadd.f32 %v9241, %v9280
        %v9285 = vadd.f32 %v9242, %v9280
        %v9286 = vadd.f32 %v9243, %v9280
        %v9287 = vadd.f32 %v9244, %v9280
        %v9288 = vadd.f32 %v9245, %v9280
        %v9289 = vadd.f32 %v9246, %v9280
        %v9290 = vadd.f32 %v9247, %v9280
        %v9291 = vadd.f32 %v9248, %v9280
        %v9292 = vadd.f32 %v9249, %v9280
        %v9293 = vadd.f32 %v9250, %v9280
        %v9294 = vadd.f32 %v9251, %v9280
        %v9295 = vadd.f32 %v9252, %v9280
        %v9296 = vadd.f32 %v9253, %v9280
        %v9297 = vadd.f32 %v9254, %v9280
        %v9298 = vadd.f32 %v9255, %v9280
        %v9299 = vadd.f32 %v9256, %v9280
        %v9300 = vadd.f32 %v9257, %v9280
        %v9301 = vadd.f32 %v9258, %v9280
        %v9302 = vadd.f32 %v9259, %v9280
        %v9303 = vadd.f32 %v9260, %v9280
        %v9304 = vadd.f32 %v9261, %v9280
        %v9305 = vadd.f32 %v9262, %v9280
        %v9306 = vadd.f32 %v9263, %v9280
        %v9307 = vadd.f32 %v9264, %v9280
        %v9308 = vadd.f32 %v9265, %v9280
        %v9309 = vadd.f32 %v9266, %v9280
        %v9310 = vadd.f32 %v9267, %v9280
        %v9311 = vadd.f32 %v9268, %v9280
        %v9312 = vadd.f32 %v9269, %v9280
        %v9313 = vadd.f32 %v9270, %v9280
        %v9314 = vadd.f32 %v9271, %v9280
        %v9315 = vadd.f32 %v9272, %v9280
        %v9316 = vadd.f32 %v9273, %v9280
        %v9317 = vadd.f32 %v9274, %v9280
        %v9318 = vld [vmem:[%s254 + $0x8] sm:$0xe]
        %v9319 = vld [vmem:[%s254 + $0xc] sm:$0xf]
        %v9320 = vld [vmem:[%s254 + $0x10] sm:$0xf]
        %v9321 = vld [vmem:[%s254 + $0x14] sm:$0xf]
        %v9322 = vld [vmem:[%s254 + $0x18] sm:$0xf]
        %v9323 = vld [vmem:[%s254 + $0x1c] sm:$0xf]
        %v9324 = vld [vmem:[%s254 + $0x20] sm:$0xf]
        %v9325 = vld [vmem:[%s254 + $0x24] sm:$0xf]
        %v9326 = vld [vmem:[%s254 + $0x28] sm:$0xf]
        %v9327 = vld [vmem:[%s254 + $0x2c] sm:$0xf]
        %v9328 = vld [vmem:[%s254 + $0x30] sm:$0xf]
        %v9329 = vld [vmem:[%s254 + $0x34] sm:$0xf]
        %v9330 = vld [vmem:[%s254 + $0x38] sm:$0xf]
        %v9331 = vld [vmem:[%s254 + $0x3c] sm:$0xf]
        %v9332 = vld [vmem:[%s254 + $0x40] sm:$0xf]
        %v9333 = vld [vmem:[%s254 + $0x44] sm:$0xf]
        %v9334 = vld [vmem:[%s254 + $0x48] sm:$0xf]
        %v9335 = vld [vmem:[%s254 + $0x4c] sm:$0xf]
        %v9336 = vld [vmem:[%s254 + $0x50] sm:$0xf]
        %v9337 = vld [vmem:[%s254 + $0x54] sm:$0xf]
        %v9338 = vld [vmem:[%s254 + $0x58] sm:$0xf]
        %v9339 = vld [vmem:[%s254 + $0x5c] sm:$0xf]
        %v9340 = vld [vmem:[%s254 + $0x60] sm:$0xf]
        %v9341 = vld [vmem:[%s254 + $0x64] sm:$0xf]
        %v9342 = vld [vmem:[%s254 + $0x68] sm:$0xf]
        %v9343 = vld [vmem:[%s254 + $0x6c] sm:$0xf]
        %v9344 = vld [vmem:[%s254 + $0x70] sm:$0xf]
        %v9345 = vld [vmem:[%s254 + $0x74] sm:$0xf]
        %v9346 = vld [vmem:[%s254 + $0x78] sm:$0xf]
        %v9347 = vld [vmem:[%s254 + $0x7c] sm:$0xf]
        %v9348 = vld [vmem:[%s254 + $0x80] sm:$0xf]
        %v9349 = vld [vmem:[%s254 + $0x84] sm:$0xf]
        %v9350 = vld [vmem:[%s254 + $0x88] sm:$0xf]
        %v9351 = vld [vmem:[%s254 + $0x8c] sm:$0xf]
        %v9352 = vld [vmem:[%s254 + $0x90] sm:$0xf]
        %v9353 = vld [vmem:[%s254 + $0x94] sm:$0xf]
        %v9354 = vld [vmem:[%s254 + $0x98] sm:$0x1]
        %v9355 = vunpack.c.l.bf16 %v9318
        %v9356 = vunpack.c.l.bf16 %v9319
        %v9357 = vunpack.c.l.bf16 %v9320
        %v9358 = vunpack.c.l.bf16 %v9321
        %v9359 = vunpack.c.l.bf16 %v9322
        %v9360 = vunpack.c.l.bf16 %v9323
        %v9361 = vunpack.c.l.bf16 %v9324
        %v9362 = vunpack.c.l.bf16 %v9325
        %v9363 = vunpack.c.l.bf16 %v9326
        %v9364 = vunpack.c.l.bf16 %v9327
        %v9365 = vunpack.c.l.bf16 %v9328
        %v9366 = vunpack.c.l.bf16 %v9329
        %v9367 = vunpack.c.l.bf16 %v9330
        %v9368 = vunpack.c.l.bf16 %v9331
        %v9369 = vunpack.c.l.bf16 %v9332
        %v9370 = vunpack.c.l.bf16 %v9333
        %v9371 = vunpack.c.l.bf16 %v9334
        %v9372 = vunpack.c.l.bf16 %v9335
        %v9373 = vunpack.c.l.bf16 %v9336
        %v9374 = vunpack.c.l.bf16 %v9337
        %v9375 = vunpack.c.l.bf16 %v9338
        %v9376 = vunpack.c.l.bf16 %v9339
        %v9377 = vunpack.c.l.bf16 %v9340
        %v9378 = vunpack.c.l.bf16 %v9341
        %v9379 = vunpack.c.l.bf16 %v9342
        %v9380 = vunpack.c.l.bf16 %v9343
        %v9381 = vunpack.c.l.bf16 %v9344
        %v9382 = vunpack.c.l.bf16 %v9345
        %v9383 = vunpack.c.l.bf16 %v9346
        %v9384 = vunpack.c.l.bf16 %v9347
        %v9385 = vunpack.c.l.bf16 %v9348
        %v9386 = vunpack.c.l.bf16 %v9349
        %v9387 = vunpack.c.l.bf16 %v9350
        %v9388 = vunpack.c.l.bf16 %v9351
        %v9389 = vunpack.c.l.bf16 %v9352
        %v9390 = vunpack.c.l.bf16 %v9353
        %v9391 = vunpack.c.l.bf16 %v9354
        %vm9429 = vcmask 1044480
        %v9430 = vrot.slane %v9355, 3
        %v9431 = vrot.slane %v9356, 3
        %v9432 = vsel %vm9429, %v9430, %v9431
        %v9433 = vrot.slane %v9357, 3
        %v9434 = vsel %vm9429, %v9431, %v9433
        %v9435 = vrot.slane %v9358, 3
        %v9436 = vsel %vm9429, %v9433, %v9435
        %v9437 = vrot.slane %v9359, 3
        %v9438 = vsel %vm9429, %v9435, %v9437
        %v9439 = vrot.slane %v9360, 3
        %v9440 = vsel %vm9429, %v9437, %v9439
        %v9441 = vrot.slane %v9361, 3
        %v9442 = vsel %vm9429, %v9439, %v9441
        %v9443 = vrot.slane %v9362, 3
        %v9444 = vsel %vm9429, %v9441, %v9443
        %v9445 = vrot.slane %v9363, 3
        %v9446 = vsel %vm9429, %v9443, %v9445
        %v9447 = vrot.slane %v9364, 3
        %v9448 = vsel %vm9429, %v9445, %v9447
        %v9449 = vrot.slane %v9365, 3
        %v9450 = vsel %vm9429, %v9447, %v9449
        %v9451 = vrot.slane %v9366, 3
        %v9452 = vsel %vm9429, %v9449, %v9451
        %v9453 = vrot.slane %v9367, 3
        %v9454 = vsel %vm9429, %v9451, %v9453
        %v9455 = vrot.slane %v9368, 3
        %v9456 = vsel %vm9429, %v9453, %v9455
        %v9457 = vrot.slane %v9369, 3
        %v9458 = vsel %vm9429, %v9455, %v9457
        %v9459 = vrot.slane %v9370, 3
        %v9460 = vsel %vm9429, %v9457, %v9459
        %v9461 = vrot.slane %v9371, 3
        %v9462 = vsel %vm9429, %v9459, %v9461
        %v9463 = vrot.slane %v9372, 3
        %v9464 = vsel %vm9429, %v9461, %v9463
        %v9465 = vrot.slane %v9373, 3
        %v9466 = vsel %vm9429, %v9463, %v9465
        %v9467 = vrot.slane %v9374, 3
        %v9468 = vsel %vm9429, %v9465, %v9467
        %v9469 = vrot.slane %v9375, 3
        %v9470 = vsel %vm9429, %v9467, %v9469
        %v9471 = vrot.slane %v9376, 3
        %v9472 = vsel %vm9429, %v9469, %v9471
        %v9473 = vrot.slane %v9377, 3
        %v9474 = vsel %vm9429, %v9471, %v9473
        %v9475 = vrot.slane %v9378, 3
        %v9476 = vsel %vm9429, %v9473, %v9475
        %v9477 = vrot.slane %v9379, 3
        %v9478 = vsel %vm9429, %v9475, %v9477
        %v9479 = vrot.slane %v9380, 3
        %v9480 = vsel %vm9429, %v9477, %v9479
        %v9481 = vrot.slane %v9381, 3
        %v9482 = vsel %vm9429, %v9479, %v9481
        %v9483 = vrot.slane %v9382, 3
        %v9484 = vsel %vm9429, %v9481, %v9483
        %v9485 = vrot.slane %v9383, 3
        %v9486 = vsel %vm9429, %v9483, %v9485
        %v9487 = vrot.slane %v9384, 3
        %v9488 = vsel %vm9429, %v9485, %v9487
        %v9489 = vrot.slane %v9385, 3
        %v9490 = vsel %vm9429, %v9487, %v9489
        %v9491 = vrot.slane %v9386, 3
        %v9492 = vsel %vm9429, %v9489, %v9491
        %v9493 = vrot.slane %v9387, 3
        %v9494 = vsel %vm9429, %v9491, %v9493
        %v9495 = vrot.slane %v9388, 3
        %v9496 = vsel %vm9429, %v9493, %v9495
        %v9497 = vrot.slane %v9389, 3
        %v9498 = vsel %vm9429, %v9495, %v9497
        %v9499 = vrot.slane %v9390, 3
        %v9500 = vsel %vm9429, %v9497, %v9499
        %v9501 = vrot.slane %v9391, 3
        %v9502 = vsel %vm9429, %v9499, %v9501
        %v9539 = vadd.f32 %v9282, %v9432
        %v9540 = vadd.f32 %v9283, %v9434
        %v9541 = vadd.f32 %v9284, %v9436
        %v9542 = vadd.f32 %v9285, %v9438
        %v9543 = vadd.f32 %v9286, %v9440
        %v9544 = vadd.f32 %v9287, %v9442
        %v9545 = vadd.f32 %v9288, %v9444
        %v9546 = vadd.f32 %v9289, %v9446
        %v9547 = vadd.f32 %v9290, %v9448
        %v9548 = vadd.f32 %v9291, %v9450
        %v9549 = vadd.f32 %v9292, %v9452
        %v9550 = vadd.f32 %v9293, %v9454
        %v9551 = vadd.f32 %v9294, %v9456
        %v9552 = vadd.f32 %v9295, %v9458
        %v9553 = vadd.f32 %v9296, %v9460
        %v9554 = vadd.f32 %v9297, %v9462
        %v9555 = vadd.f32 %v9298, %v9464
        %v9556 = vadd.f32 %v9299, %v9466
        %v9557 = vadd.f32 %v9300, %v9468
        %v9558 = vadd.f32 %v9301, %v9470
        %v9559 = vadd.f32 %v9302, %v9472
        %v9560 = vadd.f32 %v9303, %v9474
        %v9561 = vadd.f32 %v9304, %v9476
        %v9562 = vadd.f32 %v9305, %v9478
        %v9563 = vadd.f32 %v9306, %v9480
        %v9564 = vadd.f32 %v9307, %v9482
        %v9565 = vadd.f32 %v9308, %v9484
        %v9566 = vadd.f32 %v9309, %v9486
        %v9567 = vadd.f32 %v9310, %v9488
        %v9568 = vadd.f32 %v9311, %v9490
        %v9569 = vadd.f32 %v9312, %v9492
        %v9570 = vadd.f32 %v9313, %v9494
        %v9571 = vadd.f32 %v9314, %v9496
        %v9572 = vadd.f32 %v9315, %v9498
        %v9573 = vadd.f32 %v9316, %v9500
        %v9574 = vadd.f32 %v9317, %v9502
        %v9575 = vmax.f32 %v9539, 0.0
        %v9576 = vmax.f32 %v9540, 0.0
        %v9577 = vmax.f32 %v9541, 0.0
        %v9578 = vmax.f32 %v9542, 0.0
        %v9579 = vmax.f32 %v9543, 0.0
        %v9580 = vmax.f32 %v9544, 0.0
        %v9581 = vmax.f32 %v9545, 0.0
        %v9582 = vmax.f32 %v9546, 0.0
        %v9583 = vmax.f32 %v9547, 0.0
        %v9584 = vmax.f32 %v9548, 0.0
        %v9585 = vmax.f32 %v9549, 0.0
        %v9586 = vmax.f32 %v9550, 0.0
        %v9587 = vmax.f32 %v9551, 0.0
        %v9588 = vmax.f32 %v9552, 0.0
        %v9589 = vmax.f32 %v9553, 0.0
        %v9590 = vmax.f32 %v9554, 0.0
        %v9591 = vmax.f32 %v9555, 0.0
        %v9592 = vmax.f32 %v9556, 0.0
        %v9593 = vmax.f32 %v9557, 0.0
        %v9594 = vmax.f32 %v9558, 0.0
        %v9595 = vmax.f32 %v9559, 0.0
        %v9596 = vmax.f32 %v9560, 0.0
        %v9597 = vmax.f32 %v9561, 0.0
        %v9598 = vmax.f32 %v9562, 0.0
        %v9599 = vmax.f32 %v9563, 0.0
        %v9600 = vmax.f32 %v9564, 0.0
        %v9601 = vmax.f32 %v9565, 0.0
        %v9602 = vmax.f32 %v9566, 0.0
        %v9603 = vmax.f32 %v9567, 0.0
        %v9604 = vmax.f32 %v9568, 0.0
        %v9605 = vmax.f32 %v9569, 0.0
        %v9606 = vmax.f32 %v9570, 0.0
        %v9607 = vmax.f32 %v9571, 0.0
        %v9608 = vmax.f32 %v9572, 0.0
        %v9609 = vmax.f32 %v9573, 0.0
        %v9610 = vmax.f32 %v9574, 0.0
        %v9611 = vsel %vm4851, %v9575, 0.0
        %v9612 = vsel %vm4852, %v9576, 0.0
        %v9613 = vsel %vm4853, %v9577, 0.0
        %v9614 = vsel %vm4854, %v9578, 0.0
        %v9615 = vsel %vm4855, %v9579, 0.0
        %v9616 = vsel %vm4856, %v9580, 0.0
        %v9617 = vsel %vm4857, %v9581, 0.0
        %v9618 = vsel %vm4858, %v9582, 0.0
        %v9619 = vsel %vm4859, %v9583, 0.0
        %v9620 = vsel %vm4860, %v9584, 0.0
        %v9621 = vsel %vm4861, %v9585, 0.0
        %v9622 = vsel %vm4862, %v9586, 0.0
        %v9623 = vsel %vm4863, %v9587, 0.0
        %v9624 = vsel %vm4864, %v9588, 0.0
        %v9625 = vsel %vm4865, %v9589, 0.0
        %v9626 = vsel %vm4866, %v9590, 0.0
        %v9627 = vsel %vm4867, %v9591, 0.0
        %v9628 = vsel %vm4868, %v9592, 0.0
        %v9629 = vsel %vm4869, %v9593, 0.0
        %v9630 = vsel %vm4870, %v9594, 0.0
        %v9631 = vsel %vm4871, %v9595, 0.0
        %v9632 = vsel %vm4872, %v9596, 0.0
        %v9633 = vsel %vm4873, %v9597, 0.0
        %v9634 = vsel %vm4874, %v9598, 0.0
        %v9635 = vsel %vm4875, %v9599, 0.0
        %v9636 = vsel %vm4876, %v9600, 0.0
        %v9637 = vsel %vm4877, %v9601, 0.0
        %v9638 = vsel %vm4878, %v9602, 0.0
        %v9639 = vsel %vm4879, %v9603, 0.0
        %v9640 = vsel %vm4880, %v9604, 0.0
        %v9641 = vsel %vm4881, %v9605, 0.0
        %v9642 = vsel %vm4882, %v9606, 0.0
        %v9643 = vsel %vm4883, %v9607, 0.0
        %v9644 = vsel %vm4884, %v9608, 0.0
        %v9645 = vsel %vm4885, %v9609, 0.0
        %v9646 = vsel %vm4886, %v9610, 0.0
        %9647 = vst [vmem:[%s296] sm:$0xff] 0.0
        %9648 = vst [vmem:[%s296 + $0x8] sm:$0xff] 0.0
        %9649 = vst [vmem:[%s296 + $0x10] sm:$0x7] 0.0
        %9650 = vst [vmem:[%s296 + $0x131] sm:$0xff] 0.0
        %9651 = vst [vmem:[%s296 + $0x139] sm:$0xff] 0.0
        %9652 = vst [vmem:[%s296 + $0x141] sm:$0x7] 0.0
        %9653 = vst [vmem:[%s296 + $0x13] sm:$0xff] %v9611
        %9654 = vst [vmem:[%s296 + $0x1b] sm:$0xff] %v9612
        %9655 = vst [vmem:[%s296 + $0x23] sm:$0xff] %v9613
        %9656 = vst [vmem:[%s296 + $0x2b] sm:$0xff] %v9614
        %9657 = vst [vmem:[%s296 + $0x33] sm:$0xff] %v9615
        %9658 = vst [vmem:[%s296 + $0x3b] sm:$0xff] %v9616
        %9659 = vst [vmem:[%s296 + $0x43] sm:$0xff] %v9617
        %9660 = vst [vmem:[%s296 + $0x4b] sm:$0xff] %v9618
        %9661 = vst [vmem:[%s296 + $0x53] sm:$0xff] %v9619
        %9662 = vst [vmem:[%s296 + $0x5b] sm:$0xff] %v9620
        %9663 = vst [vmem:[%s296 + $0x63] sm:$0xff] %v9621
        %9664 = vst [vmem:[%s296 + $0x6b] sm:$0xff] %v9622
        %9665 = vst [vmem:[%s296 + $0x73] sm:$0xff] %v9623
        %9666 = vst [vmem:[%s296 + $0x7b] sm:$0xff] %v9624
        %9667 = vst [vmem:[%s296 + $0x83] sm:$0xff] %v9625
        %9668 = vst [vmem:[%s296 + $0x8b] sm:$0xff] %v9626
        %9669 = vst [vmem:[%s296 + $0x93] sm:$0xff] %v9627
        %9670 = vst [vmem:[%s296 + $0x9b] sm:$0xff] %v9628
        %9671 = vst [vmem:[%s296 + $0xa3] sm:$0xff] %v9629
        %9672 = vst [vmem:[%s296 + $0xab] sm:$0xff] %v9630
        %9673 = vst [vmem:[%s296 + $0xb3] sm:$0xff] %v9631
        %9674 = vst [vmem:[%s296 + $0xbb] sm:$0xff] %v9632
        %9675 = vst [vmem:[%s296 + $0xc3] sm:$0xff] %v9633
        %9676 = vst [vmem:[%s296 + $0xcb] sm:$0xff] %v9634
        %9677 = vst [vmem:[%s296 + $0xd3] sm:$0xff] %v9635
        %9678 = vst [vmem:[%s296 + $0xdb] sm:$0xff] %v9636
        %9679 = vst [vmem:[%s296 + $0xe3] sm:$0xff] %v9637
        %9680 = vst [vmem:[%s296 + $0xeb] sm:$0xff] %v9638
        %9681 = vst [vmem:[%s296 + $0xf3] sm:$0xff] %v9639
        %9682 = vst [vmem:[%s296 + $0xfb] sm:$0xff] %v9640
        %9683 = vst [vmem:[%s296 + $0x103] sm:$0xff] %v9641
        %9684 = vst [vmem:[%s296 + $0x10b] sm:$0xff] %v9642
        %9685 = vst [vmem:[%s296 + $0x113] sm:$0xff] %v9643
        %9686 = vst [vmem:[%s296 + $0x11b] sm:$0xff] %v9644
        %9687 = vst [vmem:[%s296 + $0x123] sm:$0xff] %v9645
        %9688 = vst [vmem:[%s296 + $0x12b] sm:$0x3f] %v9646
        %s9689 = sand.u32 %s142, 1
        %s9690 = scalar_lea.sflag [#allocation5], %s9689
        %s9691 = sand.u32 %s142, 1
        %s9692 = smul.addr %s9691, 328
        %s9693 = scalar_lea.vmem [#allocation12], %s9692
        // Predicated region
        $region61: #{basic_block_forward.1} parent=39 // pred_check
          %p9694 = pneg %p152
        $region62: #{basic_block_forward.1} parent=39 // pred_check_branch
          %9696 = sbr.rel (%p9694) target = $region64
        $region63: #{basic_block_forward.1} parent=39 // pred_region
          %s9698 = ssub.s32 5248, 5248
          %9699 = vsyncadd %s9690, %s9698
          %s9700 = smul.addr %s24, 41
          %s9701 = smul.addr %s9700, 128
          %s9702 = scalar_lea.hbm %s5, %s9701
          %s9703 = sshll.u32 %s9693, 4
          %s9704 = int_to_ptr.vmem [resolvable:$true] %s9703
          %9709 = dma.vmem_to_hbm [thread:$0]  %s9704, 5248, %s9702, %s9690, 128, 128, 8
        $region64: #{basic_block_forward.1} parent=39 // pred_fallthru
          _
      $region40: #{basic_block_forward.1} parent=5 // pred_fallthru
        _
      %p9710 = scmp.le.s32.totalorder 2, %s19
      // Predicated region
      $region65: #{basic_block_forward.1} parent=5 // pred_check
        %p9711 = pneg %p9710
      $region66: #{basic_block_forward.1} parent=5 // pred_check_branch
        %9713 = sbr.rel (%p9711) target = $region68
      $region67: #{basic_block_forward.1} parent=5 // pred_region
        %s9714 = ssub.s32 %s19, 2
        // Predicated region
        $region69: #{basic_block_forward.1} parent=67 // pred_check
          %p9715 = pneg %p158
        $region70: #{basic_block_forward.1} parent=67 // pred_check_branch
          %9717 = sbr.rel (%p9715) target = $region72
        $region71: #{basic_block_forward.1} parent=67 // pred_region
          %s9718 = sand.u32 %s143, 1
          %s9719 = scalar_lea.sflag [#allocation5], %s9718
          %s9720 = sand.u32 %s143, 1
          %s9721 = smul.addr %s9720, 328
          %s9722 = scalar_lea.vmem [#allocation12], %s9721
          %9723 = dma.done %s9719, 5248
        $region72: #{basic_block_forward.1} parent=67 // pred_fallthru
          _
      $region68: #{basic_block_forward.1} parent=5 // pred_fallthru
        _
    $region6: #{basic_block_forward.1} parent=1 // loop_footer
      %s23 = sadd.s32 1, %s19
    $region7: #{basic_block_forward.1} parent=1 // loop_footer_branch
      %18 = sbr.rel target = $region3
    $region8: #{basic_block_forward.1} parent=1 // loop_exit
      _
    %9724 = vsyncpa [#allocation4], 1
    %s9725 = scalar_lea.sflag [#allocation4], 1
    %9726 = vsyncpa %s9725, 1
    %9727 = vsyncpa [#allocation7], 1
    %9728 = vsyncpa [#allocation10], 1
    %9729 = vsyncpa [#allocation5], 1
    %s9730 = scalar_lea.sflag [#allocation5], 1
    %9731 = vsyncpa %s9730, 1

</llo_original>
